<compile_context>
chip_gen: v5e
topology: v5e:2x2
jax: 0.10.0
libtpu: 0.0.40
codegen_flags: <defaults>
</compile_context>

<pallas_src>
import jax
import jax.numpy as jnp
from jax.experimental import pallas as pl
from jax.experimental.pallas import tpu as pltpu
import functools


# ----------------------- fused bidirectional LSTM layer -----------------------
def _bilstm_layer_kernel(x_ref, wih_ref, whh_ref, b_ref, y_ref, hT_ref,
                         gf_sc, gb_sc, hf_sc, cf_sc, hb_sc, cb_sc):
    # x_ref:   (T, B, D)  bf16, time-major
    # wih_ref: (2, D, 4H) bf16   (0 = fwd, 1 = bwd), pre-transposed (in, out)
    # whh_ref: (2, H, 4H) bf16
    # b_ref:   (2, 1, 4H) f32    (b_ih + b_hh)
    # y_ref:   (T, B, 2H) bf16   [fwd | bwd] per time step (next layer's input)
    # hT_ref:  (B, 2H)    f32    final hidden states [h_fwd | h_bwd]
    T, B, D = x_ref.shape
    H = whh_ref.shape[1]

    # ---- hoisted input projection: one big MXU matmul per direction ----------
    x2d = x_ref[...].reshape(T * B, D)                                   # bf16
    gf = jnp.dot(x2d, wih_ref[0], preferred_element_type=jnp.float32) + b_ref[0]
    gb = jnp.dot(x2d, wih_ref[1], preferred_element_type=jnp.float32) + b_ref[1]
    gf_sc[...] = gf.reshape(T, B, 4 * H)
    gb_sc[...] = gb.reshape(T, B, 4 * H)

    # Recurrent weights loaded once, outside the serial loop.
    whh_f = whh_ref[0]
    whh_b = whh_ref[1]

    hf_sc[...] = jnp.zeros_like(hf_sc)
    cf_sc[...] = jnp.zeros_like(cf_sc)
    hb_sc[...] = jnp.zeros_like(hb_sc)
    cb_sc[...] = jnp.zeros_like(cb_sc)

    def cell(gates, h, c, whh):
        gates = gates + jnp.dot(h.astype(jnp.bfloat16), whh,
                                preferred_element_type=jnp.float32)      # (B,4H) f32
        # Full-width activations (EUP) instead of four 32-lane slivers.
        sg = jax.nn.sigmoid(gates)
        th = jnp.tanh(gates)
        i = sg[:, 0 * H:1 * H]
        f = sg[:, 1 * H:2 * H]
        g = th[:, 2 * H:3 * H]
        o = sg[:, 3 * H:4 * H]
        c_new = f * c + i * g
        h_new = o * jnp.tanh(c_new)
        return h_new, c_new

    def step(t, carry):
        tb = T - 1 - t                                   # backward reads reversed
        h_f, c_f = cell(gf_sc[t], hf_sc[...], cf_sc[...], whh_f)
        h_b, c_b = cell(gb_sc[tb], hb_sc[...], cb_sc[...], whh_b)
        hf_sc[...] = h_f
        cf_sc[...] = c_f
        hb_sc[...] = h_b
        cb_sc[...] = c_b
        y_ref[t, :, 0:H] = h_f.astype(y_ref.dtype)
        y_ref[tb, :, H:2 * H] = h_b.astype(y_ref.dtype)
        return carry

    unroll = T if T <= 16 else 4
    jax.lax.fori_loop(0, T, step, 0, unroll=unroll)

    hT_ref[:, 0:H] = hf_sc[...]
    hT_ref[:, H:2 * H] = hb_sc[...]


def bilstm_layer(x_tbd, wih_s, whh_s, b_s):
    """Fused bi-directional LSTM layer. x_tbd: (T,B,D) bf16 -> (y (T,B,2H) bf16, hT (B,2H) f32)."""
    T, B, D = x_tbd.shape
    H = whh_s.shape[1]
    # NOTE: 4*H == 128 here so gate tiles are lane-aligned; other H still work
    # but pay masked-lane overhead.
    flops = 2 * (2 * T * B * D * 4 * H + 2 * T * B * H * 4 * H)
    trans = 2 * T * B * (2 * 4 * H + H)
    bytes_acc = (x_tbd.size * 2 + wih_s.size * 2 + whh_s.size * 2 + b_s.size * 4
                 + T * B * 2 * H * 2 + B * 2 * H * 4)
    return pl.pallas_call(
        _bilstm_layer_kernel,
        out_shape=(jax.ShapeDtypeStruct((T, B, 2 * H), jnp.bfloat16),
                   jax.ShapeDtypeStruct((B, 2 * H), jnp.float32)),
        in_specs=[pl.BlockSpec(memory_space=pltpu.MemorySpace.VMEM)] * 4,
        out_specs=(pl.BlockSpec(memory_space=pltpu.MemorySpace.VMEM),
                   pl.BlockSpec(memory_space=pltpu.MemorySpace.VMEM)),
        scratch_shapes=[pltpu.VMEM((T, B, 4 * H), jnp.float32),   # gates fwd
                        pltpu.VMEM((T, B, 4 * H), jnp.float32),   # gates bwd
                        pltpu.VMEM((B, H), jnp.float32),          # h fwd
                        pltpu.VMEM((B, H), jnp.float32),          # c fwd
                        pltpu.VMEM((B, H), jnp.float32),          # h bwd
                        pltpu.VMEM((B, H), jnp.float32)],         # c bwd
        compiler_params=pltpu.CompilerParams(vmem_limit_bytes=64 * 1024 * 1024),
        cost_estimate=pl.CostEstimate(flops=flops, transcendentals=trans,
                                      bytes_accessed=bytes_acc),
    )(x_tbd, wih_s, whh_s, b_s)


# -------------------------------- MLP head ------------------------------------
def _head_kernel(h_ref, w1, b1, w2, b2, w3, b3, w4, b4, w5, b5, out_ref):
    # F.relu(hidden) (dropout = identity), then
    # Linear(2H,512)->Linear(512,512)->Dropout(id)->Linear(512,256)
    # ->Linear(256,128)->Linear(128,out_pad).  Final layer is zero-padded to a
    # 128-lane-wide slab so the store is lane-dense.
    z = jnp.maximum(h_ref[...], 0.0)
    z = jnp.dot(z.astype(jnp.bfloat16), w1[...], preferred_element_type=jnp.float32) + b1[...]
    z = jnp.dot(z.astype(jnp.bfloat16), w2[...], preferred_element_type=jnp.float32) + b2[...]
    z = jnp.dot(z.astype(jnp.bfloat16), w3[...], preferred_element_type=jnp.float32) + b3[...]
    z = jnp.dot(z.astype(jnp.bfloat16), w4[...], preferred_element_type=jnp.float32) + b4[...]
    out_ref[...] = (jnp.dot(z.astype(jnp.bfloat16), w5[...],
                            preferred_element_type=jnp.float32) + b5[...])


def mlp_head(hT, head_params):
    B = hT.shape[0]
    out_pad = head_params[-1][0].shape[1]
    args = [hT]
    flops = 0
    bytes_acc = hT.size * 4 + B * out_pad * 4
    for (w, b) in head_params:
        args += [w, b]
        flops += 2 * B * w.shape[0] * w.shape[1]
        bytes_acc += w.size * 2 + b.size * 4
    return pl.pallas_call(
        _head_kernel,
        out_shape=jax.ShapeDtypeStruct((B, out_pad), jnp.float32),
        in_specs=[pl.BlockSpec(memory_space=pltpu.MemorySpace.VMEM)] * len(args),
        out_specs=pl.BlockSpec(memory_space=pltpu.MemorySpace.VMEM),
        compiler_params=pltpu.CompilerParams(vmem_limit_bytes=64 * 1024 * 1024),
        cost_estimate=pl.CostEstimate(flops=flops, transcendentals=0,
                                      bytes_accessed=bytes_acc),
    )(*args)


# --------------------------------- full model ---------------------------------
@functools.partial(jax.jit, static_argnames=("out_dim",))
def lstm_model_forward(kparams, token_ids, *, out_dim):
    # "BERT" embedding lookup (frozen, deterministic), then F.relu(embedded).
    emb = kparams["embedding"][token_ids]                       # (B, T, E) f32
    emb = jnp.maximum(emb, 0.0)
    x = jnp.transpose(emb, (1, 0, 2)).astype(jnp.bfloat16)      # time-major (T, B, E)

    hT = None
    for (wih_s, whh_s, b_s) in kparams["lstm"]:
        x, hT = bilstm_layer(x, wih_s, whh_s, b_s)   # x: (T,B,2H) feeds next layer
    # hT = [hidden[-2] | hidden[-1]] of the top layer -> head (relu inside kernel).
    logits_pad = mlp_head(hT, kparams["head"])
    return logits_pad[:, :out_dim]


# ------------------------- parameter init / preparation -----------------------
def init_lstm_model_params(key, vocab, emb, hidden, n_layers, output_dim):
    """PyTorch-layout parameters (W_ih (4H,in), W_hh (4H,H), b_ih, b_hh; Linear (in,out))."""
    keys = iter(jax.random.split(key, 64))

    def unif(k, shape, bound):
        return jax.random.uniform(k, shape, jnp.float32, -bound, bound)

    params = {}
    params["embedding"] = 0.02 * jax.random.normal(next(keys), (vocab, emb), jnp.float32)

    lstm_bound = hidden ** -0.5
    layers = []
    for l in range(n_layers):
        in_dim = emb if l == 0 else 2 * hidden
        layer = {}
        for d in ("fwd", "bwd"):
            layer[d] = (
                unif(next(keys), (4 * hidden, in_dim), lstm_bound),   # W_ih
                unif(next(keys), (4 * hidden, hidden), lstm_bound),   # W_hh
                unif(next(keys), (4 * hidden,), lstm_bound),          # b_ih
                unif(next(keys), (4 * hidden,), lstm_bound),          # b_hh
            )
        layers.append(layer)
    params["lstm"] = layers

    head_dims = [2 * hidden, 512, 512, 256, 128, output_dim]
    head = []
    for i in range(5):
        fan_in, fan_out = head_dims[i], head_dims[i + 1]
        bd = fan_in ** -0.5
        head.append((unif(next(keys), (fan_in, fan_out), bd),   # stored (in, out)
                     unif(next(keys), (1, fan_out), bd)))
    params["head"] = head
    return params


def prepare_params(params):
    """One-time prep into kernel layout: stacked/transposed bf16 weights, folded biases, padded head."""
    kp = {"embedding": params["embedding"]}

    lstm = []
    for layer in params["lstm"]:
        wih = jnp.stack([jnp.transpose(layer[d][0]) for d in ("fwd", "bwd")]
                        ).astype(jnp.bfloat16)                     # (2, D_in, 4H)
        whh = jnp.stack([jnp.transpose(layer[d][1]) for d in ("fwd", "bwd")]
                        ).astype(jnp.bfloat16)                     # (2, H, 4H)
        b = jnp.stack([(layer[d][2] + layer[d][3]).reshape(1, -1)
                       for d in ("fwd", "bwd")]).astype(jnp.float32)  # (2, 1, 4H)
        lstm.append((wih, whh, b))
    kp["lstm"] = lstm

    head = []
    n = len(params["head"])
    for idx, (w, b) in enumerate(params["head"]):
        if idx == n - 1:
            pad = (-w.shape[1]) % 128       # pad final output to a 128-lane slab
            w = jnp.pad(w, ((0, 0), (0, pad)))
            b = jnp.pad(b, ((0, 0), (0, pad)))
        head.append((w.astype(jnp.bfloat16), b.astype(jnp.float32)))
    kp["head"] = head
    return kp


if __name__ == "__main__":
    B, T = 2, 8
    VOCAB, EMB, HIDDEN, N_LAYERS, OUT_DIM = 100, 128, 32, 2, 3

    key = jax.random.PRNGKey(0)
    k_tok, k_par = jax.random.split(key)
    tokens = jax.random.randint(k_tok, (B, T), 0, VOCAB, dtype=jnp.int32)
    params = init_lstm_model_params(k_par, VOCAB, EMB, HIDDEN, N_LAYERS, OUT_DIM)
    kparams = prepare_params(params)

    out = jax.block_until_ready(lstm_model_forward(kparams, tokens, out_dim=OUT_DIM))
    assert out.shape == (B, OUT_DIM) and out.dtype == jnp.float32
    print("KERNEL_OK")
</pallas_src>

<mosaic_0001>
module attributes {stable_mosaic.version = 11 : i64} {
  func.func @_head_kernel(%arg0: memref<2x64xf32, #tpu.memory_space<vmem>>, %arg1: memref<64x512xbf16, #tpu.memory_space<vmem>>, %arg2: memref<1x512xf32, #tpu.memory_space<vmem>>, %arg3: memref<512x512xbf16, #tpu.memory_space<vmem>>, %arg4: memref<1x512xf32, #tpu.memory_space<vmem>>, %arg5: memref<512x256xbf16, #tpu.memory_space<vmem>>, %arg6: memref<1x256xf32, #tpu.memory_space<vmem>>, %arg7: memref<256x128xbf16, #tpu.memory_space<vmem>>, %arg8: memref<1x128xf32, #tpu.memory_space<vmem>>, %arg9: memref<128x128xbf16, #tpu.memory_space<vmem>>, %arg10: memref<1x128xf32, #tpu.memory_space<vmem>>, %arg11: memref<2x128xf32, #tpu.memory_space<vmem>>) attributes {dimension_semantics = [], scalar_prefetch = 0 : i64, scratch_operands = 0 : i64, tpu.core_type = #tpu.core_type<tc>} {
    %c0 = arith.constant 0 : index
    %c0_0 = arith.constant 0 : index
    %0 = vector.load %arg0[%c0, %c0_0] : memref<2x64xf32, #tpu.memory_space<vmem>>, vector<2x64xf32>
    %cst = arith.constant 0.000000e+00 : f32
    %1 = vector.broadcast %cst : f32 to vector<2x64xf32>
    %2 = arith.maximumf %0, %1 : vector<2x64xf32>
    %3 = arith.truncf %2 : vector<2x64xf32> to vector<2x64xbf16>
    %c0_1 = arith.constant 0 : index
    %c0_2 = arith.constant 0 : index
    %4 = vector.load %arg1[%c0_1, %c0_2] : memref<64x512xbf16, #tpu.memory_space<vmem>>, vector<64x512xbf16>
    %cst_3 = arith.constant dense<0.000000e+00> : vector<2x512xf32>
    %5 = tpu.matmul %3, %4, %cst_3 {dimension_numbers = #tpu.dot_dimension_numbers<[1], [0], [0], [1], [0, 0, 1, 1], [], []>} : vector<2x64xbf16>, vector<64x512xbf16>, vector<2x512xf32> -> vector<2x512xf32>
    %c0_4 = arith.constant 0 : index
    %c0_5 = arith.constant 0 : index
    %6 = vector.load %arg2[%c0_4, %c0_5] : memref<1x512xf32, #tpu.memory_space<vmem>>, vector<1x512xf32>
    %7 = vector.broadcast %6 : vector<1x512xf32> to vector<2x512xf32>
    %8 = arith.addf %5, %7 : vector<2x512xf32>
    %9 = arith.truncf %8 : vector<2x512xf32> to vector<2x512xbf16>
    %c0_6 = arith.constant 0 : index
    %c0_7 = arith.constant 0 : index
    %10 = vector.load %arg3[%c0_6, %c0_7] : memref<512x512xbf16, #tpu.memory_space<vmem>>, vector<512x512xbf16>
    %cst_8 = arith.constant dense<0.000000e+00> : vector<2x512xf32>
    %11 = tpu.matmul %9, %10, %cst_8 {dimension_numbers = #tpu.dot_dimension_numbers<[1], [0], [0], [1], [0, 0, 1, 1], [], []>} : vector<2x512xbf16>, vector<512x512xbf16>, vector<2x512xf32> -> vector<2x512xf32>
    %c0_9 = arith.constant 0 : index
    %c0_10 = arith.constant 0 : index
    %12 = vector.load %arg4[%c0_9, %c0_10] : memref<1x512xf32, #tpu.memory_space<vmem>>, vector<1x512xf32>
    %13 = vector.broadcast %12 : vector<1x512xf32> to vector<2x512xf32>
    %14 = arith.addf %11, %13 : vector<2x512xf32>
    %15 = arith.truncf %14 : vector<2x512xf32> to vector<2x512xbf16>
    %c0_11 = arith.constant 0 : index
    %c0_12 = arith.constant 0 : index
    %16 = vector.load %arg5[%c0_11, %c0_12] : memref<512x256xbf16, #tpu.memory_space<vmem>>, vector<512x256xbf16>
    %cst_13 = arith.constant dense<0.000000e+00> : vector<2x256xf32>
    %17 = tpu.matmul %15, %16, %cst_13 {dimension_numbers = #tpu.dot_dimension_numbers<[1], [0], [0], [1], [0, 0, 1, 1], [], []>} : vector<2x512xbf16>, vector<512x256xbf16>, vector<2x256xf32> -> vector<2x256xf32>
    %c0_14 = arith.constant 0 : index
    %c0_15 = arith.constant 0 : index
    %18 = vector.load %arg6[%c0_14, %c0_15] : memref<1x256xf32, #tpu.memory_space<vmem>>, vector<1x256xf32>
    %19 = vector.broadcast %18 : vector<1x256xf32> to vector<2x256xf32>
    %20 = arith.addf %17, %19 : vector<2x256xf32>
    %21 = arith.truncf %20 : vector<2x256xf32> to vector<2x256xbf16>
    %c0_16 = arith.constant 0 : index
    %c0_17 = arith.constant 0 : index
    %22 = vector.load %arg7[%c0_16, %c0_17] : memref<256x128xbf16, #tpu.memory_space<vmem>>, vector<256x128xbf16>
    %cst_18 = arith.constant dense<0.000000e+00> : vector<2x128xf32>
    %23 = tpu.matmul %21, %22, %cst_18 {dimension_numbers = #tpu.dot_dimension_numbers<[1], [0], [0], [1], [0, 0, 1, 1], [], []>} : vector<2x256xbf16>, vector<256x128xbf16>, vector<2x128xf32> -> vector<2x128xf32>
    %c0_19 = arith.constant 0 : index
    %c0_20 = arith.constant 0 : index
    %24 = vector.load %arg8[%c0_19, %c0_20] : memref<1x128xf32, #tpu.memory_space<vmem>>, vector<1x128xf32>
    %25 = vector.broadcast %24 : vector<1x128xf32> to vector<2x128xf32>
    %26 = arith.addf %23, %25 : vector<2x128xf32>
    %27 = arith.truncf %26 : vector<2x128xf32> to vector<2x128xbf16>
    %c0_21 = arith.constant 0 : index
    %c0_22 = arith.constant 0 : index
    %28 = vector.load %arg9[%c0_21, %c0_22] : memref<128x128xbf16, #tpu.memory_space<vmem>>, vector<128x128xbf16>
    %cst_23 = arith.constant dense<0.000000e+00> : vector<2x128xf32>
    %29 = tpu.matmul %27, %28, %cst_23 {dimension_numbers = #tpu.dot_dimension_numbers<[1], [0], [0], [1], [0, 0, 1, 1], [], []>} : vector<2x128xbf16>, vector<128x128xbf16>, vector<2x128xf32> -> vector<2x128xf32>
    %c0_24 = arith.constant 0 : index
    %c0_25 = arith.constant 0 : index
    %30 = vector.load %arg10[%c0_24, %c0_25] : memref<1x128xf32, #tpu.memory_space<vmem>>, vector<1x128xf32>
    %31 = vector.broadcast %30 : vector<1x128xf32> to vector<2x128xf32>
    %32 = arith.addf %29, %31 : vector<2x128xf32>
    %c0_26 = arith.constant 0 : index
    %c0_27 = arith.constant 0 : index
    %33 = vector.load %arg11[%c0_26, %c0_27] : memref<2x128xf32, #tpu.memory_space<vmem>>, vector<2x128xf32>
    tpu.vector_store %arg11[%c0_26, %c0_27], %32 {strides = array<i32>} : memref<2x128xf32, #tpu.memory_space<vmem>>, vector<2x128xf32>,
    return
  }
}

module attributes {stable_mosaic.version = 11 : i64} {
  func.func @_bilstm_layer_kernel(%arg0: memref<8x2x128xbf16, #tpu.memory_space<vmem>>, %arg1: memref<2x128x128xbf16, #tpu.memory_space<vmem>>, %arg2: memref<2x32x128xbf16, #tpu.memory_space<vmem>>, %arg3: memref<2x1x128xf32, #tpu.memory_space<vmem>>, %arg4: memref<8x2x64xbf16, #tpu.memory_space<vmem>>, %arg5: memref<2x64xf32, #tpu.memory_space<vmem>>, %arg6: memref<8x2x128xf32, #tpu.memory_space<vmem>>, %arg7: memref<8x2x128xf32, #tpu.memory_space<vmem>>, %arg8: memref<2x32xf32, #tpu.memory_space<vmem>>, %arg9: memref<2x32xf32, #tpu.memory_space<vmem>>, %arg10: memref<2x32xf32, #tpu.memory_space<vmem>>, %arg11: memref<2x32xf32, #tpu.memory_space<vmem>>) attributes {dimension_semantics = [], scalar_prefetch = 0 : i64, scratch_operands = 6 : i64, tpu.core_type = #tpu.core_type<tc>} {
    %c0 = arith.constant 0 : index
    %c0_0 = arith.constant 0 : index
    %c0_1 = arith.constant 0 : index
    %0 = vector.load %arg0[%c0, %c0_0, %c0_1] : memref<8x2x128xbf16, #tpu.memory_space<vmem>>, vector<8x2x128xbf16>
    %1 = vector.shape_cast %0 : vector<8x2x128xbf16> to vector<16x128xbf16>
    %c0_2 = arith.constant 0 : index
    %c0_3 = arith.constant 0 : index
    %c0_4 = arith.constant 0 : index
    %2 = vector.load %arg1[%c0_2, %c0_3, %c0_4] : memref<2x128x128xbf16, #tpu.memory_space<vmem>>, vector<1x128x128xbf16>
    %3 = vector.shape_cast %2 : vector<1x128x128xbf16> to vector<128x128xbf16>
    %cst = arith.constant dense<0.000000e+00> : vector<16x128xf32>
    %4 = tpu.matmul %1, %3, %cst {dimension_numbers = #tpu.dot_dimension_numbers<[1], [0], [0], [1], [0, 0, 1, 1], [], []>} : vector<16x128xbf16>, vector<128x128xbf16>, vector<16x128xf32> -> vector<16x128xf32>
    %c0_5 = arith.constant 0 : index
    %c0_6 = arith.constant 0 : index
    %c0_7 = arith.constant 0 : index
    %5 = vector.load %arg3[%c0_5, %c0_6, %c0_7] : memref<2x1x128xf32, #tpu.memory_space<vmem>>, vector<1x1x128xf32>
    %6 = vector.shape_cast %5 : vector<1x1x128xf32> to vector<1x128xf32>
    %7 = vector.broadcast %6 : vector<1x128xf32> to vector<16x128xf32>
    %8 = arith.addf %4, %7 : vector<16x128xf32>
    %c1 = arith.constant 1 : index
    %c0_8 = arith.constant 0 : index
    %c0_9 = arith.constant 0 : index
    %9 = vector.load %arg1[%c1, %c0_8, %c0_9] : memref<2x128x128xbf16, #tpu.memory_space<vmem>>, vector<1x128x128xbf16>
    %10 = vector.shape_cast %9 : vector<1x128x128xbf16> to vector<128x128xbf16>
    %cst_10 = arith.constant dense<0.000000e+00> : vector<16x128xf32>
    %11 = tpu.matmul %1, %10, %cst_10 {dimension_numbers = #tpu.dot_dimension_numbers<[1], [0], [0], [1], [0, 0, 1, 1], [], []>} : vector<16x128xbf16>, vector<128x128xbf16>, vector<16x128xf32> -> vector<16x128xf32>
    %c1_11 = arith.constant 1 : index
    %c0_12 = arith.constant 0 : index
    %c0_13 = arith.constant 0 : index
    %12 = vector.load %arg3[%c1_11, %c0_12, %c0_13] : memref<2x1x128xf32, #tpu.memory_space<vmem>>, vector<1x1x128xf32>
    %13 = vector.shape_cast %12 : vector<1x1x128xf32> to vector<1x128xf32>
    %14 = vector.broadcast %13 : vector<1x128xf32> to vector<16x128xf32>
    %15 = arith.addf %11, %14 : vector<16x128xf32>
    %16 = vector.shape_cast %8 : vector<16x128xf32> to vector<8x2x128xf32>
    %c0_14 = arith.constant 0 : index
    %c0_15 = arith.constant 0 : index
    %c0_16 = arith.constant 0 : index
    %17 = vector.load %arg6[%c0_14, %c0_15, %c0_16] : memref<8x2x128xf32, #tpu.memory_space<vmem>>, vector<8x2x128xf32>
    tpu.vector_store %arg6[%c0_14, %c0_15, %c0_16], %16 {strides = array<i32>} : memref<8x2x128xf32, #tpu.memory_space<vmem>>, vector<8x2x128xf32>,
    %18 = vector.shape_cast %15 : vector<16x128xf32> to vector<8x2x128xf32>
    %c0_17 = arith.constant 0 : index
    %c0_18 = arith.constant 0 : index
    %c0_19 = arith.constant 0 : index
    %19 = vector.load %arg7[%c0_17, %c0_18, %c0_19] : memref<8x2x128xf32, #tpu.memory_space<vmem>>, vector<8x2x128xf32>
    tpu.vector_store %arg7[%c0_17, %c0_18, %c0_19], %18 {strides = array<i32>} : memref<8x2x128xf32, #tpu.memory_space<vmem>>, vector<8x2x128xf32>,
    %c0_20 = arith.constant 0 : index
    %c0_21 = arith.constant 0 : index
    %c0_22 = arith.constant 0 : index
    %20 = vector.load %arg2[%c0_20, %c0_21, %c0_22] : memref<2x32x128xbf16, #tpu.memory_space<vmem>>, vector<1x32x128xbf16>
    %21 = vector.shape_cast %20 : vector<1x32x128xbf16> to vector<32x128xbf16>
    %c1_23 = arith.constant 1 : index
    %c0_24 = arith.constant 0 : index
    %c0_25 = arith.constant 0 : index
    %22 = vector.load %arg2[%c1_23, %c0_24, %c0_25] : memref<2x32x128xbf16, #tpu.memory_space<vmem>>, vector<1x32x128xbf16>
    %23 = vector.shape_cast %22 : vector<1x32x128xbf16> to vector<32x128xbf16>
    %cst_26 = arith.constant 0.000000e+00 : f32
    %24 = vector.broadcast %cst_26 : f32 to vector<2x32xf32>
    %c0_27 = arith.constant 0 : index
    %c0_28 = arith.constant 0 : index
    %25 = vector.load %arg8[%c0_27, %c0_28] : memref<2x32xf32, #tpu.memory_space<vmem>>, vector<2x32xf32>
    tpu.vector_store %arg8[%c0_27, %c0_28], %24 {strides = array<i32>} : memref<2x32xf32, #tpu.memory_space<vmem>>, vector<2x32xf32>,
    %cst_29 = arith.constant 0.000000e+00 : f32
    %26 = vector.broadcast %cst_29 : f32 to vector<2x32xf32>
    %c0_30 = arith.constant 0 : index
    %c0_31 = arith.constant 0 : index
    %27 = vector.load %arg9[%c0_30, %c0_31] : memref<2x32xf32, #tpu.memory_space<vmem>>, vector<2x32xf32>
    tpu.vector_store %arg9[%c0_30, %c0_31], %26 {strides = array<i32>} : memref<2x32xf32, #tpu.memory_space<vmem>>, vector<2x32xf32>,
    %cst_32 = arith.constant 0.000000e+00 : f32
    %28 = vector.broadcast %cst_32 : f32 to vector<2x32xf32>
    %c0_33 = arith.constant 0 : index
    %c0_34 = arith.constant 0 : index
    %29 = vector.load %arg10[%c0_33, %c0_34] : memref<2x32xf32, #tpu.memory_space<vmem>>, vector<2x32xf32>
    tpu.vector_store %arg10[%c0_33, %c0_34], %28 {strides = array<i32>} : memref<2x32xf32, #tpu.memory_space<vmem>>, vector<2x32xf32>,
    %cst_35 = arith.constant 0.000000e+00 : f32
    %30 = vector.broadcast %cst_35 : f32 to vector<2x32xf32>
    %c0_36 = arith.constant 0 : index
    %c0_37 = arith.constant 0 : index
    %31 = vector.load %arg11[%c0_36, %c0_37] : memref<2x32xf32, #tpu.memory_space<vmem>>, vector<2x32xf32>
    tpu.vector_store %arg11[%c0_36, %c0_37], %30 {strides = array<i32>} : memref<2x32xf32, #tpu.memory_space<vmem>>, vector<2x32xf32>,
    %c0_i32 = arith.constant 0 : i32
    %c7_i32 = arith.constant 7 : i32
    %32 = arith.subi %c7_i32, %c0_i32 : i32
    %33 = arith.index_cast %c0_i32 : i32 to index
    %c0_38 = arith.constant 0 : index
    %c0_39 = arith.constant 0 : index
    %34 = vector.load %arg6[%33, %c0_38, %c0_39] : memref<8x2x128xf32, #tpu.memory_space<vmem>>, vector<1x2x128xf32>
    %35 = vector.shape_cast %34 : vector<1x2x128xf32> to vector<2x128xf32>
    %c0_40 = arith.constant 0 : index
    %c0_41 = arith.constant 0 : index
    %36 = vector.load %arg8[%c0_40, %c0_41] : memref<2x32xf32, #tpu.memory_space<vmem>>, vector<2x32xf32>
    %c0_42 = arith.constant 0 : index
    %c0_43 = arith.constant 0 : index
    %37 = vector.load %arg9[%c0_42, %c0_43] : memref<2x32xf32, #tpu.memory_space<vmem>>, vector<2x32xf32>
    %38 = arith.truncf %36 : vector<2x32xf32> to vector<2x32xbf16>
    %cst_44 = arith.constant dense<0.000000e+00> : vector<2x128xf32>
    %39 = tpu.matmul %38, %21, %cst_44 {dimension_numbers = #tpu.dot_dimension_numbers<[1], [0], [0], [1], [0, 0, 1, 1], [], []>} : vector<2x32xbf16>, vector<32x128xbf16>, vector<2x128xf32> -> vector<2x128xf32>
    %40 = arith.addf %35, %39 : vector<2x128xf32>
    %41 = arith.negf %40 : vector<2x128xf32>
    %42 = math.exp %41 : vector<2x128xf32>
    %cst_45 = arith.constant 1.000000e+00 : f32
    %43 = vector.broadcast %cst_45 : f32 to vector<2x128xf32>
    %44 = arith.addf %43, %42 : vector<2x128xf32>
    %45 = arith.divf %43, %44 : vector<2x128xf32>
    %46 = math.tanh %40 : vector<2x128xf32>
    %47 = vector.extract_strided_slice %45 {offsets = [0, 0], sizes = [2, 32], strides = [1, 1]} : vector<2x128xf32> to vector<2x32xf32>
    %48 = vector.extract_strided_slice %45 {offsets = [0, 32], sizes = [2, 32], strides = [1, 1]} : vector<2x128xf32> to vector<2x32xf32>
    %49 = vector.extract_strided_slice %46 {offsets = [0, 64], sizes = [2, 32], strides = [1, 1]} : vector<2x128xf32> to vector<2x32xf32>
    %50 = vector.extract_strided_slice %45 {offsets = [0, 96], sizes = [2, 32], strides = [1, 1]} : vector<2x128xf32> to vector<2x32xf32>
    %51 = arith.mulf %48, %37 : vector<2x32xf32>
    %52 = arith.mulf %47, %49 : vector<2x32xf32>
    %53 = arith.addf %51, %52 : vector<2x32xf32>
    %54 = math.tanh %53 : vector<2x32xf32>
    %55 = arith.mulf %50, %54 : vector<2x32xf32>
    %56 = arith.index_cast %32 : i32 to index
    %c0_46 = arith.constant 0 : index
    %c0_47 = arith.constant 0 : index
    %57 = vector.load %arg7[%56, %c0_46, %c0_47] : memref<8x2x128xf32, #tpu.memory_space<vmem>>, vector<1x2x128xf32>
    %58 = vector.shape_cast %57 : vector<1x2x128xf32> to vector<2x128xf32>
    %c0_48 = arith.constant 0 : index
    %c0_49 = arith.constant 0 : index
    %59 = vector.load %arg10[%c0_48, %c0_49] : memref<2x32xf32, #tpu.memory_space<vmem>>, vector<2x32xf32>
    %c0_50 = arith.constant 0 : index
    %c0_51 = arith.constant 0 : index
    %60 = vector.load %arg11[%c0_50, %c0_51] : memref<2x32xf32, #tpu.memory_space<vmem>>, vector<2x32xf32>
    %61 = arith.truncf %59 : vector<2x32xf32> to vector<2x32xbf16>
    %cst_52 = arith.constant dense<0.000000e+00> : vector<2x128xf32>
    %62 = tpu.matmul %61, %23, %cst_52 {dimension_numbers = #tpu.dot_dimension_numbers<[1], [0], [0], [1], [0, 0, 1, 1], [], []>} : vector<2x32xbf16>, vector<32x128xbf16>, vector<2x128xf32> -> vector<2x128xf32>
    %63 = arith.addf %58, %62 : vector<2x128xf32>
    %64 = arith.negf %63 : vector<2x128xf32>
    %65 = math.exp %64 : vector<2x128xf32>
    %cst_53 = arith.constant 1.000000e+00 : f32
    %66 = vector.broadcast %cst_53 : f32 to vector<2x128xf32>
    %67 = arith.addf %66, %65 : vector<2x128xf32>
    %68 = arith.divf %66, %67 : vector<2x128xf32>
    %69 = math.tanh %63 : vector<2x128xf32>
    %70 = vector.extract_strided_slice %68 {offsets = [0, 0], sizes = [2, 32], strides = [1, 1]} : vector<2x128xf32> to vector<2x32xf32>
    %71 = vector.extract_strided_slice %68 {offsets = [0, 32], sizes = [2, 32], strides = [1, 1]} : vector<2x128xf32> to vector<2x32xf32>
    %72 = vector.extract_strided_slice %69 {offsets = [0, 64], sizes = [2, 32], strides = [1, 1]} : vector<2x128xf32> to vector<2x32xf32>
    %73 = vector.extract_strided_slice %68 {offsets = [0, 96], sizes = [2, 32], strides = [1, 1]} : vector<2x128xf32> to vector<2x32xf32>
    %74 = arith.mulf %71, %60 : vector<2x32xf32>
    %75 = arith.mulf %70, %72 : vector<2x32xf32>
    %76 = arith.addf %74, %75 : vector<2x32xf32>
    %77 = math.tanh %76 : vector<2x32xf32>
    %78 = arith.mulf %73, %77 : vector<2x32xf32>
    %c0_54 = arith.constant 0 : index
    %c0_55 = arith.constant 0 : index
    %79 = vector.load %arg8[%c0_54, %c0_55] : memref<2x32xf32, #tpu.memory_space<vmem>>, vector<2x32xf32>
    tpu.vector_store %arg8[%c0_54, %c0_55], %55 {strides = array<i32>} : memref<2x32xf32, #tpu.memory_space<vmem>>, vector<2x32xf32>,
    %c0_56 = arith.constant 0 : index
    %c0_57 = arith.constant 0 : index
    %80 = vector.load %arg9[%c0_56, %c0_57] : memref<2x32xf32, #tpu.memory_space<vmem>>, vector<2x32xf32>
    tpu.vector_store %arg9[%c0_56, %c0_57], %53 {strides = array<i32>} : memref<2x32xf32, #tpu.memory_space<vmem>>, vector<2x32xf32>,
    %c0_58 = arith.constant 0 : index
    %c0_59 = arith.constant 0 : index
    %81 = vector.load %arg10[%c0_58, %c0_59] : memref<2x32xf32, #tpu.memory_space<vmem>>, vector<2x32xf32>
    tpu.vector_store %arg10[%c0_58, %c0_59], %78 {strides = array<i32>} : memref<2x32xf32, #tpu.memory_space<vmem>>, vector<2x32xf32>,
    %c0_60 = arith.constant 0 : index
    %c0_61 = arith.constant 0 : index
    %82 = vector.load %arg11[%c0_60, %c0_61] : memref<2x32xf32, #tpu.memory_space<vmem>>, vector<2x32xf32>
    tpu.vector_store %arg11[%c0_60, %c0_61], %76 {strides = array<i32>} : memref<2x32xf32, #tpu.memory_space<vmem>>, vector<2x32xf32>,
    %83 = arith.truncf %55 : vector<2x32xf32> to vector<2x32xbf16>
    %84 = arith.index_cast %c0_i32 : i32 to index
    %c0_62 = arith.constant 0 : index
    %c0_63 = arith.constant 0 : index
    %85 = vector.load %arg4[%84, %c0_62, %c0_63] : memref<8x2x64xbf16, #tpu.memory_space<vmem>>, vector<1x2x32xbf16>
    %86 = vector.shape_cast %85 : vector<1x2x32xbf16> to vector<2x32xbf16>
    %87 = vector.shape_cast %83 : vector<2x32xbf16> to vector<1x2x32xbf16>
    tpu.vector_store %arg4[%84, %c0_62, %c0_63], %87 {strides = array<i32>} : memref<8x2x64xbf16, #tpu.memory_space<vmem>>, vector<1x2x32xbf16>,
    %88 = arith.truncf %78 : vector<2x32xf32> to vector<2x32xbf16>
    %89 = arith.index_cast %32 : i32 to index
    %c0_64 = arith.constant 0 : index
    %c32 = arith.constant 32 : index
    %90 = vector.load %arg4[%89, %c0_64, %c32] : memref<8x2x64xbf16, #tpu.memory_space<vmem>>, vector<1x2x32xbf16>
    %91 = vector.shape_cast %90 : vector<1x2x32xbf16> to vector<2x32xbf16>
    %92 = vector.shape_cast %88 : vector<2x32xbf16> to vector<1x2x32xbf16>
    tpu.vector_store %arg4[%89, %c0_64, %c32], %92 {strides = array<i32>} : memref<8x2x64xbf16, #tpu.memory_space<vmem>>, vector<1x2x32xbf16>,
    %c1_i32 = arith.constant 1 : i32
    %c7_i32_65 = arith.constant 7 : i32
    %93 = arith.subi %c7_i32_65, %c1_i32 : i32
    %94 = arith.index_cast %c1_i32 : i32 to index
    %c0_66 = arith.constant 0 : index
    %c0_67 = arith.constant 0 : index
    %95 = vector.load %arg6[%94, %c0_66, %c0_67] : memref<8x2x128xf32, #tpu.memory_space<vmem>>, vector<1x2x128xf32>
    %96 = vector.shape_cast %95 : vector<1x2x128xf32> to vector<2x128xf32>
    %c0_68 = arith.constant 0 : index
    %c0_69 = arith.constant 0 : index
    %97 = vector.load %arg8[%c0_68, %c0_69] : memref<2x32xf32, #tpu.memory_space<vmem>>, vector<2x32xf32>
    %c0_70 = arith.constant 0 : index
    %c0_71 = arith.constant 0 : index
    %98 = vector.load %arg9[%c0_70, %c0_71] : memref<2x32xf32, #tpu.memory_space<vmem>>, vector<2x32xf32>
    %99 = arith.truncf %97 : vector<2x32xf32> to vector<2x32xbf16>
    %cst_72 = arith.constant dense<0.000000e+00> : vector<2x128xf32>
    %100 = tpu.matmul %99, %21, %cst_72 {dimension_numbers = #tpu.dot_dimension_numbers<[1], [0], [0], [1], [0, 0, 1, 1], [], []>} : vector<2x32xbf16>, vector<32x128xbf16>, vector<2x128xf32> -> vector<2x128xf32>
    %101 = arith.addf %96, %100 : vector<2x128xf32>
    %102 = arith.negf %101 : vector<2x128xf32>
    %103 = math.exp %102 : vector<2x128xf32>
    %cst_73 = arith.constant 1.000000e+00 : f32
    %104 = vector.broadcast %cst_73 : f32 to vector<2x128xf32>
    %105 = arith.addf %104, %103 : vector<2x128xf32>
    %106 = arith.divf %104, %105 : vector<2x128xf32>
    %107 = math.tanh %101 : vector<2x128xf32>
    %108 = vector.extract_strided_slice %106 {offsets = [0, 0], sizes = [2, 32], strides = [1, 1]} : vector<2x128xf32> to vector<2x32xf32>
    %109 = vector.extract_strided_slice %106 {offsets = [0, 32], sizes = [2, 32], strides = [1, 1]} : vector<2x128xf32> to vector<2x32xf32>
    %110 = vector.extract_strided_slice %107 {offsets = [0, 64], sizes = [2, 32], strides = [1, 1]} : vector<2x128xf32> to vector<2x32xf32>
    %111 = vector.extract_strided_slice %106 {offsets = [0, 96], sizes = [2, 32], strides = [1, 1]} : vector<2x128xf32> to vector<2x32xf32>
    %112 = arith.mulf %109, %98 : vector<2x32xf32>
    %113 = arith.mulf %108, %110 : vector<2x32xf32>
    %114 = arith.addf %112, %113 : vector<2x32xf32>
    %115 = math.tanh %114 : vector<2x32xf32>
    %116 = arith.mulf %111, %115 : vector<2x32xf32>
    %117 = arith.index_cast %93 : i32 to index
    %c0_74 = arith.constant 0 : index
    %c0_75 = arith.constant 0 : index
    %118 = vector.load %arg7[%117, %c0_74, %c0_75] : memref<8x2x128xf32, #tpu.memory_space<vmem>>, vector<1x2x128xf32>
    %119 = vector.shape_cast %118 : vector<1x2x128xf32> to vector<2x128xf32>
    %c0_76 = arith.constant 0 : index
    %c0_77 = arith.constant 0 : index
    %120 = vector.load %arg10[%c0_76, %c0_77] : memref<2x32xf32, #tpu.memory_space<vmem>>, vector<2x32xf32>
    %c0_78 = arith.constant 0 : index
    %c0_79 = arith.constant 0 : index
    %121 = vector.load %arg11[%c0_78, %c0_79] : memref<2x32xf32, #tpu.memory_space<vmem>>, vector<2x32xf32>
    %122 = arith.truncf %120 : vector<2x32xf32> to vector<2x32xbf16>
    %cst_80 = arith.constant dense<0.000000e+00> : vector<2x128xf32>
    %123 = tpu.matmul %122, %23, %cst_80 {dimension_numbers = #tpu.dot_dimension_numbers<[1], [0], [0], [1], [0, 0, 1, 1], [], []>} : vector<2x32xbf16>, vector<32x128xbf16>, vector<2x128xf32> -> vector<2x128xf32>
    %124 = arith.addf %119, %123 : vector<2x128xf32>
    %125 = arith.negf %124 : vector<2x128xf32>
    %126 = math.exp %125 : vector<2x128xf32>
    %cst_81 = arith.constant 1.000000e+00 : f32
    %127 = vector.broadcast %cst_81 : f32 to vector<2x128xf32>
    %128 = arith.addf %127, %126 : vector<2x128xf32>
    %129 = arith.divf %127, %128 : vector<2x128xf32>
    %130 = math.tanh %124 : vector<2x128xf32>
    %131 = vector.extract_strided_slice %129 {offsets = [0, 0], sizes = [2, 32], strides = [1, 1]} : vector<2x128xf32> to vector<2x32xf32>
    %132 = vector.extract_strided_slice %129 {offsets = [0, 32], sizes = [2, 32], strides = [1, 1]} : vector<2x128xf32> to vector<2x32xf32>
    %133 = vector.extract_strided_slice %130 {offsets = [0, 64], sizes = [2, 32], strides = [1, 1]} : vector<2x128xf32> to vector<2x32xf32>
    %134 = vector.extract_strided_slice %129 {offsets = [0, 96], sizes = [2, 32], strides = [1, 1]} : vector<2x128xf32> to vector<2x32xf32>
    %135 = arith.mulf %132, %121 : vector<2x32xf32>
    %136 = arith.mulf %131, %133 : vector<2x32xf32>
    %137 = arith.addf %135, %136 : vector<2x32xf32>
    %138 = math.tanh %137 : vector<2x32xf32>
    %139 = arith.mulf %134, %138 : vector<2x32xf32>
    %c0_82 = arith.constant 0 : index
    %c0_83 = arith.constant 0 : index
    %140 = vector.load %arg8[%c0_82, %c0_83] : memref<2x32xf32, #tpu.memory_space<vmem>>, vector<2x32xf32>
    tpu.vector_store %arg8[%c0_82, %c0_83], %116 {strides = array<i32>} : memref<2x32xf32, #tpu.memory_space<vmem>>, vector<2x32xf32>,
    %c0_84 = arith.constant 0 : index
    %c0_85 = arith.constant 0 : index
    %141 = vector.load %arg9[%c0_84, %c0_85] : memref<2x32xf32, #tpu.memory_space<vmem>>, vector<2x32xf32>
    tpu.vector_store %arg9[%c0_84, %c0_85], %114 {strides = array<i32>} : memref<2x32xf32, #tpu.memory_space<vmem>>, vector<2x32xf32>,
    %c0_86 = arith.constant 0 : index
    %c0_87 = arith.constant 0 : index
    %142 = vector.load %arg10[%c0_86, %c0_87] : memref<2x32xf32, #tpu.memory_space<vmem>>, vector<2x32xf32>
    tpu.vector_store %arg10[%c0_86, %c0_87], %139 {strides = array<i32>} : memref<2x32xf32, #tpu.memory_space<vmem>>, vector<2x32xf32>,
    %c0_88 = arith.constant 0 : index
    %c0_89 = arith.constant 0 : index
    %143 = vector.load %arg11[%c0_88, %c0_89] : memref<2x32xf32, #tpu.memory_space<vmem>>, vector<2x32xf32>
    tpu.vector_store %arg11[%c0_88, %c0_89], %137 {strides = array<i32>} : memref<2x32xf32, #tpu.memory_space<vmem>>, vector<2x32xf32>,
    %144 = arith.truncf %116 : vector<2x32xf32> to vector<2x32xbf16>
    %145 = arith.index_cast %c1_i32 : i32 to index
    %c0_90 = arith.constant 0 : index
    %c0_91 = arith.constant 0 : index
    %146 = vector.load %arg4[%145, %c0_90, %c0_91] : memref<8x2x64xbf16, #tpu.memory_space<vmem>>, vector<1x2x32xbf16>
    %147 = vector.shape_cast %146 : vector<1x2x32xbf16> to vector<2x32xbf16>
    %148 = vector.shape_cast %144 : vector<2x32xbf16> to vector<1x2x32xbf16>
    tpu.vector_store %arg4[%145, %c0_90, %c0_91], %148 {strides = array<i32>} : memref<8x2x64xbf16, #tpu.memory_space<vmem>>, vector<1x2x32xbf16>,
    %149 = arith.truncf %139 : vector<2x32xf32> to vector<2x32xbf16>
    %150 = arith.index_cast %93 : i32 to index
    %c0_92 = arith.constant 0 : index
    %c32_93 = arith.constant 32 : index
    %151 = vector.load %arg4[%150, %c0_92, %c32_93] : memref<8x2x64xbf16, #tpu.memory_space<vmem>>, vector<1x2x32xbf16>
    %152 = vector.shape_cast %151 : vector<1x2x32xbf16> to vector<2x32xbf16>
    %153 = vector.shape_cast %149 : vector<2x32xbf16> to vector<1x2x32xbf16>
    tpu.vector_store %arg4[%150, %c0_92, %c32_93], %153 {strides = array<i32>} : memref<8x2x64xbf16, #tpu.memory_space<vmem>>, vector<1x2x32xbf16>,
    %c2_i32 = arith.constant 2 : i32
    %c7_i32_94 = arith.constant 7 : i32
    %154 = arith.subi %c7_i32_94, %c2_i32 : i32
    %155 = arith.index_cast %c2_i32 : i32 to index
    %c0_95 = arith.constant 0 : index
    %c0_96 = arith.constant 0 : index
    %156 = vector.load %arg6[%155, %c0_95, %c0_96] : memref<8x2x128xf32, #tpu.memory_space<vmem>>, vector<1x2x128xf32>
    %157 = vector.shape_cast %156 : vector<1x2x128xf32> to vector<2x128xf32>
    %c0_97 = arith.constant 0 : index
    %c0_98 = arith.constant 0 : index
    %158 = vector.load %arg8[%c0_97, %c0_98] : memref<2x32xf32, #tpu.memory_space<vmem>>, vector<2x32xf32>
    %c0_99 = arith.constant 0 : index
    %c0_100 = arith.constant 0 : index
    %159 = vector.load %arg9[%c0_99, %c0_100] : memref<2x32xf32, #tpu.memory_space<vmem>>, vector<2x32xf32>
    %160 = arith.truncf %158 : vector<2x32xf32> to vector<2x32xbf16>
    %cst_101 = arith.constant dense<0.000000e+00> : vector<2x128xf32>
    %161 = tpu.matmul %160, %21, %cst_101 {dimension_numbers = #tpu.dot_dimension_numbers<[1], [0], [0], [1], [0, 0, 1, 1], [], []>} : vector<2x32xbf16>, vector<32x128xbf16>, vector<2x128xf32> -> vector<2x128xf32>
    %162 = arith.addf %157, %161 : vector<2x128xf32>
    %163 = arith.negf %162 : vector<2x128xf32>
    %164 = math.exp %163 : vector<2x128xf32>
    %cst_102 = arith.constant 1.000000e+00 : f32
    %165 = vector.broadcast %cst_102 : f32 to vector<2x128xf32>
    %166 = arith.addf %165, %164 : vector<2x128xf32>
    %167 = arith.divf %165, %166 : vector<2x128xf32>
    %168 = math.tanh %162 : vector<2x128xf32>
    %169 = vector.extract_strided_slice %167 {offsets = [0, 0], sizes = [2, 32], strides = [1, 1]} : vector<2x128xf32> to vector<2x32xf32>
    %170 = vector.extract_strided_slice %167 {offsets = [0, 32], sizes = [2, 32], strides = [1, 1]} : vector<2x128xf32> to vector<2x32xf32>
    %171 = vector.extract_strided_slice %168 {offsets = [0, 64], sizes = [2, 32], strides = [1, 1]} : vector<2x128xf32> to vector<2x32xf32>
    %172 = vector.extract_strided_slice %167 {offsets = [0, 96], sizes = [2, 32], strides = [1, 1]} : vector<2x128xf32> to vector<2x32xf32>
    %173 = arith.mulf %170, %159 : vector<2x32xf32>
    %174 = arith.mulf %169, %171 : vector<2x32xf32>
    %175 = arith.addf %173, %174 : vector<2x32xf32>
    %176 = math.tanh %175 : vector<2x32xf32>
    %177 = arith.mulf %172, %176 : vector<2x32xf32>
    %178 = arith.index_cast %154 : i32 to index
    %c0_103 = arith.constant 0 : index
    %c0_104 = arith.constant 0 : index
    %179 = vector.load %arg7[%178, %c0_103, %c0_104] : memref<8x2x128xf32, #tpu.memory_space<vmem>>, vector<1x2x128xf32>
    %180 = vector.shape_cast %179 : vector<1x2x128xf32> to vector<2x128xf32>
    %c0_105 = arith.constant 0 : index
    %c0_106 = arith.constant 0 : index
    %181 = vector.load %arg10[%c0_105, %c0_106] : memref<2x32xf32, #tpu.memory_space<vmem>>, vector<2x32xf32>
    %c0_107 = arith.constant 0 : index
    %c0_108 = arith.constant 0 : index
    %182 = vector.load %arg11[%c0_107, %c0_108] : memref<2x32xf32, #tpu.memory_space<vmem>>, vector<2x32xf32>
    %183 = arith.truncf %181 : vector<2x32xf32> to vector<2x32xbf16>
    %cst_109 = arith.constant dense<0.000000e+00> : vector<2x128xf32>
    %184 = tpu.matmul %183, %23, %cst_109 {dimension_numbers = #tpu.dot_dimension_numbers<[1], [0], [0], [1], [0, 0, 1, 1], [], []>} : vector<2x32xbf16>, vector<32x128xbf16>, vector<2x128xf32> -> vector<2x128xf32>
    %185 = arith.addf %180, %184 : vector<2x128xf32>
    %186 = arith.negf %185 : vector<2x128xf32>
    %187 = math.exp %186 : vector<2x128xf32>
    %cst_110 = arith.constant 1.000000e+00 : f32
    %188 = vector.broadcast %cst_110 : f32 to vector<2x128xf32>
    %189 = arith.addf %188, %187 : vector<2x128xf32>
    %190 = arith.divf %188, %189 : vector<2x128xf32>
    %191 = math.tanh %185 : vector<2x128xf32>
    %192 = vector.extract_strided_slice %190 {offsets = [0, 0], sizes = [2, 32], strides = [1, 1]} : vector<2x128xf32> to vector<2x32xf32>
    %193 = vector.extract_strided_slice %190 {offsets = [0, 32], sizes = [2, 32], strides = [1, 1]} : vector<2x128xf32> to vector<2x32xf32>
    %194 = vector.extract_strided_slice %191 {offsets = [0, 64], sizes = [2, 32], strides = [1, 1]} : vector<2x128xf32> to vector<2x32xf32>
    %195 = vector.extract_strided_slice %190 {offsets = [0, 96], sizes = [2, 32], strides = [1, 1]} : vector<2x128xf32> to vector<2x32xf32>
    %196 = arith.mulf %193, %182 : vector<2x32xf32>
    %197 = arith.mulf %192, %194 : vector<2x32xf32>
    %198 = arith.addf %196, %197 : vector<2x32xf32>
    %199 = math.tanh %198 : vector<2x32xf32>
    %200 = arith.mulf %195, %199 : vector<2x32xf32>
    %c0_111 = arith.constant 0 : index
    %c0_112 = arith.constant 0 : index
    %201 = vector.load %arg8[%c0_111, %c0_112] : memref<2x32xf32, #tpu.memory_space<vmem>>, vector<2x32xf32>
    tpu.vector_store %arg8[%c0_111, %c0_112], %177 {strides = array<i32>} : memref<2x32xf32, #tpu.memory_space<vmem>>, vector<2x32xf32>,
    %c0_113 = arith.constant 0 : index
    %c0_114 = arith.constant 0 : index
    %202 = vector.load %arg9[%c0_113, %c0_114] : memref<2x32xf32, #tpu.memory_space<vmem>>, vector<2x32xf32>
    tpu.vector_store %arg9[%c0_113, %c0_114], %175 {strides = array<i32>} : memref<2x32xf32, #tpu.memory_space<vmem>>, vector<2x32xf32>,
    %c0_115 = arith.constant 0 : index
    %c0_116 = arith.constant 0 : index
    %203 = vector.load %arg10[%c0_115, %c0_116] : memref<2x32xf32, #tpu.memory_space<vmem>>, vector<2x32xf32>
    tpu.vector_store %arg10[%c0_115, %c0_116], %200 {strides = array<i32>} : memref<2x32xf32, #tpu.memory_space<vmem>>, vector<2x32xf32>,
    %c0_117 = arith.constant 0 : index
    %c0_118 = arith.constant 0 : index
    %204 = vector.load %arg11[%c0_117, %c0_118] : memref<2x32xf32, #tpu.memory_space<vmem>>, vector<2x32xf32>
    tpu.vector_store %arg11[%c0_117, %c0_118], %198 {strides = array<i32>} : memref<2x32xf32, #tpu.memory_space<vmem>>, vector<2x32xf32>,
    %205 = arith.truncf %177 : vector<2x32xf32> to vector<2x32xbf16>
    %206 = arith.index_cast %c2_i32 : i32 to index
    %c0_119 = arith.constant 0 : index
    %c0_120 = arith.constant 0 : index
    %207 = vector.load %arg4[%206, %c0_119, %c0_120] : memref<8x2x64xbf16, #tpu.memory_space<vmem>>, vector<1x2x32xbf16>
    %208 = vector.shape_cast %207 : vector<1x2x32xbf16> to vector<2x32xbf16>
    %209 = vector.shape_cast %205 : vector<2x32xbf16> to vector<1x2x32xbf16>
    tpu.vector_store %arg4[%206, %c0_119, %c0_120], %209 {strides = array<i32>} : memref<8x2x64xbf16, #tpu.memory_space<vmem>>, vector<1x2x32xbf16>,
    %210 = arith.truncf %200 : vector<2x32xf32> to vector<2x32xbf16>
    %211 = arith.index_cast %154 : i32 to index
    %c0_121 = arith.constant 0 : index
    %c32_122 = arith.constant 32 : index
    %212 = vector.load %arg4[%211, %c0_121, %c32_122] : memref<8x2x64xbf16, #tpu.memory_space<vmem>>, vector<1x2x32xbf16>
    %213 = vector.shape_cast %212 : vector<1x2x32xbf16> to vector<2x32xbf16>
    %214 = vector.shape_cast %210 : vector<2x32xbf16> to vector<1x2x32xbf16>
    tpu.vector_store %arg4[%211, %c0_121, %c32_122], %214 {strides = array<i32>} : memref<8x2x64xbf16, #tpu.memory_space<vmem>>, vector<1x2x32xbf16>,
    %c3_i32 = arith.constant 3 : i32
    %c7_i32_123 = arith.constant 7 : i32
    %215 = arith.subi %c7_i32_123, %c3_i32 : i32
    %216 = arith.index_cast %c3_i32 : i32 to index
    %c0_124 = arith.constant 0 : index
    %c0_125 = arith.constant 0 : index
    %217 = vector.load %arg6[%216, %c0_124, %c0_125] : memref<8x2x128xf32, #tpu.memory_space<vmem>>, vector<1x2x128xf32>
    %218 = vector.shape_cast %217 : vector<1x2x128xf32> to vector<2x128xf32>
    %c0_126 = arith.constant 0 : index
    %c0_127 = arith.constant 0 : index
    %219 = vector.load %arg8[%c0_126, %c0_127] : memref<2x32xf32, #tpu.memory_space<vmem>>, vector<2x32xf32>
    %c0_128 = arith.constant 0 : index
    %c0_129 = arith.constant 0 : index
    %220 = vector.load %arg9[%c0_128, %c0_129] : memref<2x32xf32, #tpu.memory_space<vmem>>, vector<2x32xf32>
    %221 = arith.truncf %219 : vector<2x32xf32> to vector<2x32xbf16>
    %cst_130 = arith.constant dense<0.000000e+00> : vector<2x128xf32>
    %222 = tpu.matmul %221, %21, %cst_130 {dimension_numbers = #tpu.dot_dimension_numbers<[1], [0], [0], [1], [0, 0, 1, 1], [], []>} : vector<2x32xbf16>, vector<32x128xbf16>, vector<2x128xf32> -> vector<2x128xf32>
    %223 = arith.addf %218, %222 : vector<2x128xf32>
    %224 = arith.negf %223 : vector<2x128xf32>
    %225 = math.exp %224 : vector<2x128xf32>
    %cst_131 = arith.constant 1.000000e+00 : f32
    %226 = vector.broadcast %cst_131 : f32 to vector<2x128xf32>
    %227 = arith.addf %226, %225 : vector<2x128xf32>
    %228 = arith.divf %226, %227 : vector<2x128xf32>
    %229 = math.tanh %223 : vector<2x128xf32>
    %230 = vector.extract_strided_slice %228 {offsets = [0, 0], sizes = [2, 32], strides = [1, 1]} : vector<2x128xf32> to vector<2x32xf32>
    %231 = vector.extract_strided_slice %228 {offsets = [0, 32], sizes = [2, 32], strides = [1, 1]} : vector<2x128xf32> to vector<2x32xf32>
    %232 = vector.extract_strided_slice %229 {offsets = [0, 64], sizes = [2, 32], strides = [1, 1]} : vector<2x128xf32> to vector<2x32xf32>
    %233 = vector.extract_strided_slice %228 {offsets = [0, 96], sizes = [2, 32], strides = [1, 1]} : vector<2x128xf32> to vector<2x32xf32>
    %234 = arith.mulf %231, %220 : vector<2x32xf32>
    %235 = arith.mulf %230, %232 : vector<2x32xf32>
    %236 = arith.addf %234, %235 : vector<2x32xf32>
    %237 = math.tanh %236 : vector<2x32xf32>
    %238 = arith.mulf %233, %237 : vector<2x32xf32>
    %239 = arith.index_cast %215 : i32 to index
    %c0_132 = arith.constant 0 : index
    %c0_133 = arith.constant 0 : index
    %240 = vector.load %arg7[%239, %c0_132, %c0_133] : memref<8x2x128xf32, #tpu.memory_space<vmem>>, vector<1x2x128xf32>
    %241 = vector.shape_cast %240 : vector<1x2x128xf32> to vector<2x128xf32>
    %c0_134 = arith.constant 0 : index
    %c0_135 = arith.constant 0 : index
    %242 = vector.load %arg10[%c0_134, %c0_135] : memref<2x32xf32, #tpu.memory_space<vmem>>, vector<2x32xf32>
    %c0_136 = arith.constant 0 : index
    %c0_137 = arith.constant 0 : index
    %243 = vector.load %arg11[%c0_136, %c0_137] : memref<2x32xf32, #tpu.memory_space<vmem>>, vector<2x32xf32>
    %244 = arith.truncf %242 : vector<2x32xf32> to vector<2x32xbf16>
    %cst_138 = arith.constant dense<0.000000e+00> : vector<2x128xf32>
    %245 = tpu.matmul %244, %23, %cst_138 {dimension_numbers = #tpu.dot_dimension_numbers<[1], [0], [0], [1], [0, 0, 1, 1], [], []>} : vector<2x32xbf16>, vector<32x128xbf16>, vector<2x128xf32> -> vector<2x128xf32>
    %246 = arith.addf %241, %245 : vector<2x128xf32>
    %247 = arith.negf %246 : vector<2x128xf32>
    %248 = math.exp %247 : vector<2x128xf32>
    %cst_139 = arith.constant 1.000000e+00 : f32
    %249 = vector.broadcast %cst_139 : f32 to vector<2x128xf32>
    %250 = arith.addf %249, %248 : vector<2x128xf32>
    %251 = arith.divf %249, %250 : vector<2x128xf32>
    %252 = math.tanh %246 : vector<2x128xf32>
    %253 = vector.extract_strided_slice %251 {offsets = [0, 0], sizes = [2, 32], strides = [1, 1]} : vector<2x128xf32> to vector<2x32xf32>
    %254 = vector.extract_strided_slice %251 {offsets = [0, 32], sizes = [2, 32], strides = [1, 1]} : vector<2x128xf32> to vector<2x32xf32>
    %255 = vector.extract_strided_slice %252 {offsets = [0, 64], sizes = [2, 32], strides = [1, 1]} : vector<2x128xf32> to vector<2x32xf32>
    %256 = vector.extract_strided_slice %251 {offsets = [0, 96], sizes = [2, 32], strides = [1, 1]} : vector<2x128xf32> to vector<2x32xf32>
    %257 = arith.mulf %254, %243 : vector<2x32xf32>
    %258 = arith.mulf %253, %255 : vector<2x32xf32>
    %259 = arith.addf %257, %258 : vector<2x32xf32>
    %260 = math.tanh %259 : vector<2x32xf32>
    %261 = arith.mulf %256, %260 : vector<2x32xf32>
    %c0_140 = arith.constant 0 : index
    %c0_141 = arith.constant 0 : index
    %262 = vector.load %arg8[%c0_140, %c0_141] : memref<2x32xf32, #tpu.memory_space<vmem>>, vector<2x32xf32>
    tpu.vector_store %arg8[%c0_140, %c0_141], %238 {strides = array<i32>} : memref<2x32xf32, #tpu.memory_space<vmem>>, vector<2x32xf32>,
    %c0_142 = arith.constant 0 : index
    %c0_143 = arith.constant 0 : index
    %263 = vector.load %arg9[%c0_142, %c0_143] : memref<2x32xf32, #tpu.memory_space<vmem>>, vector<2x32xf32>
    tpu.vector_store %arg9[%c0_142, %c0_143], %236 {strides = array<i32>} : memref<2x32xf32, #tpu.memory_space<vmem>>, vector<2x32xf32>,
    %c0_144 = arith.constant 0 : index
    %c0_145 = arith.constant 0 : index
    %264 = vector.load %arg10[%c0_144, %c0_145] : memref<2x32xf32, #tpu.memory_space<vmem>>, vector<2x32xf32>
    tpu.vector_store %arg10[%c0_144, %c0_145], %261 {strides = array<i32>} : memref<2x32xf32, #tpu.memory_space<vmem>>, vector<2x32xf32>,
    %c0_146 = arith.constant 0 : index
    %c0_147 = arith.constant 0 : index
    %265 = vector.load %arg11[%c0_146, %c0_147] : memref<2x32xf32, #tpu.memory_space<vmem>>, vector<2x32xf32>
    tpu.vector_store %arg11[%c0_146, %c0_147], %259 {strides = array<i32>} : memref<2x32xf32, #tpu.memory_space<vmem>>, vector<2x32xf32>,
    %266 = arith.truncf %238 : vector<2x32xf32> to vector<2x32xbf16>
    %267 = arith.index_cast %c3_i32 : i32 to index
    %c0_148 = arith.constant 0 : index
    %c0_149 = arith.constant 0 : index
    %268 = vector.load %arg4[%267, %c0_148, %c0_149] : memref<8x2x64xbf16, #tpu.memory_space<vmem>>, vector<1x2x32xbf16>
    %269 = vector.shape_cast %268 : vector<1x2x32xbf16> to vector<2x32xbf16>
    %270 = vector.shape_cast %266 : vector<2x32xbf16> to vector<1x2x32xbf16>
    tpu.vector_store %arg4[%267, %c0_148, %c0_149], %270 {strides = array<i32>} : memref<8x2x64xbf16, #tpu.memory_space<vmem>>, vector<1x2x32xbf16>,
    %271 = arith.truncf %261 : vector<2x32xf32> to vector<2x32xbf16>
    %272 = arith.index_cast %215 : i32 to index
    %c0_150 = arith.constant 0 : index
    %c32_151 = arith.constant 32 : index
    %273 = vector.load %arg4[%272, %c0_150, %c32_151] : memref<8x2x64xbf16, #tpu.memory_space<vmem>>, vector<1x2x32xbf16>
    %274 = vector.shape_cast %273 : vector<1x2x32xbf16> to vector<2x32xbf16>
    %275 = vector.shape_cast %271 : vector<2x32xbf16> to vector<1x2x32xbf16>
    tpu.vector_store %arg4[%272, %c0_150, %c32_151], %275 {strides = array<i32>} : memref<8x2x64xbf16, #tpu.memory_space<vmem>>, vector<1x2x32xbf16>,
    %c4_i32 = arith.constant 4 : i32
    %c7_i32_152 = arith.constant 7 : i32
    %276 = arith.subi %c7_i32_152, %c4_i32 : i32
    %277 = arith.index_cast %c4_i32 : i32 to index
    %c0_153 = arith.constant 0 : index
    %c0_154 = arith.constant 0 : index
    %278 = vector.load %arg6[%277, %c0_153, %c0_154] : memref<8x2x128xf32, #tpu.memory_space<vmem>>, vector<1x2x128xf32>
    %279 = vector.shape_cast %278 : vector<1x2x128xf32> to vector<2x128xf32>
    %c0_155 = arith.constant 0 : index
    %c0_156 = arith.constant 0 : index
    %280 = vector.load %arg8[%c0_155, %c0_156] : memref<2x32xf32, #tpu.memory_space<vmem>>, vector<2x32xf32>
    %c0_157 = arith.constant 0 : index
    %c0_158 = arith.constant 0 : index
    %281 = vector.load %arg9[%c0_157, %c0_158] : memref<2x32xf32, #tpu.memory_space<vmem>>, vector<2x32xf32>
    %282 = arith.truncf %280 : vector<2x32xf32> to vector<2x32xbf16>
    %cst_159 = arith.constant dense<0.000000e+00> : vector<2x128xf32>
    %283 = tpu.matmul %282, %21, %cst_159 {dimension_numbers = #tpu.dot_dimension_numbers<[1], [0], [0], [1], [0, 0, 1, 1], [], []>} : vector<2x32xbf16>, vector<32x128xbf16>, vector<2x128xf32> -> vector<2x128xf32>
    %284 = arith.addf %279, %283 : vector<2x128xf32>
    %285 = arith.negf %284 : vector<2x128xf32>
    %286 = math.exp %285 : vector<2x128xf32>
    %cst_160 = arith.constant 1.000000e+00 : f32
    %287 = vector.broadcast %cst_160 : f32 to vector<2x128xf32>
    %288 = arith.addf %287, %286 : vector<2x128xf32>
    %289 = arith.divf %287, %288 : vector<2x128xf32>
    %290 = math.tanh %284 : vector<2x128xf32>
    %291 = vector.extract_strided_slice %289 {offsets = [0, 0], sizes = [2, 32], strides = [1, 1]} : vector<2x128xf32> to vector<2x32xf32>
    %292 = vector.extract_strided_slice %289 {offsets = [0, 32], sizes = [2, 32], strides = [1, 1]} : vector<2x128xf32> to vector<2x32xf32>
    %293 = vector.extract_strided_slice %290 {offsets = [0, 64], sizes = [2, 32], strides = [1, 1]} : vector<2x128xf32> to vector<2x32xf32>
    %294 = vector.extract_strided_slice %289 {offsets = [0, 96], sizes = [2, 32], strides = [1, 1]} : vector<2x128xf32> to vector<2x32xf32>
    %295 = arith.mulf %292, %281 : vector<2x32xf32>
    %296 = arith.mulf %291, %293 : vector<2x32xf32>
    %297 = arith.addf %295, %296 : vector<2x32xf32>
    %298 = math.tanh %297 : vector<2x32xf32>
    %299 = arith.mulf %294, %298 : vector<2x32xf32>
    %300 = arith.index_cast %276 : i32 to index
    %c0_161 = arith.constant 0 : index
    %c0_162 = arith.constant 0 : index
    %301 = vector.load %arg7[%300, %c0_161, %c0_162] : memref<8x2x128xf32, #tpu.memory_space<vmem>>, vector<1x2x128xf32>
    %302 = vector.shape_cast %301 : vector<1x2x128xf32> to vector<2x128xf32>
    %c0_163 = arith.constant 0 : index
    %c0_164 = arith.constant 0 : index
    %303 = vector.load %arg10[%c0_163, %c0_164] : memref<2x32xf32, #tpu.memory_space<vmem>>, vector<2x32xf32>
    %c0_165 = arith.constant 0 : index
    %c0_166 = arith.constant 0 : index
    %304 = vector.load %arg11[%c0_165, %c0_166] : memref<2x32xf32, #tpu.memory_space<vmem>>, vector<2x32xf32>
    %305 = arith.truncf %303 : vector<2x32xf32> to vector<2x32xbf16>
    %cst_167 = arith.constant dense<0.000000e+00> : vector<2x128xf32>
    %306 = tpu.matmul %305, %23, %cst_167 {dimension_numbers = #tpu.dot_dimension_numbers<[1], [0], [0], [1], [0, 0, 1, 1], [], []>} : vector<2x32xbf16>, vector<32x128xbf16>, vector<2x128xf32> -> vector<2x128xf32>
    %307 = arith.addf %302, %306 : vector<2x128xf32>
    %308 = arith.negf %307 : vector<2x128xf32>
    %309 = math.exp %308 : vector<2x128xf32>
    %cst_168 = arith.constant 1.000000e+00 : f32
    %310 = vector.broadcast %cst_168 : f32 to vector<2x128xf32>
    %311 = arith.addf %310, %309 : vector<2x128xf32>
    %312 = arith.divf %310, %311 : vector<2x128xf32>
    %313 = math.tanh %307 : vector<2x128xf32>
    %314 = vector.extract_strided_slice %312 {offsets = [0, 0], sizes = [2, 32], strides = [1, 1]} : vector<2x128xf32> to vector<2x32xf32>
    %315 = vector.extract_strided_slice %312 {offsets = [0, 32], sizes = [2, 32], strides = [1, 1]} : vector<2x128xf32> to vector<2x32xf32>
    %316 = vector.extract_strided_slice %313 {offsets = [0, 64], sizes = [2, 32], strides = [1, 1]} : vector<2x128xf32> to vector<2x32xf32>
    %317 = vector.extract_strided_slice %312 {offsets = [0, 96], sizes = [2, 32], strides = [1, 1]} : vector<2x128xf32> to vector<2x32xf32>
    %318 = arith.mulf %315, %304 : vector<2x32xf32>
    %319 = arith.mulf %314, %316 : vector<2x32xf32>
    %320 = arith.addf %318, %319 : vector<2x32xf32>
    %321 = math.tanh %320 : vector<2x32xf32>
    %322 = arith.mulf %317, %321 : vector<2x32xf32>
    %c0_169 = arith.constant 0 : index
    %c0_170 = arith.constant 0 : index
    %323 = vector.load %arg8[%c0_169, %c0_170] : memref<2x32xf32, #tpu.memory_space<vmem>>, vector<2x32xf32>
    tpu.vector_store %arg8[%c0_169, %c0_170], %299 {strides = array<i32>} : memref<2x32xf32, #tpu.memory_space<vmem>>, vector<2x32xf32>,
    %c0_171 = arith.constant 0 : index
    %c0_172 = arith.constant 0 : index
    %324 = vector.load %arg9[%c0_171, %c0_172] : memref<2x32xf32, #tpu.memory_space<vmem>>, vector<2x32xf32>
    tpu.vector_store %arg9[%c0_171, %c0_172], %297 {strides = array<i32>} : memref<2x32xf32, #tpu.memory_space<vmem>>, vector<2x32xf32>,
    %c0_173 = arith.constant 0 : index
    %c0_174 = arith.constant 0 : index
    %325 = vector.load %arg10[%c0_173, %c0_174] : memref<2x32xf32, #tpu.memory_space<vmem>>, vector<2x32xf32>
    tpu.vector_store %arg10[%c0_173, %c0_174], %322 {strides = array<i32>} : memref<2x32xf32, #tpu.memory_space<vmem>>, vector<2x32xf32>,
    %c0_175 = arith.constant 0 : index
    %c0_176 = arith.constant 0 : index
    %326 = vector.load %arg11[%c0_175, %c0_176] : memref<2x32xf32, #tpu.memory_space<vmem>>, vector<2x32xf32>
    tpu.vector_store %arg11[%c0_175, %c0_176], %320 {strides = array<i32>} : memref<2x32xf32, #tpu.memory_space<vmem>>, vector<2x32xf32>,
    %327 = arith.truncf %299 : vector<2x32xf32> to vector<2x32xbf16>
    %328 = arith.index_cast %c4_i32 : i32 to index
    %c0_177 = arith.constant 0 : index
    %c0_178 = arith.constant 0 : index
    %329 = vector.load %arg4[%328, %c0_177, %c0_178] : memref<8x2x64xbf16, #tpu.memory_space<vmem>>, vector<1x2x32xbf16>
    %330 = vector.shape_cast %329 : vector<1x2x32xbf16> to vector<2x32xbf16>
    %331 = vector.shape_cast %327 : vector<2x32xbf16> to vector<1x2x32xbf16>
    tpu.vector_store %arg4[%328, %c0_177, %c0_178], %331 {strides = array<i32>} : memref<8x2x64xbf16, #tpu.memory_space<vmem>>, vector<1x2x32xbf16>,
    %332 = arith.truncf %322 : vector<2x32xf32> to vector<2x32xbf16>
    %333 = arith.index_cast %276 : i32 to index
    %c0_179 = arith.constant 0 : index
    %c32_180 = arith.constant 32 : index
    %334 = vector.load %arg4[%333, %c0_179, %c32_180] : memref<8x2x64xbf16, #tpu.memory_space<vmem>>, vector<1x2x32xbf16>
    %335 = vector.shape_cast %334 : vector<1x2x32xbf16> to vector<2x32xbf16>
    %336 = vector.shape_cast %332 : vector<2x32xbf16> to vector<1x2x32xbf16>
    tpu.vector_store %arg4[%333, %c0_179, %c32_180], %336 {strides = array<i32>} : memref<8x2x64xbf16, #tpu.memory_space<vmem>>, vector<1x2x32xbf16>,
    %c5_i32 = arith.constant 5 : i32
    %c7_i32_181 = arith.constant 7 : i32
    %337 = arith.subi %c7_i32_181, %c5_i32 : i32
    %338 = arith.index_cast %c5_i32 : i32 to index
    %c0_182 = arith.constant 0 : index
    %c0_183 = arith.constant 0 : index
    %339 = vector.load %arg6[%338, %c0_182, %c0_183] : memref<8x2x128xf32, #tpu.memory_space<vmem>>, vector<1x2x128xf32>
    %340 = vector.shape_cast %339 : vector<1x2x128xf32> to vector<2x128xf32>
    %c0_184 = arith.constant 0 : index
    %c0_185 = arith.constant 0 : index
    %341 = vector.load %arg8[%c0_184, %c0_185] : memref<2x32xf32, #tpu.memory_space<vmem>>, vector<2x32xf32>
    %c0_186 = arith.constant 0 : index
    %c0_187 = arith.constant 0 : index
    %342 = vector.load %arg9[%c0_186, %c0_187] : memref<2x32xf32, #tpu.memory_space<vmem>>, vector<2x32xf32>
    %343 = arith.truncf %341 : vector<2x32xf32> to vector<2x32xbf16>
    %cst_188 = arith.constant dense<0.000000e+00> : vector<2x128xf32>
    %344 = tpu.matmul %343, %21, %cst_188 {dimension_numbers = #tpu.dot_dimension_numbers<[1], [0], [0], [1], [0, 0, 1, 1], [], []>} : vector<2x32xbf16>, vector<32x128xbf16>, vector<2x128xf32> -> vector<2x128xf32>
    %345 = arith.addf %340, %344 : vector<2x128xf32>
    %346 = arith.negf %345 : vector<2x128xf32>
    %347 = math.exp %346 : vector<2x128xf32>
    %cst_189 = arith.constant 1.000000e+00 : f32
    %348 = vector.broadcast %cst_189 : f32 to vector<2x128xf32>
    %349 = arith.addf %348, %347 : vector<2x128xf32>
    %350 = arith.divf %348, %349 : vector<2x128xf32>
    %351 = math.tanh %345 : vector<2x128xf32>
    %352 = vector.extract_strided_slice %350 {offsets = [0, 0], sizes = [2, 32], strides = [1, 1]} : vector<2x128xf32> to vector<2x32xf32>
    %353 = vector.extract_strided_slice %350 {offsets = [0, 32], sizes = [2, 32], strides = [1, 1]} : vector<2x128xf32> to vector<2x32xf32>
    %354 = vector.extract_strided_slice %351 {offsets = [0, 64], sizes = [2, 32], strides = [1, 1]} : vector<2x128xf32> to vector<2x32xf32>
    %355 = vector.extract_strided_slice %350 {offsets = [0, 96], sizes = [2, 32], strides = [1, 1]} : vector<2x128xf32> to vector<2x32xf32>
    %356 = arith.mulf %353, %342 : vector<2x32xf32>
    %357 = arith.mulf %352, %354 : vector<2x32xf32>
    %358 = arith.addf %356, %357 : vector<2x32xf32>
    %359 = math.tanh %358 : vector<2x32xf32>
    %360 = arith.mulf %355, %359 : vector<2x32xf32>
    %361 = arith.index_cast %337 : i32 to index
    %c0_190 = arith.constant 0 : index
    %c0_191 = arith.constant 0 : index
    %362 = vector.load %arg7[%361, %c0_190, %c0_191] : memref<8x2x128xf32, #tpu.memory_space<vmem>>, vector<1x2x128xf32>
    %363 = vector.shape_cast %362 : vector<1x2x128xf32> to vector<2x128xf32>
    %c0_192 = arith.constant 0 : index
    %c0_193 = arith.constant 0 : index
    %364 = vector.load %arg10[%c0_192, %c0_193] : memref<2x32xf32, #tpu.memory_space<vmem>>, vector<2x32xf32>
    %c0_194 = arith.constant 0 : index
    %c0_195 = arith.constant 0 : index
    %365 = vector.load %arg11[%c0_194, %c0_195] : memref<2x32xf32, #tpu.memory_space<vmem>>, vector<2x32xf32>
    %366 = arith.truncf %364 : vector<2x32xf32> to vector<2x32xbf16>
    %cst_196 = arith.constant dense<0.000000e+00> : vector<2x128xf32>
    %367 = tpu.matmul %366, %23, %cst_196 {dimension_numbers = #tpu.dot_dimension_numbers<[1], [0], [0], [1], [0, 0, 1, 1], [], []>} : vector<2x32xbf16>, vector<32x128xbf16>, vector<2x128xf32> -> vector<2x128xf32>
    %368 = arith.addf %363, %367 : vector<2x128xf32>
    %369 = arith.negf %368 : vector<2x128xf32>
    %370 = math.exp %369 : vector<2x128xf32>
    %cst_197 = arith.constant 1.000000e+00 : f32
    %371 = vector.broadcast %cst_197 : f32 to vector<2x128xf32>
    %372 = arith.addf %371, %370 : vector<2x128xf32>
    %373 = arith.divf %371, %372 : vector<2x128xf32>
    %374 = math.tanh %368 : vector<2x128xf32>
    %375 = vector.extract_strided_slice %373 {offsets = [0, 0], sizes = [2, 32], strides = [1, 1]} : vector<2x128xf32> to vector<2x32xf32>
    %376 = vector.extract_strided_slice %373 {offsets = [0, 32], sizes = [2, 32], strides = [1, 1]} : vector<2x128xf32> to vector<2x32xf32>
    %377 = vector.extract_strided_slice %374 {offsets = [0, 64], sizes = [2, 32], strides = [1, 1]} : vector<2x128xf32> to vector<2x32xf32>
    %378 = vector.extract_strided_slice %373 {offsets = [0, 96], sizes = [2, 32], strides = [1, 1]} : vector<2x128xf32> to vector<2x32xf32>
    %379 = arith.mulf %376, %365 : vector<2x32xf32>
    %380 = arith.mulf %375, %377 : vector<2x32xf32>
    %381 = arith.addf %379, %380 : vector<2x32xf32>
    %382 = math.tanh %381 : vector<2x32xf32>
    %383 = arith.mulf %378, %382 : vector<2x32xf32>
    %c0_198 = arith.constant 0 : index
    %c0_199 = arith.constant 0 : index
    %384 = vector.load %arg8[%c0_198, %c0_199] : memref<2x32xf32, #tpu.memory_space<vmem>>, vector<2x32xf32>
    tpu.vector_store %arg8[%c0_198, %c0_199], %360 {strides = array<i32>} : memref<2x32xf32, #tpu.memory_space<vmem>>, vector<2x32xf32>,
    %c0_200 = arith.constant 0 : index
    %c0_201 = arith.constant 0 : index
    %385 = vector.load %arg9[%c0_200, %c0_201] : memref<2x32xf32, #tpu.memory_space<vmem>>, vector<2x32xf32>
    tpu.vector_store %arg9[%c0_200, %c0_201], %358 {strides = array<i32>} : memref<2x32xf32, #tpu.memory_space<vmem>>, vector<2x32xf32>,
    %c0_202 = arith.constant 0 : index
    %c0_203 = arith.constant 0 : index
    %386 = vector.load %arg10[%c0_202, %c0_203] : memref<2x32xf32, #tpu.memory_space<vmem>>, vector<2x32xf32>
    tpu.vector_store %arg10[%c0_202, %c0_203], %383 {strides = array<i32>} : memref<2x32xf32, #tpu.memory_space<vmem>>, vector<2x32xf32>,
    %c0_204 = arith.constant 0 : index
    %c0_205 = arith.constant 0 : index
    %387 = vector.load %arg11[%c0_204, %c0_205] : memref<2x32xf32, #tpu.memory_space<vmem>>, vector<2x32xf32>
    tpu.vector_store %arg11[%c0_204, %c0_205], %381 {strides = array<i32>} : memref<2x32xf32, #tpu.memory_space<vmem>>, vector<2x32xf32>,
    %388 = arith.truncf %360 : vector<2x32xf32> to vector<2x32xbf16>
    %389 = arith.index_cast %c5_i32 : i32 to index
    %c0_206 = arith.constant 0 : index
    %c0_207 = arith.constant 0 : index
    %390 = vector.load %arg4[%389, %c0_206, %c0_207] : memref<8x2x64xbf16, #tpu.memory_space<vmem>>, vector<1x2x32xbf16>
    %391 = vector.shape_cast %390 : vector<1x2x32xbf16> to vector<2x32xbf16>
    %392 = vector.shape_cast %388 : vector<2x32xbf16> to vector<1x2x32xbf16>
    tpu.vector_store %arg4[%389, %c0_206, %c0_207], %392 {strides = array<i32>} : memref<8x2x64xbf16, #tpu.memory_space<vmem>>, vector<1x2x32xbf16>,
    %393 = arith.truncf %383 : vector<2x32xf32> to vector<2x32xbf16>
    %394 = arith.index_cast %337 : i32 to index
    %c0_208 = arith.constant 0 : index
    %c32_209 = arith.constant 32 : index
    %395 = vector.load %arg4[%394, %c0_208, %c32_209] : memref<8x2x64xbf16, #tpu.memory_space<vmem>>, vector<1x2x32xbf16>
    %396 = vector.shape_cast %395 : vector<1x2x32xbf16> to vector<2x32xbf16>
    %397 = vector.shape_cast %393 : vector<2x32xbf16> to vector<1x2x32xbf16>
    tpu.vector_store %arg4[%394, %c0_208, %c32_209], %397 {strides = array<i32>} : memref<8x2x64xbf16, #tpu.memory_space<vmem>>, vector<1x2x32xbf16>,
    %c6_i32 = arith.constant 6 : i32
    %c7_i32_210 = arith.constant 7 : i32
    %398 = arith.subi %c7_i32_210, %c6_i32 : i32
    %399 = arith.index_cast %c6_i32 : i32 to index
    %c0_211 = arith.constant 0 : index
    %c0_212 = arith.constant 0 : index
    %400 = vector.load %arg6[%399, %c0_211, %c0_212] : memref<8x2x128xf32, #tpu.memory_space<vmem>>, vector<1x2x128xf32>
    %401 = vector.shape_cast %400 : vector<1x2x128xf32> to vector<2x128xf32>
    %c0_213 = arith.constant 0 : index
    %c0_214 = arith.constant 0 : index
    %402 = vector.load %arg8[%c0_213, %c0_214] : memref<2x32xf32, #tpu.memory_space<vmem>>, vector<2x32xf32>
    %c0_215 = arith.constant 0 : index
    %c0_216 = arith.constant 0 : index
    %403 = vector.load %arg9[%c0_215, %c0_216] : memref<2x32xf32, #tpu.memory_space<vmem>>, vector<2x32xf32>
    %404 = arith.truncf %402 : vector<2x32xf32> to vector<2x32xbf16>
    %cst_217 = arith.constant dense<0.000000e+00> : vector<2x128xf32>
    %405 = tpu.matmul %404, %21, %cst_217 {dimension_numbers = #tpu.dot_dimension_numbers<[1], [0], [0], [1], [0, 0, 1, 1], [], []>} : vector<2x32xbf16>, vector<32x128xbf16>, vector<2x128xf32> -> vector<2x128xf32>
    %406 = arith.addf %401, %405 : vector<2x128xf32>
    %407 = arith.negf %406 : vector<2x128xf32>
    %408 = math.exp %407 : vector<2x128xf32>
    %cst_218 = arith.constant 1.000000e+00 : f32
    %409 = vector.broadcast %cst_218 : f32 to vector<2x128xf32>
    %410 = arith.addf %409, %408 : vector<2x128xf32>
    %411 = arith.divf %409, %410 : vector<2x128xf32>
    %412 = math.tanh %406 : vector<2x128xf32>
    %413 = vector.extract_strided_slice %411 {offsets = [0, 0], sizes = [2, 32], strides = [1, 1]} : vector<2x128xf32> to vector<2x32xf32>
    %414 = vector.extract_strided_slice %411 {offsets = [0, 32], sizes = [2, 32], strides = [1, 1]} : vector<2x128xf32> to vector<2x32xf32>
    %415 = vector.extract_strided_slice %412 {offsets = [0, 64], sizes = [2, 32], strides = [1, 1]} : vector<2x128xf32> to vector<2x32xf32>
    %416 = vector.extract_strided_slice %411 {offsets = [0, 96], sizes = [2, 32], strides = [1, 1]} : vector<2x128xf32> to vector<2x32xf32>
    %417 = arith.mulf %414, %403 : vector<2x32xf32>
    %418 = arith.mulf %413, %415 : vector<2x32xf32>
    %419 = arith.addf %417, %418 : vector<2x32xf32>
    %420 = math.tanh %419 : vector<2x32xf32>
    %421 = arith.mulf %416, %420 : vector<2x32xf32>
    %422 = arith.index_cast %398 : i32 to index
    %c0_219 = arith.constant 0 : index
    %c0_220 = arith.constant 0 : index
    %423 = vector.load %arg7[%422, %c0_219, %c0_220] : memref<8x2x128xf32, #tpu.memory_space<vmem>>, vector<1x2x128xf32>
    %424 = vector.shape_cast %423 : vector<1x2x128xf32> to vector<2x128xf32>
    %c0_221 = arith.constant 0 : index
    %c0_222 = arith.constant 0 : index
    %425 = vector.load %arg10[%c0_221, %c0_222] : memref<2x32xf32, #tpu.memory_space<vmem>>, vector<2x32xf32>
    %c0_223 = arith.constant 0 : index
    %c0_224 = arith.constant 0 : index
    %426 = vector.load %arg11[%c0_223, %c0_224] : memref<2x32xf32, #tpu.memory_space<vmem>>, vector<2x32xf32>
    %427 = arith.truncf %425 : vector<2x32xf32> to vector<2x32xbf16>
    %cst_225 = arith.constant dense<0.000000e+00> : vector<2x128xf32>
    %428 = tpu.matmul %427, %23, %cst_225 {dimension_numbers = #tpu.dot_dimension_numbers<[1], [0], [0], [1], [0, 0, 1, 1], [], []>} : vector<2x32xbf16>, vector<32x128xbf16>, vector<2x128xf32> -> vector<2x128xf32>
    %429 = arith.addf %424, %428 : vector<2x128xf32>
    %430 = arith.negf %429 : vector<2x128xf32>
    %431 = math.exp %430 : vector<2x128xf32>
    %cst_226 = arith.constant 1.000000e+00 : f32
    %432 = vector.broadcast %cst_226 : f32 to vector<2x128xf32>
    %433 = arith.addf %432, %431 : vector<2x128xf32>
    %434 = arith.divf %432, %433 : vector<2x128xf32>
    %435 = math.tanh %429 : vector<2x128xf32>
    %436 = vector.extract_strided_slice %434 {offsets = [0, 0], sizes = [2, 32], strides = [1, 1]} : vector<2x128xf32> to vector<2x32xf32>
    %437 = vector.extract_strided_slice %434 {offsets = [0, 32], sizes = [2, 32], strides = [1, 1]} : vector<2x128xf32> to vector<2x32xf32>
    %438 = vector.extract_strided_slice %435 {offsets = [0, 64], sizes = [2, 32], strides = [1, 1]} : vector<2x128xf32> to vector<2x32xf32>
    %439 = vector.extract_strided_slice %434 {offsets = [0, 96], sizes = [2, 32], strides = [1, 1]} : vector<2x128xf32> to vector<2x32xf32>
    %440 = arith.mulf %437, %426 : vector<2x32xf32>
    %441 = arith.mulf %436, %438 : vector<2x32xf32>
    %442 = arith.addf %440, %441 : vector<2x32xf32>
    %443 = math.tanh %442 : vector<2x32xf32>
    %444 = arith.mulf %439, %443 : vector<2x32xf32>
    %c0_227 = arith.constant 0 : index
    %c0_228 = arith.constant 0 : index
    %445 = vector.load %arg8[%c0_227, %c0_228] : memref<2x32xf32, #tpu.memory_space<vmem>>, vector<2x32xf32>
    tpu.vector_store %arg8[%c0_227, %c0_228], %421 {strides = array<i32>} : memref<2x32xf32, #tpu.memory_space<vmem>>, vector<2x32xf32>,
    %c0_229 = arith.constant 0 : index
    %c0_230 = arith.constant 0 : index
    %446 = vector.load %arg9[%c0_229, %c0_230] : memref<2x32xf32, #tpu.memory_space<vmem>>, vector<2x32xf32>
    tpu.vector_store %arg9[%c0_229, %c0_230], %419 {strides = array<i32>} : memref<2x32xf32, #tpu.memory_space<vmem>>, vector<2x32xf32>,
    %c0_231 = arith.constant 0 : index
    %c0_232 = arith.constant 0 : index
    %447 = vector.load %arg10[%c0_231, %c0_232] : memref<2x32xf32, #tpu.memory_space<vmem>>, vector<2x32xf32>
    tpu.vector_store %arg10[%c0_231, %c0_232], %444 {strides = array<i32>} : memref<2x32xf32, #tpu.memory_space<vmem>>, vector<2x32xf32>,
    %c0_233 = arith.constant 0 : index
    %c0_234 = arith.constant 0 : index
    %448 = vector.load %arg11[%c0_233, %c0_234] : memref<2x32xf32, #tpu.memory_space<vmem>>, vector<2x32xf32>
    tpu.vector_store %arg11[%c0_233, %c0_234], %442 {strides = array<i32>} : memref<2x32xf32, #tpu.memory_space<vmem>>, vector<2x32xf32>,
    %449 = arith.truncf %421 : vector<2x32xf32> to vector<2x32xbf16>
    %450 = arith.index_cast %c6_i32 : i32 to index
    %c0_235 = arith.constant 0 : index
    %c0_236 = arith.constant 0 : index
    %451 = vector.load %arg4[%450, %c0_235, %c0_236] : memref<8x2x64xbf16, #tpu.memory_space<vmem>>, vector<1x2x32xbf16>
    %452 = vector.shape_cast %451 : vector<1x2x32xbf16> to vector<2x32xbf16>
    %453 = vector.shape_cast %449 : vector<2x32xbf16> to vector<1x2x32xbf16>
    tpu.vector_store %arg4[%450, %c0_235, %c0_236], %453 {strides = array<i32>} : memref<8x2x64xbf16, #tpu.memory_space<vmem>>, vector<1x2x32xbf16>,
    %454 = arith.truncf %444 : vector<2x32xf32> to vector<2x32xbf16>
    %455 = arith.index_cast %398 : i32 to index
    %c0_237 = arith.constant 0 : index
    %c32_238 = arith.constant 32 : index
    %456 = vector.load %arg4[%455, %c0_237, %c32_238] : memref<8x2x64xbf16, #tpu.memory_space<vmem>>, vector<1x2x32xbf16>
    %457 = vector.shape_cast %456 : vector<1x2x32xbf16> to vector<2x32xbf16>
    %458 = vector.shape_cast %454 : vector<2x32xbf16> to vector<1x2x32xbf16>
    tpu.vector_store %arg4[%455, %c0_237, %c32_238], %458 {strides = array<i32>} : memref<8x2x64xbf16, #tpu.memory_space<vmem>>, vector<1x2x32xbf16>,
    %c7_i32_239 = arith.constant 7 : i32
    %c7_i32_240 = arith.constant 7 : i32
    %459 = arith.subi %c7_i32_240, %c7_i32_239 : i32
    %460 = arith.index_cast %c7_i32_239 : i32 to index
    %c0_241 = arith.constant 0 : index
    %c0_242 = arith.constant 0 : index
    %461 = vector.load %arg6[%460, %c0_241, %c0_242] : memref<8x2x128xf32, #tpu.memory_space<vmem>>, vector<1x2x128xf32>
    %462 = vector.shape_cast %461 : vector<1x2x128xf32> to vector<2x128xf32>
    %c0_243 = arith.constant 0 : index
    %c0_244 = arith.constant 0 : index
    %463 = vector.load %arg8[%c0_243, %c0_244] : memref<2x32xf32, #tpu.memory_space<vmem>>, vector<2x32xf32>
    %c0_245 = arith.constant 0 : index
    %c0_246 = arith.constant 0 : index
    %464 = vector.load %arg9[%c0_245, %c0_246] : memref<2x32xf32, #tpu.memory_space<vmem>>, vector<2x32xf32>
    %465 = arith.truncf %463 : vector<2x32xf32> to vector<2x32xbf16>
    %cst_247 = arith.constant dense<0.000000e+00> : vector<2x128xf32>
    %466 = tpu.matmul %465, %21, %cst_247 {dimension_numbers = #tpu.dot_dimension_numbers<[1], [0], [0], [1], [0, 0, 1, 1], [], []>} : vector<2x32xbf16>, vector<32x128xbf16>, vector<2x128xf32> -> vector<2x128xf32>
    %467 = arith.addf %462, %466 : vector<2x128xf32>
    %468 = arith.negf %467 : vector<2x128xf32>
    %469 = math.exp %468 : vector<2x128xf32>
    %cst_248 = arith.constant 1.000000e+00 : f32
    %470 = vector.broadcast %cst_248 : f32 to vector<2x128xf32>
    %471 = arith.addf %470, %469 : vector<2x128xf32>
    %472 = arith.divf %470, %471 : vector<2x128xf32>
    %473 = math.tanh %467 : vector<2x128xf32>
    %474 = vector.extract_strided_slice %472 {offsets = [0, 0], sizes = [2, 32], strides = [1, 1]} : vector<2x128xf32> to vector<2x32xf32>
    %475 = vector.extract_strided_slice %472 {offsets = [0, 32], sizes = [2, 32], strides = [1, 1]} : vector<2x128xf32> to vector<2x32xf32>
    %476 = vector.extract_strided_slice %473 {offsets = [0, 64], sizes = [2, 32], strides = [1, 1]} : vector<2x128xf32> to vector<2x32xf32>
    %477 = vector.extract_strided_slice %472 {offsets = [0, 96], sizes = [2, 32], strides = [1, 1]} : vector<2x128xf32> to vector<2x32xf32>
    %478 = arith.mulf %475, %464 : vector<2x32xf32>
    %479 = arith.mulf %474, %476 : vector<2x32xf32>
    %480 = arith.addf %478, %479 : vector<2x32xf32>
    %481 = math.tanh %480 : vector<2x32xf32>
    %482 = arith.mulf %477, %481 : vector<2x32xf32>
    %483 = arith.index_cast %459 : i32 to index
    %c0_249 = arith.constant 0 : index
    %c0_250 = arith.constant 0 : index
    %484 = vector.load %arg7[%483, %c0_249, %c0_250] : memref<8x2x128xf32, #tpu.memory_space<vmem>>, vector<1x2x128xf32>
    %485 = vector.shape_cast %484 : vector<1x2x128xf32> to vector<2x128xf32>
    %c0_251 = arith.constant 0 : index
    %c0_252 = arith.constant 0 : index
    %486 = vector.load %arg10[%c0_251, %c0_252] : memref<2x32xf32, #tpu.memory_space<vmem>>, vector<2x32xf32>
    %c0_253 = arith.constant 0 : index
    %c0_254 = arith.constant 0 : index
    %487 = vector.load %arg11[%c0_253, %c0_254] : memref<2x32xf32, #tpu.memory_space<vmem>>, vector<2x32xf32>
    %488 = arith.truncf %486 : vector<2x32xf32> to vector<2x32xbf16>
    %cst_255 = arith.constant dense<0.000000e+00> : vector<2x128xf32>
    %489 = tpu.matmul %488, %23, %cst_255 {dimension_numbers = #tpu.dot_dimension_numbers<[1], [0], [0], [1], [0, 0, 1, 1], [], []>} : vector<2x32xbf16>, vector<32x128xbf16>, vector<2x128xf32> -> vector<2x128xf32>
    %490 = arith.addf %485, %489 : vector<2x128xf32>
    %491 = arith.negf %490 : vector<2x128xf32>
    %492 = math.exp %491 : vector<2x128xf32>
    %cst_256 = arith.constant 1.000000e+00 : f32
    %493 = vector.broadcast %cst_256 : f32 to vector<2x128xf32>
    %494 = arith.addf %493, %492 : vector<2x128xf32>
    %495 = arith.divf %493, %494 : vector<2x128xf32>
    %496 = math.tanh %490 : vector<2x128xf32>
    %497 = vector.extract_strided_slice %495 {offsets = [0, 0], sizes = [2, 32], strides = [1, 1]} : vector<2x128xf32> to vector<2x32xf32>
    %498 = vector.extract_strided_slice %495 {offsets = [0, 32], sizes = [2, 32], strides = [1, 1]} : vector<2x128xf32> to vector<2x32xf32>
    %499 = vector.extract_strided_slice %496 {offsets = [0, 64], sizes = [2, 32], strides = [1, 1]} : vector<2x128xf32> to vector<2x32xf32>
    %500 = vector.extract_strided_slice %495 {offsets = [0, 96], sizes = [2, 32], strides = [1, 1]} : vector<2x128xf32> to vector<2x32xf32>
    %501 = arith.mulf %498, %487 : vector<2x32xf32>
    %502 = arith.mulf %497, %499 : vector<2x32xf32>
    %503 = arith.addf %501, %502 : vector<2x32xf32>
    %504 = math.tanh %503 : vector<2x32xf32>
    %505 = arith.mulf %500, %504 : vector<2x32xf32>
    %c0_257 = arith.constant 0 : index
    %c0_258 = arith.constant 0 : index
    %506 = vector.load %arg8[%c0_257, %c0_258] : memref<2x32xf32, #tpu.memory_space<vmem>>, vector<2x32xf32>
    tpu.vector_store %arg8[%c0_257, %c0_258], %482 {strides = array<i32>} : memref<2x32xf32, #tpu.memory_space<vmem>>, vector<2x32xf32>,
    %c0_259 = arith.constant 0 : index
    %c0_260 = arith.constant 0 : index
    %507 = vector.load %arg9[%c0_259, %c0_260] : memref<2x32xf32, #tpu.memory_space<vmem>>, vector<2x32xf32>
    tpu.vector_store %arg9[%c0_259, %c0_260], %480 {strides = array<i32>} : memref<2x32xf32, #tpu.memory_space<vmem>>, vector<2x32xf32>,
    %c0_261 = arith.constant 0 : index
    %c0_262 = arith.constant 0 : index
    %508 = vector.load %arg10[%c0_261, %c0_262] : memref<2x32xf32, #tpu.memory_space<vmem>>, vector<2x32xf32>
    tpu.vector_store %arg10[%c0_261, %c0_262], %505 {strides = array<i32>} : memref<2x32xf32, #tpu.memory_space<vmem>>, vector<2x32xf32>,
    %c0_263 = arith.constant 0 : index
    %c0_264 = arith.constant 0 : index
    %509 = vector.load %arg11[%c0_263, %c0_264] : memref<2x32xf32, #tpu.memory_space<vmem>>, vector<2x32xf32>
    tpu.vector_store %arg11[%c0_263, %c0_264], %503 {strides = array<i32>} : memref<2x32xf32, #tpu.memory_space<vmem>>, vector<2x32xf32>,
    %510 = arith.truncf %482 : vector<2x32xf32> to vector<2x32xbf16>
    %511 = arith.index_cast %c7_i32_239 : i32 to index
    %c0_265 = arith.constant 0 : index
    %c0_266 = arith.constant 0 : index
    %512 = vector.load %arg4[%511, %c0_265, %c0_266] : memref<8x2x64xbf16, #tpu.memory_space<vmem>>, vector<1x2x32xbf16>
    %513 = vector.shape_cast %512 : vector<1x2x32xbf16> to vector<2x32xbf16>
    %514 = vector.shape_cast %510 : vector<2x32xbf16> to vector<1x2x32xbf16>
    tpu.vector_store %arg4[%511, %c0_265, %c0_266], %514 {strides = array<i32>} : memref<8x2x64xbf16, #tpu.memory_space<vmem>>, vector<1x2x32xbf16>,
    %515 = arith.truncf %505 : vector<2x32xf32> to vector<2x32xbf16>
    %516 = arith.index_cast %459 : i32 to index
    %c0_267 = arith.constant 0 : index
    %c32_268 = arith.constant 32 : index
    %517 = vector.load %arg4[%516, %c0_267, %c32_268] : memref<8x2x64xbf16, #tpu.memory_space<vmem>>, vector<1x2x32xbf16>
    %518 = vector.shape_cast %517 : vector<1x2x32xbf16> to vector<2x32xbf16>
    %519 = vector.shape_cast %515 : vector<2x32xbf16> to vector<1x2x32xbf16>
    tpu.vector_store %arg4[%516, %c0_267, %c32_268], %519 {strides = array<i32>} : memref<8x2x64xbf16, #tpu.memory_space<vmem>>, vector<1x2x32xbf16>,
    %c8_i32 = arith.constant 8 : i32
    %c0_269 = arith.constant 0 : index
    %c0_270 = arith.constant 0 : index
    %520 = vector.load %arg8[%c0_269, %c0_270] : memref<2x32xf32, #tpu.memory_space<vmem>>, vector<2x32xf32>
    %c0_271 = arith.constant 0 : index
    %c0_272 = arith.constant 0 : index
    %521 = vector.load %arg5[%c0_271, %c0_272] : memref<2x64xf32, #tpu.memory_space<vmem>>, vector<2x32xf32>
    tpu.vector_store %arg5[%c0_271, %c0_272], %520 {strides = array<i32>} : memref<2x64xf32, #tpu.memory_space<vmem>>, vector<2x32xf32>,
    %c0_273 = arith.constant 0 : index
    %c0_274 = arith.constant 0 : index
    %522 = vector.load %arg10[%c0_273, %c0_274] : memref<2x32xf32, #tpu.memory_space<vmem>>, vector<2x32xf32>
    %c0_275 = arith.constant 0 : index
    %c32_276 = arith.constant 32 : index
    %523 = vector.load %arg5[%c0_275, %c32_276] : memref<2x64xf32, #tpu.memory_space<vmem>>, vector<2x32xf32>
    tpu.vector_store %arg5[%c0_275, %c32_276], %522 {strides = array<i32>} : memref<2x64xf32, #tpu.memory_space<vmem>>, vector<2x32xf32>,
    return
  }
}

module attributes {stable_mosaic.version = 11 : i64} {
  func.func @_bilstm_layer_kernel(%arg0: memref<8x2x64xbf16, #tpu.memory_space<vmem>>, %arg1: memref<2x64x128xbf16, #tpu.memory_space<vmem>>, %arg2: memref<2x32x128xbf16, #tpu.memory_space<vmem>>, %arg3: memref<2x1x128xf32, #tpu.memory_space<vmem>>, %arg4: memref<8x2x64xbf16, #tpu.memory_space<vmem>>, %arg5: memref<2x64xf32, #tpu.memory_space<vmem>>, %arg6: memref<8x2x128xf32, #tpu.memory_space<vmem>>, %arg7: memref<8x2x128xf32, #tpu.memory_space<vmem>>, %arg8: memref<2x32xf32, #tpu.memory_space<vmem>>, %arg9: memref<2x32xf32, #tpu.memory_space<vmem>>, %arg10: memref<2x32xf32, #tpu.memory_space<vmem>>, %arg11: memref<2x32xf32, #tpu.memory_space<vmem>>) attributes {dimension_semantics = [], scalar_prefetch = 0 : i64, scratch_operands = 6 : i64, tpu.core_type = #tpu.core_type<tc>} {
    %c0 = arith.constant 0 : index
    %c0_0 = arith.constant 0 : index
    %c0_1 = arith.constant 0 : index
    %0 = vector.load %arg0[%c0, %c0_0, %c0_1] : memref<8x2x64xbf16, #tpu.memory_space<vmem>>, vector<8x2x64xbf16>
    %1 = vector.shape_cast %0 : vector<8x2x64xbf16> to vector<16x64xbf16>
    %c0_2 = arith.constant 0 : index
    %c0_3 = arith.constant 0 : index
    %c0_4 = arith.constant 0 : index
    %2 = vector.load %arg1[%c0_2, %c0_3, %c0_4] : memref<2x64x128xbf16, #tpu.memory_space<vmem>>, vector<1x64x128xbf16>
    %3 = vector.shape_cast %2 : vector<1x64x128xbf16> to vector<64x128xbf16>
    %cst = arith.constant dense<0.000000e+00> : vector<16x128xf32>
    %4 = tpu.matmul %1, %3, %cst {dimension_numbers = #tpu.dot_dimension_numbers<[1], [0], [0], [1], [0, 0, 1, 1], [], []>} : vector<16x64xbf16>, vector<64x128xbf16>, vector<16x128xf32> -> vector<16x128xf32>
    %c0_5 = arith.constant 0 : index
    %c0_6 = arith.constant 0 : index
    %c0_7 = arith.constant 0 : index
    %5 = vector.load %arg3[%c0_5, %c0_6, %c0_7] : memref<2x1x128xf32, #tpu.memory_space<vmem>>, vector<1x1x128xf32>
    %6 = vector.shape_cast %5 : vector<1x1x128xf32> to vector<1x128xf32>
    %7 = vector.broadcast %6 : vector<1x128xf32> to vector<16x128xf32>
    %8 = arith.addf %4, %7 : vector<16x128xf32>
    %c1 = arith.constant 1 : index
    %c0_8 = arith.constant 0 : index
    %c0_9 = arith.constant 0 : index
    %9 = vector.load %arg1[%c1, %c0_8, %c0_9] : memref<2x64x128xbf16, #tpu.memory_space<vmem>>, vector<1x64x128xbf16>
    %10 = vector.shape_cast %9 : vector<1x64x128xbf16> to vector<64x128xbf16>
    %cst_10 = arith.constant dense<0.000000e+00> : vector<16x128xf32>
    %11 = tpu.matmul %1, %10, %cst_10 {dimension_numbers = #tpu.dot_dimension_numbers<[1], [0], [0], [1], [0, 0, 1, 1], [], []>} : vector<16x64xbf16>, vector<64x128xbf16>, vector<16x128xf32> -> vector<16x128xf32>
    %c1_11 = arith.constant 1 : index
    %c0_12 = arith.constant 0 : index
    %c0_13 = arith.constant 0 : index
    %12 = vector.load %arg3[%c1_11, %c0_12, %c0_13] : memref<2x1x128xf32, #tpu.memory_space<vmem>>, vector<1x1x128xf32>
    %13 = vector.shape_cast %12 : vector<1x1x128xf32> to vector<1x128xf32>
    %14 = vector.broadcast %13 : vector<1x128xf32> to vector<16x128xf32>
    %15 = arith.addf %11, %14 : vector<16x128xf32>
    %16 = vector.shape_cast %8 : vector<16x128xf32> to vector<8x2x128xf32>
    %c0_14 = arith.constant 0 : index
    %c0_15 = arith.constant 0 : index
    %c0_16 = arith.constant 0 : index
    %17 = vector.load %arg6[%c0_14, %c0_15, %c0_16] : memref<8x2x128xf32, #tpu.memory_space<vmem>>, vector<8x2x128xf32>
    tpu.vector_store %arg6[%c0_14, %c0_15, %c0_16], %16 {strides = array<i32>} : memref<8x2x128xf32, #tpu.memory_space<vmem>>, vector<8x2x128xf32>,
    %18 = vector.shape_cast %15 : vector<16x128xf32> to vector<8x2x128xf32>
    %c0_17 = arith.constant 0 : index
    %c0_18 = arith.constant 0 : index
    %c0_19 = arith.constant 0 : index
    %19 = vector.load %arg7[%c0_17, %c0_18, %c0_19] : memref<8x2x128xf32, #tpu.memory_space<vmem>>, vector<8x2x128xf32>
    tpu.vector_store %arg7[%c0_17, %c0_18, %c0_19], %18 {strides = array<i32>} : memref<8x2x128xf32, #tpu.memory_space<vmem>>, vector<8x2x128xf32>,
    %c0_20 = arith.constant 0 : index
    %c0_21 = arith.constant 0 : index
    %c0_22 = arith.constant 0 : index
    %20 = vector.load %arg2[%c0_20, %c0_21, %c0_22] : memref<2x32x128xbf16, #tpu.memory_space<vmem>>, vector<1x32x128xbf16>
    %21 = vector.shape_cast %20 : vector<1x32x128xbf16> to vector<32x128xbf16>
    %c1_23 = arith.constant 1 : index
    %c0_24 = arith.constant 0 : index
    %c0_25 = arith.constant 0 : index
    %22 = vector.load %arg2[%c1_23, %c0_24, %c0_25] : memref<2x32x128xbf16, #tpu.memory_space<vmem>>, vector<1x32x128xbf16>
    %23 = vector.shape_cast %22 : vector<1x32x128xbf16> to vector<32x128xbf16>
    %cst_26 = arith.constant 0.000000e+00 : f32
    %24 = vector.broadcast %cst_26 : f32 to vector<2x32xf32>
    %c0_27 = arith.constant 0 : index
    %c0_28 = arith.constant 0 : index
    %25 = vector.load %arg8[%c0_27, %c0_28] : memref<2x32xf32, #tpu.memory_space<vmem>>, vector<2x32xf32>
    tpu.vector_store %arg8[%c0_27, %c0_28], %24 {strides = array<i32>} : memref<2x32xf32, #tpu.memory_space<vmem>>, vector<2x32xf32>,
    %cst_29 = arith.constant 0.000000e+00 : f32
    %26 = vector.broadcast %cst_29 : f32 to vector<2x32xf32>
    %c0_30 = arith.constant 0 : index
    %c0_31 = arith.constant 0 : index
    %27 = vector.load %arg9[%c0_30, %c0_31] : memref<2x32xf32, #tpu.memory_space<vmem>>, vector<2x32xf32>
    tpu.vector_store %arg9[%c0_30, %c0_31], %26 {strides = array<i32>} : memref<2x32xf32, #tpu.memory_space<vmem>>, vector<2x32xf32>,
    %cst_32 = arith.constant 0.000000e+00 : f32
    %28 = vector.broadcast %cst_32 : f32 to vector<2x32xf32>
    %c0_33 = arith.constant 0 : index
    %c0_34 = arith.constant 0 : index
    %29 = vector.load %arg10[%c0_33, %c0_34] : memref<2x32xf32, #tpu.memory_space<vmem>>, vector<2x32xf32>
    tpu.vector_store %arg10[%c0_33, %c0_34], %28 {strides = array<i32>} : memref<2x32xf32, #tpu.memory_space<vmem>>, vector<2x32xf32>,
    %cst_35 = arith.constant 0.000000e+00 : f32
    %30 = vector.broadcast %cst_35 : f32 to vector<2x32xf32>
    %c0_36 = arith.constant 0 : index
    %c0_37 = arith.constant 0 : index
    %31 = vector.load %arg11[%c0_36, %c0_37] : memref<2x32xf32, #tpu.memory_space<vmem>>, vector<2x32xf32>
    tpu.vector_store %arg11[%c0_36, %c0_37], %30 {strides = array<i32>} : memref<2x32xf32, #tpu.memory_space<vmem>>, vector<2x32xf32>,
    %c0_i32 = arith.constant 0 : i32
    %c7_i32 = arith.constant 7 : i32
    %32 = arith.subi %c7_i32, %c0_i32 : i32
    %33 = arith.index_cast %c0_i32 : i32 to index
    %c0_38 = arith.constant 0 : index
    %c0_39 = arith.constant 0 : index
    %34 = vector.load %arg6[%33, %c0_38, %c0_39] : memref<8x2x128xf32, #tpu.memory_space<vmem>>, vector<1x2x128xf32>
    %35 = vector.shape_cast %34 : vector<1x2x128xf32> to vector<2x128xf32>
    %c0_40 = arith.constant 0 : index
    %c0_41 = arith.constant 0 : index
    %36 = vector.load %arg8[%c0_40, %c0_41] : memref<2x32xf32, #tpu.memory_space<vmem>>, vector<2x32xf32>
    %c0_42 = arith.constant 0 : index
    %c0_43 = arith.constant 0 : index
    %37 = vector.load %arg9[%c0_42, %c0_43] : memref<2x32xf32, #tpu.memory_space<vmem>>, vector<2x32xf32>
    %38 = arith.truncf %36 : vector<2x32xf32> to vector<2x32xbf16>
    %cst_44 = arith.constant dense<0.000000e+00> : vector<2x128xf32>
    %39 = tpu.matmul %38, %21, %cst_44 {dimension_numbers = #tpu.dot_dimension_numbers<[1], [0], [0], [1], [0, 0, 1, 1], [], []>} : vector<2x32xbf16>, vector<32x128xbf16>, vector<2x128xf32> -> vector<2x128xf32>
    %40 = arith.addf %35, %39 : vector<2x128xf32>
    %41 = arith.negf %40 : vector<2x128xf32>
    %42 = math.exp %41 : vector<2x128xf32>
    %cst_45 = arith.constant 1.000000e+00 : f32
    %43 = vector.broadcast %cst_45 : f32 to vector<2x128xf32>
    %44 = arith.addf %43, %42 : vector<2x128xf32>
    %45 = arith.divf %43, %44 : vector<2x128xf32>
    %46 = math.tanh %40 : vector<2x128xf32>
    %47 = vector.extract_strided_slice %45 {offsets = [0, 0], sizes = [2, 32], strides = [1, 1]} : vector<2x128xf32> to vector<2x32xf32>
    %48 = vector.extract_strided_slice %45 {offsets = [0, 32], sizes = [2, 32], strides = [1, 1]} : vector<2x128xf32> to vector<2x32xf32>
    %49 = vector.extract_strided_slice %46 {offsets = [0, 64], sizes = [2, 32], strides = [1, 1]} : vector<2x128xf32> to vector<2x32xf32>
    %50 = vector.extract_strided_slice %45 {offsets = [0, 96], sizes = [2, 32], strides = [1, 1]} : vector<2x128xf32> to vector<2x32xf32>
    %51 = arith.mulf %48, %37 : vector<2x32xf32>
    %52 = arith.mulf %47, %49 : vector<2x32xf32>
    %53 = arith.addf %51, %52 : vector<2x32xf32>
    %54 = math.tanh %53 : vector<2x32xf32>
    %55 = arith.mulf %50, %54 : vector<2x32xf32>
    %56 = arith.index_cast %32 : i32 to index
    %c0_46 = arith.constant 0 : index
    %c0_47 = arith.constant 0 : index
    %57 = vector.load %arg7[%56, %c0_46, %c0_47] : memref<8x2x128xf32, #tpu.memory_space<vmem>>, vector<1x2x128xf32>
    %58 = vector.shape_cast %57 : vector<1x2x128xf32> to vector<2x128xf32>
    %c0_48 = arith.constant 0 : index
    %c0_49 = arith.constant 0 : index
    %59 = vector.load %arg10[%c0_48, %c0_49] : memref<2x32xf32, #tpu.memory_space<vmem>>, vector<2x32xf32>
    %c0_50 = arith.constant 0 : index
    %c0_51 = arith.constant 0 : index
    %60 = vector.load %arg11[%c0_50, %c0_51] : memref<2x32xf32, #tpu.memory_space<vmem>>, vector<2x32xf32>
    %61 = arith.truncf %59 : vector<2x32xf32> to vector<2x32xbf16>
    %cst_52 = arith.constant dense<0.000000e+00> : vector<2x128xf32>
    %62 = tpu.matmul %61, %23, %cst_52 {dimension_numbers = #tpu.dot_dimension_numbers<[1], [0], [0], [1], [0, 0, 1, 1], [], []>} : vector<2x32xbf16>, vector<32x128xbf16>, vector<2x128xf32> -> vector<2x128xf32>
    %63 = arith.addf %58, %62 : vector<2x128xf32>
    %64 = arith.negf %63 : vector<2x128xf32>
    %65 = math.exp %64 : vector<2x128xf32>
    %cst_53 = arith.constant 1.000000e+00 : f32
    %66 = vector.broadcast %cst_53 : f32 to vector<2x128xf32>
    %67 = arith.addf %66, %65 : vector<2x128xf32>
    %68 = arith.divf %66, %67 : vector<2x128xf32>
    %69 = math.tanh %63 : vector<2x128xf32>
    %70 = vector.extract_strided_slice %68 {offsets = [0, 0], sizes = [2, 32], strides = [1, 1]} : vector<2x128xf32> to vector<2x32xf32>
    %71 = vector.extract_strided_slice %68 {offsets = [0, 32], sizes = [2, 32], strides = [1, 1]} : vector<2x128xf32> to vector<2x32xf32>
    %72 = vector.extract_strided_slice %69 {offsets = [0, 64], sizes = [2, 32], strides = [1, 1]} : vector<2x128xf32> to vector<2x32xf32>
    %73 = vector.extract_strided_slice %68 {offsets = [0, 96], sizes = [2, 32], strides = [1, 1]} : vector<2x128xf32> to vector<2x32xf32>
    %74 = arith.mulf %71, %60 : vector<2x32xf32>
    %75 = arith.mulf %70, %72 : vector<2x32xf32>
    %76 = arith.addf %74, %75 : vector<2x32xf32>
    %77 = math.tanh %76 : vector<2x32xf32>
    %78 = arith.mulf %73, %77 : vector<2x32xf32>
    %c0_54 = arith.constant 0 : index
    %c0_55 = arith.constant 0 : index
    %79 = vector.load %arg8[%c0_54, %c0_55] : memref<2x32xf32, #tpu.memory_space<vmem>>, vector<2x32xf32>
    tpu.vector_store %arg8[%c0_54, %c0_55], %55 {strides = array<i32>} : memref<2x32xf32, #tpu.memory_space<vmem>>, vector<2x32xf32>,
    %c0_56 = arith.constant 0 : index
    %c0_57 = arith.constant 0 : index
    %80 = vector.load %arg9[%c0_56, %c0_57] : memref<2x32xf32, #tpu.memory_space<vmem>>, vector<2x32xf32>
    tpu.vector_store %arg9[%c0_56, %c0_57], %53 {strides = array<i32>} : memref<2x32xf32, #tpu.memory_space<vmem>>, vector<2x32xf32>,
    %c0_58 = arith.constant 0 : index
    %c0_59 = arith.constant 0 : index
    %81 = vector.load %arg10[%c0_58, %c0_59] : memref<2x32xf32, #tpu.memory_space<vmem>>, vector<2x32xf32>
    tpu.vector_store %arg10[%c0_58, %c0_59], %78 {strides = array<i32>} : memref<2x32xf32, #tpu.memory_space<vmem>>, vector<2x32xf32>,
    %c0_60 = arith.constant 0 : index
    %c0_61 = arith.constant 0 : index
    %82 = vector.load %arg11[%c0_60, %c0_61] : memref<2x32xf32, #tpu.memory_space<vmem>>, vector<2x32xf32>
    tpu.vector_store %arg11[%c0_60, %c0_61], %76 {strides = array<i32>} : memref<2x32xf32, #tpu.memory_space<vmem>>, vector<2x32xf32>,
    %83 = arith.truncf %55 : vector<2x32xf32> to vector<2x32xbf16>
    %84 = arith.index_cast %c0_i32 : i32 to index
    %c0_62 = arith.constant 0 : index
    %c0_63 = arith.constant 0 : index
    %85 = vector.load %arg4[%84, %c0_62, %c0_63] : memref<8x2x64xbf16, #tpu.memory_space<vmem>>, vector<1x2x32xbf16>
    %86 = vector.shape_cast %85 : vector<1x2x32xbf16> to vector<2x32xbf16>
    %87 = vector.shape_cast %83 : vector<2x32xbf16> to vector<1x2x32xbf16>
    tpu.vector_store %arg4[%84, %c0_62, %c0_63], %87 {strides = array<i32>} : memref<8x2x64xbf16, #tpu.memory_space<vmem>>, vector<1x2x32xbf16>,
    %88 = arith.truncf %78 : vector<2x32xf32> to vector<2x32xbf16>
    %89 = arith.index_cast %32 : i32 to index
    %c0_64 = arith.constant 0 : index
    %c32 = arith.constant 32 : index
    %90 = vector.load %arg4[%89, %c0_64, %c32] : memref<8x2x64xbf16, #tpu.memory_space<vmem>>, vector<1x2x32xbf16>
    %91 = vector.shape_cast %90 : vector<1x2x32xbf16> to vector<2x32xbf16>
    %92 = vector.shape_cast %88 : vector<2x32xbf16> to vector<1x2x32xbf16>
    tpu.vector_store %arg4[%89, %c0_64, %c32], %92 {strides = array<i32>} : memref<8x2x64xbf16, #tpu.memory_space<vmem>>, vector<1x2x32xbf16>,
    %c1_i32 = arith.constant 1 : i32
    %c7_i32_65 = arith.constant 7 : i32
    %93 = arith.subi %c7_i32_65, %c1_i32 : i32
    %94 = arith.index_cast %c1_i32 : i32 to index
    %c0_66 = arith.constant 0 : index
    %c0_67 = arith.constant 0 : index
    %95 = vector.load %arg6[%94, %c0_66, %c0_67] : memref<8x2x128xf32, #tpu.memory_space<vmem>>, vector<1x2x128xf32>
    %96 = vector.shape_cast %95 : vector<1x2x128xf32> to vector<2x128xf32>
    %c0_68 = arith.constant 0 : index
    %c0_69 = arith.constant 0 : index
    %97 = vector.load %arg8[%c0_68, %c0_69] : memref<2x32xf32, #tpu.memory_space<vmem>>, vector<2x32xf32>
    %c0_70 = arith.constant 0 : index
    %c0_71 = arith.constant 0 : index
    %98 = vector.load %arg9[%c0_70, %c0_71] : memref<2x32xf32, #tpu.memory_space<vmem>>, vector<2x32xf32>
    %99 = arith.truncf %97 : vector<2x32xf32> to vector<2x32xbf16>
    %cst_72 = arith.constant dense<0.000000e+00> : vector<2x128xf32>
    %100 = tpu.matmul %99, %21, %cst_72 {dimension_numbers = #tpu.dot_dimension_numbers<[1], [0], [0], [1], [0, 0, 1, 1], [], []>} : vector<2x32xbf16>, vector<32x128xbf16>, vector<2x128xf32> -> vector<2x128xf32>
    %101 = arith.addf %96, %100 : vector<2x128xf32>
    %102 = arith.negf %101 : vector<2x128xf32>
    %103 = math.exp %102 : vector<2x128xf32>
    %cst_73 = arith.constant 1.000000e+00 : f32
    %104 = vector.broadcast %cst_73 : f32 to vector<2x128xf32>
    %105 = arith.addf %104, %103 : vector<2x128xf32>
    %106 = arith.divf %104, %105 : vector<2x128xf32>
    %107 = math.tanh %101 : vector<2x128xf32>
    %108 = vector.extract_strided_slice %106 {offsets = [0, 0], sizes = [2, 32], strides = [1, 1]} : vector<2x128xf32> to vector<2x32xf32>
    %109 = vector.extract_strided_slice %106 {offsets = [0, 32], sizes = [2, 32], strides = [1, 1]} : vector<2x128xf32> to vector<2x32xf32>
    %110 = vector.extract_strided_slice %107 {offsets = [0, 64], sizes = [2, 32], strides = [1, 1]} : vector<2x128xf32> to vector<2x32xf32>
    %111 = vector.extract_strided_slice %106 {offsets = [0, 96], sizes = [2, 32], strides = [1, 1]} : vector<2x128xf32> to vector<2x32xf32>
    %112 = arith.mulf %109, %98 : vector<2x32xf32>
    %113 = arith.mulf %108, %110 : vector<2x32xf32>
    %114 = arith.addf %112, %113 : vector<2x32xf32>
    %115 = math.tanh %114 : vector<2x32xf32>
    %116 = arith.mulf %111, %115 : vector<2x32xf32>
    %117 = arith.index_cast %93 : i32 to index
    %c0_74 = arith.constant 0 : index
    %c0_75 = arith.constant 0 : index
    %118 = vector.load %arg7[%117, %c0_74, %c0_75] : memref<8x2x128xf32, #tpu.memory_space<vmem>>, vector<1x2x128xf32>
    %119 = vector.shape_cast %118 : vector<1x2x128xf32> to vector<2x128xf32>
    %c0_76 = arith.constant 0 : index
    %c0_77 = arith.constant 0 : index
    %120 = vector.load %arg10[%c0_76, %c0_77] : memref<2x32xf32, #tpu.memory_space<vmem>>, vector<2x32xf32>
    %c0_78 = arith.constant 0 : index
    %c0_79 = arith.constant 0 : index
    %121 = vector.load %arg11[%c0_78, %c0_79] : memref<2x32xf32, #tpu.memory_space<vmem>>, vector<2x32xf32>
    %122 = arith.truncf %120 : vector<2x32xf32> to vector<2x32xbf16>
    %cst_80 = arith.constant dense<0.000000e+00> : vector<2x128xf32>
    %123 = tpu.matmul %122, %23, %cst_80 {dimension_numbers = #tpu.dot_dimension_numbers<[1], [0], [0], [1], [0, 0, 1, 1], [], []>} : vector<2x32xbf16>, vector<32x128xbf16>, vector<2x128xf32> -> vector<2x128xf32>
    %124 = arith.addf %119, %123 : vector<2x128xf32>
    %125 = arith.negf %124 : vector<2x128xf32>
    %126 = math.exp %125 : vector<2x128xf32>
    %cst_81 = arith.constant 1.000000e+00 : f32
    %127 = vector.broadcast %cst_81 : f32 to vector<2x128xf32>
    %128 = arith.addf %127, %126 : vector<2x128xf32>
    %129 = arith.divf %127, %128 : vector<2x128xf32>
    %130 = math.tanh %124 : vector<2x128xf32>
    %131 = vector.extract_strided_slice %129 {offsets = [0, 0], sizes = [2, 32], strides = [1, 1]} : vector<2x128xf32> to vector<2x32xf32>
    %132 = vector.extract_strided_slice %129 {offsets = [0, 32], sizes = [2, 32], strides = [1, 1]} : vector<2x128xf32> to vector<2x32xf32>
    %133 = vector.extract_strided_slice %130 {offsets = [0, 64], sizes = [2, 32], strides = [1, 1]} : vector<2x128xf32> to vector<2x32xf32>
    %134 = vector.extract_strided_slice %129 {offsets = [0, 96], sizes = [2, 32], strides = [1, 1]} : vector<2x128xf32> to vector<2x32xf32>
    %135 = arith.mulf %132, %121 : vector<2x32xf32>
    %136 = arith.mulf %131, %133 : vector<2x32xf32>
    %137 = arith.addf %135, %136 : vector<2x32xf32>
    %138 = math.tanh %137 : vector<2x32xf32>
    %139 = arith.mulf %134, %138 : vector<2x32xf32>
    %c0_82 = arith.constant 0 : index
    %c0_83 = arith.constant 0 : index
    %140 = vector.load %arg8[%c0_82, %c0_83] : memref<2x32xf32, #tpu.memory_space<vmem>>, vector<2x32xf32>
    tpu.vector_store %arg8[%c0_82, %c0_83], %116 {strides = array<i32>} : memref<2x32xf32, #tpu.memory_space<vmem>>, vector<2x32xf32>,
    %c0_84 = arith.constant 0 : index
    %c0_85 = arith.constant 0 : index
    %141 = vector.load %arg9[%c0_84, %c0_85] : memref<2x32xf32, #tpu.memory_space<vmem>>, vector<2x32xf32>
    tpu.vector_store %arg9[%c0_84, %c0_85], %114 {strides = array<i32>} : memref<2x32xf32, #tpu.memory_space<vmem>>, vector<2x32xf32>,
    %c0_86 = arith.constant 0 : index
    %c0_87 = arith.constant 0 : index
    %142 = vector.load %arg10[%c0_86, %c0_87] : memref<2x32xf32, #tpu.memory_space<vmem>>, vector<2x32xf32>
    tpu.vector_store %arg10[%c0_86, %c0_87], %139 {strides = array<i32>} : memref<2x32xf32, #tpu.memory_space<vmem>>, vector<2x32xf32>,
    %c0_88 = arith.constant 0 : index
    %c0_89 = arith.constant 0 : index
    %143 = vector.load %arg11[%c0_88, %c0_89] : memref<2x32xf32, #tpu.memory_space<vmem>>, vector<2x32xf32>
    tpu.vector_store %arg11[%c0_88, %c0_89], %137 {strides = array<i32>} : memref<2x32xf32, #tpu.memory_space<vmem>>, vector<2x32xf32>,
    %144 = arith.truncf %116 : vector<2x32xf32> to vector<2x32xbf16>
    %145 = arith.index_cast %c1_i32 : i32 to index
    %c0_90 = arith.constant 0 : index
    %c0_91 = arith.constant 0 : index
    %146 = vector.load %arg4[%145, %c0_90, %c0_91] : memref<8x2x64xbf16, #tpu.memory_space<vmem>>, vector<1x2x32xbf16>
    %147 = vector.shape_cast %146 : vector<1x2x32xbf16> to vector<2x32xbf16>
    %148 = vector.shape_cast %144 : vector<2x32xbf16> to vector<1x2x32xbf16>
    tpu.vector_store %arg4[%145, %c0_90, %c0_91], %148 {strides = array<i32>} : memref<8x2x64xbf16, #tpu.memory_space<vmem>>, vector<1x2x32xbf16>,
    %149 = arith.truncf %139 : vector<2x32xf32> to vector<2x32xbf16>
    %150 = arith.index_cast %93 : i32 to index
    %c0_92 = arith.constant 0 : index
    %c32_93 = arith.constant 32 : index
    %151 = vector.load %arg4[%150, %c0_92, %c32_93] : memref<8x2x64xbf16, #tpu.memory_space<vmem>>, vector<1x2x32xbf16>
    %152 = vector.shape_cast %151 : vector<1x2x32xbf16> to vector<2x32xbf16>
    %153 = vector.shape_cast %149 : vector<2x32xbf16> to vector<1x2x32xbf16>
    tpu.vector_store %arg4[%150, %c0_92, %c32_93], %153 {strides = array<i32>} : memref<8x2x64xbf16, #tpu.memory_space<vmem>>, vector<1x2x32xbf16>,
    %c2_i32 = arith.constant 2 : i32
    %c7_i32_94 = arith.constant 7 : i32
    %154 = arith.subi %c7_i32_94, %c2_i32 : i32
    %155 = arith.index_cast %c2_i32 : i32 to index
    %c0_95 = arith.constant 0 : index
    %c0_96 = arith.constant 0 : index
    %156 = vector.load %arg6[%155, %c0_95, %c0_96] : memref<8x2x128xf32, #tpu.memory_space<vmem>>, vector<1x2x128xf32>
    %157 = vector.shape_cast %156 : vector<1x2x128xf32> to vector<2x128xf32>
    %c0_97 = arith.constant 0 : index
    %c0_98 = arith.constant 0 : index
    %158 = vector.load %arg8[%c0_97, %c0_98] : memref<2x32xf32, #tpu.memory_space<vmem>>, vector<2x32xf32>
    %c0_99 = arith.constant 0 : index
    %c0_100 = arith.constant 0 : index
    %159 = vector.load %arg9[%c0_99, %c0_100] : memref<2x32xf32, #tpu.memory_space<vmem>>, vector<2x32xf32>
    %160 = arith.truncf %158 : vector<2x32xf32> to vector<2x32xbf16>
    %cst_101 = arith.constant dense<0.000000e+00> : vector<2x128xf32>
    %161 = tpu.matmul %160, %21, %cst_101 {dimension_numbers = #tpu.dot_dimension_numbers<[1], [0], [0], [1], [0, 0, 1, 1], [], []>} : vector<2x32xbf16>, vector<32x128xbf16>, vector<2x128xf32> -> vector<2x128xf32>
    %162 = arith.addf %157, %161 : vector<2x128xf32>
    %163 = arith.negf %162 : vector<2x128xf32>
    %164 = math.exp %163 : vector<2x128xf32>
    %cst_102 = arith.constant 1.000000e+00 : f32
    %165 = vector.broadcast %cst_102 : f32 to vector<2x128xf32>
    %166 = arith.addf %165, %164 : vector<2x128xf32>
    %167 = arith.divf %165, %166 : vector<2x128xf32>
    %168 = math.tanh %162 : vector<2x128xf32>
    %169 = vector.extract_strided_slice %167 {offsets = [0, 0], sizes = [2, 32], strides = [1, 1]} : vector<2x128xf32> to vector<2x32xf32>
    %170 = vector.extract_strided_slice %167 {offsets = [0, 32], sizes = [2, 32], strides = [1, 1]} : vector<2x128xf32> to vector<2x32xf32>
    %171 = vector.extract_strided_slice %168 {offsets = [0, 64], sizes = [2, 32], strides = [1, 1]} : vector<2x128xf32> to vector<2x32xf32>
    %172 = vector.extract_strided_slice %167 {offsets = [0, 96], sizes = [2, 32], strides = [1, 1]} : vector<2x128xf32> to vector<2x32xf32>
    %173 = arith.mulf %170, %159 : vector<2x32xf32>
    %174 = arith.mulf %169, %171 : vector<2x32xf32>
    %175 = arith.addf %173, %174 : vector<2x32xf32>
    %176 = math.tanh %175 : vector<2x32xf32>
    %177 = arith.mulf %172, %176 : vector<2x32xf32>
    %178 = arith.index_cast %154 : i32 to index
    %c0_103 = arith.constant 0 : index
    %c0_104 = arith.constant 0 : index
    %179 = vector.load %arg7[%178, %c0_103, %c0_104] : memref<8x2x128xf32, #tpu.memory_space<vmem>>, vector<1x2x128xf32>
    %180 = vector.shape_cast %179 : vector<1x2x128xf32> to vector<2x128xf32>
    %c0_105 = arith.constant 0 : index
    %c0_106 = arith.constant 0 : index
    %181 = vector.load %arg10[%c0_105, %c0_106] : memref<2x32xf32, #tpu.memory_space<vmem>>, vector<2x32xf32>
    %c0_107 = arith.constant 0 : index
    %c0_108 = arith.constant 0 : index
    %182 = vector.load %arg11[%c0_107, %c0_108] : memref<2x32xf32, #tpu.memory_space<vmem>>, vector<2x32xf32>
    %183 = arith.truncf %181 : vector<2x32xf32> to vector<2x32xbf16>
    %cst_109 = arith.constant dense<0.000000e+00> : vector<2x128xf32>
    %184 = tpu.matmul %183, %23, %cst_109 {dimension_numbers = #tpu.dot_dimension_numbers<[1], [0], [0], [1], [0, 0, 1, 1], [], []>} : vector<2x32xbf16>, vector<32x128xbf16>, vector<2x128xf32> -> vector<2x128xf32>
    %185 = arith.addf %180, %184 : vector<2x128xf32>
    %186 = arith.negf %185 : vector<2x128xf32>
    %187 = math.exp %186 : vector<2x128xf32>
    %cst_110 = arith.constant 1.000000e+00 : f32
    %188 = vector.broadcast %cst_110 : f32 to vector<2x128xf32>
    %189 = arith.addf %188, %187 : vector<2x128xf32>
    %190 = arith.divf %188, %189 : vector<2x128xf32>
    %191 = math.tanh %185 : vector<2x128xf32>
    %192 = vector.extract_strided_slice %190 {offsets = [0, 0], sizes = [2, 32], strides = [1, 1]} : vector<2x128xf32> to vector<2x32xf32>
    %193 = vector.extract_strided_slice %190 {offsets = [0, 32], sizes = [2, 32], strides = [1, 1]} : vector<2x128xf32> to vector<2x32xf32>
    %194 = vector.extract_strided_slice %191 {offsets = [0, 64], sizes = [2, 32], strides = [1, 1]} : vector<2x128xf32> to vector<2x32xf32>
    %195 = vector.extract_strided_slice %190 {offsets = [0, 96], sizes = [2, 32], strides = [1, 1]} : vector<2x128xf32> to vector<2x32xf32>
    %196 = arith.mulf %193, %182 : vector<2x32xf32>
    %197 = arith.mulf %192, %194 : vector<2x32xf32>
    %198 = arith.addf %196, %197 : vector<2x32xf32>
    %199 = math.tanh %198 : vector<2x32xf32>
    %200 = arith.mulf %195, %199 : vector<2x32xf32>
    %c0_111 = arith.constant 0 : index
    %c0_112 = arith.constant 0 : index
    %201 = vector.load %arg8[%c0_111, %c0_112] : memref<2x32xf32, #tpu.memory_space<vmem>>, vector<2x32xf32>
    tpu.vector_store %arg8[%c0_111, %c0_112], %177 {strides = array<i32>} : memref<2x32xf32, #tpu.memory_space<vmem>>, vector<2x32xf32>,
    %c0_113 = arith.constant 0 : index
    %c0_114 = arith.constant 0 : index
    %202 = vector.load %arg9[%c0_113, %c0_114] : memref<2x32xf32, #tpu.memory_space<vmem>>, vector<2x32xf32>
    tpu.vector_store %arg9[%c0_113, %c0_114], %175 {strides = array<i32>} : memref<2x32xf32, #tpu.memory_space<vmem>>, vector<2x32xf32>,
    %c0_115 = arith.constant 0 : index
    %c0_116 = arith.constant 0 : index
    %203 = vector.load %arg10[%c0_115, %c0_116] : memref<2x32xf32, #tpu.memory_space<vmem>>, vector<2x32xf32>
    tpu.vector_store %arg10[%c0_115, %c0_116], %200 {strides = array<i32>} : memref<2x32xf32, #tpu.memory_space<vmem>>, vector<2x32xf32>,
    %c0_117 = arith.constant 0 : index
    %c0_118 = arith.constant 0 : index
    %204 = vector.load %arg11[%c0_117, %c0_118] : memref<2x32xf32, #tpu.memory_space<vmem>>, vector<2x32xf32>
    tpu.vector_store %arg11[%c0_117, %c0_118], %198 {strides = array<i32>} : memref<2x32xf32, #tpu.memory_space<vmem>>, vector<2x32xf32>,
    %205 = arith.truncf %177 : vector<2x32xf32> to vector<2x32xbf16>
    %206 = arith.index_cast %c2_i32 : i32 to index
    %c0_119 = arith.constant 0 : index
    %c0_120 = arith.constant 0 : index
    %207 = vector.load %arg4[%206, %c0_119, %c0_120] : memref<8x2x64xbf16, #tpu.memory_space<vmem>>, vector<1x2x32xbf16>
    %208 = vector.shape_cast %207 : vector<1x2x32xbf16> to vector<2x32xbf16>
    %209 = vector.shape_cast %205 : vector<2x32xbf16> to vector<1x2x32xbf16>
    tpu.vector_store %arg4[%206, %c0_119, %c0_120], %209 {strides = array<i32>} : memref<8x2x64xbf16, #tpu.memory_space<vmem>>, vector<1x2x32xbf16>,
    %210 = arith.truncf %200 : vector<2x32xf32> to vector<2x32xbf16>
    %211 = arith.index_cast %154 : i32 to index
    %c0_121 = arith.constant 0 : index
    %c32_122 = arith.constant 32 : index
    %212 = vector.load %arg4[%211, %c0_121, %c32_122] : memref<8x2x64xbf16, #tpu.memory_space<vmem>>, vector<1x2x32xbf16>
    %213 = vector.shape_cast %212 : vector<1x2x32xbf16> to vector<2x32xbf16>
    %214 = vector.shape_cast %210 : vector<2x32xbf16> to vector<1x2x32xbf16>
    tpu.vector_store %arg4[%211, %c0_121, %c32_122], %214 {strides = array<i32>} : memref<8x2x64xbf16, #tpu.memory_space<vmem>>, vector<1x2x32xbf16>,
    %c3_i32 = arith.constant 3 : i32
    %c7_i32_123 = arith.constant 7 : i32
    %215 = arith.subi %c7_i32_123, %c3_i32 : i32
    %216 = arith.index_cast %c3_i32 : i32 to index
    %c0_124 = arith.constant 0 : index
    %c0_125 = arith.constant 0 : index
    %217 = vector.load %arg6[%216, %c0_124, %c0_125] : memref<8x2x128xf32, #tpu.memory_space<vmem>>, vector<1x2x128xf32>
    %218 = vector.shape_cast %217 : vector<1x2x128xf32> to vector<2x128xf32>
    %c0_126 = arith.constant 0 : index
    %c0_127 = arith.constant 0 : index
    %219 = vector.load %arg8[%c0_126, %c0_127] : memref<2x32xf32, #tpu.memory_space<vmem>>, vector<2x32xf32>
    %c0_128 = arith.constant 0 : index
    %c0_129 = arith.constant 0 : index
    %220 = vector.load %arg9[%c0_128, %c0_129] : memref<2x32xf32, #tpu.memory_space<vmem>>, vector<2x32xf32>
    %221 = arith.truncf %219 : vector<2x32xf32> to vector<2x32xbf16>
    %cst_130 = arith.constant dense<0.000000e+00> : vector<2x128xf32>
    %222 = tpu.matmul %221, %21, %cst_130 {dimension_numbers = #tpu.dot_dimension_numbers<[1], [0], [0], [1], [0, 0, 1, 1], [], []>} : vector<2x32xbf16>, vector<32x128xbf16>, vector<2x128xf32> -> vector<2x128xf32>
    %223 = arith.addf %218, %222 : vector<2x128xf32>
    %224 = arith.negf %223 : vector<2x128xf32>
    %225 = math.exp %224 : vector<2x128xf32>
    %cst_131 = arith.constant 1.000000e+00 : f32
    %226 = vector.broadcast %cst_131 : f32 to vector<2x128xf32>
    %227 = arith.addf %226, %225 : vector<2x128xf32>
    %228 = arith.divf %226, %227 : vector<2x128xf32>
    %229 = math.tanh %223 : vector<2x128xf32>
    %230 = vector.extract_strided_slice %228 {offsets = [0, 0], sizes = [2, 32], strides = [1, 1]} : vector<2x128xf32> to vector<2x32xf32>
    %231 = vector.extract_strided_slice %228 {offsets = [0, 32], sizes = [2, 32], strides = [1, 1]} : vector<2x128xf32> to vector<2x32xf32>
    %232 = vector.extract_strided_slice %229 {offsets = [0, 64], sizes = [2, 32], strides = [1, 1]} : vector<2x128xf32> to vector<2x32xf32>
    %233 = vector.extract_strided_slice %228 {offsets = [0, 96], sizes = [2, 32], strides = [1, 1]} : vector<2x128xf32> to vector<2x32xf32>
    %234 = arith.mulf %231, %220 : vector<2x32xf32>
    %235 = arith.mulf %230, %232 : vector<2x32xf32>
    %236 = arith.addf %234, %235 : vector<2x32xf32>
    %237 = math.tanh %236 : vector<2x32xf32>
    %238 = arith.mulf %233, %237 : vector<2x32xf32>
    %239 = arith.index_cast %215 : i32 to index
    %c0_132 = arith.constant 0 : index
    %c0_133 = arith.constant 0 : index
    %240 = vector.load %arg7[%239, %c0_132, %c0_133] : memref<8x2x128xf32, #tpu.memory_space<vmem>>, vector<1x2x128xf32>
    %241 = vector.shape_cast %240 : vector<1x2x128xf32> to vector<2x128xf32>
    %c0_134 = arith.constant 0 : index
    %c0_135 = arith.constant 0 : index
    %242 = vector.load %arg10[%c0_134, %c0_135] : memref<2x32xf32, #tpu.memory_space<vmem>>, vector<2x32xf32>
    %c0_136 = arith.constant 0 : index
    %c0_137 = arith.constant 0 : index
    %243 = vector.load %arg11[%c0_136, %c0_137] : memref<2x32xf32, #tpu.memory_space<vmem>>, vector<2x32xf32>
    %244 = arith.truncf %242 : vector<2x32xf32> to vector<2x32xbf16>
    %cst_138 = arith.constant dense<0.000000e+00> : vector<2x128xf32>
    %245 = tpu.matmul %244, %23, %cst_138 {dimension_numbers = #tpu.dot_dimension_numbers<[1], [0], [0], [1], [0, 0, 1, 1], [], []>} : vector<2x32xbf16>, vector<32x128xbf16>, vector<2x128xf32> -> vector<2x128xf32>
    %246 = arith.addf %241, %245 : vector<2x128xf32>
    %247 = arith.negf %246 : vector<2x128xf32>
    %248 = math.exp %247 : vector<2x128xf32>
    %cst_139 = arith.constant 1.000000e+00 : f32
    %249 = vector.broadcast %cst_139 : f32 to vector<2x128xf32>
    %250 = arith.addf %249, %248 : vector<2x128xf32>
    %251 = arith.divf %249, %250 : vector<2x128xf32>
    %252 = math.tanh %246 : vector<2x128xf32>
    %253 = vector.extract_strided_slice %251 {offsets = [0, 0], sizes = [2, 32], strides = [1, 1]} : vector<2x128xf32> to vector<2x32xf32>
    %254 = vector.extract_strided_slice %251 {offsets = [0, 32], sizes = [2, 32], strides = [1, 1]} : vector<2x128xf32> to vector<2x32xf32>
    %255 = vector.extract_strided_slice %252 {offsets = [0, 64], sizes = [2, 32], strides = [1, 1]} : vector<2x128xf32> to vector<2x32xf32>
    %256 = vector.extract_strided_slice %251 {offsets = [0, 96], sizes = [2, 32], strides = [1, 1]} : vector<2x128xf32> to vector<2x32xf32>
    %257 = arith.mulf %254, %243 : vector<2x32xf32>
    %258 = arith.mulf %253, %255 : vector<2x32xf32>
    %259 = arith.addf %257, %258 : vector<2x32xf32>
    %260 = math.tanh %259 : vector<2x32xf32>
    %261 = arith.mulf %256, %260 : vector<2x32xf32>
    %c0_140 = arith.constant 0 : index
    %c0_141 = arith.constant 0 : index
    %262 = vector.load %arg8[%c0_140, %c0_141] : memref<2x32xf32, #tpu.memory_space<vmem>>, vector<2x32xf32>
    tpu.vector_store %arg8[%c0_140, %c0_141], %238 {strides = array<i32>} : memref<2x32xf32, #tpu.memory_space<vmem>>, vector<2x32xf32>,
    %c0_142 = arith.constant 0 : index
    %c0_143 = arith.constant 0 : index
    %263 = vector.load %arg9[%c0_142, %c0_143] : memref<2x32xf32, #tpu.memory_space<vmem>>, vector<2x32xf32>
    tpu.vector_store %arg9[%c0_142, %c0_143], %236 {strides = array<i32>} : memref<2x32xf32, #tpu.memory_space<vmem>>, vector<2x32xf32>,
    %c0_144 = arith.constant 0 : index
    %c0_145 = arith.constant 0 : index
    %264 = vector.load %arg10[%c0_144, %c0_145] : memref<2x32xf32, #tpu.memory_space<vmem>>, vector<2x32xf32>
    tpu.vector_store %arg10[%c0_144, %c0_145], %261 {strides = array<i32>} : memref<2x32xf32, #tpu.memory_space<vmem>>, vector<2x32xf32>,
    %c0_146 = arith.constant 0 : index
    %c0_147 = arith.constant 0 : index
    %265 = vector.load %arg11[%c0_146, %c0_147] : memref<2x32xf32, #tpu.memory_space<vmem>>, vector<2x32xf32>
    tpu.vector_store %arg11[%c0_146, %c0_147], %259 {strides = array<i32>} : memref<2x32xf32, #tpu.memory_space<vmem>>, vector<2x32xf32>,
    %266 = arith.truncf %238 : vector<2x32xf32> to vector<2x32xbf16>
    %267 = arith.index_cast %c3_i32 : i32 to index
    %c0_148 = arith.constant 0 : index
    %c0_149 = arith.constant 0 : index
    %268 = vector.load %arg4[%267, %c0_148, %c0_149] : memref<8x2x64xbf16, #tpu.memory_space<vmem>>, vector<1x2x32xbf16>
    %269 = vector.shape_cast %268 : vector<1x2x32xbf16> to vector<2x32xbf16>
    %270 = vector.shape_cast %266 : vector<2x32xbf16> to vector<1x2x32xbf16>
    tpu.vector_store %arg4[%267, %c0_148, %c0_149], %270 {strides = array<i32>} : memref<8x2x64xbf16, #tpu.memory_space<vmem>>, vector<1x2x32xbf16>,
    %271 = arith.truncf %261 : vector<2x32xf32> to vector<2x32xbf16>
    %272 = arith.index_cast %215 : i32 to index
    %c0_150 = arith.constant 0 : index
    %c32_151 = arith.constant 32 : index
    %273 = vector.load %arg4[%272, %c0_150, %c32_151] : memref<8x2x64xbf16, #tpu.memory_space<vmem>>, vector<1x2x32xbf16>
    %274 = vector.shape_cast %273 : vector<1x2x32xbf16> to vector<2x32xbf16>
    %275 = vector.shape_cast %271 : vector<2x32xbf16> to vector<1x2x32xbf16>
    tpu.vector_store %arg4[%272, %c0_150, %c32_151], %275 {strides = array<i32>} : memref<8x2x64xbf16, #tpu.memory_space<vmem>>, vector<1x2x32xbf16>,
    %c4_i32 = arith.constant 4 : i32
    %c7_i32_152 = arith.constant 7 : i32
    %276 = arith.subi %c7_i32_152, %c4_i32 : i32
    %277 = arith.index_cast %c4_i32 : i32 to index
    %c0_153 = arith.constant 0 : index
    %c0_154 = arith.constant 0 : index
    %278 = vector.load %arg6[%277, %c0_153, %c0_154] : memref<8x2x128xf32, #tpu.memory_space<vmem>>, vector<1x2x128xf32>
    %279 = vector.shape_cast %278 : vector<1x2x128xf32> to vector<2x128xf32>
    %c0_155 = arith.constant 0 : index
    %c0_156 = arith.constant 0 : index
    %280 = vector.load %arg8[%c0_155, %c0_156] : memref<2x32xf32, #tpu.memory_space<vmem>>, vector<2x32xf32>
    %c0_157 = arith.constant 0 : index
    %c0_158 = arith.constant 0 : index
    %281 = vector.load %arg9[%c0_157, %c0_158] : memref<2x32xf32, #tpu.memory_space<vmem>>, vector<2x32xf32>
    %282 = arith.truncf %280 : vector<2x32xf32> to vector<2x32xbf16>
    %cst_159 = arith.constant dense<0.000000e+00> : vector<2x128xf32>
    %283 = tpu.matmul %282, %21, %cst_159 {dimension_numbers = #tpu.dot_dimension_numbers<[1], [0], [0], [1], [0, 0, 1, 1], [], []>} : vector<2x32xbf16>, vector<32x128xbf16>, vector<2x128xf32> -> vector<2x128xf32>
    %284 = arith.addf %279, %283 : vector<2x128xf32>
    %285 = arith.negf %284 : vector<2x128xf32>
    %286 = math.exp %285 : vector<2x128xf32>
    %cst_160 = arith.constant 1.000000e+00 : f32
    %287 = vector.broadcast %cst_160 : f32 to vector<2x128xf32>
    %288 = arith.addf %287, %286 : vector<2x128xf32>
    %289 = arith.divf %287, %288 : vector<2x128xf32>
    %290 = math.tanh %284 : vector<2x128xf32>
    %291 = vector.extract_strided_slice %289 {offsets = [0, 0], sizes = [2, 32], strides = [1, 1]} : vector<2x128xf32> to vector<2x32xf32>
    %292 = vector.extract_strided_slice %289 {offsets = [0, 32], sizes = [2, 32], strides = [1, 1]} : vector<2x128xf32> to vector<2x32xf32>
    %293 = vector.extract_strided_slice %290 {offsets = [0, 64], sizes = [2, 32], strides = [1, 1]} : vector<2x128xf32> to vector<2x32xf32>
    %294 = vector.extract_strided_slice %289 {offsets = [0, 96], sizes = [2, 32], strides = [1, 1]} : vector<2x128xf32> to vector<2x32xf32>
    %295 = arith.mulf %292, %281 : vector<2x32xf32>
    %296 = arith.mulf %291, %293 : vector<2x32xf32>
    %297 = arith.addf %295, %296 : vector<2x32xf32>
    %298 = math.tanh %297 : vector<2x32xf32>
    %299 = arith.mulf %294, %298 : vector<2x32xf32>
    %300 = arith.index_cast %276 : i32 to index
    %c0_161 = arith.constant 0 : index
    %c0_162 = arith.constant 0 : index
    %301 = vector.load %arg7[%300, %c0_161, %c0_162] : memref<8x2x128xf32, #tpu.memory_space<vmem>>, vector<1x2x128xf32>
    %302 = vector.shape_cast %301 : vector<1x2x128xf32> to vector<2x128xf32>
    %c0_163 = arith.constant 0 : index
    %c0_164 = arith.constant 0 : index
    %303 = vector.load %arg10[%c0_163, %c0_164] : memref<2x32xf32, #tpu.memory_space<vmem>>, vector<2x32xf32>
    %c0_165 = arith.constant 0 : index
    %c0_166 = arith.constant 0 : index
    %304 = vector.load %arg11[%c0_165, %c0_166] : memref<2x32xf32, #tpu.memory_space<vmem>>, vector<2x32xf32>
    %305 = arith.truncf %303 : vector<2x32xf32> to vector<2x32xbf16>
    %cst_167 = arith.constant dense<0.000000e+00> : vector<2x128xf32>
    %306 = tpu.matmul %305, %23, %cst_167 {dimension_numbers = #tpu.dot_dimension_numbers<[1], [0], [0], [1], [0, 0, 1, 1], [], []>} : vector<2x32xbf16>, vector<32x128xbf16>, vector<2x128xf32> -> vector<2x128xf32>
    %307 = arith.addf %302, %306 : vector<2x128xf32>
    %308 = arith.negf %307 : vector<2x128xf32>
    %309 = math.exp %308 : vector<2x128xf32>
    %cst_168 = arith.constant 1.000000e+00 : f32
    %310 = vector.broadcast %cst_168 : f32 to vector<2x128xf32>
    %311 = arith.addf %310, %309 : vector<2x128xf32>
    %312 = arith.divf %310, %311 : vector<2x128xf32>
    %313 = math.tanh %307 : vector<2x128xf32>
    %314 = vector.extract_strided_slice %312 {offsets = [0, 0], sizes = [2, 32], strides = [1, 1]} : vector<2x128xf32> to vector<2x32xf32>
    %315 = vector.extract_strided_slice %312 {offsets = [0, 32], sizes = [2, 32], strides = [1, 1]} : vector<2x128xf32> to vector<2x32xf32>
    %316 = vector.extract_strided_slice %313 {offsets = [0, 64], sizes = [2, 32], strides = [1, 1]} : vector<2x128xf32> to vector<2x32xf32>
    %317 = vector.extract_strided_slice %312 {offsets = [0, 96], sizes = [2, 32], strides = [1, 1]} : vector<2x128xf32> to vector<2x32xf32>
    %318 = arith.mulf %315, %304 : vector<2x32xf32>
    %319 = arith.mulf %314, %316 : vector<2x32xf32>
    %320 = arith.addf %318, %319 : vector<2x32xf32>
    %321 = math.tanh %320 : vector<2x32xf32>
    %322 = arith.mulf %317, %321 : vector<2x32xf32>
    %c0_169 = arith.constant 0 : index
    %c0_170 = arith.constant 0 : index
    %323 = vector.load %arg8[%c0_169, %c0_170] : memref<2x32xf32, #tpu.memory_space<vmem>>, vector<2x32xf32>
    tpu.vector_store %arg8[%c0_169, %c0_170], %299 {strides = array<i32>} : memref<2x32xf32, #tpu.memory_space<vmem>>, vector<2x32xf32>,
    %c0_171 = arith.constant 0 : index
    %c0_172 = arith.constant 0 : index
    %324 = vector.load %arg9[%c0_171, %c0_172] : memref<2x32xf32, #tpu.memory_space<vmem>>, vector<2x32xf32>
    tpu.vector_store %arg9[%c0_171, %c0_172], %297 {strides = array<i32>} : memref<2x32xf32, #tpu.memory_space<vmem>>, vector<2x32xf32>,
    %c0_173 = arith.constant 0 : index
    %c0_174 = arith.constant 0 : index
    %325 = vector.load %arg10[%c0_173, %c0_174] : memref<2x32xf32, #tpu.memory_space<vmem>>, vector<2x32xf32>
    tpu.vector_store %arg10[%c0_173, %c0_174], %322 {strides = array<i32>} : memref<2x32xf32, #tpu.memory_space<vmem>>, vector<2x32xf32>,
    %c0_175 = arith.constant 0 : index
    %c0_176 = arith.constant 0 : index
    %326 = vector.load %arg11[%c0_175, %c0_176] : memref<2x32xf32, #tpu.memory_space<vmem>>, vector<2x32xf32>
    tpu.vector_store %arg11[%c0_175, %c0_176], %320 {strides = array<i32>} : memref<2x32xf32, #tpu.memory_space<vmem>>, vector<2x32xf32>,
    %327 = arith.truncf %299 : vector<2x32xf32> to vector<2x32xbf16>
    %328 = arith.index_cast %c4_i32 : i32 to index
    %c0_177 = arith.constant 0 : index
    %c0_178 = arith.constant 0 : index
    %329 = vector.load %arg4[%328, %c0_177, %c0_178] : memref<8x2x64xbf16, #tpu.memory_space<vmem>>, vector<1x2x32xbf16>
    %330 = vector.shape_cast %329 : vector<1x2x32xbf16> to vector<2x32xbf16>
    %331 = vector.shape_cast %327 : vector<2x32xbf16> to vector<1x2x32xbf16>
    tpu.vector_store %arg4[%328, %c0_177, %c0_178], %331 {strides = array<i32>} : memref<8x2x64xbf16, #tpu.memory_space<vmem>>, vector<1x2x32xbf16>,
    %332 = arith.truncf %322 : vector<2x32xf32> to vector<2x32xbf16>
    %333 = arith.index_cast %276 : i32 to index
    %c0_179 = arith.constant 0 : index
    %c32_180 = arith.constant 32 : index
    %334 = vector.load %arg4[%333, %c0_179, %c32_180] : memref<8x2x64xbf16, #tpu.memory_space<vmem>>, vector<1x2x32xbf16>
    %335 = vector.shape_cast %334 : vector<1x2x32xbf16> to vector<2x32xbf16>
    %336 = vector.shape_cast %332 : vector<2x32xbf16> to vector<1x2x32xbf16>
    tpu.vector_store %arg4[%333, %c0_179, %c32_180], %336 {strides = array<i32>} : memref<8x2x64xbf16, #tpu.memory_space<vmem>>, vector<1x2x32xbf16>,
    %c5_i32 = arith.constant 5 : i32
    %c7_i32_181 = arith.constant 7 : i32
    %337 = arith.subi %c7_i32_181, %c5_i32 : i32
    %338 = arith.index_cast %c5_i32 : i32 to index
    %c0_182 = arith.constant 0 : index
    %c0_183 = arith.constant 0 : index
    %339 = vector.load %arg6[%338, %c0_182, %c0_183] : memref<8x2x128xf32, #tpu.memory_space<vmem>>, vector<1x2x128xf32>
    %340 = vector.shape_cast %339 : vector<1x2x128xf32> to vector<2x128xf32>
    %c0_184 = arith.constant 0 : index
    %c0_185 = arith.constant 0 : index
    %341 = vector.load %arg8[%c0_184, %c0_185] : memref<2x32xf32, #tpu.memory_space<vmem>>, vector<2x32xf32>
    %c0_186 = arith.constant 0 : index
    %c0_187 = arith.constant 0 : index
    %342 = vector.load %arg9[%c0_186, %c0_187] : memref<2x32xf32, #tpu.memory_space<vmem>>, vector<2x32xf32>
    %343 = arith.truncf %341 : vector<2x32xf32> to vector<2x32xbf16>
    %cst_188 = arith.constant dense<0.000000e+00> : vector<2x128xf32>
    %344 = tpu.matmul %343, %21, %cst_188 {dimension_numbers = #tpu.dot_dimension_numbers<[1], [0], [0], [1], [0, 0, 1, 1], [], []>} : vector<2x32xbf16>, vector<32x128xbf16>, vector<2x128xf32> -> vector<2x128xf32>
    %345 = arith.addf %340, %344 : vector<2x128xf32>
    %346 = arith.negf %345 : vector<2x128xf32>
    %347 = math.exp %346 : vector<2x128xf32>
    %cst_189 = arith.constant 1.000000e+00 : f32
    %348 = vector.broadcast %cst_189 : f32 to vector<2x128xf32>
    %349 = arith.addf %348, %347 : vector<2x128xf32>
    %350 = arith.divf %348, %349 : vector<2x128xf32>
    %351 = math.tanh %345 : vector<2x128xf32>
    %352 = vector.extract_strided_slice %350 {offsets = [0, 0], sizes = [2, 32], strides = [1, 1]} : vector<2x128xf32> to vector<2x32xf32>
    %353 = vector.extract_strided_slice %350 {offsets = [0, 32], sizes = [2, 32], strides = [1, 1]} : vector<2x128xf32> to vector<2x32xf32>
    %354 = vector.extract_strided_slice %351 {offsets = [0, 64], sizes = [2, 32], strides = [1, 1]} : vector<2x128xf32> to vector<2x32xf32>
    %355 = vector.extract_strided_slice %350 {offsets = [0, 96], sizes = [2, 32], strides = [1, 1]} : vector<2x128xf32> to vector<2x32xf32>
    %356 = arith.mulf %353, %342 : vector<2x32xf32>
    %357 = arith.mulf %352, %354 : vector<2x32xf32>
    %358 = arith.addf %356, %357 : vector<2x32xf32>
    %359 = math.tanh %358 : vector<2x32xf32>
    %360 = arith.mulf %355, %359 : vector<2x32xf32>
    %361 = arith.index_cast %337 : i32 to index
    %c0_190 = arith.constant 0 : index
    %c0_191 = arith.constant 0 : index
    %362 = vector.load %arg7[%361, %c0_190, %c0_191] : memref<8x2x128xf32, #tpu.memory_space<vmem>>, vector<1x2x128xf32>
    %363 = vector.shape_cast %362 : vector<1x2x128xf32> to vector<2x128xf32>
    %c0_192 = arith.constant 0 : index
    %c0_193 = arith.constant 0 : index
    %364 = vector.load %arg10[%c0_192, %c0_193] : memref<2x32xf32, #tpu.memory_space<vmem>>, vector<2x32xf32>
    %c0_194 = arith.constant 0 : index
    %c0_195 = arith.constant 0 : index
    %365 = vector.load %arg11[%c0_194, %c0_195] : memref<2x32xf32, #tpu.memory_space<vmem>>, vector<2x32xf32>
    %366 = arith.truncf %364 : vector<2x32xf32> to vector<2x32xbf16>
    %cst_196 = arith.constant dense<0.000000e+00> : vector<2x128xf32>
    %367 = tpu.matmul %366, %23, %cst_196 {dimension_numbers = #tpu.dot_dimension_numbers<[1], [0], [0], [1], [0, 0, 1, 1], [], []>} : vector<2x32xbf16>, vector<32x128xbf16>, vector<2x128xf32> -> vector<2x128xf32>
    %368 = arith.addf %363, %367 : vector<2x128xf32>
    %369 = arith.negf %368 : vector<2x128xf32>
    %370 = math.exp %369 : vector<2x128xf32>
    %cst_197 = arith.constant 1.000000e+00 : f32
    %371 = vector.broadcast %cst_197 : f32 to vector<2x128xf32>
    %372 = arith.addf %371, %370 : vector<2x128xf32>
    %373 = arith.divf %371, %372 : vector<2x128xf32>
    %374 = math.tanh %368 : vector<2x128xf32>
    %375 = vector.extract_strided_slice %373 {offsets = [0, 0], sizes = [2, 32], strides = [1, 1]} : vector<2x128xf32> to vector<2x32xf32>
    %376 = vector.extract_strided_slice %373 {offsets = [0, 32], sizes = [2, 32], strides = [1, 1]} : vector<2x128xf32> to vector<2x32xf32>
    %377 = vector.extract_strided_slice %374 {offsets = [0, 64], sizes = [2, 32], strides = [1, 1]} : vector<2x128xf32> to vector<2x32xf32>
    %378 = vector.extract_strided_slice %373 {offsets = [0, 96], sizes = [2, 32], strides = [1, 1]} : vector<2x128xf32> to vector<2x32xf32>
    %379 = arith.mulf %376, %365 : vector<2x32xf32>
    %380 = arith.mulf %375, %377 : vector<2x32xf32>
    %381 = arith.addf %379, %380 : vector<2x32xf32>
    %382 = math.tanh %381 : vector<2x32xf32>
    %383 = arith.mulf %378, %382 : vector<2x32xf32>
    %c0_198 = arith.constant 0 : index
    %c0_199 = arith.constant 0 : index
    %384 = vector.load %arg8[%c0_198, %c0_199] : memref<2x32xf32, #tpu.memory_space<vmem>>, vector<2x32xf32>
    tpu.vector_store %arg8[%c0_198, %c0_199], %360 {strides = array<i32>} : memref<2x32xf32, #tpu.memory_space<vmem>>, vector<2x32xf32>,
    %c0_200 = arith.constant 0 : index
    %c0_201 = arith.constant 0 : index
    %385 = vector.load %arg9[%c0_200, %c0_201] : memref<2x32xf32, #tpu.memory_space<vmem>>, vector<2x32xf32>
    tpu.vector_store %arg9[%c0_200, %c0_201], %358 {strides = array<i32>} : memref<2x32xf32, #tpu.memory_space<vmem>>, vector<2x32xf32>,
    %c0_202 = arith.constant 0 : index
    %c0_203 = arith.constant 0 : index
    %386 = vector.load %arg10[%c0_202, %c0_203] : memref<2x32xf32, #tpu.memory_space<vmem>>, vector<2x32xf32>
    tpu.vector_store %arg10[%c0_202, %c0_203], %383 {strides = array<i32>} : memref<2x32xf32, #tpu.memory_space<vmem>>, vector<2x32xf32>,
    %c0_204 = arith.constant 0 : index
    %c0_205 = arith.constant 0 : index
    %387 = vector.load %arg11[%c0_204, %c0_205] : memref<2x32xf32, #tpu.memory_space<vmem>>, vector<2x32xf32>
    tpu.vector_store %arg11[%c0_204, %c0_205], %381 {strides = array<i32>} : memref<2x32xf32, #tpu.memory_space<vmem>>, vector<2x32xf32>,
    %388 = arith.truncf %360 : vector<2x32xf32> to vector<2x32xbf16>
    %389 = arith.index_cast %c5_i32 : i32 to index
    %c0_206 = arith.constant 0 : index
    %c0_207 = arith.constant 0 : index
    %390 = vector.load %arg4[%389, %c0_206, %c0_207] : memref<8x2x64xbf16, #tpu.memory_space<vmem>>, vector<1x2x32xbf16>
    %391 = vector.shape_cast %390 : vector<1x2x32xbf16> to vector<2x32xbf16>
    %392 = vector.shape_cast %388 : vector<2x32xbf16> to vector<1x2x32xbf16>
    tpu.vector_store %arg4[%389, %c0_206, %c0_207], %392 {strides = array<i32>} : memref<8x2x64xbf16, #tpu.memory_space<vmem>>, vector<1x2x32xbf16>,
    %393 = arith.truncf %383 : vector<2x32xf32> to vector<2x32xbf16>
    %394 = arith.index_cast %337 : i32 to index
    %c0_208 = arith.constant 0 : index
    %c32_209 = arith.constant 32 : index
    %395 = vector.load %arg4[%394, %c0_208, %c32_209] : memref<8x2x64xbf16, #tpu.memory_space<vmem>>, vector<1x2x32xbf16>
    %396 = vector.shape_cast %395 : vector<1x2x32xbf16> to vector<2x32xbf16>
    %397 = vector.shape_cast %393 : vector<2x32xbf16> to vector<1x2x32xbf16>
    tpu.vector_store %arg4[%394, %c0_208, %c32_209], %397 {strides = array<i32>} : memref<8x2x64xbf16, #tpu.memory_space<vmem>>, vector<1x2x32xbf16>,
    %c6_i32 = arith.constant 6 : i32
    %c7_i32_210 = arith.constant 7 : i32
    %398 = arith.subi %c7_i32_210, %c6_i32 : i32
    %399 = arith.index_cast %c6_i32 : i32 to index
    %c0_211 = arith.constant 0 : index
    %c0_212 = arith.constant 0 : index
    %400 = vector.load %arg6[%399, %c0_211, %c0_212] : memref<8x2x128xf32, #tpu.memory_space<vmem>>, vector<1x2x128xf32>
    %401 = vector.shape_cast %400 : vector<1x2x128xf32> to vector<2x128xf32>
    %c0_213 = arith.constant 0 : index
    %c0_214 = arith.constant 0 : index
    %402 = vector.load %arg8[%c0_213, %c0_214] : memref<2x32xf32, #tpu.memory_space<vmem>>, vector<2x32xf32>
    %c0_215 = arith.constant 0 : index
    %c0_216 = arith.constant 0 : index
    %403 = vector.load %arg9[%c0_215, %c0_216] : memref<2x32xf32, #tpu.memory_space<vmem>>, vector<2x32xf32>
    %404 = arith.truncf %402 : vector<2x32xf32> to vector<2x32xbf16>
    %cst_217 = arith.constant dense<0.000000e+00> : vector<2x128xf32>
    %405 = tpu.matmul %404, %21, %cst_217 {dimension_numbers = #tpu.dot_dimension_numbers<[1], [0], [0], [1], [0, 0, 1, 1], [], []>} : vector<2x32xbf16>, vector<32x128xbf16>, vector<2x128xf32> -> vector<2x128xf32>
    %406 = arith.addf %401, %405 : vector<2x128xf32>
    %407 = arith.negf %406 : vector<2x128xf32>
    %408 = math.exp %407 : vector<2x128xf32>
    %cst_218 = arith.constant 1.000000e+00 : f32
    %409 = vector.broadcast %cst_218 : f32 to vector<2x128xf32>
    %410 = arith.addf %409, %408 : vector<2x128xf32>
    %411 = arith.divf %409, %410 : vector<2x128xf32>
    %412 = math.tanh %406 : vector<2x128xf32>
    %413 = vector.extract_strided_slice %411 {offsets = [0, 0], sizes = [2, 32], strides = [1, 1]} : vector<2x128xf32> to vector<2x32xf32>
    %414 = vector.extract_strided_slice %411 {offsets = [0, 32], sizes = [2, 32], strides = [1, 1]} : vector<2x128xf32> to vector<2x32xf32>
    %415 = vector.extract_strided_slice %412 {offsets = [0, 64], sizes = [2, 32], strides = [1, 1]} : vector<2x128xf32> to vector<2x32xf32>
    %416 = vector.extract_strided_slice %411 {offsets = [0, 96], sizes = [2, 32], strides = [1, 1]} : vector<2x128xf32> to vector<2x32xf32>
    %417 = arith.mulf %414, %403 : vector<2x32xf32>
    %418 = arith.mulf %413, %415 : vector<2x32xf32>
    %419 = arith.addf %417, %418 : vector<2x32xf32>
    %420 = math.tanh %419 : vector<2x32xf32>
    %421 = arith.mulf %416, %420 : vector<2x32xf32>
    %422 = arith.index_cast %398 : i32 to index
    %c0_219 = arith.constant 0 : index
    %c0_220 = arith.constant 0 : index
    %423 = vector.load %arg7[%422, %c0_219, %c0_220] : memref<8x2x128xf32, #tpu.memory_space<vmem>>, vector<1x2x128xf32>
    %424 = vector.shape_cast %423 : vector<1x2x128xf32> to vector<2x128xf32>
    %c0_221 = arith.constant 0 : index
    %c0_222 = arith.constant 0 : index
    %425 = vector.load %arg10[%c0_221, %c0_222] : memref<2x32xf32, #tpu.memory_space<vmem>>, vector<2x32xf32>
    %c0_223 = arith.constant 0 : index
    %c0_224 = arith.constant 0 : index
    %426 = vector.load %arg11[%c0_223, %c0_224] : memref<2x32xf32, #tpu.memory_space<vmem>>, vector<2x32xf32>
    %427 = arith.truncf %425 : vector<2x32xf32> to vector<2x32xbf16>
    %cst_225 = arith.constant dense<0.000000e+00> : vector<2x128xf32>
    %428 = tpu.matmul %427, %23, %cst_225 {dimension_numbers = #tpu.dot_dimension_numbers<[1], [0], [0], [1], [0, 0, 1, 1], [], []>} : vector<2x32xbf16>, vector<32x128xbf16>, vector<2x128xf32> -> vector<2x128xf32>
    %429 = arith.addf %424, %428 : vector<2x128xf32>
    %430 = arith.negf %429 : vector<2x128xf32>
    %431 = math.exp %430 : vector<2x128xf32>
    %cst_226 = arith.constant 1.000000e+00 : f32
    %432 = vector.broadcast %cst_226 : f32 to vector<2x128xf32>
    %433 = arith.addf %432, %431 : vector<2x128xf32>
    %434 = arith.divf %432, %433 : vector<2x128xf32>
    %435 = math.tanh %429 : vector<2x128xf32>
    %436 = vector.extract_strided_slice %434 {offsets = [0, 0], sizes = [2, 32], strides = [1, 1]} : vector<2x128xf32> to vector<2x32xf32>
    %437 = vector.extract_strided_slice %434 {offsets = [0, 32], sizes = [2, 32], strides = [1, 1]} : vector<2x128xf32> to vector<2x32xf32>
    %438 = vector.extract_strided_slice %435 {offsets = [0, 64], sizes = [2, 32], strides = [1, 1]} : vector<2x128xf32> to vector<2x32xf32>
    %439 = vector.extract_strided_slice %434 {offsets = [0, 96], sizes = [2, 32], strides = [1, 1]} : vector<2x128xf32> to vector<2x32xf32>
    %440 = arith.mulf %437, %426 : vector<2x32xf32>
    %441 = arith.mulf %436, %438 : vector<2x32xf32>
    %442 = arith.addf %440, %441 : vector<2x32xf32>
    %443 = math.tanh %442 : vector<2x32xf32>
    %444 = arith.mulf %439, %443 : vector<2x32xf32>
    %c0_227 = arith.constant 0 : index
    %c0_228 = arith.constant 0 : index
    %445 = vector.load %arg8[%c0_227, %c0_228] : memref<2x32xf32, #tpu.memory_space<vmem>>, vector<2x32xf32>
    tpu.vector_store %arg8[%c0_227, %c0_228], %421 {strides = array<i32>} : memref<2x32xf32, #tpu.memory_space<vmem>>, vector<2x32xf32>,
    %c0_229 = arith.constant 0 : index
    %c0_230 = arith.constant 0 : index
    %446 = vector.load %arg9[%c0_229, %c0_230] : memref<2x32xf32, #tpu.memory_space<vmem>>, vector<2x32xf32>
    tpu.vector_store %arg9[%c0_229, %c0_230], %419 {strides = array<i32>} : memref<2x32xf32, #tpu.memory_space<vmem>>, vector<2x32xf32>,
    %c0_231 = arith.constant 0 : index
    %c0_232 = arith.constant 0 : index
    %447 = vector.load %arg10[%c0_231, %c0_232] : memref<2x32xf32, #tpu.memory_space<vmem>>, vector<2x32xf32>
    tpu.vector_store %arg10[%c0_231, %c0_232], %444 {strides = array<i32>} : memref<2x32xf32, #tpu.memory_space<vmem>>, vector<2x32xf32>,
    %c0_233 = arith.constant 0 : index
    %c0_234 = arith.constant 0 : index
    %448 = vector.load %arg11[%c0_233, %c0_234] : memref<2x32xf32, #tpu.memory_space<vmem>>, vector<2x32xf32>
    tpu.vector_store %arg11[%c0_233, %c0_234], %442 {strides = array<i32>} : memref<2x32xf32, #tpu.memory_space<vmem>>, vector<2x32xf32>,
    %449 = arith.truncf %421 : vector<2x32xf32> to vector<2x32xbf16>
    %450 = arith.index_cast %c6_i32 : i32 to index
    %c0_235 = arith.constant 0 : index
    %c0_236 = arith.constant 0 : index
    %451 = vector.load %arg4[%450, %c0_235, %c0_236] : memref<8x2x64xbf16, #tpu.memory_space<vmem>>, vector<1x2x32xbf16>
    %452 = vector.shape_cast %451 : vector<1x2x32xbf16> to vector<2x32xbf16>
    %453 = vector.shape_cast %449 : vector<2x32xbf16> to vector<1x2x32xbf16>
    tpu.vector_store %arg4[%450, %c0_235, %c0_236], %453 {strides = array<i32>} : memref<8x2x64xbf16, #tpu.memory_space<vmem>>, vector<1x2x32xbf16>,
    %454 = arith.truncf %444 : vector<2x32xf32> to vector<2x32xbf16>
    %455 = arith.index_cast %398 : i32 to index
    %c0_237 = arith.constant 0 : index
    %c32_238 = arith.constant 32 : index
    %456 = vector.load %arg4[%455, %c0_237, %c32_238] : memref<8x2x64xbf16, #tpu.memory_space<vmem>>, vector<1x2x32xbf16>
    %457 = vector.shape_cast %456 : vector<1x2x32xbf16> to vector<2x32xbf16>
    %458 = vector.shape_cast %454 : vector<2x32xbf16> to vector<1x2x32xbf16>
    tpu.vector_store %arg4[%455, %c0_237, %c32_238], %458 {strides = array<i32>} : memref<8x2x64xbf16, #tpu.memory_space<vmem>>, vector<1x2x32xbf16>,
    %c7_i32_239 = arith.constant 7 : i32
    %c7_i32_240 = arith.constant 7 : i32
    %459 = arith.subi %c7_i32_240, %c7_i32_239 : i32
    %460 = arith.index_cast %c7_i32_239 : i32 to index
    %c0_241 = arith.constant 0 : index
    %c0_242 = arith.constant 0 : index
    %461 = vector.load %arg6[%460, %c0_241, %c0_242] : memref<8x2x128xf32, #tpu.memory_space<vmem>>, vector<1x2x128xf32>
    %462 = vector.shape_cast %461 : vector<1x2x128xf32> to vector<2x128xf32>
    %c0_243 = arith.constant 0 : index
    %c0_244 = arith.constant 0 : index
    %463 = vector.load %arg8[%c0_243, %c0_244] : memref<2x32xf32, #tpu.memory_space<vmem>>, vector<2x32xf32>
    %c0_245 = arith.constant 0 : index
    %c0_246 = arith.constant 0 : index
    %464 = vector.load %arg9[%c0_245, %c0_246] : memref<2x32xf32, #tpu.memory_space<vmem>>, vector<2x32xf32>
    %465 = arith.truncf %463 : vector<2x32xf32> to vector<2x32xbf16>
    %cst_247 = arith.constant dense<0.000000e+00> : vector<2x128xf32>
    %466 = tpu.matmul %465, %21, %cst_247 {dimension_numbers = #tpu.dot_dimension_numbers<[1], [0], [0], [1], [0, 0, 1, 1], [], []>} : vector<2x32xbf16>, vector<32x128xbf16>, vector<2x128xf32> -> vector<2x128xf32>
    %467 = arith.addf %462, %466 : vector<2x128xf32>
    %468 = arith.negf %467 : vector<2x128xf32>
    %469 = math.exp %468 : vector<2x128xf32>
    %cst_248 = arith.constant 1.000000e+00 : f32
    %470 = vector.broadcast %cst_248 : f32 to vector<2x128xf32>
    %471 = arith.addf %470, %469 : vector<2x128xf32>
    %472 = arith.divf %470, %471 : vector<2x128xf32>
    %473 = math.tanh %467 : vector<2x128xf32>
    %474 = vector.extract_strided_slice %472 {offsets = [0, 0], sizes = [2, 32], strides = [1, 1]} : vector<2x128xf32> to vector<2x32xf32>
    %475 = vector.extract_strided_slice %472 {offsets = [0, 32], sizes = [2, 32], strides = [1, 1]} : vector<2x128xf32> to vector<2x32xf32>
    %476 = vector.extract_strided_slice %473 {offsets = [0, 64], sizes = [2, 32], strides = [1, 1]} : vector<2x128xf32> to vector<2x32xf32>
    %477 = vector.extract_strided_slice %472 {offsets = [0, 96], sizes = [2, 32], strides = [1, 1]} : vector<2x128xf32> to vector<2x32xf32>
    %478 = arith.mulf %475, %464 : vector<2x32xf32>
    %479 = arith.mulf %474, %476 : vector<2x32xf32>
    %480 = arith.addf %478, %479 : vector<2x32xf32>
    %481 = math.tanh %480 : vector<2x32xf32>
    %482 = arith.mulf %477, %481 : vector<2x32xf32>
    %483 = arith.index_cast %459 : i32 to index
    %c0_249 = arith.constant 0 : index
    %c0_250 = arith.constant 0 : index
    %484 = vector.load %arg7[%483, %c0_249, %c0_250] : memref<8x2x128xf32, #tpu.memory_space<vmem>>, vector<1x2x128xf32>
    %485 = vector.shape_cast %484 : vector<1x2x128xf32> to vector<2x128xf32>
    %c0_251 = arith.constant 0 : index
    %c0_252 = arith.constant 0 : index
    %486 = vector.load %arg10[%c0_251, %c0_252] : memref<2x32xf32, #tpu.memory_space<vmem>>, vector<2x32xf32>
    %c0_253 = arith.constant 0 : index
    %c0_254 = arith.constant 0 : index
    %487 = vector.load %arg11[%c0_253, %c0_254] : memref<2x32xf32, #tpu.memory_space<vmem>>, vector<2x32xf32>
    %488 = arith.truncf %486 : vector<2x32xf32> to vector<2x32xbf16>
    %cst_255 = arith.constant dense<0.000000e+00> : vector<2x128xf32>
    %489 = tpu.matmul %488, %23, %cst_255 {dimension_numbers = #tpu.dot_dimension_numbers<[1], [0], [0], [1], [0, 0, 1, 1], [], []>} : vector<2x32xbf16>, vector<32x128xbf16>, vector<2x128xf32> -> vector<2x128xf32>
    %490 = arith.addf %485, %489 : vector<2x128xf32>
    %491 = arith.negf %490 : vector<2x128xf32>
    %492 = math.exp %491 : vector<2x128xf32>
    %cst_256 = arith.constant 1.000000e+00 : f32
    %493 = vector.broadcast %cst_256 : f32 to vector<2x128xf32>
    %494 = arith.addf %493, %492 : vector<2x128xf32>
    %495 = arith.divf %493, %494 : vector<2x128xf32>
    %496 = math.tanh %490 : vector<2x128xf32>
    %497 = vector.extract_strided_slice %495 {offsets = [0, 0], sizes = [2, 32], strides = [1, 1]} : vector<2x128xf32> to vector<2x32xf32>
    %498 = vector.extract_strided_slice %495 {offsets = [0, 32], sizes = [2, 32], strides = [1, 1]} : vector<2x128xf32> to vector<2x32xf32>
    %499 = vector.extract_strided_slice %496 {offsets = [0, 64], sizes = [2, 32], strides = [1, 1]} : vector<2x128xf32> to vector<2x32xf32>
    %500 = vector.extract_strided_slice %495 {offsets = [0, 96], sizes = [2, 32], strides = [1, 1]} : vector<2x128xf32> to vector<2x32xf32>
    %501 = arith.mulf %498, %487 : vector<2x32xf32>
    %502 = arith.mulf %497, %499 : vector<2x32xf32>
    %503 = arith.addf %501, %502 : vector<2x32xf32>
    %504 = math.tanh %503 : vector<2x32xf32>
    %505 = arith.mulf %500, %504 : vector<2x32xf32>
    %c0_257 = arith.constant 0 : index
    %c0_258 = arith.constant 0 : index
    %506 = vector.load %arg8[%c0_257, %c0_258] : memref<2x32xf32, #tpu.memory_space<vmem>>, vector<2x32xf32>
    tpu.vector_store %arg8[%c0_257, %c0_258], %482 {strides = array<i32>} : memref<2x32xf32, #tpu.memory_space<vmem>>, vector<2x32xf32>,
    %c0_259 = arith.constant 0 : index
    %c0_260 = arith.constant 0 : index
    %507 = vector.load %arg9[%c0_259, %c0_260] : memref<2x32xf32, #tpu.memory_space<vmem>>, vector<2x32xf32>
    tpu.vector_store %arg9[%c0_259, %c0_260], %480 {strides = array<i32>} : memref<2x32xf32, #tpu.memory_space<vmem>>, vector<2x32xf32>,
    %c0_261 = arith.constant 0 : index
    %c0_262 = arith.constant 0 : index
    %508 = vector.load %arg10[%c0_261, %c0_262] : memref<2x32xf32, #tpu.memory_space<vmem>>, vector<2x32xf32>
    tpu.vector_store %arg10[%c0_261, %c0_262], %505 {strides = array<i32>} : memref<2x32xf32, #tpu.memory_space<vmem>>, vector<2x32xf32>,
    %c0_263 = arith.constant 0 : index
    %c0_264 = arith.constant 0 : index
    %509 = vector.load %arg11[%c0_263, %c0_264] : memref<2x32xf32, #tpu.memory_space<vmem>>, vector<2x32xf32>
    tpu.vector_store %arg11[%c0_263, %c0_264], %503 {strides = array<i32>} : memref<2x32xf32, #tpu.memory_space<vmem>>, vector<2x32xf32>,
    %510 = arith.truncf %482 : vector<2x32xf32> to vector<2x32xbf16>
    %511 = arith.index_cast %c7_i32_239 : i32 to index
    %c0_265 = arith.constant 0 : index
    %c0_266 = arith.constant 0 : index
    %512 = vector.load %arg4[%511, %c0_265, %c0_266] : memref<8x2x64xbf16, #tpu.memory_space<vmem>>, vector<1x2x32xbf16>
    %513 = vector.shape_cast %512 : vector<1x2x32xbf16> to vector<2x32xbf16>
    %514 = vector.shape_cast %510 : vector<2x32xbf16> to vector<1x2x32xbf16>
    tpu.vector_store %arg4[%511, %c0_265, %c0_266], %514 {strides = array<i32>} : memref<8x2x64xbf16, #tpu.memory_space<vmem>>, vector<1x2x32xbf16>,
    %515 = arith.truncf %505 : vector<2x32xf32> to vector<2x32xbf16>
    %516 = arith.index_cast %459 : i32 to index
    %c0_267 = arith.constant 0 : index
    %c32_268 = arith.constant 32 : index
    %517 = vector.load %arg4[%516, %c0_267, %c32_268] : memref<8x2x64xbf16, #tpu.memory_space<vmem>>, vector<1x2x32xbf16>
    %518 = vector.shape_cast %517 : vector<1x2x32xbf16> to vector<2x32xbf16>
    %519 = vector.shape_cast %515 : vector<2x32xbf16> to vector<1x2x32xbf16>
    tpu.vector_store %arg4[%516, %c0_267, %c32_268], %519 {strides = array<i32>} : memref<8x2x64xbf16, #tpu.memory_space<vmem>>, vector<1x2x32xbf16>,
    %c8_i32 = arith.constant 8 : i32
    %c0_269 = arith.constant 0 : index
    %c0_270 = arith.constant 0 : index
    %520 = vector.load %arg8[%c0_269, %c0_270] : memref<2x32xf32, #tpu.memory_space<vmem>>, vector<2x32xf32>
    %c0_271 = arith.constant 0 : index
    %c0_272 = arith.constant 0 : index
    %521 = vector.load %arg5[%c0_271, %c0_272] : memref<2x64xf32, #tpu.memory_space<vmem>>, vector<2x32xf32>
    tpu.vector_store %arg5[%c0_271, %c0_272], %520 {strides = array<i32>} : memref<2x64xf32, #tpu.memory_space<vmem>>, vector<2x32xf32>,
    %c0_273 = arith.constant 0 : index
    %c0_274 = arith.constant 0 : index
    %522 = vector.load %arg10[%c0_273, %c0_274] : memref<2x32xf32, #tpu.memory_space<vmem>>, vector<2x32xf32>
    %c0_275 = arith.constant 0 : index
    %c32_276 = arith.constant 32 : index
    %523 = vector.load %arg5[%c0_275, %c32_276] : memref<2x64xf32, #tpu.memory_space<vmem>>, vector<2x32xf32>
    tpu.vector_store %arg5[%c0_275, %c32_276], %522 {strides = array<i32>} : memref<2x64xf32, #tpu.memory_space<vmem>>, vector<2x32xf32>,
    return
  }
}

</mosaic_0001>

<llo_original>
// kernel: lstm_model_forward.4
$region0: #{lstm_model_forward.4}
  #allocation0 [shape = 'u32[]', space=smem, size = 0x4, offset = 0x4, fixed_abs, tag = 'smem constant byte address 0x4 - core index']
  #allocation1 [shape = 'u32[72,128]{1,0:T(1,128)}', space=vmem, size = 0x9000, scoped, tag = 'internal scratch']
  #allocation2 [shape = 'f32[8,2,128]{2,1,0:T(2,128)}', space=vmem, size = 0x2000, scoped, tag = 'scratch operand']
  #allocation3 [shape = 'f32[8,2,128]{2,1,0:T(2,128)}', space=vmem, size = 0x2000, scoped, tag = 'scratch operand']
  #allocation4 [shape = 'f32[2,32]{1,0:T(2,128)}', space=vmem, size = 0x400, scoped, tag = 'scratch operand']
  #allocation5 [shape = 'f32[2,32]{1,0:T(2,128)}', space=vmem, size = 0x400, scoped, tag = 'scratch operand']
  #allocation6 [shape = 'f32[2,32]{1,0:T(2,128)}', space=vmem, size = 0x400, scoped, tag = 'scratch operand']
  #allocation7 [shape = 'f32[2,32]{1,0:T(2,128)}', space=vmem, size = 0x400, scoped, tag = 'scratch operand']
  %s0 = inlined_call_operand.vmem [shape: bf16[8,2,64], index: 0, kind: input, shape index: {}]
  %s1 = inlined_call_operand.hbm [shape: bf16[2,64,128], index: 1, kind: input, shape index: {}]
  %s2 = inlined_call_operand.vmem [shape: bf16[2,32,128], index: 2, kind: input, shape index: {}]
  %s3 = inlined_call_operand.vmem [shape: f32[2,1,128], index: 3, kind: input, shape index: {}]
  %s4 = inlined_call_operand.hbm [shape: bf16[8,2,64], index: 4, kind: output, shape index: {0}]
  %s5 = inlined_call_operand.vmem [shape: f32[2,64], index: 5, kind: output, shape index: {1}]
  %6 = xla_tuple %s4, %s5
  %s7 = sld [smem:[#allocation0]]
  $region38: #{lstm_model_forward.4} parent=0
    _
  %s9 = ssub.s32 1, %s7
  %s10 = scalar_select 0, %s9, %s7
  $region1: #{lstm_model_forward.4} parent=0
    #allocation8 [shape = 'u8[32768]{0}', space=vmem, size = 0x8000, scoped, tag = 'input window, operand 1, single buffered']
    #allocation9 [shape = 's32[1]{0}', space=sflag, size = 0x4, scoped, tag = 'scoped memory for lstm_model_forward.4']
    #allocation10 [shape = 's32[1]{0}', space=sflag, size = 0x4, scoped, tag = 'scoped memory for lstm_model_forward.4']
    #allocation11 [shape = 'u8[4096]{0}', space=vmem, size = 0x1000, scoped, tag = 'output window, operand 0, single buffered']
    %11 = vsyncpa [#allocation9], 0
    %12 = vsyncpa [#allocation10], 0
    // Predicated region
    $region2: #{lstm_model_forward.4} parent=1 // pred_check
      _
    $region3: #{lstm_model_forward.4} parent=1 // pred_check_branch
      %14 = sbr.rel (0) target = $region5
    $region4: #{lstm_model_forward.4} parent=1 // pred_region
      _
    $region5: #{lstm_model_forward.4} parent=1 // pred_fallthru
      _
    // Predicated region
    $region6: #{lstm_model_forward.4} parent=1 // pred_check
      _
    $region7: #{lstm_model_forward.4} parent=1 // pred_check_branch
      %16 = sbr.rel (0) target = $region9
    $region8: #{lstm_model_forward.4} parent=1 // pred_region
      %18 = vsyncadd [#allocation9], 0
      %s19 = sshll.u32 %s1, 4
      %s20 = int_to_ptr.hbm [resolvable:$true] %s19
      %s21 = sshll.u32 [#allocation8], 4
      %s22 = int_to_ptr.vmem [resolvable:$true] %s21
      %27 = dma.hbm_to_vmem [thread:$0]  %s20, 1024, %s22, [#allocation9], 64, 64, 4
    $region9: #{lstm_model_forward.4} parent=1 // pred_fallthru
      _
    // Predicated region
    $region10: #{lstm_model_forward.4} parent=1 // pred_check
      _
    $region11: #{lstm_model_forward.4} parent=1 // pred_check_branch
      %29 = sbr.rel (0) target = $region13
    $region12: #{lstm_model_forward.4} parent=1 // pred_region
      _
    $region13: #{lstm_model_forward.4} parent=1 // pred_fallthru
      _
    // Predicated region
    $region14: #{lstm_model_forward.4} parent=1 // pred_check
      _
    $region15: #{lstm_model_forward.4} parent=1 // pred_check_branch
      %31 = sbr.rel (0) target = $region17
    $region16: #{lstm_model_forward.4} parent=1 // pred_region
      _
    $region17: #{lstm_model_forward.4} parent=1 // pred_fallthru
      _
    // Predicated region
    $region18: #{lstm_model_forward.4} parent=1 // pred_check
      _
    $region19: #{lstm_model_forward.4} parent=1 // pred_check_branch
      %33 = sbr.rel (0) target = $region21
    $region20: #{lstm_model_forward.4} parent=1 // pred_region
      %35 = dma.done [#allocation9], 1024
    $region21: #{lstm_model_forward.4} parent=1 // pred_fallthru
      _
    %v37 = vld [vmem:[%s0] sm:$0x1]
    %v38 = vld [vmem:[%s0 + $0x1] sm:$0x1]
    %v39 = vld [vmem:[%s0 + $0x2] sm:$0x1]
    %v40 = vld [vmem:[%s0 + $0x3] sm:$0x1]
    %v41 = vld [vmem:[%s0 + $0x4] sm:$0x1]
    %v42 = vld [vmem:[%s0 + $0x5] sm:$0x1]
    %v43 = vld [vmem:[%s0 + $0x6] sm:$0x1]
    %v44 = vld [vmem:[%s0 + $0x7] sm:$0x1]
    %v45 = vld [vmem:[#allocation8] sm:$0xf]
    %v46 = vld [vmem:[#allocation8 + $0x4] sm:$0xf]
    %v47 = vld [vmem:[#allocation8 + $0x8] sm:$0xf]
    %v48 = vld [vmem:[#allocation8 + $0xc] sm:$0xf]
    %v49 = vld [vmem:[#allocation8 + $0x10] sm:$0xf]
    %v50 = vld [vmem:[#allocation8 + $0x14] sm:$0xf]
    %v51 = vld [vmem:[#allocation8 + $0x18] sm:$0xf]
    %v52 = vld [vmem:[#allocation8 + $0x1c] sm:$0xf]
    %v53 = vld [vmem:[%s3] sm:$0x1]
    %v55 = vperm.slane %v53, 0
    %58 = vst [vmem:[#allocation1] ss:$9 sm:$0xff] %v37
    %s60 = scalar_lea.vmem [#allocation1], 1
    %61 = vst [vmem:[%s60] ss:$9 sm:$0xff] %v38
    %s63 = scalar_lea.vmem [#allocation1], 2
    %64 = vst [vmem:[%s63] ss:$9 sm:$0xff] %v39
    %s66 = scalar_lea.vmem [#allocation1], 3
    %67 = vst [vmem:[%s66] ss:$9 sm:$0xff] %v40
    %s69 = scalar_lea.vmem [#allocation1], 4
    %70 = vst [vmem:[%s69] ss:$9 sm:$0xff] %v41
    %s72 = scalar_lea.vmem [#allocation1], 5
    %73 = vst [vmem:[%s72] ss:$9 sm:$0xff] %v42
    %s75 = scalar_lea.vmem [#allocation1], 6
    %76 = vst [vmem:[%s75] ss:$9 sm:$0xff] %v43
    %s78 = scalar_lea.vmem [#allocation1], 7
    %79 = vst [vmem:[%s78] ss:$9 sm:$0xff] %v44
    %v80 = vld [vmem:[#allocation1] sm:$0xff]
    %v89 = vunpack.c.l.b16 %v45
    %v90 = vunpack.c.l.b16 %v46
    %v91 = vunpack.c.l.b16 %v47
    %v92 = vunpack.c.l.b16 %v48
    %v93 = vunpack.c.l.b16 %v49
    %v94 = vunpack.c.l.b16 %v50
    %v95 = vunpack.c.l.b16 %v51
    %v96 = vunpack.c.l.b16 %v52
    %v97 = vpack.c.b16 %v90, %v89
    %v98 = vpack.c.b16 %v92, %v91
    %v99 = vpack.c.b16 %v94, %v93
    %v100 = vpack.c.b16 %v96, %v95
    %vm105 = vcmask 523264
    %v106 = vsel %vm105, %v80, 0
    %108 = vmatpush.bf16.msra.mxu0 0
    %109 = vmatpush.bf16.msra.mxu0 0
    %110 = vmatpush.bf16.msra.mxu0 0
    %111 = vmatpush.bf16.msra.mxu0 0
    %112 = vmatpush.bf16.msra.mxu0 %v100
    %113 = vmatpush.bf16.msra.mxu0 %v99
    %114 = vmatpush.bf16.msra.mxu0 %v98
    %115 = vmatpush.bf16.msra.mxu0 %v97
    %116 = vmatmul.bf16.gmra.mxu0 %v106
    %v117 = vpop.f32.mrf.mxu0
    %v118 = vadd.f32 %v55, %v117
    %v119 = vpop.f32.mrf.mxu0
    %v120 = vadd.f32 %v55, %v119
    %121 = vdwg.mxu0
    %s122 = scalar_lea.vmem [#allocation8], 32
    %v123 = vld [vmem:[%s122] sm:$0xf]
    %v124 = vld [vmem:[%s122 + $0x4] sm:$0xf]
    %v125 = vld [vmem:[%s122 + $0x8] sm:$0xf]
    %v126 = vld [vmem:[%s122 + $0xc] sm:$0xf]
    %v127 = vld [vmem:[%s122 + $0x10] sm:$0xf]
    %v128 = vld [vmem:[%s122 + $0x14] sm:$0xf]
    %v129 = vld [vmem:[%s122 + $0x18] sm:$0xf]
    %v130 = vld [vmem:[%s122 + $0x1c] sm:$0xf]
    %s131 = scalar_lea.vmem %s3, 1
    %v132 = vld [vmem:[%s131] sm:$0x1]
    %v134 = vperm.slane %v132, 0
    %136 = vst [vmem:[#allocation1] ss:$9 sm:$0xff] %v37
    %s137 = scalar_lea.vmem [#allocation1], 1
    %138 = vst [vmem:[%s137] ss:$9 sm:$0xff] %v38
    %s139 = scalar_lea.vmem [#allocation1], 2
    %140 = vst [vmem:[%s139] ss:$9 sm:$0xff] %v39
    %s141 = scalar_lea.vmem [#allocation1], 3
    %142 = vst [vmem:[%s141] ss:$9 sm:$0xff] %v40
    %s143 = scalar_lea.vmem [#allocation1], 4
    %144 = vst [vmem:[%s143] ss:$9 sm:$0xff] %v41
    %s145 = scalar_lea.vmem [#allocation1], 5
    %146 = vst [vmem:[%s145] ss:$9 sm:$0xff] %v42
    %s147 = scalar_lea.vmem [#allocation1], 6
    %148 = vst [vmem:[%s147] ss:$9 sm:$0xff] %v43
    %s149 = scalar_lea.vmem [#allocation1], 7
    %150 = vst [vmem:[%s149] ss:$9 sm:$0xff] %v44
    %v151 = vld [vmem:[#allocation1] sm:$0xff]
    %v160 = vunpack.c.l.b16 %v123
    %v161 = vunpack.c.l.b16 %v124
    %v162 = vunpack.c.l.b16 %v125
    %v163 = vunpack.c.l.b16 %v126
    %v164 = vunpack.c.l.b16 %v127
    %v165 = vunpack.c.l.b16 %v128
    %v166 = vunpack.c.l.b16 %v129
    %v167 = vunpack.c.l.b16 %v130
    %v168 = vpack.c.b16 %v161, %v160
    %v169 = vpack.c.b16 %v163, %v162
    %v170 = vpack.c.b16 %v165, %v164
    %v171 = vpack.c.b16 %v167, %v166
    %v176 = vsel %vm105, %v151, 0
    %178 = vmatpush.bf16.msra.mxu0 0
    %179 = vmatpush.bf16.msra.mxu0 0
    %180 = vmatpush.bf16.msra.mxu0 0
    %181 = vmatpush.bf16.msra.mxu0 0
    %182 = vmatpush.bf16.msra.mxu0 %v171
    %183 = vmatpush.bf16.msra.mxu0 %v170
    %184 = vmatpush.bf16.msra.mxu0 %v169
    %185 = vmatpush.bf16.msra.mxu0 %v168
    %186 = vmatmul.bf16.gmra.mxu0 %v176
    %v187 = vpop.f32.mrf.mxu0
    %v188 = vadd.f32 %v134, %v187
    %v189 = vpop.f32.mrf.mxu0
    %v190 = vadd.f32 %v134, %v189
    %191 = vdwg.mxu0
    %v194 = vrot.slane %v118, 2
    %v195 = vrot.slane %v118, 4
    %v196 = vrot.slane %v118, 6
    %v197 = vrot.slane %v120, 2
    %v198 = vrot.slane %v120, 4
    %v199 = vrot.slane %v120, 6
    %206 = vst [vmem:[#allocation2] sm:$0x3] %v118
    %207 = vst [vmem:[#allocation2 + $0x2] sm:$0x3] %v194
    %208 = vst [vmem:[#allocation2 + $0x4] sm:$0x3] %v195
    %209 = vst [vmem:[#allocation2 + $0x6] sm:$0x3] %v196
    %210 = vst [vmem:[#allocation2 + $0x8] sm:$0x3] %v120
    %211 = vst [vmem:[#allocation2 + $0xa] sm:$0x3] %v197
    %212 = vst [vmem:[#allocation2 + $0xc] sm:$0x3] %v198
    %213 = vst [vmem:[#allocation2 + $0xe] sm:$0x3] %v199
    %v216 = vrot.slane %v188, 2
    %v217 = vrot.slane %v188, 4
    %v218 = vrot.slane %v188, 6
    %v219 = vrot.slane %v190, 2
    %v220 = vrot.slane %v190, 4
    %v221 = vrot.slane %v190, 6
    %228 = vst [vmem:[#allocation3] sm:$0x3] %v188
    %229 = vst [vmem:[#allocation3 + $0x2] sm:$0x3] %v216
    %230 = vst [vmem:[#allocation3 + $0x4] sm:$0x3] %v217
    %231 = vst [vmem:[#allocation3 + $0x6] sm:$0x3] %v218
    %232 = vst [vmem:[#allocation3 + $0x8] sm:$0x3] %v190
    %233 = vst [vmem:[#allocation3 + $0xa] sm:$0x3] %v219
    %234 = vst [vmem:[#allocation3 + $0xc] sm:$0x3] %v220
    %235 = vst [vmem:[#allocation3 + $0xe] sm:$0x3] %v221
    %v236 = vld [vmem:[%s2] sm:$0xf]
    %v237 = vld [vmem:[%s2 + $0x4] sm:$0xf]
    %v238 = vld [vmem:[%s2 + $0x8] sm:$0xf]
    %v239 = vld [vmem:[%s2 + $0xc] sm:$0xf]
    %s240 = scalar_lea.vmem %s2, 16
    %v241 = vld [vmem:[%s240] sm:$0xf]
    %v242 = vld [vmem:[%s240 + $0x4] sm:$0xf]
    %v243 = vld [vmem:[%s240 + $0x8] sm:$0xf]
    %v244 = vld [vmem:[%s240 + $0xc] sm:$0xf]
    %vm245 = vcmask 254976
    %246 = vst.msk [vmem:[#allocation4] sm:$0x3] %vm245, 0.0
    %247 = vst.msk [vmem:[#allocation5] sm:$0x3] %vm245, 0.0
    %248 = vst.msk [vmem:[#allocation6] sm:$0x3] %vm245, 0.0
    %249 = vst.msk [vmem:[#allocation7] sm:$0x3] %vm245, 0.0
    %v250 = vld [vmem:[#allocation2] sm:$0x3]
    %v251 = vld [vmem:[#allocation4] sm:$0x3]
    %v252 = vld [vmem:[#allocation5] sm:$0x3]
    %v253 = vpack.c.bf16 %v251, %v251
    %v258 = vunpack.c.l.b16 %v236
    %v259 = vunpack.c.l.b16 %v237
    %v260 = vunpack.c.l.b16 %v238
    %v261 = vunpack.c.l.b16 %v239
    %v262 = vpack.c.b16 %v259, %v258
    %v263 = vpack.c.b16 %v261, %v260
    %vm266 = vcmask 261120
    %v268 = vsel %vm266, %v253, 0
    %270 = vmatpush.bf16.msra.mxu0 0
    %271 = vmatpush.bf16.msra.mxu0 0
    %272 = vmatpush.bf16.msra.mxu0 0
    %273 = vmatpush.bf16.msra.mxu0 0
    %274 = vmatpush.bf16.msra.mxu0 0
    %275 = vmatpush.bf16.msra.mxu0 0
    %276 = vmatpush.bf16.msra.mxu0 %v263
    %277 = vmatpush.bf16.msra.mxu0 %v262
    %278 = vmatmul.bf16.gmra.mxu0 %v268
    %v279 = vpop.f32.mrf.mxu0
    %v280 = vadd.f32 0.0, %v279
    %v281 = vpop.f32.mrf.mxu0
    %282 = vdwg.mxu0
    %v283 = vadd.f32 %v250, %v280
    %v284 = vxor.u32 %v283, 2147483648
    %v285 = vmul.f32 %v284, 1.442695
    %v286 = vpow.pop %v285
    %v287 = vadd.f32 %v286, 1.0
    %v288 = vrcp.pop %v287
    %v289 = vmul.f32 %v287, %v288
    %v290 = vsub.f32 1.0, %v289
    %v291 = vmul.f32 %v288, %v290
    %v292 = vadd.f32 %v288, %v291
    %vm293 = vweird.f32 %v287
    %vm294 = vweird.f32 %v288
    %vm295 = vmor %vm293, %vm294
    %v296 = vsel %vm295, %v288, %v292
    %v297 = vand.u32 2147483647, %v287
    %vm298 = vcmp.eq.f32.partialorder %v297, 8.507059e+37
    %v299 = vand.u32 %v287, 2147483648
    %v300 = vor.u32 1.1754944e-38, %v299
    %v301 = vsel %vm298, %v300, %v296
    %v302 = vmul.f32 1.0, %v301
    %v303 = vtanh.pop %v283
    %305 = vrot.lane.b32.xlu0 %v252, 32
    %v306 = vpop.permute.xlu0 %305
    %v308 = vmul.f32 %v302, %v306
    %310 = vrot.lane.b32.xlu0 %v303, 64
    %v311 = vpop.permute.xlu0 %310
    %v313 = vmul.f32 %v302, %v311
    %315 = vrot.lane.b32.xlu0 %v313, 32
    %v316 = vpop.permute.xlu0 %315
    %v318 = vadd.f32 %v308, %v316
    %v319 = vtanh.pop %v318
    %321 = vrot.lane.b32.xlu0 %v319, 64
    %v322 = vpop.permute.xlu0 %321
    %v324 = vmul.f32 %v302, %v322
    %s325 = scalar_lea.vmem [#allocation3], 14
    %v326 = vld [vmem:[%s325] sm:$0x3]
    %v327 = vld [vmem:[#allocation6] sm:$0x3]
    %v328 = vld [vmem:[#allocation7] sm:$0x3]
    %v329 = vpack.c.bf16 %v327, %v327
    %v334 = vunpack.c.l.b16 %v241
    %v335 = vunpack.c.l.b16 %v242
    %v336 = vunpack.c.l.b16 %v243
    %v337 = vunpack.c.l.b16 %v244
    %v338 = vpack.c.b16 %v335, %v334
    %v339 = vpack.c.b16 %v337, %v336
    %v343 = vsel %vm266, %v329, 0
    %345 = vmatpush.bf16.msra.mxu0 0
    %346 = vmatpush.bf16.msra.mxu0 0
    %347 = vmatpush.bf16.msra.mxu0 0
    %348 = vmatpush.bf16.msra.mxu0 0
    %349 = vmatpush.bf16.msra.mxu0 0
    %350 = vmatpush.bf16.msra.mxu0 0
    %351 = vmatpush.bf16.msra.mxu0 %v339
    %352 = vmatpush.bf16.msra.mxu0 %v338
    %353 = vmatmul.bf16.gmra.mxu0 %v343
    %v354 = vpop.f32.mrf.mxu0
    %v355 = vadd.f32 0.0, %v354
    %v356 = vpop.f32.mrf.mxu0
    %357 = vdwg.mxu0
    %v358 = vadd.f32 %v326, %v355
    %v359 = vxor.u32 %v358, 2147483648
    %v360 = vmul.f32 %v359, 1.442695
    %v361 = vpow.pop %v360
    %v362 = vadd.f32 %v361, 1.0
    %v363 = vrcp.pop %v362
    %v364 = vmul.f32 %v362, %v363
    %v365 = vsub.f32 1.0, %v364
    %v366 = vmul.f32 %v363, %v365
    %v367 = vadd.f32 %v363, %v366
    %vm368 = vweird.f32 %v362
    %vm369 = vweird.f32 %v363
    %vm370 = vmor %vm368, %vm369
    %v371 = vsel %vm370, %v363, %v367
    %v372 = vand.u32 2147483647, %v362
    %vm373 = vcmp.eq.f32.partialorder %v372, 8.507059e+37
    %v374 = vand.u32 %v362, 2147483648
    %v375 = vor.u32 1.1754944e-38, %v374
    %v376 = vsel %vm373, %v375, %v371
    %v377 = vmul.f32 1.0, %v376
    %v378 = vtanh.pop %v358
    %380 = vrot.lane.b32.xlu0 %v328, 32
    %v381 = vpop.permute.xlu0 %380
    %v383 = vmul.f32 %v377, %v381
    %385 = vrot.lane.b32.xlu0 %v378, 64
    %v386 = vpop.permute.xlu0 %385
    %v388 = vmul.f32 %v377, %v386
    %390 = vrot.lane.b32.xlu0 %v388, 32
    %v391 = vpop.permute.xlu0 %390
    %v393 = vadd.f32 %v383, %v391
    %v394 = vtanh.pop %v393
    %396 = vrot.lane.b32.xlu0 %v394, 64
    %v397 = vpop.permute.xlu0 %396
    %v399 = vmul.f32 %v377, %v397
    %401 = vrot.lane.b32.xlu0 %v324, 32
    %v402 = vpop.permute.xlu0 %401
    %404 = vst.msk [vmem:[#allocation4] sm:$0x3] %vm245, %v402
    %406 = vrot.lane.b32.xlu0 %v318, 96
    %v407 = vpop.permute.xlu0 %406
    %409 = vst.msk [vmem:[#allocation5] sm:$0x3] %vm245, %v407
    %411 = vrot.lane.b32.xlu0 %v399, 32
    %v412 = vpop.permute.xlu0 %411
    %414 = vst.msk [vmem:[#allocation6] sm:$0x3] %vm245, %v412
    %416 = vrot.lane.b32.xlu0 %v393, 96
    %v417 = vpop.permute.xlu0 %416
    %419 = vst.msk [vmem:[#allocation7] sm:$0x3] %vm245, %v417
    %v420 = vpack.c.bf16 %v324, %v324
    %v422 = vrot.slane %v420, 3
    %vm423 = vcmask 1040384
    %v426 = vsel %vm423, %v420, %v422
    %428 = vrot.lane.b32.xlu0 %v426, 32
    %v429 = vpop.permute.xlu0 %428
    %vm431 = vcmask 253952
    %432 = vst.msk [vmem:[#allocation11] sm:$0x1] %vm431, %v429
    %v433 = vpack.c.bf16 %v399, %v399
    %v435 = vrot.slane %v433, 3
    %v438 = vsel %vm423, %v433, %v435
    %440 = vrot.lane.b32.xlu0 %v438, 64
    %v441 = vpop.permute.xlu0 %440
    %s443 = scalar_lea.vmem [#allocation11], 7
    %vm444 = vcmask 516352
    %445 = vst.msk [vmem:[%s443] sm:$0x1] %vm444, %v441
    %s446 = scalar_lea.vmem [#allocation2], 2
    %v447 = vld [vmem:[%s446] sm:$0x3]
    %v448 = vld [vmem:[#allocation4] sm:$0x3]
    %v449 = vld [vmem:[#allocation5] sm:$0x3]
    %v450 = vpack.c.bf16 %v448, %v448
    %v452 = vsel %vm266, %v450, 0
    %454 = vmatpush.bf16.msra.mxu0 0
    %455 = vmatpush.bf16.msra.mxu0 0
    %456 = vmatpush.bf16.msra.mxu0 0
    %457 = vmatpush.bf16.msra.mxu0 0
    %458 = vmatpush.bf16.msra.mxu0 0
    %459 = vmatpush.bf16.msra.mxu0 0
    %460 = vmatpush.bf16.msra.mxu0 %v263
    %461 = vmatpush.bf16.msra.mxu0 %v262
    %462 = vmatmul.bf16.gmra.mxu0 %v452
    %v463 = vpop.f32.mrf.mxu0
    %v464 = vadd.f32 0.0, %v463
    %v465 = vpop.f32.mrf.mxu0
    %466 = vdwg.mxu0
    %v467 = vadd.f32 %v447, %v464
    %v468 = vxor.u32 %v467, 2147483648
    %v469 = vmul.f32 %v468, 1.442695
    %v470 = vpow.pop %v469
    %v471 = vadd.f32 %v470, 1.0
    %v472 = vrcp.pop %v471
    %v473 = vmul.f32 %v471, %v472
    %v474 = vsub.f32 1.0, %v473
    %v475 = vmul.f32 %v472, %v474
    %v476 = vadd.f32 %v472, %v475
    %vm477 = vweird.f32 %v471
    %vm478 = vweird.f32 %v472
    %vm479 = vmor %vm477, %vm478
    %v480 = vsel %vm479, %v472, %v476
    %v481 = vand.u32 2147483647, %v471
    %vm482 = vcmp.eq.f32.partialorder %v481, 8.507059e+37
    %v483 = vand.u32 %v471, 2147483648
    %v484 = vor.u32 1.1754944e-38, %v483
    %v485 = vsel %vm482, %v484, %v480
    %v486 = vmul.f32 1.0, %v485
    %v487 = vtanh.pop %v467
    %489 = vrot.lane.b32.xlu0 %v449, 32
    %v490 = vpop.permute.xlu0 %489
    %v492 = vmul.f32 %v486, %v490
    %494 = vrot.lane.b32.xlu0 %v487, 64
    %v495 = vpop.permute.xlu0 %494
    %v497 = vmul.f32 %v486, %v495
    %499 = vrot.lane.b32.xlu0 %v497, 32
    %v500 = vpop.permute.xlu0 %499
    %v502 = vadd.f32 %v492, %v500
    %v503 = vtanh.pop %v502
    %505 = vrot.lane.b32.xlu0 %v503, 64
    %v506 = vpop.permute.xlu0 %505
    %v508 = vmul.f32 %v486, %v506
    %s509 = scalar_lea.vmem [#allocation3], 12
    %v510 = vld [vmem:[%s509] sm:$0x3]
    %v511 = vld [vmem:[#allocation6] sm:$0x3]
    %v512 = vld [vmem:[#allocation7] sm:$0x3]
    %v513 = vpack.c.bf16 %v511, %v511
    %v515 = vsel %vm266, %v513, 0
    %517 = vmatpush.bf16.msra.mxu0 0
    %518 = vmatpush.bf16.msra.mxu0 0
    %519 = vmatpush.bf16.msra.mxu0 0
    %520 = vmatpush.bf16.msra.mxu0 0
    %521 = vmatpush.bf16.msra.mxu0 0
    %522 = vmatpush.bf16.msra.mxu0 0
    %523 = vmatpush.bf16.msra.mxu0 %v339
    %524 = vmatpush.bf16.msra.mxu0 %v338
    %525 = vmatmul.bf16.gmra.mxu0 %v515
    %v526 = vpop.f32.mrf.mxu0
    %v527 = vadd.f32 0.0, %v526
    %v528 = vpop.f32.mrf.mxu0
    %529 = vdwg.mxu0
    %v530 = vadd.f32 %v510, %v527
    %v531 = vxor.u32 %v530, 2147483648
    %v532 = vmul.f32 %v531, 1.442695
    %v533 = vpow.pop %v532
    %v534 = vadd.f32 %v533, 1.0
    %v535 = vrcp.pop %v534
    %v536 = vmul.f32 %v534, %v535
    %v537 = vsub.f32 1.0, %v536
    %v538 = vmul.f32 %v535, %v537
    %v539 = vadd.f32 %v535, %v538
    %vm540 = vweird.f32 %v534
    %vm541 = vweird.f32 %v535
    %vm542 = vmor %vm540, %vm541
    %v543 = vsel %vm542, %v535, %v539
    %v544 = vand.u32 2147483647, %v534
    %vm545 = vcmp.eq.f32.partialorder %v544, 8.507059e+37
    %v546 = vand.u32 %v534, 2147483648
    %v547 = vor.u32 1.1754944e-38, %v546
    %v548 = vsel %vm545, %v547, %v543
    %v549 = vmul.f32 1.0, %v548
    %v550 = vtanh.pop %v530
    %552 = vrot.lane.b32.xlu0 %v512, 32
    %v553 = vpop.permute.xlu0 %552
    %v555 = vmul.f32 %v549, %v553
    %557 = vrot.lane.b32.xlu0 %v550, 64
    %v558 = vpop.permute.xlu0 %557
    %v560 = vmul.f32 %v549, %v558
    %562 = vrot.lane.b32.xlu0 %v560, 32
    %v563 = vpop.permute.xlu0 %562
    %v565 = vadd.f32 %v555, %v563
    %v566 = vtanh.pop %v565
    %568 = vrot.lane.b32.xlu0 %v566, 64
    %v569 = vpop.permute.xlu0 %568
    %v571 = vmul.f32 %v549, %v569
    %573 = vrot.lane.b32.xlu0 %v508, 32
    %v574 = vpop.permute.xlu0 %573
    %576 = vst.msk [vmem:[#allocation4] sm:$0x3] %vm245, %v574
    %578 = vrot.lane.b32.xlu0 %v502, 96
    %v579 = vpop.permute.xlu0 %578
    %581 = vst.msk [vmem:[#allocation5] sm:$0x3] %vm245, %v579
    %583 = vrot.lane.b32.xlu0 %v571, 32
    %v584 = vpop.permute.xlu0 %583
    %586 = vst.msk [vmem:[#allocation6] sm:$0x3] %vm245, %v584
    %588 = vrot.lane.b32.xlu0 %v565, 96
    %v589 = vpop.permute.xlu0 %588
    %591 = vst.msk [vmem:[#allocation7] sm:$0x3] %vm245, %v589
    %v592 = vpack.c.bf16 %v508, %v508
    %v594 = vrot.slane %v592, 3
    %v597 = vsel %vm423, %v592, %v594
    %599 = vrot.lane.b32.xlu0 %v597, 32
    %v600 = vpop.permute.xlu0 %599
    %s602 = scalar_lea.vmem [#allocation11], 1
    %603 = vst.msk [vmem:[%s602] sm:$0x1] %vm431, %v600
    %v604 = vpack.c.bf16 %v571, %v571
    %v606 = vrot.slane %v604, 3
    %v609 = vsel %vm423, %v604, %v606
    %611 = vrot.lane.b32.xlu0 %v609, 64
    %v612 = vpop.permute.xlu0 %611
    %s614 = scalar_lea.vmem [#allocation11], 6
    %615 = vst.msk [vmem:[%s614] sm:$0x1] %vm444, %v612
    %s616 = scalar_lea.vmem [#allocation2], 4
    %v617 = vld [vmem:[%s616] sm:$0x3]
    %v618 = vld [vmem:[#allocation4] sm:$0x3]
    %v619 = vld [vmem:[#allocation5] sm:$0x3]
    %v620 = vpack.c.bf16 %v618, %v618
    %v622 = vsel %vm266, %v620, 0
    %624 = vmatpush.bf16.msra.mxu0 0
    %625 = vmatpush.bf16.msra.mxu0 0
    %626 = vmatpush.bf16.msra.mxu0 0
    %627 = vmatpush.bf16.msra.mxu0 0
    %628 = vmatpush.bf16.msra.mxu0 0
    %629 = vmatpush.bf16.msra.mxu0 0
    %630 = vmatpush.bf16.msra.mxu0 %v263
    %631 = vmatpush.bf16.msra.mxu0 %v262
    %632 = vmatmul.bf16.gmra.mxu0 %v622
    %v633 = vpop.f32.mrf.mxu0
    %v634 = vadd.f32 0.0, %v633
    %v635 = vpop.f32.mrf.mxu0
    %636 = vdwg.mxu0
    %v637 = vadd.f32 %v617, %v634
    %v638 = vxor.u32 %v637, 2147483648
    %v639 = vmul.f32 %v638, 1.442695
    %v640 = vpow.pop %v639
    %v641 = vadd.f32 %v640, 1.0
    %v642 = vrcp.pop %v641
    %v643 = vmul.f32 %v641, %v642
    %v644 = vsub.f32 1.0, %v643
    %v645 = vmul.f32 %v642, %v644
    %v646 = vadd.f32 %v642, %v645
    %vm647 = vweird.f32 %v641
    %vm648 = vweird.f32 %v642
    %vm649 = vmor %vm647, %vm648
    %v650 = vsel %vm649, %v642, %v646
    %v651 = vand.u32 2147483647, %v641
    %vm652 = vcmp.eq.f32.partialorder %v651, 8.507059e+37
    %v653 = vand.u32 %v641, 2147483648
    %v654 = vor.u32 1.1754944e-38, %v653
    %v655 = vsel %vm652, %v654, %v650
    %v656 = vmul.f32 1.0, %v655
    %v657 = vtanh.pop %v637
    %659 = vrot.lane.b32.xlu0 %v619, 32
    %v660 = vpop.permute.xlu0 %659
    %v662 = vmul.f32 %v656, %v660
    %664 = vrot.lane.b32.xlu0 %v657, 64
    %v665 = vpop.permute.xlu0 %664
    %v667 = vmul.f32 %v656, %v665
    %669 = vrot.lane.b32.xlu0 %v667, 32
    %v670 = vpop.permute.xlu0 %669
    %v672 = vadd.f32 %v662, %v670
    %v673 = vtanh.pop %v672
    %675 = vrot.lane.b32.xlu0 %v673, 64
    %v676 = vpop.permute.xlu0 %675
    %v678 = vmul.f32 %v656, %v676
    %s679 = scalar_lea.vmem [#allocation3], 10
    %v680 = vld [vmem:[%s679] sm:$0x3]
    %v681 = vld [vmem:[#allocation6] sm:$0x3]
    %v682 = vld [vmem:[#allocation7] sm:$0x3]
    %v683 = vpack.c.bf16 %v681, %v681
    %v685 = vsel %vm266, %v683, 0
    %687 = vmatpush.bf16.msra.mxu0 0
    %688 = vmatpush.bf16.msra.mxu0 0
    %689 = vmatpush.bf16.msra.mxu0 0
    %690 = vmatpush.bf16.msra.mxu0 0
    %691 = vmatpush.bf16.msra.mxu0 0
    %692 = vmatpush.bf16.msra.mxu0 0
    %693 = vmatpush.bf16.msra.mxu0 %v339
    %694 = vmatpush.bf16.msra.mxu0 %v338
    %695 = vmatmul.bf16.gmra.mxu0 %v685
    %v696 = vpop.f32.mrf.mxu0
    %v697 = vadd.f32 0.0, %v696
    %v698 = vpop.f32.mrf.mxu0
    %699 = vdwg.mxu0
    %v700 = vadd.f32 %v680, %v697
    %v701 = vxor.u32 %v700, 2147483648
    %v702 = vmul.f32 %v701, 1.442695
    %v703 = vpow.pop %v702
    %v704 = vadd.f32 %v703, 1.0
    %v705 = vrcp.pop %v704
    %v706 = vmul.f32 %v704, %v705
    %v707 = vsub.f32 1.0, %v706
    %v708 = vmul.f32 %v705, %v707
    %v709 = vadd.f32 %v705, %v708
    %vm710 = vweird.f32 %v704
    %vm711 = vweird.f32 %v705
    %vm712 = vmor %vm710, %vm711
    %v713 = vsel %vm712, %v705, %v709
    %v714 = vand.u32 2147483647, %v704
    %vm715 = vcmp.eq.f32.partialorder %v714, 8.507059e+37
    %v716 = vand.u32 %v704, 2147483648
    %v717 = vor.u32 1.1754944e-38, %v716
    %v718 = vsel %vm715, %v717, %v713
    %v719 = vmul.f32 1.0, %v718
    %v720 = vtanh.pop %v700
    %722 = vrot.lane.b32.xlu0 %v682, 32
    %v723 = vpop.permute.xlu0 %722
    %v725 = vmul.f32 %v719, %v723
    %727 = vrot.lane.b32.xlu0 %v720, 64
    %v728 = vpop.permute.xlu0 %727
    %v730 = vmul.f32 %v719, %v728
    %732 = vrot.lane.b32.xlu0 %v730, 32
    %v733 = vpop.permute.xlu0 %732
    %v735 = vadd.f32 %v725, %v733
    %v736 = vtanh.pop %v735
    %738 = vrot.lane.b32.xlu0 %v736, 64
    %v739 = vpop.permute.xlu0 %738
    %v741 = vmul.f32 %v719, %v739
    %743 = vrot.lane.b32.xlu0 %v678, 32
    %v744 = vpop.permute.xlu0 %743
    %746 = vst.msk [vmem:[#allocation4] sm:$0x3] %vm245, %v744
    %748 = vrot.lane.b32.xlu0 %v672, 96
    %v749 = vpop.permute.xlu0 %748
    %751 = vst.msk [vmem:[#allocation5] sm:$0x3] %vm245, %v749
    %753 = vrot.lane.b32.xlu0 %v741, 32
    %v754 = vpop.permute.xlu0 %753
    %756 = vst.msk [vmem:[#allocation6] sm:$0x3] %vm245, %v754
    %758 = vrot.lane.b32.xlu0 %v735, 96
    %v759 = vpop.permute.xlu0 %758
    %761 = vst.msk [vmem:[#allocation7] sm:$0x3] %vm245, %v759
    %v762 = vpack.c.bf16 %v678, %v678
    %v764 = vrot.slane %v762, 3
    %v767 = vsel %vm423, %v762, %v764
    %769 = vrot.lane.b32.xlu0 %v767, 32
    %v770 = vpop.permute.xlu0 %769
    %s772 = scalar_lea.vmem [#allocation11], 2
    %773 = vst.msk [vmem:[%s772] sm:$0x1] %vm431, %v770
    %v774 = vpack.c.bf16 %v741, %v741
    %v776 = vrot.slane %v774, 3
    %v779 = vsel %vm423, %v774, %v776
    %781 = vrot.lane.b32.xlu0 %v779, 64
    %v782 = vpop.permute.xlu0 %781
    %s784 = scalar_lea.vmem [#allocation11], 5
    %785 = vst.msk [vmem:[%s784] sm:$0x1] %vm444, %v782
    %s786 = scalar_lea.vmem [#allocation2], 6
    %v787 = vld [vmem:[%s786] sm:$0x3]
    %v788 = vld [vmem:[#allocation4] sm:$0x3]
    %v789 = vld [vmem:[#allocation5] sm:$0x3]
    %v790 = vpack.c.bf16 %v788, %v788
    %v792 = vsel %vm266, %v790, 0
    %794 = vmatpush.bf16.msra.mxu0 0
    %795 = vmatpush.bf16.msra.mxu0 0
    %796 = vmatpush.bf16.msra.mxu0 0
    %797 = vmatpush.bf16.msra.mxu0 0
    %798 = vmatpush.bf16.msra.mxu0 0
    %799 = vmatpush.bf16.msra.mxu0 0
    %800 = vmatpush.bf16.msra.mxu0 %v263
    %801 = vmatpush.bf16.msra.mxu0 %v262
    %802 = vmatmul.bf16.gmra.mxu0 %v792
    %v803 = vpop.f32.mrf.mxu0
    %v804 = vadd.f32 0.0, %v803
    %v805 = vpop.f32.mrf.mxu0
    %806 = vdwg.mxu0
    %v807 = vadd.f32 %v787, %v804
    %v808 = vxor.u32 %v807, 2147483648
    %v809 = vmul.f32 %v808, 1.442695
    %v810 = vpow.pop %v809
    %v811 = vadd.f32 %v810, 1.0
    %v812 = vrcp.pop %v811
    %v813 = vmul.f32 %v811, %v812
    %v814 = vsub.f32 1.0, %v813
    %v815 = vmul.f32 %v812, %v814
    %v816 = vadd.f32 %v812, %v815
    %vm817 = vweird.f32 %v811
    %vm818 = vweird.f32 %v812
    %vm819 = vmor %vm817, %vm818
    %v820 = vsel %vm819, %v812, %v816
    %v821 = vand.u32 2147483647, %v811
    %vm822 = vcmp.eq.f32.partialorder %v821, 8.507059e+37
    %v823 = vand.u32 %v811, 2147483648
    %v824 = vor.u32 1.1754944e-38, %v823
    %v825 = vsel %vm822, %v824, %v820
    %v826 = vmul.f32 1.0, %v825
    %v827 = vtanh.pop %v807
    %829 = vrot.lane.b32.xlu0 %v789, 32
    %v830 = vpop.permute.xlu0 %829
    %v832 = vmul.f32 %v826, %v830
    %834 = vrot.lane.b32.xlu0 %v827, 64
    %v835 = vpop.permute.xlu0 %834
    %v837 = vmul.f32 %v826, %v835
    %839 = vrot.lane.b32.xlu0 %v837, 32
    %v840 = vpop.permute.xlu0 %839
    %v842 = vadd.f32 %v832, %v840
    %v843 = vtanh.pop %v842
    %845 = vrot.lane.b32.xlu0 %v843, 64
    %v846 = vpop.permute.xlu0 %845
    %v848 = vmul.f32 %v826, %v846
    %s849 = scalar_lea.vmem [#allocation3], 8
    %v850 = vld [vmem:[%s849] sm:$0x3]
    %v851 = vld [vmem:[#allocation6] sm:$0x3]
    %v852 = vld [vmem:[#allocation7] sm:$0x3]
    %v853 = vpack.c.bf16 %v851, %v851
    %v855 = vsel %vm266, %v853, 0
    %857 = vmatpush.bf16.msra.mxu0 0
    %858 = vmatpush.bf16.msra.mxu0 0
    %859 = vmatpush.bf16.msra.mxu0 0
    %860 = vmatpush.bf16.msra.mxu0 0
    %861 = vmatpush.bf16.msra.mxu0 0
    %862 = vmatpush.bf16.msra.mxu0 0
    %863 = vmatpush.bf16.msra.mxu0 %v339
    %864 = vmatpush.bf16.msra.mxu0 %v338
    %865 = vmatmul.bf16.gmra.mxu0 %v855
    %v866 = vpop.f32.mrf.mxu0
    %v867 = vadd.f32 0.0, %v866
    %v868 = vpop.f32.mrf.mxu0
    %869 = vdwg.mxu0
    %v870 = vadd.f32 %v850, %v867
    %v871 = vxor.u32 %v870, 2147483648
    %v872 = vmul.f32 %v871, 1.442695
    %v873 = vpow.pop %v872
    %v874 = vadd.f32 %v873, 1.0
    %v875 = vrcp.pop %v874
    %v876 = vmul.f32 %v874, %v875
    %v877 = vsub.f32 1.0, %v876
    %v878 = vmul.f32 %v875, %v877
    %v879 = vadd.f32 %v875, %v878
    %vm880 = vweird.f32 %v874
    %vm881 = vweird.f32 %v875
    %vm882 = vmor %vm880, %vm881
    %v883 = vsel %vm882, %v875, %v879
    %v884 = vand.u32 2147483647, %v874
    %vm885 = vcmp.eq.f32.partialorder %v884, 8.507059e+37
    %v886 = vand.u32 %v874, 2147483648
    %v887 = vor.u32 1.1754944e-38, %v886
    %v888 = vsel %vm885, %v887, %v883
    %v889 = vmul.f32 1.0, %v888
    %v890 = vtanh.pop %v870
    %892 = vrot.lane.b32.xlu0 %v852, 32
    %v893 = vpop.permute.xlu0 %892
    %v895 = vmul.f32 %v889, %v893
    %897 = vrot.lane.b32.xlu0 %v890, 64
    %v898 = vpop.permute.xlu0 %897
    %v900 = vmul.f32 %v889, %v898
    %902 = vrot.lane.b32.xlu0 %v900, 32
    %v903 = vpop.permute.xlu0 %902
    %v905 = vadd.f32 %v895, %v903
    %v906 = vtanh.pop %v905
    %908 = vrot.lane.b32.xlu0 %v906, 64
    %v909 = vpop.permute.xlu0 %908
    %v911 = vmul.f32 %v889, %v909
    %913 = vrot.lane.b32.xlu0 %v848, 32
    %v914 = vpop.permute.xlu0 %913
    %916 = vst.msk [vmem:[#allocation4] sm:$0x3] %vm245, %v914
    %918 = vrot.lane.b32.xlu0 %v842, 96
    %v919 = vpop.permute.xlu0 %918
    %921 = vst.msk [vmem:[#allocation5] sm:$0x3] %vm245, %v919
    %923 = vrot.lane.b32.xlu0 %v911, 32
    %v924 = vpop.permute.xlu0 %923
    %926 = vst.msk [vmem:[#allocation6] sm:$0x3] %vm245, %v924
    %928 = vrot.lane.b32.xlu0 %v905, 96
    %v929 = vpop.permute.xlu0 %928
    %931 = vst.msk [vmem:[#allocation7] sm:$0x3] %vm245, %v929
    %v932 = vpack.c.bf16 %v848, %v848
    %v934 = vrot.slane %v932, 3
    %v937 = vsel %vm423, %v932, %v934
    %939 = vrot.lane.b32.xlu0 %v937, 32
    %v940 = vpop.permute.xlu0 %939
    %s942 = scalar_lea.vmem [#allocation11], 3
    %943 = vst.msk [vmem:[%s942] sm:$0x1] %vm431, %v940
    %v944 = vpack.c.bf16 %v911, %v911
    %v946 = vrot.slane %v944, 3
    %v949 = vsel %vm423, %v944, %v946
    %951 = vrot.lane.b32.xlu0 %v949, 64
    %v952 = vpop.permute.xlu0 %951
    %s954 = scalar_lea.vmem [#allocation11], 4
    %955 = vst.msk [vmem:[%s954] sm:$0x1] %vm444, %v952
    %s956 = scalar_lea.vmem [#allocation2], 8
    %v957 = vld [vmem:[%s956] sm:$0x3]
    %v958 = vld [vmem:[#allocation4] sm:$0x3]
    %v959 = vld [vmem:[#allocation5] sm:$0x3]
    %v960 = vpack.c.bf16 %v958, %v958
    %v962 = vsel %vm266, %v960, 0
    %964 = vmatpush.bf16.msra.mxu0 0
    %965 = vmatpush.bf16.msra.mxu0 0
    %966 = vmatpush.bf16.msra.mxu0 0
    %967 = vmatpush.bf16.msra.mxu0 0
    %968 = vmatpush.bf16.msra.mxu0 0
    %969 = vmatpush.bf16.msra.mxu0 0
    %970 = vmatpush.bf16.msra.mxu0 %v263
    %971 = vmatpush.bf16.msra.mxu0 %v262
    %972 = vmatmul.bf16.gmra.mxu0 %v962
    %v973 = vpop.f32.mrf.mxu0
    %v974 = vadd.f32 0.0, %v973
    %v975 = vpop.f32.mrf.mxu0
    %976 = vdwg.mxu0
    %v977 = vadd.f32 %v957, %v974
    %v978 = vxor.u32 %v977, 2147483648
    %v979 = vmul.f32 %v978, 1.442695
    %v980 = vpow.pop %v979
    %v981 = vadd.f32 %v980, 1.0
    %v982 = vrcp.pop %v981
    %v983 = vmul.f32 %v981, %v982
    %v984 = vsub.f32 1.0, %v983
    %v985 = vmul.f32 %v982, %v984
    %v986 = vadd.f32 %v982, %v985
    %vm987 = vweird.f32 %v981
    %vm988 = vweird.f32 %v982
    %vm989 = vmor %vm987, %vm988
    %v990 = vsel %vm989, %v982, %v986
    %v991 = vand.u32 2147483647, %v981
    %vm992 = vcmp.eq.f32.partialorder %v991, 8.507059e+37
    %v993 = vand.u32 %v981, 2147483648
    %v994 = vor.u32 1.1754944e-38, %v993
    %v995 = vsel %vm992, %v994, %v990
    %v996 = vmul.f32 1.0, %v995
    %v997 = vtanh.pop %v977
    %999 = vrot.lane.b32.xlu0 %v959, 32
    %v1000 = vpop.permute.xlu0 %999
    %v1002 = vmul.f32 %v996, %v1000
    %1004 = vrot.lane.b32.xlu0 %v997, 64
    %v1005 = vpop.permute.xlu0 %1004
    %v1007 = vmul.f32 %v996, %v1005
    %1009 = vrot.lane.b32.xlu0 %v1007, 32
    %v1010 = vpop.permute.xlu0 %1009
    %v1012 = vadd.f32 %v1002, %v1010
    %v1013 = vtanh.pop %v1012
    %1015 = vrot.lane.b32.xlu0 %v1013, 64
    %v1016 = vpop.permute.xlu0 %1015
    %v1018 = vmul.f32 %v996, %v1016
    %s1019 = scalar_lea.vmem [#allocation3], 6
    %v1020 = vld [vmem:[%s1019] sm:$0x3]
    %v1021 = vld [vmem:[#allocation6] sm:$0x3]
    %v1022 = vld [vmem:[#allocation7] sm:$0x3]
    %v1023 = vpack.c.bf16 %v1021, %v1021
    %v1025 = vsel %vm266, %v1023, 0
    %1027 = vmatpush.bf16.msra.mxu0 0
    %1028 = vmatpush.bf16.msra.mxu0 0
    %1029 = vmatpush.bf16.msra.mxu0 0
    %1030 = vmatpush.bf16.msra.mxu0 0
    %1031 = vmatpush.bf16.msra.mxu0 0
    %1032 = vmatpush.bf16.msra.mxu0 0
    %1033 = vmatpush.bf16.msra.mxu0 %v339
    %1034 = vmatpush.bf16.msra.mxu0 %v338
    %1035 = vmatmul.bf16.gmra.mxu0 %v1025
    %v1036 = vpop.f32.mrf.mxu0
    %v1037 = vadd.f32 0.0, %v1036
    %v1038 = vpop.f32.mrf.mxu0
    %1039 = vdwg.mxu0
    %v1040 = vadd.f32 %v1020, %v1037
    %v1041 = vxor.u32 %v1040, 2147483648
    %v1042 = vmul.f32 %v1041, 1.442695
    %v1043 = vpow.pop %v1042
    %v1044 = vadd.f32 %v1043, 1.0
    %v1045 = vrcp.pop %v1044
    %v1046 = vmul.f32 %v1044, %v1045
    %v1047 = vsub.f32 1.0, %v1046
    %v1048 = vmul.f32 %v1045, %v1047
    %v1049 = vadd.f32 %v1045, %v1048
    %vm1050 = vweird.f32 %v1044
    %vm1051 = vweird.f32 %v1045
    %vm1052 = vmor %vm1050, %vm1051
    %v1053 = vsel %vm1052, %v1045, %v1049
    %v1054 = vand.u32 2147483647, %v1044
    %vm1055 = vcmp.eq.f32.partialorder %v1054, 8.507059e+37
    %v1056 = vand.u32 %v1044, 2147483648
    %v1057 = vor.u32 1.1754944e-38, %v1056
    %v1058 = vsel %vm1055, %v1057, %v1053
    %v1059 = vmul.f32 1.0, %v1058
    %v1060 = vtanh.pop %v1040
    %1062 = vrot.lane.b32.xlu0 %v1022, 32
    %v1063 = vpop.permute.xlu0 %1062
    %v1065 = vmul.f32 %v1059, %v1063
    %1067 = vrot.lane.b32.xlu0 %v1060, 64
    %v1068 = vpop.permute.xlu0 %1067
    %v1070 = vmul.f32 %v1059, %v1068
    %1072 = vrot.lane.b32.xlu0 %v1070, 32
    %v1073 = vpop.permute.xlu0 %1072
    %v1075 = vadd.f32 %v1065, %v1073
    %v1076 = vtanh.pop %v1075
    %1078 = vrot.lane.b32.xlu0 %v1076, 64
    %v1079 = vpop.permute.xlu0 %1078
    %v1081 = vmul.f32 %v1059, %v1079
    %1083 = vrot.lane.b32.xlu0 %v1018, 32
    %v1084 = vpop.permute.xlu0 %1083
    %1086 = vst.msk [vmem:[#allocation4] sm:$0x3] %vm245, %v1084
    %1088 = vrot.lane.b32.xlu0 %v1012, 96
    %v1089 = vpop.permute.xlu0 %1088
    %1091 = vst.msk [vmem:[#allocation5] sm:$0x3] %vm245, %v1089
    %1093 = vrot.lane.b32.xlu0 %v1081, 32
    %v1094 = vpop.permute.xlu0 %1093
    %1096 = vst.msk [vmem:[#allocation6] sm:$0x3] %vm245, %v1094
    %1098 = vrot.lane.b32.xlu0 %v1075, 96
    %v1099 = vpop.permute.xlu0 %1098
    %1101 = vst.msk [vmem:[#allocation7] sm:$0x3] %vm245, %v1099
    %v1102 = vpack.c.bf16 %v1018, %v1018
    %v1104 = vrot.slane %v1102, 3
    %v1107 = vsel %vm423, %v1102, %v1104
    %1109 = vrot.lane.b32.xlu0 %v1107, 32
    %v1110 = vpop.permute.xlu0 %1109
    %1112 = vst.msk [vmem:[%s954] sm:$0x1] %vm431, %v1110
    %v1113 = vpack.c.bf16 %v1081, %v1081
    %v1115 = vrot.slane %v1113, 3
    %v1118 = vsel %vm423, %v1113, %v1115
    %1120 = vrot.lane.b32.xlu0 %v1118, 64
    %v1121 = vpop.permute.xlu0 %1120
    %1123 = vst.msk [vmem:[%s942] sm:$0x1] %vm444, %v1121
    %s1124 = scalar_lea.vmem [#allocation2], 10
    %v1125 = vld [vmem:[%s1124] sm:$0x3]
    %v1126 = vld [vmem:[#allocation4] sm:$0x3]
    %v1127 = vld [vmem:[#allocation5] sm:$0x3]
    %v1128 = vpack.c.bf16 %v1126, %v1126
    %v1130 = vsel %vm266, %v1128, 0
    %1132 = vmatpush.bf16.msra.mxu0 0
    %1133 = vmatpush.bf16.msra.mxu0 0
    %1134 = vmatpush.bf16.msra.mxu0 0
    %1135 = vmatpush.bf16.msra.mxu0 0
    %1136 = vmatpush.bf16.msra.mxu0 0
    %1137 = vmatpush.bf16.msra.mxu0 0
    %1138 = vmatpush.bf16.msra.mxu0 %v263
    %1139 = vmatpush.bf16.msra.mxu0 %v262
    %1140 = vmatmul.bf16.gmra.mxu0 %v1130
    %v1141 = vpop.f32.mrf.mxu0
    %v1142 = vadd.f32 0.0, %v1141
    %v1143 = vpop.f32.mrf.mxu0
    %1144 = vdwg.mxu0
    %v1145 = vadd.f32 %v1125, %v1142
    %v1146 = vxor.u32 %v1145, 2147483648
    %v1147 = vmul.f32 %v1146, 1.442695
    %v1148 = vpow.pop %v1147
    %v1149 = vadd.f32 %v1148, 1.0
    %v1150 = vrcp.pop %v1149
    %v1151 = vmul.f32 %v1149, %v1150
    %v1152 = vsub.f32 1.0, %v1151
    %v1153 = vmul.f32 %v1150, %v1152
    %v1154 = vadd.f32 %v1150, %v1153
    %vm1155 = vweird.f32 %v1149
    %vm1156 = vweird.f32 %v1150
    %vm1157 = vmor %vm1155, %vm1156
    %v1158 = vsel %vm1157, %v1150, %v1154
    %v1159 = vand.u32 2147483647, %v1149
    %vm1160 = vcmp.eq.f32.partialorder %v1159, 8.507059e+37
    %v1161 = vand.u32 %v1149, 2147483648
    %v1162 = vor.u32 1.1754944e-38, %v1161
    %v1163 = vsel %vm1160, %v1162, %v1158
    %v1164 = vmul.f32 1.0, %v1163
    %v1165 = vtanh.pop %v1145
    %1167 = vrot.lane.b32.xlu0 %v1127, 32
    %v1168 = vpop.permute.xlu0 %1167
    %v1170 = vmul.f32 %v1164, %v1168
    %1172 = vrot.lane.b32.xlu0 %v1165, 64
    %v1173 = vpop.permute.xlu0 %1172
    %v1175 = vmul.f32 %v1164, %v1173
    %1177 = vrot.lane.b32.xlu0 %v1175, 32
    %v1178 = vpop.permute.xlu0 %1177
    %v1180 = vadd.f32 %v1170, %v1178
    %v1181 = vtanh.pop %v1180
    %1183 = vrot.lane.b32.xlu0 %v1181, 64
    %v1184 = vpop.permute.xlu0 %1183
    %v1186 = vmul.f32 %v1164, %v1184
    %s1187 = scalar_lea.vmem [#allocation3], 4
    %v1188 = vld [vmem:[%s1187] sm:$0x3]
    %v1189 = vld [vmem:[#allocation6] sm:$0x3]
    %v1190 = vld [vmem:[#allocation7] sm:$0x3]
    %v1191 = vpack.c.bf16 %v1189, %v1189
    %v1193 = vsel %vm266, %v1191, 0
    %1195 = vmatpush.bf16.msra.mxu0 0
    %1196 = vmatpush.bf16.msra.mxu0 0
    %1197 = vmatpush.bf16.msra.mxu0 0
    %1198 = vmatpush.bf16.msra.mxu0 0
    %1199 = vmatpush.bf16.msra.mxu0 0
    %1200 = vmatpush.bf16.msra.mxu0 0
    %1201 = vmatpush.bf16.msra.mxu0 %v339
    %1202 = vmatpush.bf16.msra.mxu0 %v338
    %1203 = vmatmul.bf16.gmra.mxu0 %v1193
    %v1204 = vpop.f32.mrf.mxu0
    %v1205 = vadd.f32 0.0, %v1204
    %v1206 = vpop.f32.mrf.mxu0
    %1207 = vdwg.mxu0
    %v1208 = vadd.f32 %v1188, %v1205
    %v1209 = vxor.u32 %v1208, 2147483648
    %v1210 = vmul.f32 %v1209, 1.442695
    %v1211 = vpow.pop %v1210
    %v1212 = vadd.f32 %v1211, 1.0
    %v1213 = vrcp.pop %v1212
    %v1214 = vmul.f32 %v1212, %v1213
    %v1215 = vsub.f32 1.0, %v1214
    %v1216 = vmul.f32 %v1213, %v1215
    %v1217 = vadd.f32 %v1213, %v1216
    %vm1218 = vweird.f32 %v1212
    %vm1219 = vweird.f32 %v1213
    %vm1220 = vmor %vm1218, %vm1219
    %v1221 = vsel %vm1220, %v1213, %v1217
    %v1222 = vand.u32 2147483647, %v1212
    %vm1223 = vcmp.eq.f32.partialorder %v1222, 8.507059e+37
    %v1224 = vand.u32 %v1212, 2147483648
    %v1225 = vor.u32 1.1754944e-38, %v1224
    %v1226 = vsel %vm1223, %v1225, %v1221
    %v1227 = vmul.f32 1.0, %v1226
    %v1228 = vtanh.pop %v1208
    %1230 = vrot.lane.b32.xlu0 %v1190, 32
    %v1231 = vpop.permute.xlu0 %1230
    %v1233 = vmul.f32 %v1227, %v1231
    %1235 = vrot.lane.b32.xlu0 %v1228, 64
    %v1236 = vpop.permute.xlu0 %1235
    %v1238 = vmul.f32 %v1227, %v1236
    %1240 = vrot.lane.b32.xlu0 %v1238, 32
    %v1241 = vpop.permute.xlu0 %1240
    %v1243 = vadd.f32 %v1233, %v1241
    %v1244 = vtanh.pop %v1243
    %1246 = vrot.lane.b32.xlu0 %v1244, 64
    %v1247 = vpop.permute.xlu0 %1246
    %v1249 = vmul.f32 %v1227, %v1247
    %1251 = vrot.lane.b32.xlu0 %v1186, 32
    %v1252 = vpop.permute.xlu0 %1251
    %1254 = vst.msk [vmem:[#allocation4] sm:$0x3] %vm245, %v1252
    %1256 = vrot.lane.b32.xlu0 %v1180, 96
    %v1257 = vpop.permute.xlu0 %1256
    %1259 = vst.msk [vmem:[#allocation5] sm:$0x3] %vm245, %v1257
    %1261 = vrot.lane.b32.xlu0 %v1249, 32
    %v1262 = vpop.permute.xlu0 %1261
    %1264 = vst.msk [vmem:[#allocation6] sm:$0x3] %vm245, %v1262
    %1266 = vrot.lane.b32.xlu0 %v1243, 96
    %v1267 = vpop.permute.xlu0 %1266
    %1269 = vst.msk [vmem:[#allocation7] sm:$0x3] %vm245, %v1267
    %v1270 = vpack.c.bf16 %v1186, %v1186
    %v1272 = vrot.slane %v1270, 3
    %v1275 = vsel %vm423, %v1270, %v1272
    %1277 = vrot.lane.b32.xlu0 %v1275, 32
    %v1278 = vpop.permute.xlu0 %1277
    %1280 = vst.msk [vmem:[%s784] sm:$0x1] %vm431, %v1278
    %v1281 = vpack.c.bf16 %v1249, %v1249
    %v1283 = vrot.slane %v1281, 3
    %v1286 = vsel %vm423, %v1281, %v1283
    %1288 = vrot.lane.b32.xlu0 %v1286, 64
    %v1289 = vpop.permute.xlu0 %1288
    %1291 = vst.msk [vmem:[%s772] sm:$0x1] %vm444, %v1289
    %s1292 = scalar_lea.vmem [#allocation2], 12
    %v1293 = vld [vmem:[%s1292] sm:$0x3]
    %v1294 = vld [vmem:[#allocation4] sm:$0x3]
    %v1295 = vld [vmem:[#allocation5] sm:$0x3]
    %v1296 = vpack.c.bf16 %v1294, %v1294
    %v1298 = vsel %vm266, %v1296, 0
    %1300 = vmatpush.bf16.msra.mxu0 0
    %1301 = vmatpush.bf16.msra.mxu0 0
    %1302 = vmatpush.bf16.msra.mxu0 0
    %1303 = vmatpush.bf16.msra.mxu0 0
    %1304 = vmatpush.bf16.msra.mxu0 0
    %1305 = vmatpush.bf16.msra.mxu0 0
    %1306 = vmatpush.bf16.msra.mxu0 %v263
    %1307 = vmatpush.bf16.msra.mxu0 %v262
    %1308 = vmatmul.bf16.gmra.mxu0 %v1298
    %v1309 = vpop.f32.mrf.mxu0
    %v1310 = vadd.f32 0.0, %v1309
    %v1311 = vpop.f32.mrf.mxu0
    %1312 = vdwg.mxu0
    %v1313 = vadd.f32 %v1293, %v1310
    %v1314 = vxor.u32 %v1313, 2147483648
    %v1315 = vmul.f32 %v1314, 1.442695
    %v1316 = vpow.pop %v1315
    %v1317 = vadd.f32 %v1316, 1.0
    %v1318 = vrcp.pop %v1317
    %v1319 = vmul.f32 %v1317, %v1318
    %v1320 = vsub.f32 1.0, %v1319
    %v1321 = vmul.f32 %v1318, %v1320
    %v1322 = vadd.f32 %v1318, %v1321
    %vm1323 = vweird.f32 %v1317
    %vm1324 = vweird.f32 %v1318
    %vm1325 = vmor %vm1323, %vm1324
    %v1326 = vsel %vm1325, %v1318, %v1322
    %v1327 = vand.u32 2147483647, %v1317
    %vm1328 = vcmp.eq.f32.partialorder %v1327, 8.507059e+37
    %v1329 = vand.u32 %v1317, 2147483648
    %v1330 = vor.u32 1.1754944e-38, %v1329
    %v1331 = vsel %vm1328, %v1330, %v1326
    %v1332 = vmul.f32 1.0, %v1331
    %v1333 = vtanh.pop %v1313
    %1335 = vrot.lane.b32.xlu0 %v1295, 32
    %v1336 = vpop.permute.xlu0 %1335
    %v1338 = vmul.f32 %v1332, %v1336
    %1340 = vrot.lane.b32.xlu0 %v1333, 64
    %v1341 = vpop.permute.xlu0 %1340
    %v1343 = vmul.f32 %v1332, %v1341
    %1345 = vrot.lane.b32.xlu0 %v1343, 32
    %v1346 = vpop.permute.xlu0 %1345
    %v1348 = vadd.f32 %v1338, %v1346
    %v1349 = vtanh.pop %v1348
    %1351 = vrot.lane.b32.xlu0 %v1349, 64
    %v1352 = vpop.permute.xlu0 %1351
    %v1354 = vmul.f32 %v1332, %v1352
    %s1355 = scalar_lea.vmem [#allocation3], 2
    %v1356 = vld [vmem:[%s1355] sm:$0x3]
    %v1357 = vld [vmem:[#allocation6] sm:$0x3]
    %v1358 = vld [vmem:[#allocation7] sm:$0x3]
    %v1359 = vpack.c.bf16 %v1357, %v1357
    %v1361 = vsel %vm266, %v1359, 0
    %1363 = vmatpush.bf16.msra.mxu0 0
    %1364 = vmatpush.bf16.msra.mxu0 0
    %1365 = vmatpush.bf16.msra.mxu0 0
    %1366 = vmatpush.bf16.msra.mxu0 0
    %1367 = vmatpush.bf16.msra.mxu0 0
    %1368 = vmatpush.bf16.msra.mxu0 0
    %1369 = vmatpush.bf16.msra.mxu0 %v339
    %1370 = vmatpush.bf16.msra.mxu0 %v338
    %1371 = vmatmul.bf16.gmra.mxu0 %v1361
    %v1372 = vpop.f32.mrf.mxu0
    %v1373 = vadd.f32 0.0, %v1372
    %v1374 = vpop.f32.mrf.mxu0
    %1375 = vdwg.mxu0
    %v1376 = vadd.f32 %v1356, %v1373
    %v1377 = vxor.u32 %v1376, 2147483648
    %v1378 = vmul.f32 %v1377, 1.442695
    %v1379 = vpow.pop %v1378
    %v1380 = vadd.f32 %v1379, 1.0
    %v1381 = vrcp.pop %v1380
    %v1382 = vmul.f32 %v1380, %v1381
    %v1383 = vsub.f32 1.0, %v1382
    %v1384 = vmul.f32 %v1381, %v1383
    %v1385 = vadd.f32 %v1381, %v1384
    %vm1386 = vweird.f32 %v1380
    %vm1387 = vweird.f32 %v1381
    %vm1388 = vmor %vm1386, %vm1387
    %v1389 = vsel %vm1388, %v1381, %v1385
    %v1390 = vand.u32 2147483647, %v1380
    %vm1391 = vcmp.eq.f32.partialorder %v1390, 8.507059e+37
    %v1392 = vand.u32 %v1380, 2147483648
    %v1393 = vor.u32 1.1754944e-38, %v1392
    %v1394 = vsel %vm1391, %v1393, %v1389
    %v1395 = vmul.f32 1.0, %v1394
    %v1396 = vtanh.pop %v1376
    %1398 = vrot.lane.b32.xlu0 %v1358, 32
    %v1399 = vpop.permute.xlu0 %1398
    %v1401 = vmul.f32 %v1395, %v1399
    %1403 = vrot.lane.b32.xlu0 %v1396, 64
    %v1404 = vpop.permute.xlu0 %1403
    %v1406 = vmul.f32 %v1395, %v1404
    %1408 = vrot.lane.b32.xlu0 %v1406, 32
    %v1409 = vpop.permute.xlu0 %1408
    %v1411 = vadd.f32 %v1401, %v1409
    %v1412 = vtanh.pop %v1411
    %1414 = vrot.lane.b32.xlu0 %v1412, 64
    %v1415 = vpop.permute.xlu0 %1414
    %v1417 = vmul.f32 %v1395, %v1415
    %1419 = vrot.lane.b32.xlu0 %v1354, 32
    %v1420 = vpop.permute.xlu0 %1419
    %1422 = vst.msk [vmem:[#allocation4] sm:$0x3] %vm245, %v1420
    %1424 = vrot.lane.b32.xlu0 %v1348, 96
    %v1425 = vpop.permute.xlu0 %1424
    %1427 = vst.msk [vmem:[#allocation5] sm:$0x3] %vm245, %v1425
    %1429 = vrot.lane.b32.xlu0 %v1417, 32
    %v1430 = vpop.permute.xlu0 %1429
    %1432 = vst.msk [vmem:[#allocation6] sm:$0x3] %vm245, %v1430
    %1434 = vrot.lane.b32.xlu0 %v1411, 96
    %v1435 = vpop.permute.xlu0 %1434
    %1437 = vst.msk [vmem:[#allocation7] sm:$0x3] %vm245, %v1435
    %v1438 = vpack.c.bf16 %v1354, %v1354
    %v1440 = vrot.slane %v1438, 3
    %v1443 = vsel %vm423, %v1438, %v1440
    %1445 = vrot.lane.b32.xlu0 %v1443, 32
    %v1446 = vpop.permute.xlu0 %1445
    %1448 = vst.msk [vmem:[%s614] sm:$0x1] %vm431, %v1446
    %v1449 = vpack.c.bf16 %v1417, %v1417
    %v1451 = vrot.slane %v1449, 3
    %v1454 = vsel %vm423, %v1449, %v1451
    %1456 = vrot.lane.b32.xlu0 %v1454, 64
    %v1457 = vpop.permute.xlu0 %1456
    %1459 = vst.msk [vmem:[%s602] sm:$0x1] %vm444, %v1457
    %s1460 = scalar_lea.vmem [#allocation2], 14
    %v1461 = vld [vmem:[%s1460] sm:$0x3]
    %v1462 = vld [vmem:[#allocation4] sm:$0x3]
    %v1463 = vld [vmem:[#allocation5] sm:$0x3]
    %v1464 = vpack.c.bf16 %v1462, %v1462
    %v1466 = vsel %vm266, %v1464, 0
    %1468 = vmatpush.bf16.msra.mxu0 0
    %1469 = vmatpush.bf16.msra.mxu0 0
    %1470 = vmatpush.bf16.msra.mxu0 0
    %1471 = vmatpush.bf16.msra.mxu0 0
    %1472 = vmatpush.bf16.msra.mxu0 0
    %1473 = vmatpush.bf16.msra.mxu0 0
    %1474 = vmatpush.bf16.msra.mxu0 %v263
    %1475 = vmatpush.bf16.msra.mxu0 %v262
    %1476 = vmatmul.bf16.gmra.mxu0 %v1466
    %v1477 = vpop.f32.mrf.mxu0
    %v1478 = vadd.f32 0.0, %v1477
    %v1479 = vpop.f32.mrf.mxu0
    %1480 = vdwg.mxu0
    %v1481 = vadd.f32 %v1461, %v1478
    %v1482 = vxor.u32 %v1481, 2147483648
    %v1483 = vmul.f32 %v1482, 1.442695
    %v1484 = vpow.pop %v1483
    %v1485 = vadd.f32 %v1484, 1.0
    %v1486 = vrcp.pop %v1485
    %v1487 = vmul.f32 %v1485, %v1486
    %v1488 = vsub.f32 1.0, %v1487
    %v1489 = vmul.f32 %v1486, %v1488
    %v1490 = vadd.f32 %v1486, %v1489
    %vm1491 = vweird.f32 %v1485
    %vm1492 = vweird.f32 %v1486
    %vm1493 = vmor %vm1491, %vm1492
    %v1494 = vsel %vm1493, %v1486, %v1490
    %v1495 = vand.u32 2147483647, %v1485
    %vm1496 = vcmp.eq.f32.partialorder %v1495, 8.507059e+37
    %v1497 = vand.u32 %v1485, 2147483648
    %v1498 = vor.u32 1.1754944e-38, %v1497
    %v1499 = vsel %vm1496, %v1498, %v1494
    %v1500 = vmul.f32 1.0, %v1499
    %v1501 = vtanh.pop %v1481
    %1503 = vrot.lane.b32.xlu0 %v1463, 32
    %v1504 = vpop.permute.xlu0 %1503
    %v1506 = vmul.f32 %v1500, %v1504
    %1508 = vrot.lane.b32.xlu0 %v1501, 64
    %v1509 = vpop.permute.xlu0 %1508
    %v1511 = vmul.f32 %v1500, %v1509
    %1513 = vrot.lane.b32.xlu0 %v1511, 32
    %v1514 = vpop.permute.xlu0 %1513
    %v1516 = vadd.f32 %v1506, %v1514
    %v1517 = vtanh.pop %v1516
    %1519 = vrot.lane.b32.xlu0 %v1517, 64
    %v1520 = vpop.permute.xlu0 %1519
    %v1522 = vmul.f32 %v1500, %v1520
    %v1523 = vld [vmem:[#allocation3] sm:$0x3]
    %v1524 = vld [vmem:[#allocation6] sm:$0x3]
    %v1525 = vld [vmem:[#allocation7] sm:$0x3]
    %v1526 = vpack.c.bf16 %v1524, %v1524
    %v1528 = vsel %vm266, %v1526, 0
    %1530 = vmatpush.bf16.msra.mxu0 0
    %1531 = vmatpush.bf16.msra.mxu0 0
    %1532 = vmatpush.bf16.msra.mxu0 0
    %1533 = vmatpush.bf16.msra.mxu0 0
    %1534 = vmatpush.bf16.msra.mxu0 0
    %1535 = vmatpush.bf16.msra.mxu0 0
    %1536 = vmatpush.bf16.msra.mxu0 %v339
    %1537 = vmatpush.bf16.msra.mxu0 %v338
    %1538 = vmatmul.bf16.gmra.mxu0 %v1528
    %v1539 = vpop.f32.mrf.mxu0
    %v1540 = vadd.f32 0.0, %v1539
    %v1541 = vpop.f32.mrf.mxu0
    %1542 = vdwg.mxu0
    %v1543 = vadd.f32 %v1523, %v1540
    %v1544 = vxor.u32 %v1543, 2147483648
    %v1545 = vmul.f32 %v1544, 1.442695
    %v1546 = vpow.pop %v1545
    %v1547 = vadd.f32 %v1546, 1.0
    %v1548 = vrcp.pop %v1547
    %v1549 = vmul.f32 %v1547, %v1548
    %v1550 = vsub.f32 1.0, %v1549
    %v1551 = vmul.f32 %v1548, %v1550
    %v1552 = vadd.f32 %v1548, %v1551
    %vm1553 = vweird.f32 %v1547
    %vm1554 = vweird.f32 %v1548
    %vm1555 = vmor %vm1553, %vm1554
    %v1556 = vsel %vm1555, %v1548, %v1552
    %v1557 = vand.u32 2147483647, %v1547
    %vm1558 = vcmp.eq.f32.partialorder %v1557, 8.507059e+37
    %v1559 = vand.u32 %v1547, 2147483648
    %v1560 = vor.u32 1.1754944e-38, %v1559
    %v1561 = vsel %vm1558, %v1560, %v1556
    %v1562 = vmul.f32 1.0, %v1561
    %v1563 = vtanh.pop %v1543
    %1565 = vrot.lane.b32.xlu0 %v1525, 32
    %v1566 = vpop.permute.xlu0 %1565
    %v1568 = vmul.f32 %v1562, %v1566
    %1570 = vrot.lane.b32.xlu0 %v1563, 64
    %v1571 = vpop.permute.xlu0 %1570
    %v1573 = vmul.f32 %v1562, %v1571
    %1575 = vrot.lane.b32.xlu0 %v1573, 32
    %v1576 = vpop.permute.xlu0 %1575
    %v1578 = vadd.f32 %v1568, %v1576
    %v1579 = vtanh.pop %v1578
    %1581 = vrot.lane.b32.xlu0 %v1579, 64
    %v1582 = vpop.permute.xlu0 %1581
    %v1584 = vmul.f32 %v1562, %v1582
    %1586 = vrot.lane.b32.xlu0 %v1522, 32
    %v1587 = vpop.permute.xlu0 %1586
    %1589 = vst.msk [vmem:[#allocation4] sm:$0x3] %vm245, %v1587
    %1591 = vrot.lane.b32.xlu0 %v1516, 96
    %v1592 = vpop.permute.xlu0 %1591
    %1594 = vst.msk [vmem:[#allocation5] sm:$0x3] %vm245, %v1592
    %1596 = vrot.lane.b32.xlu0 %v1584, 32
    %v1597 = vpop.permute.xlu0 %1596
    %1599 = vst.msk [vmem:[#allocation6] sm:$0x3] %vm245, %v1597
    %1601 = vrot.lane.b32.xlu0 %v1578, 96
    %v1602 = vpop.permute.xlu0 %1601
    %1604 = vst.msk [vmem:[#allocation7] sm:$0x3] %vm245, %v1602
    %v1605 = vpack.c.bf16 %v1522, %v1522
    %v1607 = vrot.slane %v1605, 3
    %v1610 = vsel %vm423, %v1605, %v1607
    %1612 = vrot.lane.b32.xlu0 %v1610, 32
    %v1613 = vpop.permute.xlu0 %1612
    %1615 = vst.msk [vmem:[%s443] sm:$0x1] %vm431, %v1613
    %v1616 = vpack.c.bf16 %v1584, %v1584
    %v1618 = vrot.slane %v1616, 3
    %v1621 = vsel %vm423, %v1616, %v1618
    %1623 = vrot.lane.b32.xlu0 %v1621, 64
    %v1624 = vpop.permute.xlu0 %1623
    %1626 = vst.msk [vmem:[#allocation11] sm:$0x1] %vm444, %v1624
    %v1627 = vld [vmem:[#allocation4] sm:$0x3]
    %1628 = vst.msk [vmem:[%s5] sm:$0x3] %vm245, %v1627
    %v1629 = vld [vmem:[#allocation6] sm:$0x3]
    %1631 = vrot.lane.b32.xlu0 %v1629, 32
    %v1632 = vpop.permute.xlu0 %1631
    %vm1634 = vcmask 517376
    %1635 = vst.msk [vmem:[%s5] sm:$0x3] %vm1634, %v1632
    // Predicated region
    $region22: #{lstm_model_forward.4} parent=1 // pred_check
      _
    $region23: #{lstm_model_forward.4} parent=1 // pred_check_branch
      %1637 = sbr.rel (0) target = $region25
    $region24: #{lstm_model_forward.4} parent=1 // pred_region
      %1639 = vsyncadd [#allocation10], 0
      %s1640 = sshll.u32 [#allocation11], 4
      %s1641 = int_to_ptr.vmem [resolvable:$true] %s1640
      %s1642 = sshll.u32 %s4, 4
      %s1643 = int_to_ptr.hbm [resolvable:$true] %s1642
      %1648 = dma.vmem_to_hbm [thread:$0]  %s1641, 128, %s1643, [#allocation10], 16, 16, 1
    $region25: #{lstm_model_forward.4} parent=1 // pred_fallthru
      _
    // Predicated region
    $region26: #{lstm_model_forward.4} parent=1 // pred_check
      _
    $region27: #{lstm_model_forward.4} parent=1 // pred_check_branch
      %1650 = sbr.rel (0) target = $region29
    $region28: #{lstm_model_forward.4} parent=1 // pred_region
      _
    $region29: #{lstm_model_forward.4} parent=1 // pred_fallthru
      _
    // Predicated region
    $region30: #{lstm_model_forward.4} parent=1 // pred_check
      _
    $region31: #{lstm_model_forward.4} parent=1 // pred_check_branch
      %1652 = sbr.rel (0) target = $region33
    $region32: #{lstm_model_forward.4} parent=1 // pred_region
      %1654 = dma.done [#allocation10], 128
    $region33: #{lstm_model_forward.4} parent=1 // pred_fallthru
      _
    // Predicated region
    $region34: #{lstm_model_forward.4} parent=1 // pred_check
      _
    $region35: #{lstm_model_forward.4} parent=1 // pred_check_branch
      %1656 = sbr.rel (0) target = $region37
    $region36: #{lstm_model_forward.4} parent=1 // pred_region
      _
    $region37: #{lstm_model_forward.4} parent=1 // pred_fallthru
      _
    %1657 = vsyncpa [#allocation9], 1
    %1658 = vsyncpa [#allocation10], 1

// kernel: lstm_model_forward.3
$region0: #{lstm_model_forward.3}
  #allocation0 [shape = 'u32[]', space=smem, size = 0x4, offset = 0x4, fixed_abs, tag = 'smem constant byte address 0x4 - core index']
  #allocation1 [shape = 'u32[72,128]{1,0:T(1,128)}', space=vmem, size = 0x9000, scoped, tag = 'internal scratch']
  #allocation2 [shape = 'f32[8,2,128]{2,1,0:T(2,128)}', space=vmem, size = 0x2000, scoped, tag = 'scratch operand']
  #allocation3 [shape = 'f32[8,2,128]{2,1,0:T(2,128)}', space=vmem, size = 0x2000, scoped, tag = 'scratch operand']
  #allocation4 [shape = 'f32[2,32]{1,0:T(2,128)}', space=vmem, size = 0x400, scoped, tag = 'scratch operand']
  #allocation5 [shape = 'f32[2,32]{1,0:T(2,128)}', space=vmem, size = 0x400, scoped, tag = 'scratch operand']
  #allocation6 [shape = 'f32[2,32]{1,0:T(2,128)}', space=vmem, size = 0x400, scoped, tag = 'scratch operand']
  #allocation7 [shape = 'f32[2,32]{1,0:T(2,128)}', space=vmem, size = 0x400, scoped, tag = 'scratch operand']
  %s0 = inlined_call_operand.vmem [shape: bf16[8,2,128], index: 0, kind: input, shape index: {}]
  %s1 = inlined_call_operand.vmem [shape: bf16[2,128,128], index: 1, kind: input, shape index: {}]
  %s2 = inlined_call_operand.hbm [shape: bf16[2,32,128], index: 2, kind: input, shape index: {}]
  %s3 = inlined_call_operand.hbm [shape: f32[2,1,128], index: 3, kind: input, shape index: {}]
  %s4 = inlined_call_operand.vmem [shape: bf16[8,2,64], index: 4, kind: output, shape index: {0}]
  %s5 = inlined_call_operand.hbm [shape: f32[2,64], index: 5, kind: output, shape index: {1}]
  %6 = xla_tuple %s4, %s5
  %s7 = sld [smem:[#allocation0]]
  $region42: #{lstm_model_forward.3} parent=0
    _
  %s9 = ssub.s32 1, %s7
  %s10 = scalar_select 0, %s9, %s7
  $region1: #{lstm_model_forward.3} parent=0
    #allocation8 [shape = 'u8[16384]{0}', space=vmem, size = 0x4000, scoped, tag = 'input window, operand 2, single buffered']
    #allocation9 [shape = 's32[1]{0}', space=sflag, size = 0x4, scoped, tag = 'scoped memory for lstm_model_forward.3']
    #allocation10 [shape = 's32[1]{0}', space=sflag, size = 0x4, scoped, tag = 'scoped memory for lstm_model_forward.3']
    #allocation11 [shape = 'u8[1024]{0}', space=vmem, size = 0x400, scoped, tag = 'input window, operand 3, single buffered']
    #allocation12 [shape = 's32[1]{0}', space=sflag, size = 0x4, scoped, tag = 'scoped memory for lstm_model_forward.3']
    #allocation13 [shape = 'u8[1024]{0}', space=vmem, size = 0x400, scoped, tag = 'output window, operand 1, single buffered']
    %11 = vsyncpa [#allocation9], 0
    %12 = vsyncpa [#allocation12], 0
    %13 = vsyncpa [#allocation10], 0
    // Predicated region
    $region2: #{lstm_model_forward.3} parent=1 // pred_check
      _
    $region3: #{lstm_model_forward.3} parent=1 // pred_check_branch
      %15 = sbr.rel (0) target = $region5
    $region4: #{lstm_model_forward.3} parent=1 // pred_region
      _
    $region5: #{lstm_model_forward.3} parent=1 // pred_fallthru
      _
    // Predicated region
    $region6: #{lstm_model_forward.3} parent=1 // pred_check
      _
    $region7: #{lstm_model_forward.3} parent=1 // pred_check_branch
      %17 = sbr.rel (0) target = $region9
    $region8: #{lstm_model_forward.3} parent=1 // pred_region
      _
    $region9: #{lstm_model_forward.3} parent=1 // pred_fallthru
      _
    // Predicated region
    $region10: #{lstm_model_forward.3} parent=1 // pred_check
      _
    $region11: #{lstm_model_forward.3} parent=1 // pred_check_branch
      %19 = sbr.rel (0) target = $region13
    $region12: #{lstm_model_forward.3} parent=1 // pred_region
      %21 = vsyncadd [#allocation9], 0
      %s22 = sshll.u32 %s2, 4
      %s23 = int_to_ptr.hbm [resolvable:$true] %s22
      %s24 = sshll.u32 [#allocation8], 4
      %s25 = int_to_ptr.vmem [resolvable:$true] %s24
      %30 = dma.hbm_to_vmem [thread:$0]  %s23, 512, %s25, [#allocation9], 64, 64, 4
    $region13: #{lstm_model_forward.3} parent=1 // pred_fallthru
      _
    // Predicated region
    $region14: #{lstm_model_forward.3} parent=1 // pred_check
      _
    $region15: #{lstm_model_forward.3} parent=1 // pred_check_branch
      %32 = sbr.rel (0) target = $region17
    $region16: #{lstm_model_forward.3} parent=1 // pred_region
      %34 = vsyncadd [#allocation12], 0
      %s35 = sshll.u32 %s3, 4
      %s36 = int_to_ptr.hbm [resolvable:$true] %s35
      %s37 = sshll.u32 [#allocation11], 4
      %s38 = int_to_ptr.vmem [resolvable:$true] %s37
      %43 = dma.hbm_to_vmem [thread:$0]  %s36, 32, %s38, [#allocation12], 16, 16, 1
    $region17: #{lstm_model_forward.3} parent=1 // pred_fallthru
      _
    // Predicated region
    $region18: #{lstm_model_forward.3} parent=1 // pred_check
      _
    $region19: #{lstm_model_forward.3} parent=1 // pred_check_branch
      %45 = sbr.rel (0) target = $region21
    $region20: #{lstm_model_forward.3} parent=1 // pred_region
      %47 = dma.done [#allocation9], 512
    $region21: #{lstm_model_forward.3} parent=1 // pred_fallthru
      _
    // Predicated region
    $region22: #{lstm_model_forward.3} parent=1 // pred_check
      _
    $region23: #{lstm_model_forward.3} parent=1 // pred_check_branch
      %49 = sbr.rel (0) target = $region25
    $region24: #{lstm_model_forward.3} parent=1 // pred_region
      %51 = dma.done [#allocation12], 32
    $region25: #{lstm_model_forward.3} parent=1 // pred_fallthru
      _
    %v53 = vld [vmem:[%s0] sm:$0x1]
    %v54 = vld [vmem:[%s0 + $0x1] sm:$0x1]
    %v55 = vld [vmem:[%s0 + $0x2] sm:$0x1]
    %v56 = vld [vmem:[%s0 + $0x3] sm:$0x1]
    %v57 = vld [vmem:[%s0 + $0x4] sm:$0x1]
    %v58 = vld [vmem:[%s0 + $0x5] sm:$0x1]
    %v59 = vld [vmem:[%s0 + $0x6] sm:$0x1]
    %v60 = vld [vmem:[%s0 + $0x7] sm:$0x1]
    %v61 = vld [vmem:[%s1] sm:$0xf]
    %v62 = vld [vmem:[%s1 + $0x4] sm:$0xf]
    %v63 = vld [vmem:[%s1 + $0x8] sm:$0xf]
    %v64 = vld [vmem:[%s1 + $0xc] sm:$0xf]
    %v65 = vld [vmem:[%s1 + $0x10] sm:$0xf]
    %v66 = vld [vmem:[%s1 + $0x14] sm:$0xf]
    %v67 = vld [vmem:[%s1 + $0x18] sm:$0xf]
    %v68 = vld [vmem:[%s1 + $0x1c] sm:$0xf]
    %v69 = vld [vmem:[%s1 + $0x20] sm:$0xf]
    %v70 = vld [vmem:[%s1 + $0x24] sm:$0xf]
    %v71 = vld [vmem:[%s1 + $0x28] sm:$0xf]
    %v72 = vld [vmem:[%s1 + $0x2c] sm:$0xf]
    %v73 = vld [vmem:[%s1 + $0x30] sm:$0xf]
    %v74 = vld [vmem:[%s1 + $0x34] sm:$0xf]
    %v75 = vld [vmem:[%s1 + $0x38] sm:$0xf]
    %v76 = vld [vmem:[%s1 + $0x3c] sm:$0xf]
    %v77 = vld [vmem:[#allocation11] sm:$0x1]
    %v79 = vperm.slane %v77, 0
    %82 = vst [vmem:[#allocation1] ss:$9 sm:$0xff] %v53
    %s84 = scalar_lea.vmem [#allocation1], 1
    %85 = vst [vmem:[%s84] ss:$9 sm:$0xff] %v54
    %s87 = scalar_lea.vmem [#allocation1], 2
    %88 = vst [vmem:[%s87] ss:$9 sm:$0xff] %v55
    %s90 = scalar_lea.vmem [#allocation1], 3
    %91 = vst [vmem:[%s90] ss:$9 sm:$0xff] %v56
    %s93 = scalar_lea.vmem [#allocation1], 4
    %94 = vst [vmem:[%s93] ss:$9 sm:$0xff] %v57
    %s96 = scalar_lea.vmem [#allocation1], 5
    %97 = vst [vmem:[%s96] ss:$9 sm:$0xff] %v58
    %s99 = scalar_lea.vmem [#allocation1], 6
    %100 = vst [vmem:[%s99] ss:$9 sm:$0xff] %v59
    %s102 = scalar_lea.vmem [#allocation1], 7
    %103 = vst [vmem:[%s102] ss:$9 sm:$0xff] %v60
    %v104 = vld [vmem:[#allocation1] sm:$0xff]
    %v122 = vunpack.c.l.b16 %v61
    %v123 = vunpack.c.l.b16 %v62
    %v124 = vunpack.c.l.b16 %v63
    %v125 = vunpack.c.l.b16 %v64
    %v126 = vunpack.c.l.b16 %v65
    %v127 = vunpack.c.l.b16 %v66
    %v128 = vunpack.c.l.b16 %v67
    %v129 = vunpack.c.l.b16 %v68
    %v130 = vunpack.c.l.b16 %v69
    %v131 = vunpack.c.l.b16 %v70
    %v132 = vunpack.c.l.b16 %v71
    %v133 = vunpack.c.l.b16 %v72
    %v134 = vunpack.c.l.b16 %v73
    %v135 = vunpack.c.l.b16 %v74
    %v136 = vunpack.c.l.b16 %v75
    %v137 = vunpack.c.l.b16 %v76
    %v138 = vpack.c.b16 %v123, %v122
    %v139 = vpack.c.b16 %v125, %v124
    %v140 = vpack.c.b16 %v127, %v126
    %v141 = vpack.c.b16 %v129, %v128
    %v142 = vpack.c.b16 %v131, %v130
    %v143 = vpack.c.b16 %v133, %v132
    %v144 = vpack.c.b16 %v135, %v134
    %v145 = vpack.c.b16 %v137, %v136
    %154 = vmatpush.bf16.msra.mxu0 %v145
    %155 = vmatpush.bf16.msra.mxu0 %v144
    %156 = vmatpush.bf16.msra.mxu0 %v143
    %157 = vmatpush.bf16.msra.mxu0 %v142
    %158 = vmatpush.bf16.msra.mxu0 %v141
    %159 = vmatpush.bf16.msra.mxu0 %v140
    %160 = vmatpush.bf16.msra.mxu0 %v139
    %161 = vmatpush.bf16.msra.mxu0 %v138
    %162 = vmatmul.bf16.gmra.mxu0 %v104
    %v163 = vpop.f32.mrf.mxu0
    %v164 = vadd.f32 %v79, %v163
    %v165 = vpop.f32.mrf.mxu0
    %v166 = vadd.f32 %v79, %v165
    %167 = vdwg.mxu0
    %s168 = scalar_lea.vmem %s1, 64
    %v169 = vld [vmem:[%s168] sm:$0xf]
    %v170 = vld [vmem:[%s168 + $0x4] sm:$0xf]
    %v171 = vld [vmem:[%s168 + $0x8] sm:$0xf]
    %v172 = vld [vmem:[%s168 + $0xc] sm:$0xf]
    %v173 = vld [vmem:[%s168 + $0x10] sm:$0xf]
    %v174 = vld [vmem:[%s168 + $0x14] sm:$0xf]
    %v175 = vld [vmem:[%s168 + $0x18] sm:$0xf]
    %v176 = vld [vmem:[%s168 + $0x1c] sm:$0xf]
    %v177 = vld [vmem:[%s168 + $0x20] sm:$0xf]
    %v178 = vld [vmem:[%s168 + $0x24] sm:$0xf]
    %v179 = vld [vmem:[%s168 + $0x28] sm:$0xf]
    %v180 = vld [vmem:[%s168 + $0x2c] sm:$0xf]
    %v181 = vld [vmem:[%s168 + $0x30] sm:$0xf]
    %v182 = vld [vmem:[%s168 + $0x34] sm:$0xf]
    %v183 = vld [vmem:[%s168 + $0x38] sm:$0xf]
    %v184 = vld [vmem:[%s168 + $0x3c] sm:$0xf]
    %s185 = scalar_lea.vmem [#allocation11], 1
    %v186 = vld [vmem:[%s185] sm:$0x1]
    %v188 = vperm.slane %v186, 0
    %190 = vst [vmem:[#allocation1] ss:$9 sm:$0xff] %v53
    %s191 = scalar_lea.vmem [#allocation1], 1
    %192 = vst [vmem:[%s191] ss:$9 sm:$0xff] %v54
    %s193 = scalar_lea.vmem [#allocation1], 2
    %194 = vst [vmem:[%s193] ss:$9 sm:$0xff] %v55
    %s195 = scalar_lea.vmem [#allocation1], 3
    %196 = vst [vmem:[%s195] ss:$9 sm:$0xff] %v56
    %s197 = scalar_lea.vmem [#allocation1], 4
    %198 = vst [vmem:[%s197] ss:$9 sm:$0xff] %v57
    %s199 = scalar_lea.vmem [#allocation1], 5
    %200 = vst [vmem:[%s199] ss:$9 sm:$0xff] %v58
    %s201 = scalar_lea.vmem [#allocation1], 6
    %202 = vst [vmem:[%s201] ss:$9 sm:$0xff] %v59
    %s203 = scalar_lea.vmem [#allocation1], 7
    %204 = vst [vmem:[%s203] ss:$9 sm:$0xff] %v60
    %v205 = vld [vmem:[#allocation1] sm:$0xff]
    %v223 = vunpack.c.l.b16 %v169
    %v224 = vunpack.c.l.b16 %v170
    %v225 = vunpack.c.l.b16 %v171
    %v226 = vunpack.c.l.b16 %v172
    %v227 = vunpack.c.l.b16 %v173
    %v228 = vunpack.c.l.b16 %v174
    %v229 = vunpack.c.l.b16 %v175
    %v230 = vunpack.c.l.b16 %v176
    %v231 = vunpack.c.l.b16 %v177
    %v232 = vunpack.c.l.b16 %v178
    %v233 = vunpack.c.l.b16 %v179
    %v234 = vunpack.c.l.b16 %v180
    %v235 = vunpack.c.l.b16 %v181
    %v236 = vunpack.c.l.b16 %v182
    %v237 = vunpack.c.l.b16 %v183
    %v238 = vunpack.c.l.b16 %v184
    %v239 = vpack.c.b16 %v224, %v223
    %v240 = vpack.c.b16 %v226, %v225
    %v241 = vpack.c.b16 %v228, %v227
    %v242 = vpack.c.b16 %v230, %v229
    %v243 = vpack.c.b16 %v232, %v231
    %v244 = vpack.c.b16 %v234, %v233
    %v245 = vpack.c.b16 %v236, %v235
    %v246 = vpack.c.b16 %v238, %v237
    %255 = vmatpush.bf16.msra.mxu0 %v246
    %256 = vmatpush.bf16.msra.mxu0 %v245
    %257 = vmatpush.bf16.msra.mxu0 %v244
    %258 = vmatpush.bf16.msra.mxu0 %v243
    %259 = vmatpush.bf16.msra.mxu0 %v242
    %260 = vmatpush.bf16.msra.mxu0 %v241
    %261 = vmatpush.bf16.msra.mxu0 %v240
    %262 = vmatpush.bf16.msra.mxu0 %v239
    %263 = vmatmul.bf16.gmra.mxu0 %v205
    %v264 = vpop.f32.mrf.mxu0
    %v265 = vadd.f32 %v188, %v264
    %v266 = vpop.f32.mrf.mxu0
    %v267 = vadd.f32 %v188, %v266
    %268 = vdwg.mxu0
    %v271 = vrot.slane %v164, 2
    %v272 = vrot.slane %v164, 4
    %v273 = vrot.slane %v164, 6
    %v274 = vrot.slane %v166, 2
    %v275 = vrot.slane %v166, 4
    %v276 = vrot.slane %v166, 6
    %283 = vst [vmem:[#allocation2] sm:$0x3] %v164
    %284 = vst [vmem:[#allocation2 + $0x2] sm:$0x3] %v271
    %285 = vst [vmem:[#allocation2 + $0x4] sm:$0x3] %v272
    %286 = vst [vmem:[#allocation2 + $0x6] sm:$0x3] %v273
    %287 = vst [vmem:[#allocation2 + $0x8] sm:$0x3] %v166
    %288 = vst [vmem:[#allocation2 + $0xa] sm:$0x3] %v274
    %289 = vst [vmem:[#allocation2 + $0xc] sm:$0x3] %v275
    %290 = vst [vmem:[#allocation2 + $0xe] sm:$0x3] %v276
    %v293 = vrot.slane %v265, 2
    %v294 = vrot.slane %v265, 4
    %v295 = vrot.slane %v265, 6
    %v296 = vrot.slane %v267, 2
    %v297 = vrot.slane %v267, 4
    %v298 = vrot.slane %v267, 6
    %305 = vst [vmem:[#allocation3] sm:$0x3] %v265
    %306 = vst [vmem:[#allocation3 + $0x2] sm:$0x3] %v293
    %307 = vst [vmem:[#allocation3 + $0x4] sm:$0x3] %v294
    %308 = vst [vmem:[#allocation3 + $0x6] sm:$0x3] %v295
    %309 = vst [vmem:[#allocation3 + $0x8] sm:$0x3] %v267
    %310 = vst [vmem:[#allocation3 + $0xa] sm:$0x3] %v296
    %311 = vst [vmem:[#allocation3 + $0xc] sm:$0x3] %v297
    %312 = vst [vmem:[#allocation3 + $0xe] sm:$0x3] %v298
    %v313 = vld [vmem:[#allocation8] sm:$0xf]
    %v314 = vld [vmem:[#allocation8 + $0x4] sm:$0xf]
    %v315 = vld [vmem:[#allocation8 + $0x8] sm:$0xf]
    %v316 = vld [vmem:[#allocation8 + $0xc] sm:$0xf]
    %s317 = scalar_lea.vmem [#allocation8], 16
    %v318 = vld [vmem:[%s317] sm:$0xf]
    %v319 = vld [vmem:[%s317 + $0x4] sm:$0xf]
    %v320 = vld [vmem:[%s317 + $0x8] sm:$0xf]
    %v321 = vld [vmem:[%s317 + $0xc] sm:$0xf]
    %vm322 = vcmask 254976
    %323 = vst.msk [vmem:[#allocation4] sm:$0x3] %vm322, 0.0
    %324 = vst.msk [vmem:[#allocation5] sm:$0x3] %vm322, 0.0
    %325 = vst.msk [vmem:[#allocation6] sm:$0x3] %vm322, 0.0
    %326 = vst.msk [vmem:[#allocation7] sm:$0x3] %vm322, 0.0
    %v327 = vld [vmem:[#allocation2] sm:$0x3]
    %v328 = vld [vmem:[#allocation4] sm:$0x3]
    %v329 = vld [vmem:[#allocation5] sm:$0x3]
    %v330 = vpack.c.bf16 %v328, %v328
    %v335 = vunpack.c.l.b16 %v313
    %v336 = vunpack.c.l.b16 %v314
    %v337 = vunpack.c.l.b16 %v315
    %v338 = vunpack.c.l.b16 %v316
    %v339 = vpack.c.b16 %v336, %v335
    %v340 = vpack.c.b16 %v338, %v337
    %vm343 = vcmask 261120
    %v345 = vsel %vm343, %v330, 0
    %347 = vmatpush.bf16.msra.mxu0 0
    %348 = vmatpush.bf16.msra.mxu0 0
    %349 = vmatpush.bf16.msra.mxu0 0
    %350 = vmatpush.bf16.msra.mxu0 0
    %351 = vmatpush.bf16.msra.mxu0 0
    %352 = vmatpush.bf16.msra.mxu0 0
    %353 = vmatpush.bf16.msra.mxu0 %v340
    %354 = vmatpush.bf16.msra.mxu0 %v339
    %355 = vmatmul.bf16.gmra.mxu0 %v345
    %v356 = vpop.f32.mrf.mxu0
    %v357 = vadd.f32 0.0, %v356
    %v358 = vpop.f32.mrf.mxu0
    %359 = vdwg.mxu0
    %v360 = vadd.f32 %v327, %v357
    %v361 = vxor.u32 %v360, 2147483648
    %v362 = vmul.f32 %v361, 1.442695
    %v363 = vpow.pop %v362
    %v364 = vadd.f32 %v363, 1.0
    %v365 = vrcp.pop %v364
    %v366 = vmul.f32 %v364, %v365
    %v367 = vsub.f32 1.0, %v366
    %v368 = vmul.f32 %v365, %v367
    %v369 = vadd.f32 %v365, %v368
    %vm370 = vweird.f32 %v364
    %vm371 = vweird.f32 %v365
    %vm372 = vmor %vm370, %vm371
    %v373 = vsel %vm372, %v365, %v369
    %v374 = vand.u32 2147483647, %v364
    %vm375 = vcmp.eq.f32.partialorder %v374, 8.507059e+37
    %v376 = vand.u32 %v364, 2147483648
    %v377 = vor.u32 1.1754944e-38, %v376
    %v378 = vsel %vm375, %v377, %v373
    %v379 = vmul.f32 1.0, %v378
    %v380 = vtanh.pop %v360
    %382 = vrot.lane.b32.xlu0 %v329, 32
    %v383 = vpop.permute.xlu0 %382
    %v385 = vmul.f32 %v379, %v383
    %387 = vrot.lane.b32.xlu0 %v380, 64
    %v388 = vpop.permute.xlu0 %387
    %v390 = vmul.f32 %v379, %v388
    %392 = vrot.lane.b32.xlu0 %v390, 32
    %v393 = vpop.permute.xlu0 %392
    %v395 = vadd.f32 %v385, %v393
    %v396 = vtanh.pop %v395
    %398 = vrot.lane.b32.xlu0 %v396, 64
    %v399 = vpop.permute.xlu0 %398
    %v401 = vmul.f32 %v379, %v399
    %s402 = scalar_lea.vmem [#allocation3], 14
    %v403 = vld [vmem:[%s402] sm:$0x3]
    %v404 = vld [vmem:[#allocation6] sm:$0x3]
    %v405 = vld [vmem:[#allocation7] sm:$0x3]
    %v406 = vpack.c.bf16 %v404, %v404
    %v411 = vunpack.c.l.b16 %v318
    %v412 = vunpack.c.l.b16 %v319
    %v413 = vunpack.c.l.b16 %v320
    %v414 = vunpack.c.l.b16 %v321
    %v415 = vpack.c.b16 %v412, %v411
    %v416 = vpack.c.b16 %v414, %v413
    %v420 = vsel %vm343, %v406, 0
    %422 = vmatpush.bf16.msra.mxu0 0
    %423 = vmatpush.bf16.msra.mxu0 0
    %424 = vmatpush.bf16.msra.mxu0 0
    %425 = vmatpush.bf16.msra.mxu0 0
    %426 = vmatpush.bf16.msra.mxu0 0
    %427 = vmatpush.bf16.msra.mxu0 0
    %428 = vmatpush.bf16.msra.mxu0 %v416
    %429 = vmatpush.bf16.msra.mxu0 %v415
    %430 = vmatmul.bf16.gmra.mxu0 %v420
    %v431 = vpop.f32.mrf.mxu0
    %v432 = vadd.f32 0.0, %v431
    %v433 = vpop.f32.mrf.mxu0
    %434 = vdwg.mxu0
    %v435 = vadd.f32 %v403, %v432
    %v436 = vxor.u32 %v435, 2147483648
    %v437 = vmul.f32 %v436, 1.442695
    %v438 = vpow.pop %v437
    %v439 = vadd.f32 %v438, 1.0
    %v440 = vrcp.pop %v439
    %v441 = vmul.f32 %v439, %v440
    %v442 = vsub.f32 1.0, %v441
    %v443 = vmul.f32 %v440, %v442
    %v444 = vadd.f32 %v440, %v443
    %vm445 = vweird.f32 %v439
    %vm446 = vweird.f32 %v440
    %vm447 = vmor %vm445, %vm446
    %v448 = vsel %vm447, %v440, %v444
    %v449 = vand.u32 2147483647, %v439
    %vm450 = vcmp.eq.f32.partialorder %v449, 8.507059e+37
    %v451 = vand.u32 %v439, 2147483648
    %v452 = vor.u32 1.1754944e-38, %v451
    %v453 = vsel %vm450, %v452, %v448
    %v454 = vmul.f32 1.0, %v453
    %v455 = vtanh.pop %v435
    %457 = vrot.lane.b32.xlu0 %v405, 32
    %v458 = vpop.permute.xlu0 %457
    %v460 = vmul.f32 %v454, %v458
    %462 = vrot.lane.b32.xlu0 %v455, 64
    %v463 = vpop.permute.xlu0 %462
    %v465 = vmul.f32 %v454, %v463
    %467 = vrot.lane.b32.xlu0 %v465, 32
    %v468 = vpop.permute.xlu0 %467
    %v470 = vadd.f32 %v460, %v468
    %v471 = vtanh.pop %v470
    %473 = vrot.lane.b32.xlu0 %v471, 64
    %v474 = vpop.permute.xlu0 %473
    %v476 = vmul.f32 %v454, %v474
    %478 = vrot.lane.b32.xlu0 %v401, 32
    %v479 = vpop.permute.xlu0 %478
    %481 = vst.msk [vmem:[#allocation4] sm:$0x3] %vm322, %v479
    %483 = vrot.lane.b32.xlu0 %v395, 96
    %v484 = vpop.permute.xlu0 %483
    %486 = vst.msk [vmem:[#allocation5] sm:$0x3] %vm322, %v484
    %488 = vrot.lane.b32.xlu0 %v476, 32
    %v489 = vpop.permute.xlu0 %488
    %491 = vst.msk [vmem:[#allocation6] sm:$0x3] %vm322, %v489
    %493 = vrot.lane.b32.xlu0 %v470, 96
    %v494 = vpop.permute.xlu0 %493
    %496 = vst.msk [vmem:[#allocation7] sm:$0x3] %vm322, %v494
    %v497 = vpack.c.bf16 %v401, %v401
    %v499 = vrot.slane %v497, 3
    %vm500 = vcmask 1040384
    %v503 = vsel %vm500, %v497, %v499
    %505 = vrot.lane.b32.xlu0 %v503, 32
    %v506 = vpop.permute.xlu0 %505
    %vm508 = vcmask 253952
    %509 = vst.msk [vmem:[%s4] sm:$0x1] %vm508, %v506
    %v510 = vpack.c.bf16 %v476, %v476
    %v512 = vrot.slane %v510, 3
    %v515 = vsel %vm500, %v510, %v512
    %517 = vrot.lane.b32.xlu0 %v515, 64
    %v518 = vpop.permute.xlu0 %517
    %s520 = scalar_lea.vmem %s4, 7
    %vm521 = vcmask 516352
    %522 = vst.msk [vmem:[%s520] sm:$0x1] %vm521, %v518
    %s523 = scalar_lea.vmem [#allocation2], 2
    %v524 = vld [vmem:[%s523] sm:$0x3]
    %v525 = vld [vmem:[#allocation4] sm:$0x3]
    %v526 = vld [vmem:[#allocation5] sm:$0x3]
    %v527 = vpack.c.bf16 %v525, %v525
    %v529 = vsel %vm343, %v527, 0
    %531 = vmatpush.bf16.msra.mxu0 0
    %532 = vmatpush.bf16.msra.mxu0 0
    %533 = vmatpush.bf16.msra.mxu0 0
    %534 = vmatpush.bf16.msra.mxu0 0
    %535 = vmatpush.bf16.msra.mxu0 0
    %536 = vmatpush.bf16.msra.mxu0 0
    %537 = vmatpush.bf16.msra.mxu0 %v340
    %538 = vmatpush.bf16.msra.mxu0 %v339
    %539 = vmatmul.bf16.gmra.mxu0 %v529
    %v540 = vpop.f32.mrf.mxu0
    %v541 = vadd.f32 0.0, %v540
    %v542 = vpop.f32.mrf.mxu0
    %543 = vdwg.mxu0
    %v544 = vadd.f32 %v524, %v541
    %v545 = vxor.u32 %v544, 2147483648
    %v546 = vmul.f32 %v545, 1.442695
    %v547 = vpow.pop %v546
    %v548 = vadd.f32 %v547, 1.0
    %v549 = vrcp.pop %v548
    %v550 = vmul.f32 %v548, %v549
    %v551 = vsub.f32 1.0, %v550
    %v552 = vmul.f32 %v549, %v551
    %v553 = vadd.f32 %v549, %v552
    %vm554 = vweird.f32 %v548
    %vm555 = vweird.f32 %v549
    %vm556 = vmor %vm554, %vm555
    %v557 = vsel %vm556, %v549, %v553
    %v558 = vand.u32 2147483647, %v548
    %vm559 = vcmp.eq.f32.partialorder %v558, 8.507059e+37
    %v560 = vand.u32 %v548, 2147483648
    %v561 = vor.u32 1.1754944e-38, %v560
    %v562 = vsel %vm559, %v561, %v557
    %v563 = vmul.f32 1.0, %v562
    %v564 = vtanh.pop %v544
    %566 = vrot.lane.b32.xlu0 %v526, 32
    %v567 = vpop.permute.xlu0 %566
    %v569 = vmul.f32 %v563, %v567
    %571 = vrot.lane.b32.xlu0 %v564, 64
    %v572 = vpop.permute.xlu0 %571
    %v574 = vmul.f32 %v563, %v572
    %576 = vrot.lane.b32.xlu0 %v574, 32
    %v577 = vpop.permute.xlu0 %576
    %v579 = vadd.f32 %v569, %v577
    %v580 = vtanh.pop %v579
    %582 = vrot.lane.b32.xlu0 %v580, 64
    %v583 = vpop.permute.xlu0 %582
    %v585 = vmul.f32 %v563, %v583
    %s586 = scalar_lea.vmem [#allocation3], 12
    %v587 = vld [vmem:[%s586] sm:$0x3]
    %v588 = vld [vmem:[#allocation6] sm:$0x3]
    %v589 = vld [vmem:[#allocation7] sm:$0x3]
    %v590 = vpack.c.bf16 %v588, %v588
    %v592 = vsel %vm343, %v590, 0
    %594 = vmatpush.bf16.msra.mxu0 0
    %595 = vmatpush.bf16.msra.mxu0 0
    %596 = vmatpush.bf16.msra.mxu0 0
    %597 = vmatpush.bf16.msra.mxu0 0
    %598 = vmatpush.bf16.msra.mxu0 0
    %599 = vmatpush.bf16.msra.mxu0 0
    %600 = vmatpush.bf16.msra.mxu0 %v416
    %601 = vmatpush.bf16.msra.mxu0 %v415
    %602 = vmatmul.bf16.gmra.mxu0 %v592
    %v603 = vpop.f32.mrf.mxu0
    %v604 = vadd.f32 0.0, %v603
    %v605 = vpop.f32.mrf.mxu0
    %606 = vdwg.mxu0
    %v607 = vadd.f32 %v587, %v604
    %v608 = vxor.u32 %v607, 2147483648
    %v609 = vmul.f32 %v608, 1.442695
    %v610 = vpow.pop %v609
    %v611 = vadd.f32 %v610, 1.0
    %v612 = vrcp.pop %v611
    %v613 = vmul.f32 %v611, %v612
    %v614 = vsub.f32 1.0, %v613
    %v615 = vmul.f32 %v612, %v614
    %v616 = vadd.f32 %v612, %v615
    %vm617 = vweird.f32 %v611
    %vm618 = vweird.f32 %v612
    %vm619 = vmor %vm617, %vm618
    %v620 = vsel %vm619, %v612, %v616
    %v621 = vand.u32 2147483647, %v611
    %vm622 = vcmp.eq.f32.partialorder %v621, 8.507059e+37
    %v623 = vand.u32 %v611, 2147483648
    %v624 = vor.u32 1.1754944e-38, %v623
    %v625 = vsel %vm622, %v624, %v620
    %v626 = vmul.f32 1.0, %v625
    %v627 = vtanh.pop %v607
    %629 = vrot.lane.b32.xlu0 %v589, 32
    %v630 = vpop.permute.xlu0 %629
    %v632 = vmul.f32 %v626, %v630
    %634 = vrot.lane.b32.xlu0 %v627, 64
    %v635 = vpop.permute.xlu0 %634
    %v637 = vmul.f32 %v626, %v635
    %639 = vrot.lane.b32.xlu0 %v637, 32
    %v640 = vpop.permute.xlu0 %639
    %v642 = vadd.f32 %v632, %v640
    %v643 = vtanh.pop %v642
    %645 = vrot.lane.b32.xlu0 %v643, 64
    %v646 = vpop.permute.xlu0 %645
    %v648 = vmul.f32 %v626, %v646
    %650 = vrot.lane.b32.xlu0 %v585, 32
    %v651 = vpop.permute.xlu0 %650
    %653 = vst.msk [vmem:[#allocation4] sm:$0x3] %vm322, %v651
    %655 = vrot.lane.b32.xlu0 %v579, 96
    %v656 = vpop.permute.xlu0 %655
    %658 = vst.msk [vmem:[#allocation5] sm:$0x3] %vm322, %v656
    %660 = vrot.lane.b32.xlu0 %v648, 32
    %v661 = vpop.permute.xlu0 %660
    %663 = vst.msk [vmem:[#allocation6] sm:$0x3] %vm322, %v661
    %665 = vrot.lane.b32.xlu0 %v642, 96
    %v666 = vpop.permute.xlu0 %665
    %668 = vst.msk [vmem:[#allocation7] sm:$0x3] %vm322, %v666
    %v669 = vpack.c.bf16 %v585, %v585
    %v671 = vrot.slane %v669, 3
    %v674 = vsel %vm500, %v669, %v671
    %676 = vrot.lane.b32.xlu0 %v674, 32
    %v677 = vpop.permute.xlu0 %676
    %s679 = scalar_lea.vmem %s4, 1
    %680 = vst.msk [vmem:[%s679] sm:$0x1] %vm508, %v677
    %v681 = vpack.c.bf16 %v648, %v648
    %v683 = vrot.slane %v681, 3
    %v686 = vsel %vm500, %v681, %v683
    %688 = vrot.lane.b32.xlu0 %v686, 64
    %v689 = vpop.permute.xlu0 %688
    %s691 = scalar_lea.vmem %s4, 6
    %692 = vst.msk [vmem:[%s691] sm:$0x1] %vm521, %v689
    %s693 = scalar_lea.vmem [#allocation2], 4
    %v694 = vld [vmem:[%s693] sm:$0x3]
    %v695 = vld [vmem:[#allocation4] sm:$0x3]
    %v696 = vld [vmem:[#allocation5] sm:$0x3]
    %v697 = vpack.c.bf16 %v695, %v695
    %v699 = vsel %vm343, %v697, 0
    %701 = vmatpush.bf16.msra.mxu0 0
    %702 = vmatpush.bf16.msra.mxu0 0
    %703 = vmatpush.bf16.msra.mxu0 0
    %704 = vmatpush.bf16.msra.mxu0 0
    %705 = vmatpush.bf16.msra.mxu0 0
    %706 = vmatpush.bf16.msra.mxu0 0
    %707 = vmatpush.bf16.msra.mxu0 %v340
    %708 = vmatpush.bf16.msra.mxu0 %v339
    %709 = vmatmul.bf16.gmra.mxu0 %v699
    %v710 = vpop.f32.mrf.mxu0
    %v711 = vadd.f32 0.0, %v710
    %v712 = vpop.f32.mrf.mxu0
    %713 = vdwg.mxu0
    %v714 = vadd.f32 %v694, %v711
    %v715 = vxor.u32 %v714, 2147483648
    %v716 = vmul.f32 %v715, 1.442695
    %v717 = vpow.pop %v716
    %v718 = vadd.f32 %v717, 1.0
    %v719 = vrcp.pop %v718
    %v720 = vmul.f32 %v718, %v719
    %v721 = vsub.f32 1.0, %v720
    %v722 = vmul.f32 %v719, %v721
    %v723 = vadd.f32 %v719, %v722
    %vm724 = vweird.f32 %v718
    %vm725 = vweird.f32 %v719
    %vm726 = vmor %vm724, %vm725
    %v727 = vsel %vm726, %v719, %v723
    %v728 = vand.u32 2147483647, %v718
    %vm729 = vcmp.eq.f32.partialorder %v728, 8.507059e+37
    %v730 = vand.u32 %v718, 2147483648
    %v731 = vor.u32 1.1754944e-38, %v730
    %v732 = vsel %vm729, %v731, %v727
    %v733 = vmul.f32 1.0, %v732
    %v734 = vtanh.pop %v714
    %736 = vrot.lane.b32.xlu0 %v696, 32
    %v737 = vpop.permute.xlu0 %736
    %v739 = vmul.f32 %v733, %v737
    %741 = vrot.lane.b32.xlu0 %v734, 64
    %v742 = vpop.permute.xlu0 %741
    %v744 = vmul.f32 %v733, %v742
    %746 = vrot.lane.b32.xlu0 %v744, 32
    %v747 = vpop.permute.xlu0 %746
    %v749 = vadd.f32 %v739, %v747
    %v750 = vtanh.pop %v749
    %752 = vrot.lane.b32.xlu0 %v750, 64
    %v753 = vpop.permute.xlu0 %752
    %v755 = vmul.f32 %v733, %v753
    %s756 = scalar_lea.vmem [#allocation3], 10
    %v757 = vld [vmem:[%s756] sm:$0x3]
    %v758 = vld [vmem:[#allocation6] sm:$0x3]
    %v759 = vld [vmem:[#allocation7] sm:$0x3]
    %v760 = vpack.c.bf16 %v758, %v758
    %v762 = vsel %vm343, %v760, 0
    %764 = vmatpush.bf16.msra.mxu0 0
    %765 = vmatpush.bf16.msra.mxu0 0
    %766 = vmatpush.bf16.msra.mxu0 0
    %767 = vmatpush.bf16.msra.mxu0 0
    %768 = vmatpush.bf16.msra.mxu0 0
    %769 = vmatpush.bf16.msra.mxu0 0
    %770 = vmatpush.bf16.msra.mxu0 %v416
    %771 = vmatpush.bf16.msra.mxu0 %v415
    %772 = vmatmul.bf16.gmra.mxu0 %v762
    %v773 = vpop.f32.mrf.mxu0
    %v774 = vadd.f32 0.0, %v773
    %v775 = vpop.f32.mrf.mxu0
    %776 = vdwg.mxu0
    %v777 = vadd.f32 %v757, %v774
    %v778 = vxor.u32 %v777, 2147483648
    %v779 = vmul.f32 %v778, 1.442695
    %v780 = vpow.pop %v779
    %v781 = vadd.f32 %v780, 1.0
    %v782 = vrcp.pop %v781
    %v783 = vmul.f32 %v781, %v782
    %v784 = vsub.f32 1.0, %v783
    %v785 = vmul.f32 %v782, %v784
    %v786 = vadd.f32 %v782, %v785
    %vm787 = vweird.f32 %v781
    %vm788 = vweird.f32 %v782
    %vm789 = vmor %vm787, %vm788
    %v790 = vsel %vm789, %v782, %v786
    %v791 = vand.u32 2147483647, %v781
    %vm792 = vcmp.eq.f32.partialorder %v791, 8.507059e+37
    %v793 = vand.u32 %v781, 2147483648
    %v794 = vor.u32 1.1754944e-38, %v793
    %v795 = vsel %vm792, %v794, %v790
    %v796 = vmul.f32 1.0, %v795
    %v797 = vtanh.pop %v777
    %799 = vrot.lane.b32.xlu0 %v759, 32
    %v800 = vpop.permute.xlu0 %799
    %v802 = vmul.f32 %v796, %v800
    %804 = vrot.lane.b32.xlu0 %v797, 64
    %v805 = vpop.permute.xlu0 %804
    %v807 = vmul.f32 %v796, %v805
    %809 = vrot.lane.b32.xlu0 %v807, 32
    %v810 = vpop.permute.xlu0 %809
    %v812 = vadd.f32 %v802, %v810
    %v813 = vtanh.pop %v812
    %815 = vrot.lane.b32.xlu0 %v813, 64
    %v816 = vpop.permute.xlu0 %815
    %v818 = vmul.f32 %v796, %v816
    %820 = vrot.lane.b32.xlu0 %v755, 32
    %v821 = vpop.permute.xlu0 %820
    %823 = vst.msk [vmem:[#allocation4] sm:$0x3] %vm322, %v821
    %825 = vrot.lane.b32.xlu0 %v749, 96
    %v826 = vpop.permute.xlu0 %825
    %828 = vst.msk [vmem:[#allocation5] sm:$0x3] %vm322, %v826
    %830 = vrot.lane.b32.xlu0 %v818, 32
    %v831 = vpop.permute.xlu0 %830
    %833 = vst.msk [vmem:[#allocation6] sm:$0x3] %vm322, %v831
    %835 = vrot.lane.b32.xlu0 %v812, 96
    %v836 = vpop.permute.xlu0 %835
    %838 = vst.msk [vmem:[#allocation7] sm:$0x3] %vm322, %v836
    %v839 = vpack.c.bf16 %v755, %v755
    %v841 = vrot.slane %v839, 3
    %v844 = vsel %vm500, %v839, %v841
    %846 = vrot.lane.b32.xlu0 %v844, 32
    %v847 = vpop.permute.xlu0 %846
    %s849 = scalar_lea.vmem %s4, 2
    %850 = vst.msk [vmem:[%s849] sm:$0x1] %vm508, %v847
    %v851 = vpack.c.bf16 %v818, %v818
    %v853 = vrot.slane %v851, 3
    %v856 = vsel %vm500, %v851, %v853
    %858 = vrot.lane.b32.xlu0 %v856, 64
    %v859 = vpop.permute.xlu0 %858
    %s861 = scalar_lea.vmem %s4, 5
    %862 = vst.msk [vmem:[%s861] sm:$0x1] %vm521, %v859
    %s863 = scalar_lea.vmem [#allocation2], 6
    %v864 = vld [vmem:[%s863] sm:$0x3]
    %v865 = vld [vmem:[#allocation4] sm:$0x3]
    %v866 = vld [vmem:[#allocation5] sm:$0x3]
    %v867 = vpack.c.bf16 %v865, %v865
    %v869 = vsel %vm343, %v867, 0
    %871 = vmatpush.bf16.msra.mxu0 0
    %872 = vmatpush.bf16.msra.mxu0 0
    %873 = vmatpush.bf16.msra.mxu0 0
    %874 = vmatpush.bf16.msra.mxu0 0
    %875 = vmatpush.bf16.msra.mxu0 0
    %876 = vmatpush.bf16.msra.mxu0 0
    %877 = vmatpush.bf16.msra.mxu0 %v340
    %878 = vmatpush.bf16.msra.mxu0 %v339
    %879 = vmatmul.bf16.gmra.mxu0 %v869
    %v880 = vpop.f32.mrf.mxu0
    %v881 = vadd.f32 0.0, %v880
    %v882 = vpop.f32.mrf.mxu0
    %883 = vdwg.mxu0
    %v884 = vadd.f32 %v864, %v881
    %v885 = vxor.u32 %v884, 2147483648
    %v886 = vmul.f32 %v885, 1.442695
    %v887 = vpow.pop %v886
    %v888 = vadd.f32 %v887, 1.0
    %v889 = vrcp.pop %v888
    %v890 = vmul.f32 %v888, %v889
    %v891 = vsub.f32 1.0, %v890
    %v892 = vmul.f32 %v889, %v891
    %v893 = vadd.f32 %v889, %v892
    %vm894 = vweird.f32 %v888
    %vm895 = vweird.f32 %v889
    %vm896 = vmor %vm894, %vm895
    %v897 = vsel %vm896, %v889, %v893
    %v898 = vand.u32 2147483647, %v888
    %vm899 = vcmp.eq.f32.partialorder %v898, 8.507059e+37
    %v900 = vand.u32 %v888, 2147483648
    %v901 = vor.u32 1.1754944e-38, %v900
    %v902 = vsel %vm899, %v901, %v897
    %v903 = vmul.f32 1.0, %v902
    %v904 = vtanh.pop %v884
    %906 = vrot.lane.b32.xlu0 %v866, 32
    %v907 = vpop.permute.xlu0 %906
    %v909 = vmul.f32 %v903, %v907
    %911 = vrot.lane.b32.xlu0 %v904, 64
    %v912 = vpop.permute.xlu0 %911
    %v914 = vmul.f32 %v903, %v912
    %916 = vrot.lane.b32.xlu0 %v914, 32
    %v917 = vpop.permute.xlu0 %916
    %v919 = vadd.f32 %v909, %v917
    %v920 = vtanh.pop %v919
    %922 = vrot.lane.b32.xlu0 %v920, 64
    %v923 = vpop.permute.xlu0 %922
    %v925 = vmul.f32 %v903, %v923
    %s926 = scalar_lea.vmem [#allocation3], 8
    %v927 = vld [vmem:[%s926] sm:$0x3]
    %v928 = vld [vmem:[#allocation6] sm:$0x3]
    %v929 = vld [vmem:[#allocation7] sm:$0x3]
    %v930 = vpack.c.bf16 %v928, %v928
    %v932 = vsel %vm343, %v930, 0
    %934 = vmatpush.bf16.msra.mxu0 0
    %935 = vmatpush.bf16.msra.mxu0 0
    %936 = vmatpush.bf16.msra.mxu0 0
    %937 = vmatpush.bf16.msra.mxu0 0
    %938 = vmatpush.bf16.msra.mxu0 0
    %939 = vmatpush.bf16.msra.mxu0 0
    %940 = vmatpush.bf16.msra.mxu0 %v416
    %941 = vmatpush.bf16.msra.mxu0 %v415
    %942 = vmatmul.bf16.gmra.mxu0 %v932
    %v943 = vpop.f32.mrf.mxu0
    %v944 = vadd.f32 0.0, %v943
    %v945 = vpop.f32.mrf.mxu0
    %946 = vdwg.mxu0
    %v947 = vadd.f32 %v927, %v944
    %v948 = vxor.u32 %v947, 2147483648
    %v949 = vmul.f32 %v948, 1.442695
    %v950 = vpow.pop %v949
    %v951 = vadd.f32 %v950, 1.0
    %v952 = vrcp.pop %v951
    %v953 = vmul.f32 %v951, %v952
    %v954 = vsub.f32 1.0, %v953
    %v955 = vmul.f32 %v952, %v954
    %v956 = vadd.f32 %v952, %v955
    %vm957 = vweird.f32 %v951
    %vm958 = vweird.f32 %v952
    %vm959 = vmor %vm957, %vm958
    %v960 = vsel %vm959, %v952, %v956
    %v961 = vand.u32 2147483647, %v951
    %vm962 = vcmp.eq.f32.partialorder %v961, 8.507059e+37
    %v963 = vand.u32 %v951, 2147483648
    %v964 = vor.u32 1.1754944e-38, %v963
    %v965 = vsel %vm962, %v964, %v960
    %v966 = vmul.f32 1.0, %v965
    %v967 = vtanh.pop %v947
    %969 = vrot.lane.b32.xlu0 %v929, 32
    %v970 = vpop.permute.xlu0 %969
    %v972 = vmul.f32 %v966, %v970
    %974 = vrot.lane.b32.xlu0 %v967, 64
    %v975 = vpop.permute.xlu0 %974
    %v977 = vmul.f32 %v966, %v975
    %979 = vrot.lane.b32.xlu0 %v977, 32
    %v980 = vpop.permute.xlu0 %979
    %v982 = vadd.f32 %v972, %v980
    %v983 = vtanh.pop %v982
    %985 = vrot.lane.b32.xlu0 %v983, 64
    %v986 = vpop.permute.xlu0 %985
    %v988 = vmul.f32 %v966, %v986
    %990 = vrot.lane.b32.xlu0 %v925, 32
    %v991 = vpop.permute.xlu0 %990
    %993 = vst.msk [vmem:[#allocation4] sm:$0x3] %vm322, %v991
    %995 = vrot.lane.b32.xlu0 %v919, 96
    %v996 = vpop.permute.xlu0 %995
    %998 = vst.msk [vmem:[#allocation5] sm:$0x3] %vm322, %v996
    %1000 = vrot.lane.b32.xlu0 %v988, 32
    %v1001 = vpop.permute.xlu0 %1000
    %1003 = vst.msk [vmem:[#allocation6] sm:$0x3] %vm322, %v1001
    %1005 = vrot.lane.b32.xlu0 %v982, 96
    %v1006 = vpop.permute.xlu0 %1005
    %1008 = vst.msk [vmem:[#allocation7] sm:$0x3] %vm322, %v1006
    %v1009 = vpack.c.bf16 %v925, %v925
    %v1011 = vrot.slane %v1009, 3
    %v1014 = vsel %vm500, %v1009, %v1011
    %1016 = vrot.lane.b32.xlu0 %v1014, 32
    %v1017 = vpop.permute.xlu0 %1016
    %s1019 = scalar_lea.vmem %s4, 3
    %1020 = vst.msk [vmem:[%s1019] sm:$0x1] %vm508, %v1017
    %v1021 = vpack.c.bf16 %v988, %v988
    %v1023 = vrot.slane %v1021, 3
    %v1026 = vsel %vm500, %v1021, %v1023
    %1028 = vrot.lane.b32.xlu0 %v1026, 64
    %v1029 = vpop.permute.xlu0 %1028
    %s1031 = scalar_lea.vmem %s4, 4
    %1032 = vst.msk [vmem:[%s1031] sm:$0x1] %vm521, %v1029
    %s1033 = scalar_lea.vmem [#allocation2], 8
    %v1034 = vld [vmem:[%s1033] sm:$0x3]
    %v1035 = vld [vmem:[#allocation4] sm:$0x3]
    %v1036 = vld [vmem:[#allocation5] sm:$0x3]
    %v1037 = vpack.c.bf16 %v1035, %v1035
    %v1039 = vsel %vm343, %v1037, 0
    %1041 = vmatpush.bf16.msra.mxu0 0
    %1042 = vmatpush.bf16.msra.mxu0 0
    %1043 = vmatpush.bf16.msra.mxu0 0
    %1044 = vmatpush.bf16.msra.mxu0 0
    %1045 = vmatpush.bf16.msra.mxu0 0
    %1046 = vmatpush.bf16.msra.mxu0 0
    %1047 = vmatpush.bf16.msra.mxu0 %v340
    %1048 = vmatpush.bf16.msra.mxu0 %v339
    %1049 = vmatmul.bf16.gmra.mxu0 %v1039
    %v1050 = vpop.f32.mrf.mxu0
    %v1051 = vadd.f32 0.0, %v1050
    %v1052 = vpop.f32.mrf.mxu0
    %1053 = vdwg.mxu0
    %v1054 = vadd.f32 %v1034, %v1051
    %v1055 = vxor.u32 %v1054, 2147483648
    %v1056 = vmul.f32 %v1055, 1.442695
    %v1057 = vpow.pop %v1056
    %v1058 = vadd.f32 %v1057, 1.0
    %v1059 = vrcp.pop %v1058
    %v1060 = vmul.f32 %v1058, %v1059
    %v1061 = vsub.f32 1.0, %v1060
    %v1062 = vmul.f32 %v1059, %v1061
    %v1063 = vadd.f32 %v1059, %v1062
    %vm1064 = vweird.f32 %v1058
    %vm1065 = vweird.f32 %v1059
    %vm1066 = vmor %vm1064, %vm1065
    %v1067 = vsel %vm1066, %v1059, %v1063
    %v1068 = vand.u32 2147483647, %v1058
    %vm1069 = vcmp.eq.f32.partialorder %v1068, 8.507059e+37
    %v1070 = vand.u32 %v1058, 2147483648
    %v1071 = vor.u32 1.1754944e-38, %v1070
    %v1072 = vsel %vm1069, %v1071, %v1067
    %v1073 = vmul.f32 1.0, %v1072
    %v1074 = vtanh.pop %v1054
    %1076 = vrot.lane.b32.xlu0 %v1036, 32
    %v1077 = vpop.permute.xlu0 %1076
    %v1079 = vmul.f32 %v1073, %v1077
    %1081 = vrot.lane.b32.xlu0 %v1074, 64
    %v1082 = vpop.permute.xlu0 %1081
    %v1084 = vmul.f32 %v1073, %v1082
    %1086 = vrot.lane.b32.xlu0 %v1084, 32
    %v1087 = vpop.permute.xlu0 %1086
    %v1089 = vadd.f32 %v1079, %v1087
    %v1090 = vtanh.pop %v1089
    %1092 = vrot.lane.b32.xlu0 %v1090, 64
    %v1093 = vpop.permute.xlu0 %1092
    %v1095 = vmul.f32 %v1073, %v1093
    %s1096 = scalar_lea.vmem [#allocation3], 6
    %v1097 = vld [vmem:[%s1096] sm:$0x3]
    %v1098 = vld [vmem:[#allocation6] sm:$0x3]
    %v1099 = vld [vmem:[#allocation7] sm:$0x3]
    %v1100 = vpack.c.bf16 %v1098, %v1098
    %v1102 = vsel %vm343, %v1100, 0
    %1104 = vmatpush.bf16.msra.mxu0 0
    %1105 = vmatpush.bf16.msra.mxu0 0
    %1106 = vmatpush.bf16.msra.mxu0 0
    %1107 = vmatpush.bf16.msra.mxu0 0
    %1108 = vmatpush.bf16.msra.mxu0 0
    %1109 = vmatpush.bf16.msra.mxu0 0
    %1110 = vmatpush.bf16.msra.mxu0 %v416
    %1111 = vmatpush.bf16.msra.mxu0 %v415
    %1112 = vmatmul.bf16.gmra.mxu0 %v1102
    %v1113 = vpop.f32.mrf.mxu0
    %v1114 = vadd.f32 0.0, %v1113
    %v1115 = vpop.f32.mrf.mxu0
    %1116 = vdwg.mxu0
    %v1117 = vadd.f32 %v1097, %v1114
    %v1118 = vxor.u32 %v1117, 2147483648
    %v1119 = vmul.f32 %v1118, 1.442695
    %v1120 = vpow.pop %v1119
    %v1121 = vadd.f32 %v1120, 1.0
    %v1122 = vrcp.pop %v1121
    %v1123 = vmul.f32 %v1121, %v1122
    %v1124 = vsub.f32 1.0, %v1123
    %v1125 = vmul.f32 %v1122, %v1124
    %v1126 = vadd.f32 %v1122, %v1125
    %vm1127 = vweird.f32 %v1121
    %vm1128 = vweird.f32 %v1122
    %vm1129 = vmor %vm1127, %vm1128
    %v1130 = vsel %vm1129, %v1122, %v1126
    %v1131 = vand.u32 2147483647, %v1121
    %vm1132 = vcmp.eq.f32.partialorder %v1131, 8.507059e+37
    %v1133 = vand.u32 %v1121, 2147483648
    %v1134 = vor.u32 1.1754944e-38, %v1133
    %v1135 = vsel %vm1132, %v1134, %v1130
    %v1136 = vmul.f32 1.0, %v1135
    %v1137 = vtanh.pop %v1117
    %1139 = vrot.lane.b32.xlu0 %v1099, 32
    %v1140 = vpop.permute.xlu0 %1139
    %v1142 = vmul.f32 %v1136, %v1140
    %1144 = vrot.lane.b32.xlu0 %v1137, 64
    %v1145 = vpop.permute.xlu0 %1144
    %v1147 = vmul.f32 %v1136, %v1145
    %1149 = vrot.lane.b32.xlu0 %v1147, 32
    %v1150 = vpop.permute.xlu0 %1149
    %v1152 = vadd.f32 %v1142, %v1150
    %v1153 = vtanh.pop %v1152
    %1155 = vrot.lane.b32.xlu0 %v1153, 64
    %v1156 = vpop.permute.xlu0 %1155
    %v1158 = vmul.f32 %v1136, %v1156
    %1160 = vrot.lane.b32.xlu0 %v1095, 32
    %v1161 = vpop.permute.xlu0 %1160
    %1163 = vst.msk [vmem:[#allocation4] sm:$0x3] %vm322, %v1161
    %1165 = vrot.lane.b32.xlu0 %v1089, 96
    %v1166 = vpop.permute.xlu0 %1165
    %1168 = vst.msk [vmem:[#allocation5] sm:$0x3] %vm322, %v1166
    %1170 = vrot.lane.b32.xlu0 %v1158, 32
    %v1171 = vpop.permute.xlu0 %1170
    %1173 = vst.msk [vmem:[#allocation6] sm:$0x3] %vm322, %v1171
    %1175 = vrot.lane.b32.xlu0 %v1152, 96
    %v1176 = vpop.permute.xlu0 %1175
    %1178 = vst.msk [vmem:[#allocation7] sm:$0x3] %vm322, %v1176
    %v1179 = vpack.c.bf16 %v1095, %v1095
    %v1181 = vrot.slane %v1179, 3
    %v1184 = vsel %vm500, %v1179, %v1181
    %1186 = vrot.lane.b32.xlu0 %v1184, 32
    %v1187 = vpop.permute.xlu0 %1186
    %1189 = vst.msk [vmem:[%s1031] sm:$0x1] %vm508, %v1187
    %v1190 = vpack.c.bf16 %v1158, %v1158
    %v1192 = vrot.slane %v1190, 3
    %v1195 = vsel %vm500, %v1190, %v1192
    %1197 = vrot.lane.b32.xlu0 %v1195, 64
    %v1198 = vpop.permute.xlu0 %1197
    %1200 = vst.msk [vmem:[%s1019] sm:$0x1] %vm521, %v1198
    %s1201 = scalar_lea.vmem [#allocation2], 10
    %v1202 = vld [vmem:[%s1201] sm:$0x3]
    %v1203 = vld [vmem:[#allocation4] sm:$0x3]
    %v1204 = vld [vmem:[#allocation5] sm:$0x3]
    %v1205 = vpack.c.bf16 %v1203, %v1203
    %v1207 = vsel %vm343, %v1205, 0
    %1209 = vmatpush.bf16.msra.mxu0 0
    %1210 = vmatpush.bf16.msra.mxu0 0
    %1211 = vmatpush.bf16.msra.mxu0 0
    %1212 = vmatpush.bf16.msra.mxu0 0
    %1213 = vmatpush.bf16.msra.mxu0 0
    %1214 = vmatpush.bf16.msra.mxu0 0
    %1215 = vmatpush.bf16.msra.mxu0 %v340
    %1216 = vmatpush.bf16.msra.mxu0 %v339
    %1217 = vmatmul.bf16.gmra.mxu0 %v1207
    %v1218 = vpop.f32.mrf.mxu0
    %v1219 = vadd.f32 0.0, %v1218
    %v1220 = vpop.f32.mrf.mxu0
    %1221 = vdwg.mxu0
    %v1222 = vadd.f32 %v1202, %v1219
    %v1223 = vxor.u32 %v1222, 2147483648
    %v1224 = vmul.f32 %v1223, 1.442695
    %v1225 = vpow.pop %v1224
    %v1226 = vadd.f32 %v1225, 1.0
    %v1227 = vrcp.pop %v1226
    %v1228 = vmul.f32 %v1226, %v1227
    %v1229 = vsub.f32 1.0, %v1228
    %v1230 = vmul.f32 %v1227, %v1229
    %v1231 = vadd.f32 %v1227, %v1230
    %vm1232 = vweird.f32 %v1226
    %vm1233 = vweird.f32 %v1227
    %vm1234 = vmor %vm1232, %vm1233
    %v1235 = vsel %vm1234, %v1227, %v1231
    %v1236 = vand.u32 2147483647, %v1226
    %vm1237 = vcmp.eq.f32.partialorder %v1236, 8.507059e+37
    %v1238 = vand.u32 %v1226, 2147483648
    %v1239 = vor.u32 1.1754944e-38, %v1238
    %v1240 = vsel %vm1237, %v1239, %v1235
    %v1241 = vmul.f32 1.0, %v1240
    %v1242 = vtanh.pop %v1222
    %1244 = vrot.lane.b32.xlu0 %v1204, 32
    %v1245 = vpop.permute.xlu0 %1244
    %v1247 = vmul.f32 %v1241, %v1245
    %1249 = vrot.lane.b32.xlu0 %v1242, 64
    %v1250 = vpop.permute.xlu0 %1249
    %v1252 = vmul.f32 %v1241, %v1250
    %1254 = vrot.lane.b32.xlu0 %v1252, 32
    %v1255 = vpop.permute.xlu0 %1254
    %v1257 = vadd.f32 %v1247, %v1255
    %v1258 = vtanh.pop %v1257
    %1260 = vrot.lane.b32.xlu0 %v1258, 64
    %v1261 = vpop.permute.xlu0 %1260
    %v1263 = vmul.f32 %v1241, %v1261
    %s1264 = scalar_lea.vmem [#allocation3], 4
    %v1265 = vld [vmem:[%s1264] sm:$0x3]
    %v1266 = vld [vmem:[#allocation6] sm:$0x3]
    %v1267 = vld [vmem:[#allocation7] sm:$0x3]
    %v1268 = vpack.c.bf16 %v1266, %v1266
    %v1270 = vsel %vm343, %v1268, 0
    %1272 = vmatpush.bf16.msra.mxu0 0
    %1273 = vmatpush.bf16.msra.mxu0 0
    %1274 = vmatpush.bf16.msra.mxu0 0
    %1275 = vmatpush.bf16.msra.mxu0 0
    %1276 = vmatpush.bf16.msra.mxu0 0
    %1277 = vmatpush.bf16.msra.mxu0 0
    %1278 = vmatpush.bf16.msra.mxu0 %v416
    %1279 = vmatpush.bf16.msra.mxu0 %v415
    %1280 = vmatmul.bf16.gmra.mxu0 %v1270
    %v1281 = vpop.f32.mrf.mxu0
    %v1282 = vadd.f32 0.0, %v1281
    %v1283 = vpop.f32.mrf.mxu0
    %1284 = vdwg.mxu0
    %v1285 = vadd.f32 %v1265, %v1282
    %v1286 = vxor.u32 %v1285, 2147483648
    %v1287 = vmul.f32 %v1286, 1.442695
    %v1288 = vpow.pop %v1287
    %v1289 = vadd.f32 %v1288, 1.0
    %v1290 = vrcp.pop %v1289
    %v1291 = vmul.f32 %v1289, %v1290
    %v1292 = vsub.f32 1.0, %v1291
    %v1293 = vmul.f32 %v1290, %v1292
    %v1294 = vadd.f32 %v1290, %v1293
    %vm1295 = vweird.f32 %v1289
    %vm1296 = vweird.f32 %v1290
    %vm1297 = vmor %vm1295, %vm1296
    %v1298 = vsel %vm1297, %v1290, %v1294
    %v1299 = vand.u32 2147483647, %v1289
    %vm1300 = vcmp.eq.f32.partialorder %v1299, 8.507059e+37
    %v1301 = vand.u32 %v1289, 2147483648
    %v1302 = vor.u32 1.1754944e-38, %v1301
    %v1303 = vsel %vm1300, %v1302, %v1298
    %v1304 = vmul.f32 1.0, %v1303
    %v1305 = vtanh.pop %v1285
    %1307 = vrot.lane.b32.xlu0 %v1267, 32
    %v1308 = vpop.permute.xlu0 %1307
    %v1310 = vmul.f32 %v1304, %v1308
    %1312 = vrot.lane.b32.xlu0 %v1305, 64
    %v1313 = vpop.permute.xlu0 %1312
    %v1315 = vmul.f32 %v1304, %v1313
    %1317 = vrot.lane.b32.xlu0 %v1315, 32
    %v1318 = vpop.permute.xlu0 %1317
    %v1320 = vadd.f32 %v1310, %v1318
    %v1321 = vtanh.pop %v1320
    %1323 = vrot.lane.b32.xlu0 %v1321, 64
    %v1324 = vpop.permute.xlu0 %1323
    %v1326 = vmul.f32 %v1304, %v1324
    %1328 = vrot.lane.b32.xlu0 %v1263, 32
    %v1329 = vpop.permute.xlu0 %1328
    %1331 = vst.msk [vmem:[#allocation4] sm:$0x3] %vm322, %v1329
    %1333 = vrot.lane.b32.xlu0 %v1257, 96
    %v1334 = vpop.permute.xlu0 %1333
    %1336 = vst.msk [vmem:[#allocation5] sm:$0x3] %vm322, %v1334
    %1338 = vrot.lane.b32.xlu0 %v1326, 32
    %v1339 = vpop.permute.xlu0 %1338
    %1341 = vst.msk [vmem:[#allocation6] sm:$0x3] %vm322, %v1339
    %1343 = vrot.lane.b32.xlu0 %v1320, 96
    %v1344 = vpop.permute.xlu0 %1343
    %1346 = vst.msk [vmem:[#allocation7] sm:$0x3] %vm322, %v1344
    %v1347 = vpack.c.bf16 %v1263, %v1263
    %v1349 = vrot.slane %v1347, 3
    %v1352 = vsel %vm500, %v1347, %v1349
    %1354 = vrot.lane.b32.xlu0 %v1352, 32
    %v1355 = vpop.permute.xlu0 %1354
    %1357 = vst.msk [vmem:[%s861] sm:$0x1] %vm508, %v1355
    %v1358 = vpack.c.bf16 %v1326, %v1326
    %v1360 = vrot.slane %v1358, 3
    %v1363 = vsel %vm500, %v1358, %v1360
    %1365 = vrot.lane.b32.xlu0 %v1363, 64
    %v1366 = vpop.permute.xlu0 %1365
    %1368 = vst.msk [vmem:[%s849] sm:$0x1] %vm521, %v1366
    %s1369 = scalar_lea.vmem [#allocation2], 12
    %v1370 = vld [vmem:[%s1369] sm:$0x3]
    %v1371 = vld [vmem:[#allocation4] sm:$0x3]
    %v1372 = vld [vmem:[#allocation5] sm:$0x3]
    %v1373 = vpack.c.bf16 %v1371, %v1371
    %v1375 = vsel %vm343, %v1373, 0
    %1377 = vmatpush.bf16.msra.mxu0 0
    %1378 = vmatpush.bf16.msra.mxu0 0
    %1379 = vmatpush.bf16.msra.mxu0 0
    %1380 = vmatpush.bf16.msra.mxu0 0
    %1381 = vmatpush.bf16.msra.mxu0 0
    %1382 = vmatpush.bf16.msra.mxu0 0
    %1383 = vmatpush.bf16.msra.mxu0 %v340
    %1384 = vmatpush.bf16.msra.mxu0 %v339
    %1385 = vmatmul.bf16.gmra.mxu0 %v1375
    %v1386 = vpop.f32.mrf.mxu0
    %v1387 = vadd.f32 0.0, %v1386
    %v1388 = vpop.f32.mrf.mxu0
    %1389 = vdwg.mxu0
    %v1390 = vadd.f32 %v1370, %v1387
    %v1391 = vxor.u32 %v1390, 2147483648
    %v1392 = vmul.f32 %v1391, 1.442695
    %v1393 = vpow.pop %v1392
    %v1394 = vadd.f32 %v1393, 1.0
    %v1395 = vrcp.pop %v1394
    %v1396 = vmul.f32 %v1394, %v1395
    %v1397 = vsub.f32 1.0, %v1396
    %v1398 = vmul.f32 %v1395, %v1397
    %v1399 = vadd.f32 %v1395, %v1398
    %vm1400 = vweird.f32 %v1394
    %vm1401 = vweird.f32 %v1395
    %vm1402 = vmor %vm1400, %vm1401
    %v1403 = vsel %vm1402, %v1395, %v1399
    %v1404 = vand.u32 2147483647, %v1394
    %vm1405 = vcmp.eq.f32.partialorder %v1404, 8.507059e+37
    %v1406 = vand.u32 %v1394, 2147483648
    %v1407 = vor.u32 1.1754944e-38, %v1406
    %v1408 = vsel %vm1405, %v1407, %v1403
    %v1409 = vmul.f32 1.0, %v1408
    %v1410 = vtanh.pop %v1390
    %1412 = vrot.lane.b32.xlu0 %v1372, 32
    %v1413 = vpop.permute.xlu0 %1412
    %v1415 = vmul.f32 %v1409, %v1413
    %1417 = vrot.lane.b32.xlu0 %v1410, 64
    %v1418 = vpop.permute.xlu0 %1417
    %v1420 = vmul.f32 %v1409, %v1418
    %1422 = vrot.lane.b32.xlu0 %v1420, 32
    %v1423 = vpop.permute.xlu0 %1422
    %v1425 = vadd.f32 %v1415, %v1423
    %v1426 = vtanh.pop %v1425
    %1428 = vrot.lane.b32.xlu0 %v1426, 64
    %v1429 = vpop.permute.xlu0 %1428
    %v1431 = vmul.f32 %v1409, %v1429
    %s1432 = scalar_lea.vmem [#allocation3], 2
    %v1433 = vld [vmem:[%s1432] sm:$0x3]
    %v1434 = vld [vmem:[#allocation6] sm:$0x3]
    %v1435 = vld [vmem:[#allocation7] sm:$0x3]
    %v1436 = vpack.c.bf16 %v1434, %v1434
    %v1438 = vsel %vm343, %v1436, 0
    %1440 = vmatpush.bf16.msra.mxu0 0
    %1441 = vmatpush.bf16.msra.mxu0 0
    %1442 = vmatpush.bf16.msra.mxu0 0
    %1443 = vmatpush.bf16.msra.mxu0 0
    %1444 = vmatpush.bf16.msra.mxu0 0
    %1445 = vmatpush.bf16.msra.mxu0 0
    %1446 = vmatpush.bf16.msra.mxu0 %v416
    %1447 = vmatpush.bf16.msra.mxu0 %v415
    %1448 = vmatmul.bf16.gmra.mxu0 %v1438
    %v1449 = vpop.f32.mrf.mxu0
    %v1450 = vadd.f32 0.0, %v1449
    %v1451 = vpop.f32.mrf.mxu0
    %1452 = vdwg.mxu0
    %v1453 = vadd.f32 %v1433, %v1450
    %v1454 = vxor.u32 %v1453, 2147483648
    %v1455 = vmul.f32 %v1454, 1.442695
    %v1456 = vpow.pop %v1455
    %v1457 = vadd.f32 %v1456, 1.0
    %v1458 = vrcp.pop %v1457
    %v1459 = vmul.f32 %v1457, %v1458
    %v1460 = vsub.f32 1.0, %v1459
    %v1461 = vmul.f32 %v1458, %v1460
    %v1462 = vadd.f32 %v1458, %v1461
    %vm1463 = vweird.f32 %v1457
    %vm1464 = vweird.f32 %v1458
    %vm1465 = vmor %vm1463, %vm1464
    %v1466 = vsel %vm1465, %v1458, %v1462
    %v1467 = vand.u32 2147483647, %v1457
    %vm1468 = vcmp.eq.f32.partialorder %v1467, 8.507059e+37
    %v1469 = vand.u32 %v1457, 2147483648
    %v1470 = vor.u32 1.1754944e-38, %v1469
    %v1471 = vsel %vm1468, %v1470, %v1466
    %v1472 = vmul.f32 1.0, %v1471
    %v1473 = vtanh.pop %v1453
    %1475 = vrot.lane.b32.xlu0 %v1435, 32
    %v1476 = vpop.permute.xlu0 %1475
    %v1478 = vmul.f32 %v1472, %v1476
    %1480 = vrot.lane.b32.xlu0 %v1473, 64
    %v1481 = vpop.permute.xlu0 %1480
    %v1483 = vmul.f32 %v1472, %v1481
    %1485 = vrot.lane.b32.xlu0 %v1483, 32
    %v1486 = vpop.permute.xlu0 %1485
    %v1488 = vadd.f32 %v1478, %v1486
    %v1489 = vtanh.pop %v1488
    %1491 = vrot.lane.b32.xlu0 %v1489, 64
    %v1492 = vpop.permute.xlu0 %1491
    %v1494 = vmul.f32 %v1472, %v1492
    %1496 = vrot.lane.b32.xlu0 %v1431, 32
    %v1497 = vpop.permute.xlu0 %1496
    %1499 = vst.msk [vmem:[#allocation4] sm:$0x3] %vm322, %v1497
    %1501 = vrot.lane.b32.xlu0 %v1425, 96
    %v1502 = vpop.permute.xlu0 %1501
    %1504 = vst.msk [vmem:[#allocation5] sm:$0x3] %vm322, %v1502
    %1506 = vrot.lane.b32.xlu0 %v1494, 32
    %v1507 = vpop.permute.xlu0 %1506
    %1509 = vst.msk [vmem:[#allocation6] sm:$0x3] %vm322, %v1507
    %1511 = vrot.lane.b32.xlu0 %v1488, 96
    %v1512 = vpop.permute.xlu0 %1511
    %1514 = vst.msk [vmem:[#allocation7] sm:$0x3] %vm322, %v1512
    %v1515 = vpack.c.bf16 %v1431, %v1431
    %v1517 = vrot.slane %v1515, 3
    %v1520 = vsel %vm500, %v1515, %v1517
    %1522 = vrot.lane.b32.xlu0 %v1520, 32
    %v1523 = vpop.permute.xlu0 %1522
    %1525 = vst.msk [vmem:[%s691] sm:$0x1] %vm508, %v1523
    %v1526 = vpack.c.bf16 %v1494, %v1494
    %v1528 = vrot.slane %v1526, 3
    %v1531 = vsel %vm500, %v1526, %v1528
    %1533 = vrot.lane.b32.xlu0 %v1531, 64
    %v1534 = vpop.permute.xlu0 %1533
    %1536 = vst.msk [vmem:[%s679] sm:$0x1] %vm521, %v1534
    %s1537 = scalar_lea.vmem [#allocation2], 14
    %v1538 = vld [vmem:[%s1537] sm:$0x3]
    %v1539 = vld [vmem:[#allocation4] sm:$0x3]
    %v1540 = vld [vmem:[#allocation5] sm:$0x3]
    %v1541 = vpack.c.bf16 %v1539, %v1539
    %v1543 = vsel %vm343, %v1541, 0
    %1545 = vmatpush.bf16.msra.mxu0 0
    %1546 = vmatpush.bf16.msra.mxu0 0
    %1547 = vmatpush.bf16.msra.mxu0 0
    %1548 = vmatpush.bf16.msra.mxu0 0
    %1549 = vmatpush.bf16.msra.mxu0 0
    %1550 = vmatpush.bf16.msra.mxu0 0
    %1551 = vmatpush.bf16.msra.mxu0 %v340
    %1552 = vmatpush.bf16.msra.mxu0 %v339
    %1553 = vmatmul.bf16.gmra.mxu0 %v1543
    %v1554 = vpop.f32.mrf.mxu0
    %v1555 = vadd.f32 0.0, %v1554
    %v1556 = vpop.f32.mrf.mxu0
    %1557 = vdwg.mxu0
    %v1558 = vadd.f32 %v1538, %v1555
    %v1559 = vxor.u32 %v1558, 2147483648
    %v1560 = vmul.f32 %v1559, 1.442695
    %v1561 = vpow.pop %v1560
    %v1562 = vadd.f32 %v1561, 1.0
    %v1563 = vrcp.pop %v1562
    %v1564 = vmul.f32 %v1562, %v1563
    %v1565 = vsub.f32 1.0, %v1564
    %v1566 = vmul.f32 %v1563, %v1565
    %v1567 = vadd.f32 %v1563, %v1566
    %vm1568 = vweird.f32 %v1562
    %vm1569 = vweird.f32 %v1563
    %vm1570 = vmor %vm1568, %vm1569
    %v1571 = vsel %vm1570, %v1563, %v1567
    %v1572 = vand.u32 2147483647, %v1562
    %vm1573 = vcmp.eq.f32.partialorder %v1572, 8.507059e+37
    %v1574 = vand.u32 %v1562, 2147483648
    %v1575 = vor.u32 1.1754944e-38, %v1574
    %v1576 = vsel %vm1573, %v1575, %v1571
    %v1577 = vmul.f32 1.0, %v1576
    %v1578 = vtanh.pop %v1558
    %1580 = vrot.lane.b32.xlu0 %v1540, 32
    %v1581 = vpop.permute.xlu0 %1580
    %v1583 = vmul.f32 %v1577, %v1581
    %1585 = vrot.lane.b32.xlu0 %v1578, 64
    %v1586 = vpop.permute.xlu0 %1585
    %v1588 = vmul.f32 %v1577, %v1586
    %1590 = vrot.lane.b32.xlu0 %v1588, 32
    %v1591 = vpop.permute.xlu0 %1590
    %v1593 = vadd.f32 %v1583, %v1591
    %v1594 = vtanh.pop %v1593
    %1596 = vrot.lane.b32.xlu0 %v1594, 64
    %v1597 = vpop.permute.xlu0 %1596
    %v1599 = vmul.f32 %v1577, %v1597
    %v1600 = vld [vmem:[#allocation3] sm:$0x3]
    %v1601 = vld [vmem:[#allocation6] sm:$0x3]
    %v1602 = vld [vmem:[#allocation7] sm:$0x3]
    %v1603 = vpack.c.bf16 %v1601, %v1601
    %v1605 = vsel %vm343, %v1603, 0
    %1607 = vmatpush.bf16.msra.mxu0 0
    %1608 = vmatpush.bf16.msra.mxu0 0
    %1609 = vmatpush.bf16.msra.mxu0 0
    %1610 = vmatpush.bf16.msra.mxu0 0
    %1611 = vmatpush.bf16.msra.mxu0 0
    %1612 = vmatpush.bf16.msra.mxu0 0
    %1613 = vmatpush.bf16.msra.mxu0 %v416
    %1614 = vmatpush.bf16.msra.mxu0 %v415
    %1615 = vmatmul.bf16.gmra.mxu0 %v1605
    %v1616 = vpop.f32.mrf.mxu0
    %v1617 = vadd.f32 0.0, %v1616
    %v1618 = vpop.f32.mrf.mxu0
    %1619 = vdwg.mxu0
    %v1620 = vadd.f32 %v1600, %v1617
    %v1621 = vxor.u32 %v1620, 2147483648
    %v1622 = vmul.f32 %v1621, 1.442695
    %v1623 = vpow.pop %v1622
    %v1624 = vadd.f32 %v1623, 1.0
    %v1625 = vrcp.pop %v1624
    %v1626 = vmul.f32 %v1624, %v1625
    %v1627 = vsub.f32 1.0, %v1626
    %v1628 = vmul.f32 %v1625, %v1627
    %v1629 = vadd.f32 %v1625, %v1628
    %vm1630 = vweird.f32 %v1624
    %vm1631 = vweird.f32 %v1625
    %vm1632 = vmor %vm1630, %vm1631
    %v1633 = vsel %vm1632, %v1625, %v1629
    %v1634 = vand.u32 2147483647, %v1624
    %vm1635 = vcmp.eq.f32.partialorder %v1634, 8.507059e+37
    %v1636 = vand.u32 %v1624, 2147483648
    %v1637 = vor.u32 1.1754944e-38, %v1636
    %v1638 = vsel %vm1635, %v1637, %v1633
    %v1639 = vmul.f32 1.0, %v1638
    %v1640 = vtanh.pop %v1620
    %1642 = vrot.lane.b32.xlu0 %v1602, 32
    %v1643 = vpop.permute.xlu0 %1642
    %v1645 = vmul.f32 %v1639, %v1643
    %1647 = vrot.lane.b32.xlu0 %v1640, 64
    %v1648 = vpop.permute.xlu0 %1647
    %v1650 = vmul.f32 %v1639, %v1648
    %1652 = vrot.lane.b32.xlu0 %v1650, 32
    %v1653 = vpop.permute.xlu0 %1652
    %v1655 = vadd.f32 %v1645, %v1653
    %v1656 = vtanh.pop %v1655
    %1658 = vrot.lane.b32.xlu0 %v1656, 64
    %v1659 = vpop.permute.xlu0 %1658
    %v1661 = vmul.f32 %v1639, %v1659
    %1663 = vrot.lane.b32.xlu0 %v1599, 32
    %v1664 = vpop.permute.xlu0 %1663
    %1666 = vst.msk [vmem:[#allocation4] sm:$0x3] %vm322, %v1664
    %1668 = vrot.lane.b32.xlu0 %v1593, 96
    %v1669 = vpop.permute.xlu0 %1668
    %1671 = vst.msk [vmem:[#allocation5] sm:$0x3] %vm322, %v1669
    %1673 = vrot.lane.b32.xlu0 %v1661, 32
    %v1674 = vpop.permute.xlu0 %1673
    %1676 = vst.msk [vmem:[#allocation6] sm:$0x3] %vm322, %v1674
    %1678 = vrot.lane.b32.xlu0 %v1655, 96
    %v1679 = vpop.permute.xlu0 %1678
    %1681 = vst.msk [vmem:[#allocation7] sm:$0x3] %vm322, %v1679
    %v1682 = vpack.c.bf16 %v1599, %v1599
    %v1684 = vrot.slane %v1682, 3
    %v1687 = vsel %vm500, %v1682, %v1684
    %1689 = vrot.lane.b32.xlu0 %v1687, 32
    %v1690 = vpop.permute.xlu0 %1689
    %1692 = vst.msk [vmem:[%s520] sm:$0x1] %vm508, %v1690
    %v1693 = vpack.c.bf16 %v1661, %v1661
    %v1695 = vrot.slane %v1693, 3
    %v1698 = vsel %vm500, %v1693, %v1695
    %1700 = vrot.lane.b32.xlu0 %v1698, 64
    %v1701 = vpop.permute.xlu0 %1700
    %1703 = vst.msk [vmem:[%s4] sm:$0x1] %vm521, %v1701
    %v1704 = vld [vmem:[#allocation4] sm:$0x3]
    %1705 = vst.msk [vmem:[#allocation13] sm:$0x3] %vm322, %v1704
    %v1706 = vld [vmem:[#allocation6] sm:$0x3]
    %1708 = vrot.lane.b32.xlu0 %v1706, 32
    %v1709 = vpop.permute.xlu0 %1708
    %vm1711 = vcmask 517376
    %1712 = vst.msk [vmem:[#allocation13] sm:$0x3] %vm1711, %v1709
    // Predicated region
    $region26: #{lstm_model_forward.3} parent=1 // pred_check
      _
    $region27: #{lstm_model_forward.3} parent=1 // pred_check_branch
      %1714 = sbr.rel (0) target = $region29
    $region28: #{lstm_model_forward.3} parent=1 // pred_region
      _
    $region29: #{lstm_model_forward.3} parent=1 // pred_fallthru
      _
    // Predicated region
    $region30: #{lstm_model_forward.3} parent=1 // pred_check
      _
    $region31: #{lstm_model_forward.3} parent=1 // pred_check_branch
      %1716 = sbr.rel (0) target = $region33
    $region32: #{lstm_model_forward.3} parent=1 // pred_region
      %1718 = vsyncadd [#allocation10], 0
      %s1720 = sshll.u32 [#allocation13], 4
      %s1721 = int_to_ptr.vmem [resolvable:$true] %s1720
      %s1722 = sshll.u32 %s5, 4
      %s1723 = int_to_ptr.hbm [resolvable:$true] %s1722
      %1725 = dma.vmem_to_hbm [thread:$0]  %s1721, 32, %s1723, [#allocation10]
    $region33: #{lstm_model_forward.3} parent=1 // pred_fallthru
      _
    // Predicated region
    $region34: #{lstm_model_forward.3} parent=1 // pred_check
      _
    $region35: #{lstm_model_forward.3} parent=1 // pred_check_branch
      %1727 = sbr.rel (0) target = $region37
    $region36: #{lstm_model_forward.3} parent=1 // pred_region
      _
    $region37: #{lstm_model_forward.3} parent=1 // pred_fallthru
      _
    // Predicated region
    $region38: #{lstm_model_forward.3} parent=1 // pred_check
      _
    $region39: #{lstm_model_forward.3} parent=1 // pred_check_branch
      %1729 = sbr.rel (0) target = $region41
    $region40: #{lstm_model_forward.3} parent=1 // pred_region
      %1731 = dma.done [#allocation10], 32
    $region41: #{lstm_model_forward.3} parent=1 // pred_fallthru
      _
    %1732 = vsyncpa [#allocation9], 1
    %1733 = vsyncpa [#allocation12], 1
    %1734 = vsyncpa [#allocation10], 1

// kernel: lstm_model_forward.5
$region0: #{lstm_model_forward.5}
  #allocation0 [shape = 'u32[]', space=smem, size = 0x4, offset = 0x4, fixed_abs, tag = 'smem constant byte address 0x4 - core index']
  #allocation1 [shape = 'u32[72,128]{1,0:T(1,128)}', space=vmem, size = 0x9000, scoped, tag = 'internal scratch']
  %s0 = inlined_call_operand.vmem [shape: f32[2,64], index: 0, kind: input, shape index: {}]
  %s1 = inlined_call_operand.vmem [shape: bf16[64,512], index: 1, kind: input, shape index: {}]
  %s2 = inlined_call_operand.hbm [shape: f32[1,512], index: 2, kind: input, shape index: {}]
  %s3 = inlined_call_operand.hbm [shape: bf16[512,512], index: 3, kind: input, shape index: {}]
  %s4 = inlined_call_operand.hbm [shape: f32[1,512], index: 4, kind: input, shape index: {}]
  %s5 = inlined_call_operand.hbm [shape: bf16[512,256], index: 5, kind: input, shape index: {}]
  %s6 = inlined_call_operand.hbm [shape: f32[1,256], index: 6, kind: input, shape index: {}]
  %s7 = inlined_call_operand.vmem [shape: bf16[256,128], index: 7, kind: input, shape index: {}]
  %s8 = inlined_call_operand.hbm [shape: f32[1,128], index: 8, kind: input, shape index: {}]
  %s9 = inlined_call_operand.hbm [shape: bf16[128,128], index: 9, kind: input, shape index: {}]
  %s10 = inlined_call_operand.hbm [shape: f32[1,128], index: 10, kind: input, shape index: {}]
  %s11 = inlined_call_operand.hbm [shape: f32[2,128], index: 11, kind: output, shape index: {}]
  %s12 = sld [smem:[#allocation0]]
  $region86: #{lstm_model_forward.5} parent=0
    _
  %s14 = ssub.s32 1, %s12
  %s15 = scalar_select 0, %s14, %s12
  $region1: #{lstm_model_forward.5} parent=0
    #allocation2 [shape = 'u8[2048]{0}', space=vmem, size = 0x800, scoped, tag = 'input window, operand 2, single buffered']
    #allocation3 [shape = 's32[1]{0}', space=sflag, size = 0x4, scoped, tag = 'scoped memory for lstm_model_forward.5']
    #allocation4 [shape = 's32[1]{0}', space=sflag, size = 0x4, scoped, tag = 'scoped memory for lstm_model_forward.5']
    #allocation5 [shape = 'u8[524288]{0}', space=vmem, size = 0x80000, scoped, tag = 'input window, operand 3, single buffered']
    #allocation6 [shape = 's32[1]{0}', space=sflag, size = 0x4, scoped, tag = 'scoped memory for lstm_model_forward.5']
    #allocation7 [shape = 'u8[2048]{0}', space=vmem, size = 0x800, scoped, tag = 'input window, operand 4, single buffered']
    #allocation8 [shape = 'u8[262144]{0}', space=vmem, size = 0x40000, scoped, tag = 'input window, operand 5, single buffered']
    #allocation9 [shape = 's32[1]{0}', space=sflag, size = 0x4, scoped, tag = 'scoped memory for lstm_model_forward.5']
    #allocation10 [shape = 'u8[1024]{0}', space=vmem, size = 0x400, scoped, tag = 'input window, operand 6, single buffered']
    #allocation11 [shape = 'u8[512]{0}', space=vmem, size = 0x400, scoped, tag = 'input window, operand 8, single buffered']
    #allocation12 [shape = 's32[1]{0}', space=sflag, size = 0x4, scoped, tag = 'scoped memory for lstm_model_forward.5']
    #allocation13 [shape = 'u8[32768]{0}', space=vmem, size = 0x8000, scoped, tag = 'input window, operand 9, single buffered']
    #allocation14 [shape = 'u8[512]{0}', space=vmem, size = 0x400, scoped, tag = 'input window, operand 10, single buffered']
    #allocation15 [shape = 's32[1]{0}', space=sflag, size = 0x4, scoped, tag = 'scoped memory for lstm_model_forward.5']
    #allocation16 [shape = 'u8[1024]{0}', space=vmem, size = 0x400, scoped, tag = 'output window, operand 0, single buffered']
    %16 = vsyncpa [#allocation3], 0
    %17 = vsyncpa [#allocation6], 0
    %18 = vsyncpa [#allocation9], 0
    %19 = vsyncpa [#allocation12], 0
    %20 = vsyncpa [#allocation15], 0
    %21 = vsyncpa [#allocation4], 0
    // Predicated region
    $region2: #{lstm_model_forward.5} parent=1 // pred_check
      _
    $region3: #{lstm_model_forward.5} parent=1 // pred_check_branch
      %23 = sbr.rel (0) target = $region5
    $region4: #{lstm_model_forward.5} parent=1 // pred_region
      _
    $region5: #{lstm_model_forward.5} parent=1 // pred_fallthru
      _
    // Predicated region
    $region6: #{lstm_model_forward.5} parent=1 // pred_check
      _
    $region7: #{lstm_model_forward.5} parent=1 // pred_check_branch
      %25 = sbr.rel (0) target = $region9
    $region8: #{lstm_model_forward.5} parent=1 // pred_region
      _
    $region9: #{lstm_model_forward.5} parent=1 // pred_fallthru
      _
    // Predicated region
    $region10: #{lstm_model_forward.5} parent=1 // pred_check
      _
    $region11: #{lstm_model_forward.5} parent=1 // pred_check_branch
      %27 = sbr.rel (0) target = $region13
    $region12: #{lstm_model_forward.5} parent=1 // pred_region
      %29 = vsyncadd [#allocation3], 0
      %s31 = sshll.u32 %s2, 4
      %s32 = int_to_ptr.hbm [resolvable:$true] %s31
      %s33 = sshll.u32 [#allocation2], 4
      %s34 = int_to_ptr.vmem [resolvable:$true] %s33
      %36 = dma.hbm_to_vmem [thread:$0]  %s32, 64, %s34, [#allocation3]
    $region13: #{lstm_model_forward.5} parent=1 // pred_fallthru
      _
    // Predicated region
    $region14: #{lstm_model_forward.5} parent=1 // pred_check
      _
    $region15: #{lstm_model_forward.5} parent=1 // pred_check_branch
      %38 = sbr.rel (0) target = $region17
    $region16: #{lstm_model_forward.5} parent=1 // pred_region
      %40 = vsyncadd [#allocation6], 0
      %s41 = sshll.u32 %s3, 4
      %s42 = int_to_ptr.hbm [resolvable:$true] %s41
      %s43 = sshll.u32 [#allocation5], 4
      %s44 = int_to_ptr.vmem [resolvable:$true] %s43
      %49 = dma.hbm_to_vmem [thread:$0]  %s42, 16384, %s44, [#allocation6], 256, 256, 16
    $region17: #{lstm_model_forward.5} parent=1 // pred_fallthru
      _
    // Predicated region
    $region18: #{lstm_model_forward.5} parent=1 // pred_check
      _
    $region19: #{lstm_model_forward.5} parent=1 // pred_check_branch
      %51 = sbr.rel (0) target = $region21
    $region20: #{lstm_model_forward.5} parent=1 // pred_region
      %53 = vsyncadd [#allocation6], 0
      %s55 = sshll.u32 %s4, 4
      %s56 = int_to_ptr.hbm [resolvable:$true] %s55
      %s57 = sshll.u32 [#allocation7], 4
      %s58 = int_to_ptr.vmem [resolvable:$true] %s57
      %60 = dma.hbm_to_vmem [thread:$0]  %s56, 64, %s58, [#allocation6]
    $region21: #{lstm_model_forward.5} parent=1 // pred_fallthru
      _
    // Predicated region
    $region22: #{lstm_model_forward.5} parent=1 // pred_check
      _
    $region23: #{lstm_model_forward.5} parent=1 // pred_check_branch
      %62 = sbr.rel (0) target = $region25
    $region24: #{lstm_model_forward.5} parent=1 // pred_region
      %64 = vsyncadd [#allocation9], 0
      %s65 = sshll.u32 %s5, 4
      %s66 = int_to_ptr.hbm [resolvable:$true] %s65
      %s67 = sshll.u32 [#allocation8], 4
      %s68 = int_to_ptr.vmem [resolvable:$true] %s67
      %73 = dma.hbm_to_vmem [thread:$0]  %s66, 8192, %s68, [#allocation9], 128, 128, 8
    $region25: #{lstm_model_forward.5} parent=1 // pred_fallthru
      _
    // Predicated region
    $region26: #{lstm_model_forward.5} parent=1 // pred_check
      _
    $region27: #{lstm_model_forward.5} parent=1 // pred_check_branch
      %75 = sbr.rel (0) target = $region29
    $region28: #{lstm_model_forward.5} parent=1 // pred_region
      %77 = vsyncadd [#allocation9], 0
      %s79 = sshll.u32 %s6, 4
      %s80 = int_to_ptr.hbm [resolvable:$true] %s79
      %s81 = sshll.u32 [#allocation10], 4
      %s82 = int_to_ptr.vmem [resolvable:$true] %s81
      %84 = dma.hbm_to_vmem [thread:$0]  %s80, 32, %s82, [#allocation9]
    $region29: #{lstm_model_forward.5} parent=1 // pred_fallthru
      _
    // Predicated region
    $region30: #{lstm_model_forward.5} parent=1 // pred_check
      _
    $region31: #{lstm_model_forward.5} parent=1 // pred_check_branch
      %86 = sbr.rel (0) target = $region33
    $region32: #{lstm_model_forward.5} parent=1 // pred_region
      _
    $region33: #{lstm_model_forward.5} parent=1 // pred_fallthru
      _
    // Predicated region
    $region34: #{lstm_model_forward.5} parent=1 // pred_check
      _
    $region35: #{lstm_model_forward.5} parent=1 // pred_check_branch
      %88 = sbr.rel (0) target = $region37
    $region36: #{lstm_model_forward.5} parent=1 // pred_region
      %90 = vsyncadd [#allocation12], 0
      %s92 = sshll.u32 %s8, 4
      %s93 = int_to_ptr.hbm [resolvable:$true] %s92
      %s94 = sshll.u32 [#allocation11], 4
      %s95 = int_to_ptr.vmem [resolvable:$true] %s94
      %97 = dma.hbm_to_vmem [thread:$0]  %s93, 16, %s95, [#allocation12]
    $region37: #{lstm_model_forward.5} parent=1 // pred_fallthru
      _
    // Predicated region
    $region38: #{lstm_model_forward.5} parent=1 // pred_check
      _
    $region39: #{lstm_model_forward.5} parent=1 // pred_check_branch
      %99 = sbr.rel (0) target = $region41
    $region40: #{lstm_model_forward.5} parent=1 // pred_region
      %101 = vsyncadd [#allocation12], 0
      %s102 = sshll.u32 %s9, 4
      %s103 = int_to_ptr.hbm [resolvable:$true] %s102
      %s104 = sshll.u32 [#allocation13], 4
      %s105 = int_to_ptr.vmem [resolvable:$true] %s104
      %110 = dma.hbm_to_vmem [thread:$0]  %s103, 1024, %s105, [#allocation12], 64, 64, 4
    $region41: #{lstm_model_forward.5} parent=1 // pred_fallthru
      _
    // Predicated region
    $region42: #{lstm_model_forward.5} parent=1 // pred_check
      _
    $region43: #{lstm_model_forward.5} parent=1 // pred_check_branch
      %112 = sbr.rel (0) target = $region45
    $region44: #{lstm_model_forward.5} parent=1 // pred_region
      %114 = vsyncadd [#allocation15], 0
      %s116 = sshll.u32 %s10, 4
      %s117 = int_to_ptr.hbm [resolvable:$true] %s116
      %s118 = sshll.u32 [#allocation14], 4
      %s119 = int_to_ptr.vmem [resolvable:$true] %s118
      %121 = dma.hbm_to_vmem [thread:$0]  %s117, 16, %s119, [#allocation15]
    $region45: #{lstm_model_forward.5} parent=1 // pred_fallthru
      _
    // Predicated region
    $region46: #{lstm_model_forward.5} parent=1 // pred_check
      _
    $region47: #{lstm_model_forward.5} parent=1 // pred_check_branch
      %123 = sbr.rel (0) target = $region49
    $region48: #{lstm_model_forward.5} parent=1 // pred_region
      %125 = dma.done [#allocation3], 64
    $region49: #{lstm_model_forward.5} parent=1 // pred_fallthru
      _
    // Predicated region
    $region50: #{lstm_model_forward.5} parent=1 // pred_check
      _
    $region51: #{lstm_model_forward.5} parent=1 // pred_check_branch
      %127 = sbr.rel (0) target = $region53
    $region52: #{lstm_model_forward.5} parent=1 // pred_region
      %129 = dma.done [#allocation6], 16384
    $region53: #{lstm_model_forward.5} parent=1 // pred_fallthru
      _
    // Predicated region
    $region54: #{lstm_model_forward.5} parent=1 // pred_check
      _
    $region55: #{lstm_model_forward.5} parent=1 // pred_check_branch
      %131 = sbr.rel (0) target = $region57
    $region56: #{lstm_model_forward.5} parent=1 // pred_region
      %133 = dma.done [#allocation6], 64
    $region57: #{lstm_model_forward.5} parent=1 // pred_fallthru
      _
    // Predicated region
    $region58: #{lstm_model_forward.5} parent=1 // pred_check
      _
    $region59: #{lstm_model_forward.5} parent=1 // pred_check_branch
      %135 = sbr.rel (0) target = $region61
    $region60: #{lstm_model_forward.5} parent=1 // pred_region
      %137 = dma.done [#allocation9], 8192
    $region61: #{lstm_model_forward.5} parent=1 // pred_fallthru
      _
    // Predicated region
    $region62: #{lstm_model_forward.5} parent=1 // pred_check
      _
    $region63: #{lstm_model_forward.5} parent=1 // pred_check_branch
      %139 = sbr.rel (0) target = $region65
    $region64: #{lstm_model_forward.5} parent=1 // pred_region
      %141 = dma.done [#allocation9], 32
    $region65: #{lstm_model_forward.5} parent=1 // pred_fallthru
      _
    // Predicated region
    $region66: #{lstm_model_forward.5} parent=1 // pred_check
      _
    $region67: #{lstm_model_forward.5} parent=1 // pred_check_branch
      %143 = sbr.rel (0) target = $region69
    $region68: #{lstm_model_forward.5} parent=1 // pred_region
      %145 = dma.done [#allocation12], 16
    $region69: #{lstm_model_forward.5} parent=1 // pred_fallthru
      _
    // Predicated region
    $region70: #{lstm_model_forward.5} parent=1 // pred_check
      _
    $region71: #{lstm_model_forward.5} parent=1 // pred_check_branch
      %147 = sbr.rel (0) target = $region73
    $region72: #{lstm_model_forward.5} parent=1 // pred_region
      %149 = dma.done [#allocation12], 1024
    $region73: #{lstm_model_forward.5} parent=1 // pred_fallthru
      _
    // Predicated region
    $region74: #{lstm_model_forward.5} parent=1 // pred_check
      _
    $region75: #{lstm_model_forward.5} parent=1 // pred_check_branch
      %151 = sbr.rel (0) target = $region77
    $region76: #{lstm_model_forward.5} parent=1 // pred_region
      %153 = dma.done [#allocation15], 16
    $region77: #{lstm_model_forward.5} parent=1 // pred_fallthru
      _
    %v155 = vld [vmem:[%s0] sm:$0x3]
    %v156 = vmax.f32 %v155, 0.0
    %v157 = vpack.c.bf16 %v156, %v156
    %v158 = vld [vmem:[%s1] sm:$0xff]
    %v159 = vld [vmem:[%s1 + $0x8] sm:$0xff]
    %v160 = vld [vmem:[%s1 + $0x10] sm:$0xff]
    %v161 = vld [vmem:[%s1 + $0x18] sm:$0xff]
    %v162 = vld [vmem:[%s1 + $0x20] sm:$0xff]
    %v163 = vld [vmem:[%s1 + $0x28] sm:$0xff]
    %v164 = vld [vmem:[%s1 + $0x30] sm:$0xff]
    %v165 = vld [vmem:[%s1 + $0x38] sm:$0xff]
    %v166 = vld [vmem:[%s1 + $0x40] sm:$0xff]
    %v167 = vld [vmem:[%s1 + $0x48] sm:$0xff]
    %v168 = vld [vmem:[%s1 + $0x50] sm:$0xff]
    %v169 = vld [vmem:[%s1 + $0x58] sm:$0xff]
    %v170 = vld [vmem:[%s1 + $0x60] sm:$0xff]
    %v171 = vld [vmem:[%s1 + $0x68] sm:$0xff]
    %v172 = vld [vmem:[%s1 + $0x70] sm:$0xff]
    %v173 = vld [vmem:[%s1 + $0x78] sm:$0xff]
    %v174 = vld [vmem:[#allocation2] sm:$0xf]
    %v176 = vperm.slane %v174, 0
    %v177 = vperm.slane %v174, 1
    %v178 = vperm.slane %v174, 2
    %v179 = vperm.slane %v174, 3
    %v200 = vunpack.c.l.b16 %v158
    %v201 = vunpack.c.h.b16 %v158
    %v202 = vunpack.c.l.b16 %v159
    %v203 = vunpack.c.h.b16 %v159
    %v204 = vunpack.c.l.b16 %v160
    %v205 = vunpack.c.h.b16 %v160
    %v206 = vunpack.c.l.b16 %v161
    %v207 = vunpack.c.h.b16 %v161
    %v208 = vunpack.c.l.b16 %v162
    %v209 = vunpack.c.h.b16 %v162
    %v210 = vunpack.c.l.b16 %v163
    %v211 = vunpack.c.h.b16 %v163
    %v212 = vunpack.c.l.b16 %v164
    %v213 = vunpack.c.h.b16 %v164
    %v214 = vunpack.c.l.b16 %v165
    %v215 = vunpack.c.h.b16 %v165
    %v216 = vunpack.c.l.b16 %v166
    %v217 = vunpack.c.h.b16 %v166
    %v218 = vunpack.c.l.b16 %v167
    %v219 = vunpack.c.h.b16 %v167
    %v220 = vunpack.c.l.b16 %v168
    %v221 = vunpack.c.h.b16 %v168
    %v222 = vunpack.c.l.b16 %v169
    %v223 = vunpack.c.h.b16 %v169
    %v224 = vunpack.c.l.b16 %v170
    %v225 = vunpack.c.h.b16 %v170
    %v226 = vunpack.c.l.b16 %v171
    %v227 = vunpack.c.h.b16 %v171
    %v228 = vunpack.c.l.b16 %v172
    %v229 = vunpack.c.h.b16 %v172
    %v230 = vunpack.c.l.b16 %v173
    %v231 = vunpack.c.h.b16 %v173
    %v232 = vpack.c.b16 %v204, %v200
    %v233 = vpack.c.b16 %v205, %v201
    %v234 = vpack.c.b16 %v206, %v202
    %v235 = vpack.c.b16 %v207, %v203
    %v236 = vpack.c.b16 %v212, %v208
    %v237 = vpack.c.b16 %v213, %v209
    %v238 = vpack.c.b16 %v214, %v210
    %v239 = vpack.c.b16 %v215, %v211
    %v240 = vpack.c.b16 %v220, %v216
    %v241 = vpack.c.b16 %v221, %v217
    %v242 = vpack.c.b16 %v222, %v218
    %v243 = vpack.c.b16 %v223, %v219
    %v244 = vpack.c.b16 %v228, %v224
    %v245 = vpack.c.b16 %v229, %v225
    %v246 = vpack.c.b16 %v230, %v226
    %v247 = vpack.c.b16 %v231, %v227
    %vm264 = vcmask 523264
    %v266 = vsel %vm264, %v157, 0
    %268 = vmatpush.bf16.msra.mxu0 0
    %269 = vmatpush.bf16.msra.mxu0 0
    %270 = vmatpush.bf16.msra.mxu0 0
    %271 = vmatpush.bf16.msra.mxu0 0
    %272 = vmatpush.bf16.msra.mxu0 %v244
    %273 = vmatpush.bf16.msra.mxu0 %v240
    %274 = vmatpush.bf16.msra.mxu0 %v236
    %275 = vmatpush.bf16.msra.mxu0 %v232
    %276 = vmatmul.bf16.gmra.mxu0 %v266
    %v277 = vpop.f32.mrf.mxu0
    %v278 = vadd.f32 %v176, %v277
    %v279 = vpop.f32.mrf.mxu0
    %280 = vdwg.mxu0
    %281 = vmatpush.bf16.msra.mxu0 0
    %282 = vmatpush.bf16.msra.mxu0 0
    %283 = vmatpush.bf16.msra.mxu0 0
    %284 = vmatpush.bf16.msra.mxu0 0
    %285 = vmatpush.bf16.msra.mxu0 %v245
    %286 = vmatpush.bf16.msra.mxu0 %v241
    %287 = vmatpush.bf16.msra.mxu0 %v237
    %288 = vmatpush.bf16.msra.mxu0 %v233
    %289 = vmatmul.bf16.gmra.mxu0 %v266
    %v290 = vpop.f32.mrf.mxu0
    %v291 = vadd.f32 %v177, %v290
    %v292 = vpop.f32.mrf.mxu0
    %293 = vdwg.mxu0
    %294 = vmatpush.bf16.msra.mxu0 0
    %295 = vmatpush.bf16.msra.mxu0 0
    %296 = vmatpush.bf16.msra.mxu0 0
    %297 = vmatpush.bf16.msra.mxu0 0
    %298 = vmatpush.bf16.msra.mxu0 %v246
    %299 = vmatpush.bf16.msra.mxu0 %v242
    %300 = vmatpush.bf16.msra.mxu0 %v238
    %301 = vmatpush.bf16.msra.mxu0 %v234
    %302 = vmatmul.bf16.gmra.mxu0 %v266
    %v303 = vpop.f32.mrf.mxu0
    %v304 = vadd.f32 %v178, %v303
    %v305 = vpop.f32.mrf.mxu0
    %306 = vdwg.mxu0
    %307 = vmatpush.bf16.msra.mxu0 0
    %308 = vmatpush.bf16.msra.mxu0 0
    %309 = vmatpush.bf16.msra.mxu0 0
    %310 = vmatpush.bf16.msra.mxu0 0
    %311 = vmatpush.bf16.msra.mxu0 %v247
    %312 = vmatpush.bf16.msra.mxu0 %v243
    %313 = vmatpush.bf16.msra.mxu0 %v239
    %314 = vmatpush.bf16.msra.mxu0 %v235
    %315 = vmatmul.bf16.gmra.mxu0 %v266
    %v316 = vpop.f32.mrf.mxu0
    %v317 = vadd.f32 %v179, %v316
    %v318 = vpop.f32.mrf.mxu0
    %319 = vdwg.mxu0
    %v320 = vpack.c.bf16 %v278, %v278
    %v321 = vpack.c.bf16 %v291, %v291
    %v322 = vpack.c.bf16 %v304, %v304
    %v323 = vpack.c.bf16 %v317, %v317
    %v324 = vld [vmem:[#allocation5] sm:$0xff]
    %v325 = vld [vmem:[#allocation5 + $0x8] sm:$0xff]
    %v326 = vld [vmem:[#allocation5 + $0x10] sm:$0xff]
    %v327 = vld [vmem:[#allocation5 + $0x18] sm:$0xff]
    %v328 = vld [vmem:[#allocation5 + $0x20] sm:$0xff]
    %v329 = vld [vmem:[#allocation5 + $0x28] sm:$0xff]
    %v330 = vld [vmem:[#allocation5 + $0x30] sm:$0xff]
    %v331 = vld [vmem:[#allocation5 + $0x38] sm:$0xff]
    %v332 = vld [vmem:[#allocation5 + $0x40] sm:$0xff]
    %v333 = vld [vmem:[#allocation5 + $0x48] sm:$0xff]
    %v334 = vld [vmem:[#allocation5 + $0x50] sm:$0xff]
    %v335 = vld [vmem:[#allocation5 + $0x58] sm:$0xff]
    %v336 = vld [vmem:[#allocation5 + $0x60] sm:$0xff]
    %v337 = vld [vmem:[#allocation5 + $0x68] sm:$0xff]
    %v338 = vld [vmem:[#allocation5 + $0x70] sm:$0xff]
    %v339 = vld [vmem:[#allocation5 + $0x78] sm:$0xff]
    %v340 = vld [vmem:[#allocation5 + $0x80] sm:$0xff]
    %v341 = vld [vmem:[#allocation5 + $0x88] sm:$0xff]
    %v342 = vld [vmem:[#allocation5 + $0x90] sm:$0xff]
    %v343 = vld [vmem:[#allocation5 + $0x98] sm:$0xff]
    %v344 = vld [vmem:[#allocation5 + $0xa0] sm:$0xff]
    %v345 = vld [vmem:[#allocation5 + $0xa8] sm:$0xff]
    %v346 = vld [vmem:[#allocation5 + $0xb0] sm:$0xff]
    %v347 = vld [vmem:[#allocation5 + $0xb8] sm:$0xff]
    %v348 = vld [vmem:[#allocation5 + $0xc0] sm:$0xff]
    %v349 = vld [vmem:[#allocation5 + $0xc8] sm:$0xff]
    %v350 = vld [vmem:[#allocation5 + $0xd0] sm:$0xff]
    %v351 = vld [vmem:[#allocation5 + $0xd8] sm:$0xff]
    %v352 = vld [vmem:[#allocation5 + $0xe0] sm:$0xff]
    %v353 = vld [vmem:[#allocation5 + $0xe8] sm:$0xff]
    %v354 = vld [vmem:[#allocation5 + $0xf0] sm:$0xff]
    %v355 = vld [vmem:[#allocation5 + $0xf8] sm:$0xff]
    %v356 = vld [vmem:[#allocation5 + $0x100] sm:$0xff]
    %v357 = vld [vmem:[#allocation5 + $0x108] sm:$0xff]
    %v358 = vld [vmem:[#allocation5 + $0x110] sm:$0xff]
    %v359 = vld [vmem:[#allocation5 + $0x118] sm:$0xff]
    %v360 = vld [vmem:[#allocation5 + $0x120] sm:$0xff]
    %v361 = vld [vmem:[#allocation5 + $0x128] sm:$0xff]
    %v362 = vld [vmem:[#allocation5 + $0x130] sm:$0xff]
    %v363 = vld [vmem:[#allocation5 + $0x138] sm:$0xff]
    %v364 = vld [vmem:[#allocation5 + $0x140] sm:$0xff]
    %v365 = vld [vmem:[#allocation5 + $0x148] sm:$0xff]
    %v366 = vld [vmem:[#allocation5 + $0x150] sm:$0xff]
    %v367 = vld [vmem:[#allocation5 + $0x158] sm:$0xff]
    %v368 = vld [vmem:[#allocation5 + $0x160] sm:$0xff]
    %v369 = vld [vmem:[#allocation5 + $0x168] sm:$0xff]
    %v370 = vld [vmem:[#allocation5 + $0x170] sm:$0xff]
    %v371 = vld [vmem:[#allocation5 + $0x178] sm:$0xff]
    %v372 = vld [vmem:[#allocation5 + $0x180] sm:$0xff]
    %v373 = vld [vmem:[#allocation5 + $0x188] sm:$0xff]
    %v374 = vld [vmem:[#allocation5 + $0x190] sm:$0xff]
    %v375 = vld [vmem:[#allocation5 + $0x198] sm:$0xff]
    %v376 = vld [vmem:[#allocation5 + $0x1a0] sm:$0xff]
    %v377 = vld [vmem:[#allocation5 + $0x1a8] sm:$0xff]
    %v378 = vld [vmem:[#allocation5 + $0x1b0] sm:$0xff]
    %v379 = vld [vmem:[#allocation5 + $0x1b8] sm:$0xff]
    %v380 = vld [vmem:[#allocation5 + $0x1c0] sm:$0xff]
    %v381 = vld [vmem:[#allocation5 + $0x1c8] sm:$0xff]
    %v382 = vld [vmem:[#allocation5 + $0x1d0] sm:$0xff]
    %v383 = vld [vmem:[#allocation5 + $0x1d8] sm:$0xff]
    %v384 = vld [vmem:[#allocation5 + $0x1e0] sm:$0xff]
    %v385 = vld [vmem:[#allocation5 + $0x1e8] sm:$0xff]
    %v386 = vld [vmem:[#allocation5 + $0x1f0] sm:$0xff]
    %v387 = vld [vmem:[#allocation5 + $0x1f8] sm:$0xff]
    %v388 = vld [vmem:[#allocation5 + $0x200] sm:$0xff]
    %v389 = vld [vmem:[#allocation5 + $0x208] sm:$0xff]
    %v390 = vld [vmem:[#allocation5 + $0x210] sm:$0xff]
    %v391 = vld [vmem:[#allocation5 + $0x218] sm:$0xff]
    %v392 = vld [vmem:[#allocation5 + $0x220] sm:$0xff]
    %v393 = vld [vmem:[#allocation5 + $0x228] sm:$0xff]
    %v394 = vld [vmem:[#allocation5 + $0x230] sm:$0xff]
    %v395 = vld [vmem:[#allocation5 + $0x238] sm:$0xff]
    %v396 = vld [vmem:[#allocation5 + $0x240] sm:$0xff]
    %v397 = vld [vmem:[#allocation5 + $0x248] sm:$0xff]
    %v398 = vld [vmem:[#allocation5 + $0x250] sm:$0xff]
    %v399 = vld [vmem:[#allocation5 + $0x258] sm:$0xff]
    %v400 = vld [vmem:[#allocation5 + $0x260] sm:$0xff]
    %v401 = vld [vmem:[#allocation5 + $0x268] sm:$0xff]
    %v402 = vld [vmem:[#allocation5 + $0x270] sm:$0xff]
    %v403 = vld [vmem:[#allocation5 + $0x278] sm:$0xff]
    %v404 = vld [vmem:[#allocation5 + $0x280] sm:$0xff]
    %v405 = vld [vmem:[#allocation5 + $0x288] sm:$0xff]
    %v406 = vld [vmem:[#allocation5 + $0x290] sm:$0xff]
    %v407 = vld [vmem:[#allocation5 + $0x298] sm:$0xff]
    %v408 = vld [vmem:[#allocation5 + $0x2a0] sm:$0xff]
    %v409 = vld [vmem:[#allocation5 + $0x2a8] sm:$0xff]
    %v410 = vld [vmem:[#allocation5 + $0x2b0] sm:$0xff]
    %v411 = vld [vmem:[#allocation5 + $0x2b8] sm:$0xff]
    %v412 = vld [vmem:[#allocation5 + $0x2c0] sm:$0xff]
    %v413 = vld [vmem:[#allocation5 + $0x2c8] sm:$0xff]
    %v414 = vld [vmem:[#allocation5 + $0x2d0] sm:$0xff]
    %v415 = vld [vmem:[#allocation5 + $0x2d8] sm:$0xff]
    %v416 = vld [vmem:[#allocation5 + $0x2e0] sm:$0xff]
    %v417 = vld [vmem:[#allocation5 + $0x2e8] sm:$0xff]
    %v418 = vld [vmem:[#allocation5 + $0x2f0] sm:$0xff]
    %v419 = vld [vmem:[#allocation5 + $0x2f8] sm:$0xff]
    %v420 = vld [vmem:[#allocation5 + $0x300] sm:$0xff]
    %v421 = vld [vmem:[#allocation5 + $0x308] sm:$0xff]
    %v422 = vld [vmem:[#allocation5 + $0x310] sm:$0xff]
    %v423 = vld [vmem:[#allocation5 + $0x318] sm:$0xff]
    %v424 = vld [vmem:[#allocation5 + $0x320] sm:$0xff]
    %v425 = vld [vmem:[#allocation5 + $0x328] sm:$0xff]
    %v426 = vld [vmem:[#allocation5 + $0x330] sm:$0xff]
    %v427 = vld [vmem:[#allocation5 + $0x338] sm:$0xff]
    %v428 = vld [vmem:[#allocation5 + $0x340] sm:$0xff]
    %v429 = vld [vmem:[#allocation5 + $0x348] sm:$0xff]
    %v430 = vld [vmem:[#allocation5 + $0x350] sm:$0xff]
    %v431 = vld [vmem:[#allocation5 + $0x358] sm:$0xff]
    %v432 = vld [vmem:[#allocation5 + $0x360] sm:$0xff]
    %v433 = vld [vmem:[#allocation5 + $0x368] sm:$0xff]
    %v434 = vld [vmem:[#allocation5 + $0x370] sm:$0xff]
    %v435 = vld [vmem:[#allocation5 + $0x378] sm:$0xff]
    %v436 = vld [vmem:[#allocation5 + $0x380] sm:$0xff]
    %v437 = vld [vmem:[#allocation5 + $0x388] sm:$0xff]
    %v438 = vld [vmem:[#allocation5 + $0x390] sm:$0xff]
    %v439 = vld [vmem:[#allocation5 + $0x398] sm:$0xff]
    %v440 = vld [vmem:[#allocation5 + $0x3a0] sm:$0xff]
    %v441 = vld [vmem:[#allocation5 + $0x3a8] sm:$0xff]
    %v442 = vld [vmem:[#allocation5 + $0x3b0] sm:$0xff]
    %v443 = vld [vmem:[#allocation5 + $0x3b8] sm:$0xff]
    %v444 = vld [vmem:[#allocation5 + $0x3c0] sm:$0xff]
    %v445 = vld [vmem:[#allocation5 + $0x3c8] sm:$0xff]
    %v446 = vld [vmem:[#allocation5 + $0x3d0] sm:$0xff]
    %v447 = vld [vmem:[#allocation5 + $0x3d8] sm:$0xff]
    %v448 = vld [vmem:[#allocation5 + $0x3e0] sm:$0xff]
    %v449 = vld [vmem:[#allocation5 + $0x3e8] sm:$0xff]
    %v450 = vld [vmem:[#allocation5 + $0x3f0] sm:$0xff]
    %v451 = vld [vmem:[#allocation5 + $0x3f8] sm:$0xff]
    %v452 = vld [vmem:[#allocation7] sm:$0xf]
    %v454 = vperm.slane %v452, 0
    %v455 = vperm.slane %v452, 1
    %v456 = vperm.slane %v452, 2
    %v457 = vperm.slane %v452, 3
    %v590 = vunpack.c.l.b16 %v324
    %v591 = vunpack.c.h.b16 %v324
    %v592 = vunpack.c.l.b16 %v325
    %v593 = vunpack.c.h.b16 %v325
    %v594 = vunpack.c.l.b16 %v326
    %v595 = vunpack.c.h.b16 %v326
    %v596 = vunpack.c.l.b16 %v327
    %v597 = vunpack.c.h.b16 %v327
    %v598 = vunpack.c.l.b16 %v328
    %v599 = vunpack.c.h.b16 %v328
    %v600 = vunpack.c.l.b16 %v329
    %v601 = vunpack.c.h.b16 %v329
    %v602 = vunpack.c.l.b16 %v330
    %v603 = vunpack.c.h.b16 %v330
    %v604 = vunpack.c.l.b16 %v331
    %v605 = vunpack.c.h.b16 %v331
    %v606 = vunpack.c.l.b16 %v332
    %v607 = vunpack.c.h.b16 %v332
    %v608 = vunpack.c.l.b16 %v333
    %v609 = vunpack.c.h.b16 %v333
    %v610 = vunpack.c.l.b16 %v334
    %v611 = vunpack.c.h.b16 %v334
    %v612 = vunpack.c.l.b16 %v335
    %v613 = vunpack.c.h.b16 %v335
    %v614 = vunpack.c.l.b16 %v336
    %v615 = vunpack.c.h.b16 %v336
    %v616 = vunpack.c.l.b16 %v337
    %v617 = vunpack.c.h.b16 %v337
    %v618 = vunpack.c.l.b16 %v338
    %v619 = vunpack.c.h.b16 %v338
    %v620 = vunpack.c.l.b16 %v339
    %v621 = vunpack.c.h.b16 %v339
    %v622 = vunpack.c.l.b16 %v340
    %v623 = vunpack.c.h.b16 %v340
    %v624 = vunpack.c.l.b16 %v341
    %v625 = vunpack.c.h.b16 %v341
    %v626 = vunpack.c.l.b16 %v342
    %v627 = vunpack.c.h.b16 %v342
    %v628 = vunpack.c.l.b16 %v343
    %v629 = vunpack.c.h.b16 %v343
    %v630 = vunpack.c.l.b16 %v344
    %v631 = vunpack.c.h.b16 %v344
    %v632 = vunpack.c.l.b16 %v345
    %v633 = vunpack.c.h.b16 %v345
    %v634 = vunpack.c.l.b16 %v346
    %v635 = vunpack.c.h.b16 %v346
    %v636 = vunpack.c.l.b16 %v347
    %v637 = vunpack.c.h.b16 %v347
    %v638 = vunpack.c.l.b16 %v348
    %v639 = vunpack.c.h.b16 %v348
    %v640 = vunpack.c.l.b16 %v349
    %v641 = vunpack.c.h.b16 %v349
    %v642 = vunpack.c.l.b16 %v350
    %v643 = vunpack.c.h.b16 %v350
    %v644 = vunpack.c.l.b16 %v351
    %v645 = vunpack.c.h.b16 %v351
    %v646 = vunpack.c.l.b16 %v352
    %v647 = vunpack.c.h.b16 %v352
    %v648 = vunpack.c.l.b16 %v353
    %v649 = vunpack.c.h.b16 %v353
    %v650 = vunpack.c.l.b16 %v354
    %v651 = vunpack.c.h.b16 %v354
    %v652 = vunpack.c.l.b16 %v355
    %v653 = vunpack.c.h.b16 %v355
    %v654 = vunpack.c.l.b16 %v356
    %v655 = vunpack.c.h.b16 %v356
    %v656 = vunpack.c.l.b16 %v357
    %v657 = vunpack.c.h.b16 %v357
    %v658 = vunpack.c.l.b16 %v358
    %v659 = vunpack.c.h.b16 %v358
    %v660 = vunpack.c.l.b16 %v359
    %v661 = vunpack.c.h.b16 %v359
    %v662 = vunpack.c.l.b16 %v360
    %v663 = vunpack.c.h.b16 %v360
    %v664 = vunpack.c.l.b16 %v361
    %v665 = vunpack.c.h.b16 %v361
    %v666 = vunpack.c.l.b16 %v362
    %v667 = vunpack.c.h.b16 %v362
    %v668 = vunpack.c.l.b16 %v363
    %v669 = vunpack.c.h.b16 %v363
    %v670 = vunpack.c.l.b16 %v364
    %v671 = vunpack.c.h.b16 %v364
    %v672 = vunpack.c.l.b16 %v365
    %v673 = vunpack.c.h.b16 %v365
    %v674 = vunpack.c.l.b16 %v366
    %v675 = vunpack.c.h.b16 %v366
    %v676 = vunpack.c.l.b16 %v367
    %v677 = vunpack.c.h.b16 %v367
    %v678 = vunpack.c.l.b16 %v368
    %v679 = vunpack.c.h.b16 %v368
    %v680 = vunpack.c.l.b16 %v369
    %v681 = vunpack.c.h.b16 %v369
    %v682 = vunpack.c.l.b16 %v370
    %v683 = vunpack.c.h.b16 %v370
    %v684 = vunpack.c.l.b16 %v371
    %v685 = vunpack.c.h.b16 %v371
    %v686 = vunpack.c.l.b16 %v372
    %v687 = vunpack.c.h.b16 %v372
    %v688 = vunpack.c.l.b16 %v373
    %v689 = vunpack.c.h.b16 %v373
    %v690 = vunpack.c.l.b16 %v374
    %v691 = vunpack.c.h.b16 %v374
    %v692 = vunpack.c.l.b16 %v375
    %v693 = vunpack.c.h.b16 %v375
    %v694 = vunpack.c.l.b16 %v376
    %v695 = vunpack.c.h.b16 %v376
    %v696 = vunpack.c.l.b16 %v377
    %v697 = vunpack.c.h.b16 %v377
    %v698 = vunpack.c.l.b16 %v378
    %v699 = vunpack.c.h.b16 %v378
    %v700 = vunpack.c.l.b16 %v379
    %v701 = vunpack.c.h.b16 %v379
    %v702 = vunpack.c.l.b16 %v380
    %v703 = vunpack.c.h.b16 %v380
    %v704 = vunpack.c.l.b16 %v381
    %v705 = vunpack.c.h.b16 %v381
    %v706 = vunpack.c.l.b16 %v382
    %v707 = vunpack.c.h.b16 %v382
    %v708 = vunpack.c.l.b16 %v383
    %v709 = vunpack.c.h.b16 %v383
    %v710 = vunpack.c.l.b16 %v384
    %v711 = vunpack.c.h.b16 %v384
    %v712 = vunpack.c.l.b16 %v385
    %v713 = vunpack.c.h.b16 %v385
    %v714 = vunpack.c.l.b16 %v386
    %v715 = vunpack.c.h.b16 %v386
    %v716 = vunpack.c.l.b16 %v387
    %v717 = vunpack.c.h.b16 %v387
    %v718 = vunpack.c.l.b16 %v388
    %v719 = vunpack.c.h.b16 %v388
    %v720 = vunpack.c.l.b16 %v389
    %v721 = vunpack.c.h.b16 %v389
    %v722 = vunpack.c.l.b16 %v390
    %v723 = vunpack.c.h.b16 %v390
    %v724 = vunpack.c.l.b16 %v391
    %v725 = vunpack.c.h.b16 %v391
    %v726 = vunpack.c.l.b16 %v392
    %v727 = vunpack.c.h.b16 %v392
    %v728 = vunpack.c.l.b16 %v393
    %v729 = vunpack.c.h.b16 %v393
    %v730 = vunpack.c.l.b16 %v394
    %v731 = vunpack.c.h.b16 %v394
    %v732 = vunpack.c.l.b16 %v395
    %v733 = vunpack.c.h.b16 %v395
    %v734 = vunpack.c.l.b16 %v396
    %v735 = vunpack.c.h.b16 %v396
    %v736 = vunpack.c.l.b16 %v397
    %v737 = vunpack.c.h.b16 %v397
    %v738 = vunpack.c.l.b16 %v398
    %v739 = vunpack.c.h.b16 %v398
    %v740 = vunpack.c.l.b16 %v399
    %v741 = vunpack.c.h.b16 %v399
    %v742 = vunpack.c.l.b16 %v400
    %v743 = vunpack.c.h.b16 %v400
    %v744 = vunpack.c.l.b16 %v401
    %v745 = vunpack.c.h.b16 %v401
    %v746 = vunpack.c.l.b16 %v402
    %v747 = vunpack.c.h.b16 %v402
    %v748 = vunpack.c.l.b16 %v403
    %v749 = vunpack.c.h.b16 %v403
    %v750 = vunpack.c.l.b16 %v404
    %v751 = vunpack.c.h.b16 %v404
    %v752 = vunpack.c.l.b16 %v405
    %v753 = vunpack.c.h.b16 %v405
    %v754 = vunpack.c.l.b16 %v406
    %v755 = vunpack.c.h.b16 %v406
    %v756 = vunpack.c.l.b16 %v407
    %v757 = vunpack.c.h.b16 %v407
    %v758 = vunpack.c.l.b16 %v408
    %v759 = vunpack.c.h.b16 %v408
    %v760 = vunpack.c.l.b16 %v409
    %v761 = vunpack.c.h.b16 %v409
    %v762 = vunpack.c.l.b16 %v410
    %v763 = vunpack.c.h.b16 %v410
    %v764 = vunpack.c.l.b16 %v411
    %v765 = vunpack.c.h.b16 %v411
    %v766 = vunpack.c.l.b16 %v412
    %v767 = vunpack.c.h.b16 %v412
    %v768 = vunpack.c.l.b16 %v413
    %v769 = vunpack.c.h.b16 %v413
    %v770 = vunpack.c.l.b16 %v414
    %v771 = vunpack.c.h.b16 %v414
    %v772 = vunpack.c.l.b16 %v415
    %v773 = vunpack.c.h.b16 %v415
    %v774 = vunpack.c.l.b16 %v416
    %v775 = vunpack.c.h.b16 %v416
    %v776 = vunpack.c.l.b16 %v417
    %v777 = vunpack.c.h.b16 %v417
    %v778 = vunpack.c.l.b16 %v418
    %v779 = vunpack.c.h.b16 %v418
    %v780 = vunpack.c.l.b16 %v419
    %v781 = vunpack.c.h.b16 %v419
    %v782 = vunpack.c.l.b16 %v420
    %v783 = vunpack.c.h.b16 %v420
    %v784 = vunpack.c.l.b16 %v421
    %v785 = vunpack.c.h.b16 %v421
    %v786 = vunpack.c.l.b16 %v422
    %v787 = vunpack.c.h.b16 %v422
    %v788 = vunpack.c.l.b16 %v423
    %v789 = vunpack.c.h.b16 %v423
    %v790 = vunpack.c.l.b16 %v424
    %v791 = vunpack.c.h.b16 %v424
    %v792 = vunpack.c.l.b16 %v425
    %v793 = vunpack.c.h.b16 %v425
    %v794 = vunpack.c.l.b16 %v426
    %v795 = vunpack.c.h.b16 %v426
    %v796 = vunpack.c.l.b16 %v427
    %v797 = vunpack.c.h.b16 %v427
    %v798 = vunpack.c.l.b16 %v428
    %v799 = vunpack.c.h.b16 %v428
    %v800 = vunpack.c.l.b16 %v429
    %v801 = vunpack.c.h.b16 %v429
    %v802 = vunpack.c.l.b16 %v430
    %v803 = vunpack.c.h.b16 %v430
    %v804 = vunpack.c.l.b16 %v431
    %v805 = vunpack.c.h.b16 %v431
    %v806 = vunpack.c.l.b16 %v432
    %v807 = vunpack.c.h.b16 %v432
    %v808 = vunpack.c.l.b16 %v433
    %v809 = vunpack.c.h.b16 %v433
    %v810 = vunpack.c.l.b16 %v434
    %v811 = vunpack.c.h.b16 %v434
    %v812 = vunpack.c.l.b16 %v435
    %v813 = vunpack.c.h.b16 %v435
    %v814 = vunpack.c.l.b16 %v436
    %v815 = vunpack.c.h.b16 %v436
    %v816 = vunpack.c.l.b16 %v437
    %v817 = vunpack.c.h.b16 %v437
    %v818 = vunpack.c.l.b16 %v438
    %v819 = vunpack.c.h.b16 %v438
    %v820 = vunpack.c.l.b16 %v439
    %v821 = vunpack.c.h.b16 %v439
    %v822 = vunpack.c.l.b16 %v440
    %v823 = vunpack.c.h.b16 %v440
    %v824 = vunpack.c.l.b16 %v441
    %v825 = vunpack.c.h.b16 %v441
    %v826 = vunpack.c.l.b16 %v442
    %v827 = vunpack.c.h.b16 %v442
    %v828 = vunpack.c.l.b16 %v443
    %v829 = vunpack.c.h.b16 %v443
    %v830 = vunpack.c.l.b16 %v444
    %v831 = vunpack.c.h.b16 %v444
    %v832 = vunpack.c.l.b16 %v445
    %v833 = vunpack.c.h.b16 %v445
    %v834 = vunpack.c.l.b16 %v446
    %v835 = vunpack.c.h.b16 %v446
    %v836 = vunpack.c.l.b16 %v447
    %v837 = vunpack.c.h.b16 %v447
    %v838 = vunpack.c.l.b16 %v448
    %v839 = vunpack.c.h.b16 %v448
    %v840 = vunpack.c.l.b16 %v449
    %v841 = vunpack.c.h.b16 %v449
    %v842 = vunpack.c.l.b16 %v450
    %v843 = vunpack.c.h.b16 %v450
    %v844 = vunpack.c.l.b16 %v451
    %v845 = vunpack.c.h.b16 %v451
    %v846 = vpack.c.b16 %v594, %v590
    %v847 = vpack.c.b16 %v595, %v591
    %v848 = vpack.c.b16 %v596, %v592
    %v849 = vpack.c.b16 %v597, %v593
    %v850 = vpack.c.b16 %v602, %v598
    %v851 = vpack.c.b16 %v603, %v599
    %v852 = vpack.c.b16 %v604, %v600
    %v853 = vpack.c.b16 %v605, %v601
    %v854 = vpack.c.b16 %v610, %v606
    %v855 = vpack.c.b16 %v611, %v607
    %v856 = vpack.c.b16 %v612, %v608
    %v857 = vpack.c.b16 %v613, %v609
    %v858 = vpack.c.b16 %v618, %v614
    %v859 = vpack.c.b16 %v619, %v615
    %v860 = vpack.c.b16 %v620, %v616
    %v861 = vpack.c.b16 %v621, %v617
    %v862 = vpack.c.b16 %v626, %v622
    %v863 = vpack.c.b16 %v627, %v623
    %v864 = vpack.c.b16 %v628, %v624
    %v865 = vpack.c.b16 %v629, %v625
    %v866 = vpack.c.b16 %v634, %v630
    %v867 = vpack.c.b16 %v635, %v631
    %v868 = vpack.c.b16 %v636, %v632
    %v869 = vpack.c.b16 %v637, %v633
    %v870 = vpack.c.b16 %v642, %v638
    %v871 = vpack.c.b16 %v643, %v639
    %v872 = vpack.c.b16 %v644, %v640
    %v873 = vpack.c.b16 %v645, %v641
    %v874 = vpack.c.b16 %v650, %v646
    %v875 = vpack.c.b16 %v651, %v647
    %v876 = vpack.c.b16 %v652, %v648
    %v877 = vpack.c.b16 %v653, %v649
    %v878 = vpack.c.b16 %v658, %v654
    %v879 = vpack.c.b16 %v659, %v655
    %v880 = vpack.c.b16 %v660, %v656
    %v881 = vpack.c.b16 %v661, %v657
    %v882 = vpack.c.b16 %v666, %v662
    %v883 = vpack.c.b16 %v667, %v663
    %v884 = vpack.c.b16 %v668, %v664
    %v885 = vpack.c.b16 %v669, %v665
    %v886 = vpack.c.b16 %v674, %v670
    %v887 = vpack.c.b16 %v675, %v671
    %v888 = vpack.c.b16 %v676, %v672
    %v889 = vpack.c.b16 %v677, %v673
    %v890 = vpack.c.b16 %v682, %v678
    %v891 = vpack.c.b16 %v683, %v679
    %v892 = vpack.c.b16 %v684, %v680
    %v893 = vpack.c.b16 %v685, %v681
    %v894 = vpack.c.b16 %v690, %v686
    %v895 = vpack.c.b16 %v691, %v687
    %v896 = vpack.c.b16 %v692, %v688
    %v897 = vpack.c.b16 %v693, %v689
    %v898 = vpack.c.b16 %v698, %v694
    %v899 = vpack.c.b16 %v699, %v695
    %v900 = vpack.c.b16 %v700, %v696
    %v901 = vpack.c.b16 %v701, %v697
    %v902 = vpack.c.b16 %v706, %v702
    %v903 = vpack.c.b16 %v707, %v703
    %v904 = vpack.c.b16 %v708, %v704
    %v905 = vpack.c.b16 %v709, %v705
    %v906 = vpack.c.b16 %v714, %v710
    %v907 = vpack.c.b16 %v715, %v711
    %v908 = vpack.c.b16 %v716, %v712
    %v909 = vpack.c.b16 %v717, %v713
    %v910 = vpack.c.b16 %v722, %v718
    %v911 = vpack.c.b16 %v723, %v719
    %v912 = vpack.c.b16 %v724, %v720
    %v913 = vpack.c.b16 %v725, %v721
    %v914 = vpack.c.b16 %v730, %v726
    %v915 = vpack.c.b16 %v731, %v727
    %v916 = vpack.c.b16 %v732, %v728
    %v917 = vpack.c.b16 %v733, %v729
    %v918 = vpack.c.b16 %v738, %v734
    %v919 = vpack.c.b16 %v739, %v735
    %v920 = vpack.c.b16 %v740, %v736
    %v921 = vpack.c.b16 %v741, %v737
    %v922 = vpack.c.b16 %v746, %v742
    %v923 = vpack.c.b16 %v747, %v743
    %v924 = vpack.c.b16 %v748, %v744
    %v925 = vpack.c.b16 %v749, %v745
    %v926 = vpack.c.b16 %v754, %v750
    %v927 = vpack.c.b16 %v755, %v751
    %v928 = vpack.c.b16 %v756, %v752
    %v929 = vpack.c.b16 %v757, %v753
    %v930 = vpack.c.b16 %v762, %v758
    %v931 = vpack.c.b16 %v763, %v759
    %v932 = vpack.c.b16 %v764, %v760
    %v933 = vpack.c.b16 %v765, %v761
    %v934 = vpack.c.b16 %v770, %v766
    %v935 = vpack.c.b16 %v771, %v767
    %v936 = vpack.c.b16 %v772, %v768
    %v937 = vpack.c.b16 %v773, %v769
    %v938 = vpack.c.b16 %v778, %v774
    %v939 = vpack.c.b16 %v779, %v775
    %v940 = vpack.c.b16 %v780, %v776
    %v941 = vpack.c.b16 %v781, %v777
    %v942 = vpack.c.b16 %v786, %v782
    %v943 = vpack.c.b16 %v787, %v783
    %v944 = vpack.c.b16 %v788, %v784
    %v945 = vpack.c.b16 %v789, %v785
    %v946 = vpack.c.b16 %v794, %v790
    %v947 = vpack.c.b16 %v795, %v791
    %v948 = vpack.c.b16 %v796, %v792
    %v949 = vpack.c.b16 %v797, %v793
    %v950 = vpack.c.b16 %v802, %v798
    %v951 = vpack.c.b16 %v803, %v799
    %v952 = vpack.c.b16 %v804, %v800
    %v953 = vpack.c.b16 %v805, %v801
    %v954 = vpack.c.b16 %v810, %v806
    %v955 = vpack.c.b16 %v811, %v807
    %v956 = vpack.c.b16 %v812, %v808
    %v957 = vpack.c.b16 %v813, %v809
    %v958 = vpack.c.b16 %v818, %v814
    %v959 = vpack.c.b16 %v819, %v815
    %v960 = vpack.c.b16 %v820, %v816
    %v961 = vpack.c.b16 %v821, %v817
    %v962 = vpack.c.b16 %v826, %v822
    %v963 = vpack.c.b16 %v827, %v823
    %v964 = vpack.c.b16 %v828, %v824
    %v965 = vpack.c.b16 %v829, %v825
    %v966 = vpack.c.b16 %v834, %v830
    %v967 = vpack.c.b16 %v835, %v831
    %v968 = vpack.c.b16 %v836, %v832
    %v969 = vpack.c.b16 %v837, %v833
    %v970 = vpack.c.b16 %v842, %v838
    %v971 = vpack.c.b16 %v843, %v839
    %v972 = vpack.c.b16 %v844, %v840
    %v973 = vpack.c.b16 %v845, %v841
    %1102 = vmatpush.bf16.msra.mxu0 %v874
    %1103 = vmatpush.bf16.msra.mxu0 %v870
    %1104 = vmatpush.bf16.msra.mxu0 %v866
    %1105 = vmatpush.bf16.msra.mxu0 %v862
    %1106 = vmatpush.bf16.msra.mxu0 %v858
    %1107 = vmatpush.bf16.msra.mxu0 %v854
    %1108 = vmatpush.bf16.msra.mxu0 %v850
    %1109 = vmatpush.bf16.msra.mxu0 %v846
    %1110 = vmatmul.bf16.gmra.mxu0 %v320
    %v1111 = vpop.f32.mrf.mxu0
    %v1112 = vadd.f32 %v454, %v1111
    %v1113 = vpop.f32.mrf.mxu0
    %1114 = vdwg.mxu0
    %1115 = vmatpush.bf16.msra.mxu0 %v906
    %1116 = vmatpush.bf16.msra.mxu0 %v902
    %1117 = vmatpush.bf16.msra.mxu0 %v898
    %1118 = vmatpush.bf16.msra.mxu0 %v894
    %1119 = vmatpush.bf16.msra.mxu0 %v890
    %1120 = vmatpush.bf16.msra.mxu0 %v886
    %1121 = vmatpush.bf16.msra.mxu0 %v882
    %1122 = vmatpush.bf16.msra.mxu0 %v878
    %1123 = vmatmul.bf16.gmra.mxu0 %v321
    %v1124 = vpop.f32.mrf.mxu0
    %v1125 = vadd.f32 %v1112, %v1124
    %v1126 = vpop.f32.mrf.mxu0
    %1127 = vdwg.mxu0
    %1128 = vmatpush.bf16.msra.mxu0 %v938
    %1129 = vmatpush.bf16.msra.mxu0 %v934
    %1130 = vmatpush.bf16.msra.mxu0 %v930
    %1131 = vmatpush.bf16.msra.mxu0 %v926
    %1132 = vmatpush.bf16.msra.mxu0 %v922
    %1133 = vmatpush.bf16.msra.mxu0 %v918
    %1134 = vmatpush.bf16.msra.mxu0 %v914
    %1135 = vmatpush.bf16.msra.mxu0 %v910
    %1136 = vmatmul.bf16.gmra.mxu0 %v322
    %v1137 = vpop.f32.mrf.mxu0
    %v1138 = vadd.f32 %v1125, %v1137
    %v1139 = vpop.f32.mrf.mxu0
    %1140 = vdwg.mxu0
    %1141 = vmatpush.bf16.msra.mxu0 %v970
    %1142 = vmatpush.bf16.msra.mxu0 %v966
    %1143 = vmatpush.bf16.msra.mxu0 %v962
    %1144 = vmatpush.bf16.msra.mxu0 %v958
    %1145 = vmatpush.bf16.msra.mxu0 %v954
    %1146 = vmatpush.bf16.msra.mxu0 %v950
    %1147 = vmatpush.bf16.msra.mxu0 %v946
    %1148 = vmatpush.bf16.msra.mxu0 %v942
    %1149 = vmatmul.bf16.gmra.mxu0 %v323
    %v1150 = vpop.f32.mrf.mxu0
    %v1151 = vadd.f32 %v1138, %v1150
    %v1152 = vpop.f32.mrf.mxu0
    %1153 = vdwg.mxu0
    %1154 = vmatpush.bf16.msra.mxu0 %v875
    %1155 = vmatpush.bf16.msra.mxu0 %v871
    %1156 = vmatpush.bf16.msra.mxu0 %v867
    %1157 = vmatpush.bf16.msra.mxu0 %v863
    %1158 = vmatpush.bf16.msra.mxu0 %v859
    %1159 = vmatpush.bf16.msra.mxu0 %v855
    %1160 = vmatpush.bf16.msra.mxu0 %v851
    %1161 = vmatpush.bf16.msra.mxu0 %v847
    %1162 = vmatmul.bf16.gmra.mxu0 %v320
    %v1163 = vpop.f32.mrf.mxu0
    %v1164 = vadd.f32 %v455, %v1163
    %v1165 = vpop.f32.mrf.mxu0
    %1166 = vdwg.mxu0
    %1167 = vmatpush.bf16.msra.mxu0 %v907
    %1168 = vmatpush.bf16.msra.mxu0 %v903
    %1169 = vmatpush.bf16.msra.mxu0 %v899
    %1170 = vmatpush.bf16.msra.mxu0 %v895
    %1171 = vmatpush.bf16.msra.mxu0 %v891
    %1172 = vmatpush.bf16.msra.mxu0 %v887
    %1173 = vmatpush.bf16.msra.mxu0 %v883
    %1174 = vmatpush.bf16.msra.mxu0 %v879
    %1175 = vmatmul.bf16.gmra.mxu0 %v321
    %v1176 = vpop.f32.mrf.mxu0
    %v1177 = vadd.f32 %v1164, %v1176
    %v1178 = vpop.f32.mrf.mxu0
    %1179 = vdwg.mxu0
    %1180 = vmatpush.bf16.msra.mxu0 %v939
    %1181 = vmatpush.bf16.msra.mxu0 %v935
    %1182 = vmatpush.bf16.msra.mxu0 %v931
    %1183 = vmatpush.bf16.msra.mxu0 %v927
    %1184 = vmatpush.bf16.msra.mxu0 %v923
    %1185 = vmatpush.bf16.msra.mxu0 %v919
    %1186 = vmatpush.bf16.msra.mxu0 %v915
    %1187 = vmatpush.bf16.msra.mxu0 %v911
    %1188 = vmatmul.bf16.gmra.mxu0 %v322
    %v1189 = vpop.f32.mrf.mxu0
    %v1190 = vadd.f32 %v1177, %v1189
    %v1191 = vpop.f32.mrf.mxu0
    %1192 = vdwg.mxu0
    %1193 = vmatpush.bf16.msra.mxu0 %v971
    %1194 = vmatpush.bf16.msra.mxu0 %v967
    %1195 = vmatpush.bf16.msra.mxu0 %v963
    %1196 = vmatpush.bf16.msra.mxu0 %v959
    %1197 = vmatpush.bf16.msra.mxu0 %v955
    %1198 = vmatpush.bf16.msra.mxu0 %v951
    %1199 = vmatpush.bf16.msra.mxu0 %v947
    %1200 = vmatpush.bf16.msra.mxu0 %v943
    %1201 = vmatmul.bf16.gmra.mxu0 %v323
    %v1202 = vpop.f32.mrf.mxu0
    %v1203 = vadd.f32 %v1190, %v1202
    %v1204 = vpop.f32.mrf.mxu0
    %1205 = vdwg.mxu0
    %1206 = vmatpush.bf16.msra.mxu0 %v876
    %1207 = vmatpush.bf16.msra.mxu0 %v872
    %1208 = vmatpush.bf16.msra.mxu0 %v868
    %1209 = vmatpush.bf16.msra.mxu0 %v864
    %1210 = vmatpush.bf16.msra.mxu0 %v860
    %1211 = vmatpush.bf16.msra.mxu0 %v856
    %1212 = vmatpush.bf16.msra.mxu0 %v852
    %1213 = vmatpush.bf16.msra.mxu0 %v848
    %1214 = vmatmul.bf16.gmra.mxu0 %v320
    %v1215 = vpop.f32.mrf.mxu0
    %v1216 = vadd.f32 %v456, %v1215
    %v1217 = vpop.f32.mrf.mxu0
    %1218 = vdwg.mxu0
    %1219 = vmatpush.bf16.msra.mxu0 %v908
    %1220 = vmatpush.bf16.msra.mxu0 %v904
    %1221 = vmatpush.bf16.msra.mxu0 %v900
    %1222 = vmatpush.bf16.msra.mxu0 %v896
    %1223 = vmatpush.bf16.msra.mxu0 %v892
    %1224 = vmatpush.bf16.msra.mxu0 %v888
    %1225 = vmatpush.bf16.msra.mxu0 %v884
    %1226 = vmatpush.bf16.msra.mxu0 %v880
    %1227 = vmatmul.bf16.gmra.mxu0 %v321
    %v1228 = vpop.f32.mrf.mxu0
    %v1229 = vadd.f32 %v1216, %v1228
    %v1230 = vpop.f32.mrf.mxu0
    %1231 = vdwg.mxu0
    %1232 = vmatpush.bf16.msra.mxu0 %v940
    %1233 = vmatpush.bf16.msra.mxu0 %v936
    %1234 = vmatpush.bf16.msra.mxu0 %v932
    %1235 = vmatpush.bf16.msra.mxu0 %v928
    %1236 = vmatpush.bf16.msra.mxu0 %v924
    %1237 = vmatpush.bf16.msra.mxu0 %v920
    %1238 = vmatpush.bf16.msra.mxu0 %v916
    %1239 = vmatpush.bf16.msra.mxu0 %v912
    %1240 = vmatmul.bf16.gmra.mxu0 %v322
    %v1241 = vpop.f32.mrf.mxu0
    %v1242 = vadd.f32 %v1229, %v1241
    %v1243 = vpop.f32.mrf.mxu0
    %1244 = vdwg.mxu0
    %1245 = vmatpush.bf16.msra.mxu0 %v972
    %1246 = vmatpush.bf16.msra.mxu0 %v968
    %1247 = vmatpush.bf16.msra.mxu0 %v964
    %1248 = vmatpush.bf16.msra.mxu0 %v960
    %1249 = vmatpush.bf16.msra.mxu0 %v956
    %1250 = vmatpush.bf16.msra.mxu0 %v952
    %1251 = vmatpush.bf16.msra.mxu0 %v948
    %1252 = vmatpush.bf16.msra.mxu0 %v944
    %1253 = vmatmul.bf16.gmra.mxu0 %v323
    %v1254 = vpop.f32.mrf.mxu0
    %v1255 = vadd.f32 %v1242, %v1254
    %v1256 = vpop.f32.mrf.mxu0
    %1257 = vdwg.mxu0
    %1258 = vmatpush.bf16.msra.mxu0 %v877
    %1259 = vmatpush.bf16.msra.mxu0 %v873
    %1260 = vmatpush.bf16.msra.mxu0 %v869
    %1261 = vmatpush.bf16.msra.mxu0 %v865
    %1262 = vmatpush.bf16.msra.mxu0 %v861
    %1263 = vmatpush.bf16.msra.mxu0 %v857
    %1264 = vmatpush.bf16.msra.mxu0 %v853
    %1265 = vmatpush.bf16.msra.mxu0 %v849
    %1266 = vmatmul.bf16.gmra.mxu0 %v320
    %v1267 = vpop.f32.mrf.mxu0
    %v1268 = vadd.f32 %v457, %v1267
    %v1269 = vpop.f32.mrf.mxu0
    %1270 = vdwg.mxu0
    %1271 = vmatpush.bf16.msra.mxu0 %v909
    %1272 = vmatpush.bf16.msra.mxu0 %v905
    %1273 = vmatpush.bf16.msra.mxu0 %v901
    %1274 = vmatpush.bf16.msra.mxu0 %v897
    %1275 = vmatpush.bf16.msra.mxu0 %v893
    %1276 = vmatpush.bf16.msra.mxu0 %v889
    %1277 = vmatpush.bf16.msra.mxu0 %v885
    %1278 = vmatpush.bf16.msra.mxu0 %v881
    %1279 = vmatmul.bf16.gmra.mxu0 %v321
    %v1280 = vpop.f32.mrf.mxu0
    %v1281 = vadd.f32 %v1268, %v1280
    %v1282 = vpop.f32.mrf.mxu0
    %1283 = vdwg.mxu0
    %1284 = vmatpush.bf16.msra.mxu0 %v941
    %1285 = vmatpush.bf16.msra.mxu0 %v937
    %1286 = vmatpush.bf16.msra.mxu0 %v933
    %1287 = vmatpush.bf16.msra.mxu0 %v929
    %1288 = vmatpush.bf16.msra.mxu0 %v925
    %1289 = vmatpush.bf16.msra.mxu0 %v921
    %1290 = vmatpush.bf16.msra.mxu0 %v917
    %1291 = vmatpush.bf16.msra.mxu0 %v913
    %1292 = vmatmul.bf16.gmra.mxu0 %v322
    %v1293 = vpop.f32.mrf.mxu0
    %v1294 = vadd.f32 %v1281, %v1293
    %v1295 = vpop.f32.mrf.mxu0
    %1296 = vdwg.mxu0
    %1297 = vmatpush.bf16.msra.mxu0 %v973
    %1298 = vmatpush.bf16.msra.mxu0 %v969
    %1299 = vmatpush.bf16.msra.mxu0 %v965
    %1300 = vmatpush.bf16.msra.mxu0 %v961
    %1301 = vmatpush.bf16.msra.mxu0 %v957
    %1302 = vmatpush.bf16.msra.mxu0 %v953
    %1303 = vmatpush.bf16.msra.mxu0 %v949
    %1304 = vmatpush.bf16.msra.mxu0 %v945
    %1305 = vmatmul.bf16.gmra.mxu0 %v323
    %v1306 = vpop.f32.mrf.mxu0
    %v1307 = vadd.f32 %v1294, %v1306
    %v1308 = vpop.f32.mrf.mxu0
    %1309 = vdwg.mxu0
    %v1310 = vpack.c.bf16 %v1151, %v1151
    %v1311 = vpack.c.bf16 %v1203, %v1203
    %v1312 = vpack.c.bf16 %v1255, %v1255
    %v1313 = vpack.c.bf16 %v1307, %v1307
    %v1314 = vld [vmem:[#allocation8] sm:$0xff]
    %v1315 = vld [vmem:[#allocation8 + $0x8] sm:$0xff]
    %v1316 = vld [vmem:[#allocation8 + $0x10] sm:$0xff]
    %v1317 = vld [vmem:[#allocation8 + $0x18] sm:$0xff]
    %v1318 = vld [vmem:[#allocation8 + $0x20] sm:$0xff]
    %v1319 = vld [vmem:[#allocation8 + $0x28] sm:$0xff]
    %v1320 = vld [vmem:[#allocation8 + $0x30] sm:$0xff]
    %v1321 = vld [vmem:[#allocation8 + $0x38] sm:$0xff]
    %v1322 = vld [vmem:[#allocation8 + $0x40] sm:$0xff]
    %v1323 = vld [vmem:[#allocation8 + $0x48] sm:$0xff]
    %v1324 = vld [vmem:[#allocation8 + $0x50] sm:$0xff]
    %v1325 = vld [vmem:[#allocation8 + $0x58] sm:$0xff]
    %v1326 = vld [vmem:[#allocation8 + $0x60] sm:$0xff]
    %v1327 = vld [vmem:[#allocation8 + $0x68] sm:$0xff]
    %v1328 = vld [vmem:[#allocation8 + $0x70] sm:$0xff]
    %v1329 = vld [vmem:[#allocation8 + $0x78] sm:$0xff]
    %v1330 = vld [vmem:[#allocation8 + $0x80] sm:$0xff]
    %v1331 = vld [vmem:[#allocation8 + $0x88] sm:$0xff]
    %v1332 = vld [vmem:[#allocation8 + $0x90] sm:$0xff]
    %v1333 = vld [vmem:[#allocation8 + $0x98] sm:$0xff]
    %v1334 = vld [vmem:[#allocation8 + $0xa0] sm:$0xff]
    %v1335 = vld [vmem:[#allocation8 + $0xa8] sm:$0xff]
    %v1336 = vld [vmem:[#allocation8 + $0xb0] sm:$0xff]
    %v1337 = vld [vmem:[#allocation8 + $0xb8] sm:$0xff]
    %v1338 = vld [vmem:[#allocation8 + $0xc0] sm:$0xff]
    %v1339 = vld [vmem:[#allocation8 + $0xc8] sm:$0xff]
    %v1340 = vld [vmem:[#allocation8 + $0xd0] sm:$0xff]
    %v1341 = vld [vmem:[#allocation8 + $0xd8] sm:$0xff]
    %v1342 = vld [vmem:[#allocation8 + $0xe0] sm:$0xff]
    %v1343 = vld [vmem:[#allocation8 + $0xe8] sm:$0xff]
    %v1344 = vld [vmem:[#allocation8 + $0xf0] sm:$0xff]
    %v1345 = vld [vmem:[#allocation8 + $0xf8] sm:$0xff]
    %v1346 = vld [vmem:[#allocation8 + $0x100] sm:$0xff]
    %v1347 = vld [vmem:[#allocation8 + $0x108] sm:$0xff]
    %v1348 = vld [vmem:[#allocation8 + $0x110] sm:$0xff]
    %v1349 = vld [vmem:[#allocation8 + $0x118] sm:$0xff]
    %v1350 = vld [vmem:[#allocation8 + $0x120] sm:$0xff]
    %v1351 = vld [vmem:[#allocation8 + $0x128] sm:$0xff]
    %v1352 = vld [vmem:[#allocation8 + $0x130] sm:$0xff]
    %v1353 = vld [vmem:[#allocation8 + $0x138] sm:$0xff]
    %v1354 = vld [vmem:[#allocation8 + $0x140] sm:$0xff]
    %v1355 = vld [vmem:[#allocation8 + $0x148] sm:$0xff]
    %v1356 = vld [vmem:[#allocation8 + $0x150] sm:$0xff]
    %v1357 = vld [vmem:[#allocation8 + $0x158] sm:$0xff]
    %v1358 = vld [vmem:[#allocation8 + $0x160] sm:$0xff]
    %v1359 = vld [vmem:[#allocation8 + $0x168] sm:$0xff]
    %v1360 = vld [vmem:[#allocation8 + $0x170] sm:$0xff]
    %v1361 = vld [vmem:[#allocation8 + $0x178] sm:$0xff]
    %v1362 = vld [vmem:[#allocation8 + $0x180] sm:$0xff]
    %v1363 = vld [vmem:[#allocation8 + $0x188] sm:$0xff]
    %v1364 = vld [vmem:[#allocation8 + $0x190] sm:$0xff]
    %v1365 = vld [vmem:[#allocation8 + $0x198] sm:$0xff]
    %v1366 = vld [vmem:[#allocation8 + $0x1a0] sm:$0xff]
    %v1367 = vld [vmem:[#allocation8 + $0x1a8] sm:$0xff]
    %v1368 = vld [vmem:[#allocation8 + $0x1b0] sm:$0xff]
    %v1369 = vld [vmem:[#allocation8 + $0x1b8] sm:$0xff]
    %v1370 = vld [vmem:[#allocation8 + $0x1c0] sm:$0xff]
    %v1371 = vld [vmem:[#allocation8 + $0x1c8] sm:$0xff]
    %v1372 = vld [vmem:[#allocation8 + $0x1d0] sm:$0xff]
    %v1373 = vld [vmem:[#allocation8 + $0x1d8] sm:$0xff]
    %v1374 = vld [vmem:[#allocation8 + $0x1e0] sm:$0xff]
    %v1375 = vld [vmem:[#allocation8 + $0x1e8] sm:$0xff]
    %v1376 = vld [vmem:[#allocation8 + $0x1f0] sm:$0xff]
    %v1377 = vld [vmem:[#allocation8 + $0x1f8] sm:$0xff]
    %v1378 = vld [vmem:[#allocation10] sm:$0x3]
    %v1380 = vperm.slane %v1378, 0
    %v1381 = vperm.slane %v1378, 1
    %v1448 = vunpack.c.l.b16 %v1314
    %v1449 = vunpack.c.h.b16 %v1314
    %v1450 = vunpack.c.l.b16 %v1315
    %v1451 = vunpack.c.h.b16 %v1315
    %v1452 = vunpack.c.l.b16 %v1316
    %v1453 = vunpack.c.h.b16 %v1316
    %v1454 = vunpack.c.l.b16 %v1317
    %v1455 = vunpack.c.h.b16 %v1317
    %v1456 = vunpack.c.l.b16 %v1318
    %v1457 = vunpack.c.h.b16 %v1318
    %v1458 = vunpack.c.l.b16 %v1319
    %v1459 = vunpack.c.h.b16 %v1319
    %v1460 = vunpack.c.l.b16 %v1320
    %v1461 = vunpack.c.h.b16 %v1320
    %v1462 = vunpack.c.l.b16 %v1321
    %v1463 = vunpack.c.h.b16 %v1321
    %v1464 = vunpack.c.l.b16 %v1322
    %v1465 = vunpack.c.h.b16 %v1322
    %v1466 = vunpack.c.l.b16 %v1323
    %v1467 = vunpack.c.h.b16 %v1323
    %v1468 = vunpack.c.l.b16 %v1324
    %v1469 = vunpack.c.h.b16 %v1324
    %v1470 = vunpack.c.l.b16 %v1325
    %v1471 = vunpack.c.h.b16 %v1325
    %v1472 = vunpack.c.l.b16 %v1326
    %v1473 = vunpack.c.h.b16 %v1326
    %v1474 = vunpack.c.l.b16 %v1327
    %v1475 = vunpack.c.h.b16 %v1327
    %v1476 = vunpack.c.l.b16 %v1328
    %v1477 = vunpack.c.h.b16 %v1328
    %v1478 = vunpack.c.l.b16 %v1329
    %v1479 = vunpack.c.h.b16 %v1329
    %v1480 = vunpack.c.l.b16 %v1330
    %v1481 = vunpack.c.h.b16 %v1330
    %v1482 = vunpack.c.l.b16 %v1331
    %v1483 = vunpack.c.h.b16 %v1331
    %v1484 = vunpack.c.l.b16 %v1332
    %v1485 = vunpack.c.h.b16 %v1332
    %v1486 = vunpack.c.l.b16 %v1333
    %v1487 = vunpack.c.h.b16 %v1333
    %v1488 = vunpack.c.l.b16 %v1334
    %v1489 = vunpack.c.h.b16 %v1334
    %v1490 = vunpack.c.l.b16 %v1335
    %v1491 = vunpack.c.h.b16 %v1335
    %v1492 = vunpack.c.l.b16 %v1336
    %v1493 = vunpack.c.h.b16 %v1336
    %v1494 = vunpack.c.l.b16 %v1337
    %v1495 = vunpack.c.h.b16 %v1337
    %v1496 = vunpack.c.l.b16 %v1338
    %v1497 = vunpack.c.h.b16 %v1338
    %v1498 = vunpack.c.l.b16 %v1339
    %v1499 = vunpack.c.h.b16 %v1339
    %v1500 = vunpack.c.l.b16 %v1340
    %v1501 = vunpack.c.h.b16 %v1340
    %v1502 = vunpack.c.l.b16 %v1341
    %v1503 = vunpack.c.h.b16 %v1341
    %v1504 = vunpack.c.l.b16 %v1342
    %v1505 = vunpack.c.h.b16 %v1342
    %v1506 = vunpack.c.l.b16 %v1343
    %v1507 = vunpack.c.h.b16 %v1343
    %v1508 = vunpack.c.l.b16 %v1344
    %v1509 = vunpack.c.h.b16 %v1344
    %v1510 = vunpack.c.l.b16 %v1345
    %v1511 = vunpack.c.h.b16 %v1345
    %v1512 = vunpack.c.l.b16 %v1346
    %v1513 = vunpack.c.h.b16 %v1346
    %v1514 = vunpack.c.l.b16 %v1347
    %v1515 = vunpack.c.h.b16 %v1347
    %v1516 = vunpack.c.l.b16 %v1348
    %v1517 = vunpack.c.h.b16 %v1348
    %v1518 = vunpack.c.l.b16 %v1349
    %v1519 = vunpack.c.h.b16 %v1349
    %v1520 = vunpack.c.l.b16 %v1350
    %v1521 = vunpack.c.h.b16 %v1350
    %v1522 = vunpack.c.l.b16 %v1351
    %v1523 = vunpack.c.h.b16 %v1351
    %v1524 = vunpack.c.l.b16 %v1352
    %v1525 = vunpack.c.h.b16 %v1352
    %v1526 = vunpack.c.l.b16 %v1353
    %v1527 = vunpack.c.h.b16 %v1353
    %v1528 = vunpack.c.l.b16 %v1354
    %v1529 = vunpack.c.h.b16 %v1354
    %v1530 = vunpack.c.l.b16 %v1355
    %v1531 = vunpack.c.h.b16 %v1355
    %v1532 = vunpack.c.l.b16 %v1356
    %v1533 = vunpack.c.h.b16 %v1356
    %v1534 = vunpack.c.l.b16 %v1357
    %v1535 = vunpack.c.h.b16 %v1357
    %v1536 = vunpack.c.l.b16 %v1358
    %v1537 = vunpack.c.h.b16 %v1358
    %v1538 = vunpack.c.l.b16 %v1359
    %v1539 = vunpack.c.h.b16 %v1359
    %v1540 = vunpack.c.l.b16 %v1360
    %v1541 = vunpack.c.h.b16 %v1360
    %v1542 = vunpack.c.l.b16 %v1361
    %v1543 = vunpack.c.h.b16 %v1361
    %v1544 = vunpack.c.l.b16 %v1362
    %v1545 = vunpack.c.h.b16 %v1362
    %v1546 = vunpack.c.l.b16 %v1363
    %v1547 = vunpack.c.h.b16 %v1363
    %v1548 = vunpack.c.l.b16 %v1364
    %v1549 = vunpack.c.h.b16 %v1364
    %v1550 = vunpack.c.l.b16 %v1365
    %v1551 = vunpack.c.h.b16 %v1365
    %v1552 = vunpack.c.l.b16 %v1366
    %v1553 = vunpack.c.h.b16 %v1366
    %v1554 = vunpack.c.l.b16 %v1367
    %v1555 = vunpack.c.h.b16 %v1367
    %v1556 = vunpack.c.l.b16 %v1368
    %v1557 = vunpack.c.h.b16 %v1368
    %v1558 = vunpack.c.l.b16 %v1369
    %v1559 = vunpack.c.h.b16 %v1369
    %v1560 = vunpack.c.l.b16 %v1370
    %v1561 = vunpack.c.h.b16 %v1370
    %v1562 = vunpack.c.l.b16 %v1371
    %v1563 = vunpack.c.h.b16 %v1371
    %v1564 = vunpack.c.l.b16 %v1372
    %v1565 = vunpack.c.h.b16 %v1372
    %v1566 = vunpack.c.l.b16 %v1373
    %v1567 = vunpack.c.h.b16 %v1373
    %v1568 = vunpack.c.l.b16 %v1374
    %v1569 = vunpack.c.h.b16 %v1374
    %v1570 = vunpack.c.l.b16 %v1375
    %v1571 = vunpack.c.h.b16 %v1375
    %v1572 = vunpack.c.l.b16 %v1376
    %v1573 = vunpack.c.h.b16 %v1376
    %v1574 = vunpack.c.l.b16 %v1377
    %v1575 = vunpack.c.h.b16 %v1377
    %v1576 = vpack.c.b16 %v1450, %v1448
    %v1577 = vpack.c.b16 %v1451, %v1449
    %v1578 = vpack.c.b16 %v1454, %v1452
    %v1579 = vpack.c.b16 %v1455, %v1453
    %v1580 = vpack.c.b16 %v1458, %v1456
    %v1581 = vpack.c.b16 %v1459, %v1457
    %v1582 = vpack.c.b16 %v1462, %v1460
    %v1583 = vpack.c.b16 %v1463, %v1461
    %v1584 = vpack.c.b16 %v1466, %v1464
    %v1585 = vpack.c.b16 %v1467, %v1465
    %v1586 = vpack.c.b16 %v1470, %v1468
    %v1587 = vpack.c.b16 %v1471, %v1469
    %v1588 = vpack.c.b16 %v1474, %v1472
    %v1589 = vpack.c.b16 %v1475, %v1473
    %v1590 = vpack.c.b16 %v1478, %v1476
    %v1591 = vpack.c.b16 %v1479, %v1477
    %v1592 = vpack.c.b16 %v1482, %v1480
    %v1593 = vpack.c.b16 %v1483, %v1481
    %v1594 = vpack.c.b16 %v1486, %v1484
    %v1595 = vpack.c.b16 %v1487, %v1485
    %v1596 = vpack.c.b16 %v1490, %v1488
    %v1597 = vpack.c.b16 %v1491, %v1489
    %v1598 = vpack.c.b16 %v1494, %v1492
    %v1599 = vpack.c.b16 %v1495, %v1493
    %v1600 = vpack.c.b16 %v1498, %v1496
    %v1601 = vpack.c.b16 %v1499, %v1497
    %v1602 = vpack.c.b16 %v1502, %v1500
    %v1603 = vpack.c.b16 %v1503, %v1501
    %v1604 = vpack.c.b16 %v1506, %v1504
    %v1605 = vpack.c.b16 %v1507, %v1505
    %v1606 = vpack.c.b16 %v1510, %v1508
    %v1607 = vpack.c.b16 %v1511, %v1509
    %v1608 = vpack.c.b16 %v1514, %v1512
    %v1609 = vpack.c.b16 %v1515, %v1513
    %v1610 = vpack.c.b16 %v1518, %v1516
    %v1611 = vpack.c.b16 %v1519, %v1517
    %v1612 = vpack.c.b16 %v1522, %v1520
    %v1613 = vpack.c.b16 %v1523, %v1521
    %v1614 = vpack.c.b16 %v1526, %v1524
    %v1615 = vpack.c.b16 %v1527, %v1525
    %v1616 = vpack.c.b16 %v1530, %v1528
    %v1617 = vpack.c.b16 %v1531, %v1529
    %v1618 = vpack.c.b16 %v1534, %v1532
    %v1619 = vpack.c.b16 %v1535, %v1533
    %v1620 = vpack.c.b16 %v1538, %v1536
    %v1621 = vpack.c.b16 %v1539, %v1537
    %v1622 = vpack.c.b16 %v1542, %v1540
    %v1623 = vpack.c.b16 %v1543, %v1541
    %v1624 = vpack.c.b16 %v1546, %v1544
    %v1625 = vpack.c.b16 %v1547, %v1545
    %v1626 = vpack.c.b16 %v1550, %v1548
    %v1627 = vpack.c.b16 %v1551, %v1549
    %v1628 = vpack.c.b16 %v1554, %v1552
    %v1629 = vpack.c.b16 %v1555, %v1553
    %v1630 = vpack.c.b16 %v1558, %v1556
    %v1631 = vpack.c.b16 %v1559, %v1557
    %v1632 = vpack.c.b16 %v1562, %v1560
    %v1633 = vpack.c.b16 %v1563, %v1561
    %v1634 = vpack.c.b16 %v1566, %v1564
    %v1635 = vpack.c.b16 %v1567, %v1565
    %v1636 = vpack.c.b16 %v1570, %v1568
    %v1637 = vpack.c.b16 %v1571, %v1569
    %v1638 = vpack.c.b16 %v1574, %v1572
    %v1639 = vpack.c.b16 %v1575, %v1573
    %1704 = vmatpush.bf16.msra.mxu0 %v1590
    %1705 = vmatpush.bf16.msra.mxu0 %v1588
    %1706 = vmatpush.bf16.msra.mxu0 %v1586
    %1707 = vmatpush.bf16.msra.mxu0 %v1584
    %1708 = vmatpush.bf16.msra.mxu0 %v1582
    %1709 = vmatpush.bf16.msra.mxu0 %v1580
    %1710 = vmatpush.bf16.msra.mxu0 %v1578
    %1711 = vmatpush.bf16.msra.mxu0 %v1576
    %1712 = vmatmul.bf16.gmra.mxu0 %v1310
    %v1713 = vpop.f32.mrf.mxu0
    %v1714 = vadd.f32 %v1380, %v1713
    %v1715 = vpop.f32.mrf.mxu0
    %1716 = vdwg.mxu0
    %1717 = vmatpush.bf16.msra.mxu0 %v1606
    %1718 = vmatpush.bf16.msra.mxu0 %v1604
    %1719 = vmatpush.bf16.msra.mxu0 %v1602
    %1720 = vmatpush.bf16.msra.mxu0 %v1600
    %1721 = vmatpush.bf16.msra.mxu0 %v1598
    %1722 = vmatpush.bf16.msra.mxu0 %v1596
    %1723 = vmatpush.bf16.msra.mxu0 %v1594
    %1724 = vmatpush.bf16.msra.mxu0 %v1592
    %1725 = vmatmul.bf16.gmra.mxu0 %v1311
    %v1726 = vpop.f32.mrf.mxu0
    %v1727 = vadd.f32 %v1714, %v1726
    %v1728 = vpop.f32.mrf.mxu0
    %1729 = vdwg.mxu0
    %1730 = vmatpush.bf16.msra.mxu0 %v1622
    %1731 = vmatpush.bf16.msra.mxu0 %v1620
    %1732 = vmatpush.bf16.msra.mxu0 %v1618
    %1733 = vmatpush.bf16.msra.mxu0 %v1616
    %1734 = vmatpush.bf16.msra.mxu0 %v1614
    %1735 = vmatpush.bf16.msra.mxu0 %v1612
    %1736 = vmatpush.bf16.msra.mxu0 %v1610
    %1737 = vmatpush.bf16.msra.mxu0 %v1608
    %1738 = vmatmul.bf16.gmra.mxu0 %v1312
    %v1739 = vpop.f32.mrf.mxu0
    %v1740 = vadd.f32 %v1727, %v1739
    %v1741 = vpop.f32.mrf.mxu0
    %1742 = vdwg.mxu0
    %1743 = vmatpush.bf16.msra.mxu0 %v1638
    %1744 = vmatpush.bf16.msra.mxu0 %v1636
    %1745 = vmatpush.bf16.msra.mxu0 %v1634
    %1746 = vmatpush.bf16.msra.mxu0 %v1632
    %1747 = vmatpush.bf16.msra.mxu0 %v1630
    %1748 = vmatpush.bf16.msra.mxu0 %v1628
    %1749 = vmatpush.bf16.msra.mxu0 %v1626
    %1750 = vmatpush.bf16.msra.mxu0 %v1624
    %1751 = vmatmul.bf16.gmra.mxu0 %v1313
    %v1752 = vpop.f32.mrf.mxu0
    %v1753 = vadd.f32 %v1740, %v1752
    %v1754 = vpop.f32.mrf.mxu0
    %1755 = vdwg.mxu0
    %1756 = vmatpush.bf16.msra.mxu0 %v1591
    %1757 = vmatpush.bf16.msra.mxu0 %v1589
    %1758 = vmatpush.bf16.msra.mxu0 %v1587
    %1759 = vmatpush.bf16.msra.mxu0 %v1585
    %1760 = vmatpush.bf16.msra.mxu0 %v1583
    %1761 = vmatpush.bf16.msra.mxu0 %v1581
    %1762 = vmatpush.bf16.msra.mxu0 %v1579
    %1763 = vmatpush.bf16.msra.mxu0 %v1577
    %1764 = vmatmul.bf16.gmra.mxu0 %v1310
    %v1765 = vpop.f32.mrf.mxu0
    %v1766 = vadd.f32 %v1381, %v1765
    %v1767 = vpop.f32.mrf.mxu0
    %1768 = vdwg.mxu0
    %1769 = vmatpush.bf16.msra.mxu0 %v1607
    %1770 = vmatpush.bf16.msra.mxu0 %v1605
    %1771 = vmatpush.bf16.msra.mxu0 %v1603
    %1772 = vmatpush.bf16.msra.mxu0 %v1601
    %1773 = vmatpush.bf16.msra.mxu0 %v1599
    %1774 = vmatpush.bf16.msra.mxu0 %v1597
    %1775 = vmatpush.bf16.msra.mxu0 %v1595
    %1776 = vmatpush.bf16.msra.mxu0 %v1593
    %1777 = vmatmul.bf16.gmra.mxu0 %v1311
    %v1778 = vpop.f32.mrf.mxu0
    %v1779 = vadd.f32 %v1766, %v1778
    %v1780 = vpop.f32.mrf.mxu0
    %1781 = vdwg.mxu0
    %1782 = vmatpush.bf16.msra.mxu0 %v1623
    %1783 = vmatpush.bf16.msra.mxu0 %v1621
    %1784 = vmatpush.bf16.msra.mxu0 %v1619
    %1785 = vmatpush.bf16.msra.mxu0 %v1617
    %1786 = vmatpush.bf16.msra.mxu0 %v1615
    %1787 = vmatpush.bf16.msra.mxu0 %v1613
    %1788 = vmatpush.bf16.msra.mxu0 %v1611
    %1789 = vmatpush.bf16.msra.mxu0 %v1609
    %1790 = vmatmul.bf16.gmra.mxu0 %v1312
    %v1791 = vpop.f32.mrf.mxu0
    %v1792 = vadd.f32 %v1779, %v1791
    %v1793 = vpop.f32.mrf.mxu0
    %1794 = vdwg.mxu0
    %1795 = vmatpush.bf16.msra.mxu0 %v1639
    %1796 = vmatpush.bf16.msra.mxu0 %v1637
    %1797 = vmatpush.bf16.msra.mxu0 %v1635
    %1798 = vmatpush.bf16.msra.mxu0 %v1633
    %1799 = vmatpush.bf16.msra.mxu0 %v1631
    %1800 = vmatpush.bf16.msra.mxu0 %v1629
    %1801 = vmatpush.bf16.msra.mxu0 %v1627
    %1802 = vmatpush.bf16.msra.mxu0 %v1625
    %1803 = vmatmul.bf16.gmra.mxu0 %v1313
    %v1804 = vpop.f32.mrf.mxu0
    %v1805 = vadd.f32 %v1792, %v1804
    %v1806 = vpop.f32.mrf.mxu0
    %1807 = vdwg.mxu0
    %v1808 = vpack.c.bf16 %v1753, %v1753
    %v1809 = vpack.c.bf16 %v1805, %v1805
    %v1810 = vld [vmem:[%s7] sm:$0xf]
    %v1811 = vld [vmem:[%s7 + $0x4] sm:$0xf]
    %v1812 = vld [vmem:[%s7 + $0x8] sm:$0xf]
    %v1813 = vld [vmem:[%s7 + $0xc] sm:$0xf]
    %v1814 = vld [vmem:[%s7 + $0x10] sm:$0xf]
    %v1815 = vld [vmem:[%s7 + $0x14] sm:$0xf]
    %v1816 = vld [vmem:[%s7 + $0x18] sm:$0xf]
    %v1817 = vld [vmem:[%s7 + $0x1c] sm:$0xf]
    %v1818 = vld [vmem:[%s7 + $0x20] sm:$0xf]
    %v1819 = vld [vmem:[%s7 + $0x24] sm:$0xf]
    %v1820 = vld [vmem:[%s7 + $0x28] sm:$0xf]
    %v1821 = vld [vmem:[%s7 + $0x2c] sm:$0xf]
    %v1822 = vld [vmem:[%s7 + $0x30] sm:$0xf]
    %v1823 = vld [vmem:[%s7 + $0x34] sm:$0xf]
    %v1824 = vld [vmem:[%s7 + $0x38] sm:$0xf]
    %v1825 = vld [vmem:[%s7 + $0x3c] sm:$0xf]
    %v1826 = vld [vmem:[%s7 + $0x40] sm:$0xf]
    %v1827 = vld [vmem:[%s7 + $0x44] sm:$0xf]
    %v1828 = vld [vmem:[%s7 + $0x48] sm:$0xf]
    %v1829 = vld [vmem:[%s7 + $0x4c] sm:$0xf]
    %v1830 = vld [vmem:[%s7 + $0x50] sm:$0xf]
    %v1831 = vld [vmem:[%s7 + $0x54] sm:$0xf]
    %v1832 = vld [vmem:[%s7 + $0x58] sm:$0xf]
    %v1833 = vld [vmem:[%s7 + $0x5c] sm:$0xf]
    %v1834 = vld [vmem:[%s7 + $0x60] sm:$0xf]
    %v1835 = vld [vmem:[%s7 + $0x64] sm:$0xf]
    %v1836 = vld [vmem:[%s7 + $0x68] sm:$0xf]
    %v1837 = vld [vmem:[%s7 + $0x6c] sm:$0xf]
    %v1838 = vld [vmem:[%s7 + $0x70] sm:$0xf]
    %v1839 = vld [vmem:[%s7 + $0x74] sm:$0xf]
    %v1840 = vld [vmem:[%s7 + $0x78] sm:$0xf]
    %v1841 = vld [vmem:[%s7 + $0x7c] sm:$0xf]
    %v1842 = vld [vmem:[#allocation11] sm:$0x1]
    %v1844 = vperm.slane %v1842, 0
    %v1878 = vunpack.c.l.b16 %v1810
    %v1879 = vunpack.c.l.b16 %v1811
    %v1880 = vunpack.c.l.b16 %v1812
    %v1881 = vunpack.c.l.b16 %v1813
    %v1882 = vunpack.c.l.b16 %v1814
    %v1883 = vunpack.c.l.b16 %v1815
    %v1884 = vunpack.c.l.b16 %v1816
    %v1885 = vunpack.c.l.b16 %v1817
    %v1886 = vunpack.c.l.b16 %v1818
    %v1887 = vunpack.c.l.b16 %v1819
    %v1888 = vunpack.c.l.b16 %v1820
    %v1889 = vunpack.c.l.b16 %v1821
    %v1890 = vunpack.c.l.b16 %v1822
    %v1891 = vunpack.c.l.b16 %v1823
    %v1892 = vunpack.c.l.b16 %v1824
    %v1893 = vunpack.c.l.b16 %v1825
    %v1894 = vunpack.c.l.b16 %v1826
    %v1895 = vunpack.c.l.b16 %v1827
    %v1896 = vunpack.c.l.b16 %v1828
    %v1897 = vunpack.c.l.b16 %v1829
    %v1898 = vunpack.c.l.b16 %v1830
    %v1899 = vunpack.c.l.b16 %v1831
    %v1900 = vunpack.c.l.b16 %v1832
    %v1901 = vunpack.c.l.b16 %v1833
    %v1902 = vunpack.c.l.b16 %v1834
    %v1903 = vunpack.c.l.b16 %v1835
    %v1904 = vunpack.c.l.b16 %v1836
    %v1905 = vunpack.c.l.b16 %v1837
    %v1906 = vunpack.c.l.b16 %v1838
    %v1907 = vunpack.c.l.b16 %v1839
    %v1908 = vunpack.c.l.b16 %v1840
    %v1909 = vunpack.c.l.b16 %v1841
    %v1910 = vpack.c.b16 %v1879, %v1878
    %v1911 = vpack.c.b16 %v1881, %v1880
    %v1912 = vpack.c.b16 %v1883, %v1882
    %v1913 = vpack.c.b16 %v1885, %v1884
    %v1914 = vpack.c.b16 %v1887, %v1886
    %v1915 = vpack.c.b16 %v1889, %v1888
    %v1916 = vpack.c.b16 %v1891, %v1890
    %v1917 = vpack.c.b16 %v1893, %v1892
    %v1918 = vpack.c.b16 %v1895, %v1894
    %v1919 = vpack.c.b16 %v1897, %v1896
    %v1920 = vpack.c.b16 %v1899, %v1898
    %v1921 = vpack.c.b16 %v1901, %v1900
    %v1922 = vpack.c.b16 %v1903, %v1902
    %v1923 = vpack.c.b16 %v1905, %v1904
    %v1924 = vpack.c.b16 %v1907, %v1906
    %v1925 = vpack.c.b16 %v1909, %v1908
    %1942 = vmatpush.bf16.msra.mxu0 %v1917
    %1943 = vmatpush.bf16.msra.mxu0 %v1916
    %1944 = vmatpush.bf16.msra.mxu0 %v1915
    %1945 = vmatpush.bf16.msra.mxu0 %v1914
    %1946 = vmatpush.bf16.msra.mxu0 %v1913
    %1947 = vmatpush.bf16.msra.mxu0 %v1912
    %1948 = vmatpush.bf16.msra.mxu0 %v1911
    %1949 = vmatpush.bf16.msra.mxu0 %v1910
    %1950 = vmatmul.bf16.gmra.mxu0 %v1808
    %v1951 = vpop.f32.mrf.mxu0
    %v1952 = vadd.f32 %v1844, %v1951
    %v1953 = vpop.f32.mrf.mxu0
    %1954 = vdwg.mxu0
    %1955 = vmatpush.bf16.msra.mxu0 %v1925
    %1956 = vmatpush.bf16.msra.mxu0 %v1924
    %1957 = vmatpush.bf16.msra.mxu0 %v1923
    %1958 = vmatpush.bf16.msra.mxu0 %v1922
    %1959 = vmatpush.bf16.msra.mxu0 %v1921
    %1960 = vmatpush.bf16.msra.mxu0 %v1920
    %1961 = vmatpush.bf16.msra.mxu0 %v1919
    %1962 = vmatpush.bf16.msra.mxu0 %v1918
    %1963 = vmatmul.bf16.gmra.mxu0 %v1809
    %v1964 = vpop.f32.mrf.mxu0
    %v1965 = vadd.f32 %v1952, %v1964
    %v1966 = vpop.f32.mrf.mxu0
    %1967 = vdwg.mxu0
    %v1968 = vpack.c.bf16 %v1965, %v1965
    %v1969 = vld [vmem:[#allocation13] sm:$0xf]
    %v1970 = vld [vmem:[#allocation13 + $0x4] sm:$0xf]
    %v1971 = vld [vmem:[#allocation13 + $0x8] sm:$0xf]
    %v1972 = vld [vmem:[#allocation13 + $0xc] sm:$0xf]
    %v1973 = vld [vmem:[#allocation13 + $0x10] sm:$0xf]
    %v1974 = vld [vmem:[#allocation13 + $0x14] sm:$0xf]
    %v1975 = vld [vmem:[#allocation13 + $0x18] sm:$0xf]
    %v1976 = vld [vmem:[#allocation13 + $0x1c] sm:$0xf]
    %v1977 = vld [vmem:[#allocation13 + $0x20] sm:$0xf]
    %v1978 = vld [vmem:[#allocation13 + $0x24] sm:$0xf]
    %v1979 = vld [vmem:[#allocation13 + $0x28] sm:$0xf]
    %v1980 = vld [vmem:[#allocation13 + $0x2c] sm:$0xf]
    %v1981 = vld [vmem:[#allocation13 + $0x30] sm:$0xf]
    %v1982 = vld [vmem:[#allocation13 + $0x34] sm:$0xf]
    %v1983 = vld [vmem:[#allocation13 + $0x38] sm:$0xf]
    %v1984 = vld [vmem:[#allocation13 + $0x3c] sm:$0xf]
    %v1985 = vld [vmem:[#allocation14] sm:$0x1]
    %v1987 = vperm.slane %v1985, 0
    %v2005 = vunpack.c.l.b16 %v1969
    %v2006 = vunpack.c.l.b16 %v1970
    %v2007 = vunpack.c.l.b16 %v1971
    %v2008 = vunpack.c.l.b16 %v1972
    %v2009 = vunpack.c.l.b16 %v1973
    %v2010 = vunpack.c.l.b16 %v1974
    %v2011 = vunpack.c.l.b16 %v1975
    %v2012 = vunpack.c.l.b16 %v1976
    %v2013 = vunpack.c.l.b16 %v1977
    %v2014 = vunpack.c.l.b16 %v1978
    %v2015 = vunpack.c.l.b16 %v1979
    %v2016 = vunpack.c.l.b16 %v1980
    %v2017 = vunpack.c.l.b16 %v1981
    %v2018 = vunpack.c.l.b16 %v1982
    %v2019 = vunpack.c.l.b16 %v1983
    %v2020 = vunpack.c.l.b16 %v1984
    %v2021 = vpack.c.b16 %v2006, %v2005
    %v2022 = vpack.c.b16 %v2008, %v2007
    %v2023 = vpack.c.b16 %v2010, %v2009
    %v2024 = vpack.c.b16 %v2012, %v2011
    %v2025 = vpack.c.b16 %v2014, %v2013
    %v2026 = vpack.c.b16 %v2016, %v2015
    %v2027 = vpack.c.b16 %v2018, %v2017
    %v2028 = vpack.c.b16 %v2020, %v2019
    %2037 = vmatpush.bf16.msra.mxu0 %v2028
    %2038 = vmatpush.bf16.msra.mxu0 %v2027
    %2039 = vmatpush.bf16.msra.mxu0 %v2026
    %2040 = vmatpush.bf16.msra.mxu0 %v2025
    %2041 = vmatpush.bf16.msra.mxu0 %v2024
    %2042 = vmatpush.bf16.msra.mxu0 %v2023
    %2043 = vmatpush.bf16.msra.mxu0 %v2022
    %2044 = vmatpush.bf16.msra.mxu0 %v2021
    %2045 = vmatmul.bf16.gmra.mxu0 %v1968
    %v2046 = vpop.f32.mrf.mxu0
    %v2047 = vadd.f32 %v1987, %v2046
    %v2048 = vpop.f32.mrf.mxu0
    %2049 = vdwg.mxu0
    %2050 = vst [vmem:[#allocation16] sm:$0x3] %v2047
    // Predicated region
    $region78: #{lstm_model_forward.5} parent=1 // pred_check
      _
    $region79: #{lstm_model_forward.5} parent=1 // pred_check_branch
      %2052 = sbr.rel (0) target = $region81
    $region80: #{lstm_model_forward.5} parent=1 // pred_region
      %2054 = vsyncadd [#allocation4], 0
      %s2056 = sshll.u32 [#allocation16], 4
      %s2057 = int_to_ptr.vmem [resolvable:$true] %s2056
      %s2058 = sshll.u32 %s11, 4
      %s2059 = int_to_ptr.hbm [resolvable:$true] %s2058
      %2061 = dma.vmem_to_hbm [thread:$0]  %s2057, 32, %s2059, [#allocation4]
    $region81: #{lstm_model_forward.5} parent=1 // pred_fallthru
      _
    // Predicated region
    $region82: #{lstm_model_forward.5} parent=1 // pred_check
      _
    $region83: #{lstm_model_forward.5} parent=1 // pred_check_branch
      %2063 = sbr.rel (0) target = $region85
    $region84: #{lstm_model_forward.5} parent=1 // pred_region
      %2065 = dma.done [#allocation4], 32
    $region85: #{lstm_model_forward.5} parent=1 // pred_fallthru
      _
    %2066 = vsyncpa [#allocation3], 1
    %2067 = vsyncpa [#allocation6], 1
    %2068 = vsyncpa [#allocation9], 1
    %2069 = vsyncpa [#allocation12], 1
    %2070 = vsyncpa [#allocation15], 1
    %2071 = vsyncpa [#allocation4], 1

</llo_original>
